<compile_context>
chip_gen: v7x
topology: tpu7x:2x2x1
jax: 0.10.0
libtpu: 0.0.40
codegen_flags: <defaults>
</compile_context>

<pallas_src>
import functools

import numpy as np
import jax
import jax.numpy as jnp
from jax.experimental import pallas as pl
from jax.experimental.pallas import tpu as pltpu

NHIDDEN = 128     # SPADE hidden width
EPS = 1e-5        # InstanceNorm2d eps
LEAKY = 0.2       # leaky_relu negative slope


# ----------------------------------------------------------------------------
# Chip-adaptive knobs
# ----------------------------------------------------------------------------
@functools.lru_cache(maxsize=None)
def _co_tile_max():
    """256-wide output tiles fill the 2x256x256 MXU on v6e/v7x; <=v5 MXU is 128."""
    try:
        kind = jax.devices()[0].device_kind.lower()
    except Exception:
        return 128
    if any(t in kind for t in ("v2", "v3", "v4", "v5")):
        return 128
    return 256


def _co_tile(co):
    t = _co_tile_max()
    return t if co % t == 0 else 128


@functools.lru_cache(maxsize=None)
def _vmem_limit_bytes():
    """~75% of physical VMEM, capped at 100 MiB (v5e/v6e: 128 MiB, v7x: 64 MiB)."""
    cap = 64 << 20
    try:
        cap = int(pltpu.get_tpu_info().vmem_capacity_bytes)
    except Exception:
        pass
    return int(min(cap * 3 // 4, 100 << 20))


def _compiler_params():
    return pltpu.CompilerParams(
        dimension_semantics=("parallel", "arbitrary"),
        vmem_limit_bytes=_vmem_limit_bytes())


# ----------------------------------------------------------------------------
# Kernel helpers (trace-time Python, fully static shapes)
# ----------------------------------------------------------------------------
def _instance_modulate(x_ref, gb_ref, act_inner):
    """InstanceNorm2d(affine=False) + SPADE modulation (+ optional leaky relu).

    Single pass over x: sum and sum-of-squares accumulated together in f32.
    x_ref: (1,H,W,Ci) bf16   gb_ref: (1,H,W,2*Ci) bf16  ->  (1,H,W,Ci) f32
    """
    Ci = x_ref.shape[3]
    inv_hw = 1.0 / float(x_ref.shape[1] * x_ref.shape[2])
    x = x_ref[...].astype(jnp.float32)
    mean = jnp.sum(x, axis=(1, 2), keepdims=True) * inv_hw
    ex2 = jnp.sum(x * x, axis=(1, 2), keepdims=True) * inv_hw
    var = jnp.maximum(ex2 - mean * mean, 0.0)       # biased var (matches PyTorch)
    inv_std = jax.lax.rsqrt(var + EPS)
    gamma = gb_ref[:, :, :, :Ci].astype(jnp.float32)
    beta = gb_ref[:, :, :, Ci:].astype(jnp.float32)
    h = (x - mean) * inv_std * (1.0 + gamma) + beta
    if act_inner:
        h = jnp.where(h >= 0, h, LEAKY * h)
    return h


def _store_halo(hpad_ref, h, p, H, W):
    """Store `h` (1,H,W,Ci) into the scratch interior; zero only the p-wide border."""
    if p > 0:
        Wp = W + 2 * p
        C = hpad_ref.shape[3]
        zrow = jnp.zeros((1, p, Wp, C), hpad_ref.dtype)
        hpad_ref[:, 0:p, :, :] = zrow
        hpad_ref[:, H + p:H + 2 * p, :, :] = zrow
        zcol = jnp.zeros((1, H, p, C), hpad_ref.dtype)
        hpad_ref[:, p:p + H, 0:p, :] = zcol
        hpad_ref[:, p:p + H, W + p:W + 2 * p, :] = zcol
    hpad_ref[:, p:p + H, p:p + W, :] = h.astype(hpad_ref.dtype)


def _conv_taps(hpad_ref, w_ref, H, W):
    """K*K shifted bf16 MXU matmuls (f32 accumulation) from the bf16 padded scratch."""
    K = w_ref.shape[0]
    Ci = hpad_ref.shape[3]
    Co = w_ref.shape[3]
    acc = jnp.zeros((H * W, Co), jnp.float32)
    for kh in range(K):                     # static unroll (K is 1 or 3)
        for kw in range(K):
            patch = hpad_ref[0, kh:kh + H, kw:kw + W, :].reshape(H * W, Ci)
            acc = acc + jnp.dot(patch, w_ref[kh, kw],
                                preferred_element_type=jnp.float32)
    return acc


# ----------------------------------------------------------------------------
# Pallas kernels
# ----------------------------------------------------------------------------
def _spade_conv_kernel(*refs, act_inner, add_res):
    """Fused: instance-norm + SPADE modulate (+leaky) + conv + bias (+residual).

    Per-image work (stats, modulation, halo fill) runs only at the first Cout
    tile; the bf16 halo scratch persists across the 'arbitrary' Cout axis.
    """
    if add_res:
        x_ref, gb_ref, w_ref, b_ref, res_ref, o_ref, hpad_ref = refs
    else:
        x_ref, gb_ref, w_ref, b_ref, o_ref, hpad_ref = refs
        res_ref = None
    H, W, Co = o_ref.shape[1], o_ref.shape[2], o_ref.shape[3]
    K = w_ref.shape[0]
    p = K // 2

    @pl.when(pl.program_id(1) == 0)
    def _():
        h = _instance_modulate(x_ref, gb_ref, act_inner)   # (1,H,W,Ci) f32
        _store_halo(hpad_ref, h, p, H, W)

    acc = _conv_taps(hpad_ref, w_ref, H, W) + b_ref[...]
    out = acc.reshape(1, H, W, Co)
    if add_res:
        out = out + res_ref[...].astype(jnp.float32)
    o_ref[...] = out.astype(o_ref.dtype)


def _modulation_kernel(seg_ref, ws_ref, bs_ref, wgb_ref, bgb_ref, o_ref,
                       segpad_ref, actpad_ref):
    """Fused SPADE modulation MLP: relu(conv3x3(seg)) -> conv3x3 -> [gamma|beta].

    The shared conv + ReLU and both halo fills run once per image (j == 0);
    `actv` lives only in a VMEM bf16 halo scratch (never round-trips HBM).
    """
    H, W, Co = o_ref.shape[1], o_ref.shape[2], o_ref.shape[3]

    @pl.when(pl.program_id(1) == 0)
    def _():
        _store_halo(segpad_ref, seg_ref[...], 1, H, W)
        a = _conv_taps(segpad_ref, ws_ref, H, W) + bs_ref[...]
        a = jnp.maximum(a, 0.0)
        _store_halo(actpad_ref, a.reshape(1, H, W, NHIDDEN), 1, H, W)

    acc = _conv_taps(actpad_ref, wgb_ref, H, W) + bgb_ref[...]
    o_ref[...] = acc.reshape(1, H, W, Co).astype(o_ref.dtype)


# ----------------------------------------------------------------------------
# Pallas wrappers
# ----------------------------------------------------------------------------
def spade_conv(x, gb, w, b, res=None, act_inner=True, out_dtype=jnp.bfloat16):
    """Fused SPADE norm (+leaky) + 'same' conv (+residual).  gb holds [gamma|beta]."""
    N, H, W, Ci = x.shape
    K, _, _, Co = w.shape
    p = K // 2
    ct = _co_tile(Co)
    assert gb.shape[-1] == 2 * Ci and Co % ct == 0
    add_res = res is not None
    kernel = functools.partial(_spade_conv_kernel,
                               act_inner=act_inner, add_res=add_res)
    in_specs = [
        pl.BlockSpec((1, H, W, Ci), lambda n, j: (n, 0, 0, 0)),
        pl.BlockSpec((1, H, W, 2 * Ci), lambda n, j: (n, 0, 0, 0)),
        pl.BlockSpec((K, K, Ci, ct), lambda n, j: (0, 0, 0, j)),
        pl.BlockSpec((1, ct), lambda n, j: (0, j)),
    ]
    args = [x, gb, w, b]
    if add_res:
        in_specs.append(pl.BlockSpec((1, H, W, ct), lambda n, j: (n, 0, 0, j)))
        args.append(res)
    return pl.pallas_call(
        kernel,
        out_shape=jax.ShapeDtypeStruct((N, H, W, Co), out_dtype),
        grid=(N, Co // ct),
        in_specs=in_specs,
        out_specs=pl.BlockSpec((1, H, W, ct), lambda n, j: (n, 0, 0, j)),
        scratch_shapes=[pltpu.VMEM((1, H + 2 * p, W + 2 * p, Ci), jnp.bfloat16)],
        compiler_params=_compiler_params(),
    )(*args)


def spade_modulation(seg, ws, bs, wgb, bgb, out_dtype=jnp.bfloat16):
    """One-kernel SPADE MLP: seg -> relu(conv3x3) -> conv3x3 -> [gamma | beta]."""
    N, H, W, Cin = seg.shape
    Co = wgb.shape[3]
    ct = _co_tile(Co)
    return pl.pallas_call(
        _modulation_kernel,
        out_shape=jax.ShapeDtypeStruct((N, H, W, Co), out_dtype),
        grid=(N, Co // ct),
        in_specs=[
            pl.BlockSpec((1, H, W, Cin), lambda n, j: (n, 0, 0, 0)),
            pl.BlockSpec((3, 3, Cin, NHIDDEN), lambda n, j: (0, 0, 0, 0)),
            pl.BlockSpec((1, NHIDDEN), lambda n, j: (0, 0)),
            pl.BlockSpec((3, 3, NHIDDEN, ct), lambda n, j: (0, 0, 0, j)),
            pl.BlockSpec((1, ct), lambda n, j: (0, j)),
        ],
        out_specs=pl.BlockSpec((1, H, W, ct), lambda n, j: (n, 0, 0, j)),
        scratch_shapes=[
            pltpu.VMEM((1, H + 2, W + 2, Cin), jnp.bfloat16),
            pltpu.VMEM((1, H + 2, W + 2, NHIDDEN), jnp.bfloat16),
        ],
        compiler_params=_compiler_params(),
    )(seg, ws, bs, wgb, bgb)


# ----------------------------------------------------------------------------
# Parameter init / kernel-facing weight prep (deterministic, synthetic)
# ----------------------------------------------------------------------------
def _rup(n, m=128):
    return ((n + m - 1) // m) * m


def _conv_init(key, cout, cin, ksize, bias=True):
    kw, kb = jax.random.split(key)
    fan_in = cin * ksize * ksize
    bound = 1.0 / np.sqrt(fan_in)
    w = jax.random.uniform(kw, (cout, cin, ksize, ksize), jnp.float32,
                           -bound, bound)                       # OIHW
    b = (jax.random.uniform(kb, (cout,), jnp.float32, -bound, bound)
         if bias else jnp.zeros((cout,), jnp.float32))
    return w, b


def _spectral(w_oihw):
    mat = np.asarray(w_oihw).reshape(w_oihw.shape[0], -1)
    sigma = np.linalg.norm(mat, ord=2)      # exact largest singular value
    return w_oihw / jnp.float32(sigma)


def _prep_w(w_oihw, cin_p, cout_p):
    """OIHW -> HWIO, zero-pad channels to the 128-lane layout, cast bf16."""
    w = jnp.transpose(w_oihw, (2, 3, 1, 0))
    w = jnp.pad(w, ((0, 0), (0, 0),
                    (0, cin_p - w.shape[2]), (0, cout_p - w.shape[3])))
    return w.astype(jnp.bfloat16)


def _prep_b(b, cout_p):
    return jnp.pad(b, (0, cout_p - b.shape[0])).reshape(1, cout_p) \
              .astype(jnp.float32)


def _spade_params(key, norm_nc, label_nc, norm_nc_p, label_nc_p):
    k1, k2, k3 = jax.random.split(key, 3)
    ws, bs = _conv_init(k1, NHIDDEN, label_nc, 3)
    wg, bg = _conv_init(k2, norm_nc, NHIDDEN, 3)
    wb, bb = _conv_init(k3, norm_nc, NHIDDEN, 3)
    # gamma and beta convs fused along Cout: [gamma_block | beta_block]
    gb_w = jnp.concatenate([_prep_w(wg, NHIDDEN, norm_nc_p),
                            _prep_w(wb, NHIDDEN, norm_nc_p)], axis=3)
    gb_b = jnp.concatenate([_prep_b(bg, norm_nc_p),
                            _prep_b(bb, norm_nc_p)], axis=1)
    return dict(shared_w=_prep_w(ws, label_nc_p, NHIDDEN),
                shared_b=_prep_b(bs, NHIDDEN),
                gb_w=gb_w, gb_b=gb_b)


def init_spade_resnet_block(key, fin, fout, input_nc):
    fmiddle = min(fin, fout)
    learned_shortcut = fin != fout
    fin_p, fmid_p, fout_p, inc_p = (_rup(c) for c in
                                    (fin, fmiddle, fout, input_nc))
    keys = jax.random.split(key, 6)
    w0, b0 = _conv_init(keys[0], fmiddle, fin, 3)
    w1, b1 = _conv_init(keys[1], fout, fmiddle, 3)
    params = dict(
        fout=fout, learned_shortcut=learned_shortcut,
        fin_pad=fin_p, fmid_pad=fmid_p, fout_pad=fout_p, inc_pad=inc_p,
        conv_0_w=_prep_w(_spectral(w0), fin_p, fmid_p), conv_0_b=_prep_b(b0, fmid_p),
        conv_1_w=_prep_w(_spectral(w1), fmid_p, fout_p), conv_1_b=_prep_b(b1, fout_p),
        norm_0=_spade_params(keys[2], fin, input_nc, fin_p, inc_p),
        norm_1=_spade_params(keys[3], fmiddle, input_nc, fmid_p, inc_p),
    )
    if learned_shortcut:
        ws, _ = _conv_init(keys[4], fout, fin, 1, bias=False)
        params["conv_s_w"] = _prep_w(_spectral(ws), fin_p, fout_p)
        params["conv_s_b"] = _prep_b(jnp.zeros((fout,), jnp.float32), fout_p)
        params["norm_s"] = _spade_params(keys[5], fin, input_nc, fin_p, inc_p)
    return params


# ----------------------------------------------------------------------------
# Forward pass (NHWC)
# ----------------------------------------------------------------------------
def _pad_ch(x, c_pad):
    c = x.shape[-1]
    if c == c_pad:
        return x
    return jnp.pad(x, ((0, 0), (0, 0), (0, 0), (0, c_pad - c)))


def spade_resnet_block(x, seg, params):
    """x: (N,H,W,fin), seg: (N,Hs,Ws,input_nc) -> (N,H,W,fout)."""
    N, H, W, _ = x.shape
    fout = params["fout"]

    # F.interpolate(seg, size=x.shape[2:], mode='nearest')
    # TODO(synk): nearest-neighbor resize stays in glue (gather pattern).
    if seg.shape[1:3] != (H, W):
        sh, sw = seg.shape[1], seg.shape[2]
        hi = (jnp.arange(H) * sh) // H
        wi = (jnp.arange(W) * sw) // W
        seg = seg[:, hi][:, :, wi]

    # bf16, channel-padded kernel inputs (halves input DMA; stats stay f32 in-kernel)
    x_p = _pad_ch(x, params["fin_pad"]).astype(jnp.bfloat16)
    seg_p = _pad_ch(seg, params["inc_pad"]).astype(jnp.bfloat16)

    def modulation(p):
        return spade_modulation(seg_p, p["shared_w"], p["shared_b"],
                                p["gb_w"], p["gb_b"])           # [gamma | beta]

    # shortcut branch: conv_s(norm_s(x, seg)) or identity
    if params["learned_shortcut"]:
        gbs = modulation(params["norm_s"])
        x_s = spade_conv(x_p, gbs, params["conv_s_w"], params["conv_s_b"],
                         act_inner=False)
    else:
        x_s = x_p

    # main branch: conv_0(actvn(norm_0(x))) -> conv_1(actvn(norm_1(dx))) + x_s
    gb0 = modulation(params["norm_0"])
    dx = spade_conv(x_p, gb0, params["conv_0_w"], params["conv_0_b"],
                    act_inner=True)

    gb1 = modulation(params["norm_1"])
    out = spade_conv(dx, gb1, params["conv_1_w"], params["conv_1_b"],
                     res=x_s, act_inner=True, out_dtype=jnp.float32)
    # NOTE: in a full generator, keep padded channels end-to-end and drop this slice.
    return out[..., :fout]


# ----------------------------------------------------------------------------
if __name__ == "__main__":
    key = jax.random.PRNGKey(0)
    k_param, k_x, k_seg = jax.random.split(key, 3)

    N, fin, fout, H, W = 2, 4, 8, 16, 16
    input_nc = 5

    params = init_spade_resnet_block(k_param, fin, fout, input_nc)

    # Inputs in PyTorch NCHW convention, transposed to NHWC for the kernels.
    x_nchw = jax.random.normal(k_x, (N, fin, H, W), jnp.float32)
    seg_nchw = jax.random.normal(k_seg, (N, input_nc, H, W), jnp.float32)
    x = jnp.transpose(x_nchw, (0, 2, 3, 1))
    seg = jnp.transpose(seg_nchw, (0, 2, 3, 1))

    out_nhwc = spade_resnet_block(x, seg, params)
    out_nchw = jnp.transpose(out_nhwc, (0, 3, 1, 2))   # back to NCHW
    jax.block_until_ready(out_nchw)

    assert out_nchw.shape == (N, fout, H, W)
    assert bool(jnp.all(jnp.isfinite(out_nchw)))
    print("KERNEL_OK")
</pallas_src>

<mosaic_0001>
module attributes {stable_mosaic.version = 11 : i64} {
  func.func @_modulation_kernel(%arg0: i32, %arg1: i32, %arg2: memref<1x16x16x128xbf16, #tpu.memory_space<vmem>>, %arg3: memref<3x3x128x128xbf16, #tpu.memory_space<vmem>>, %arg4: memref<1x128xf32, #tpu.memory_space<vmem>>, %arg5: memref<3x3x128x256xbf16, #tpu.memory_space<vmem>>, %arg6: memref<1x256xf32, #tpu.memory_space<vmem>>, %arg7: memref<1x16x16x256xbf16, #tpu.memory_space<vmem>>, %arg8: memref<1x18x18x128xbf16, #tpu.memory_space<vmem>>, %arg9: memref<1x18x18x128xbf16, #tpu.memory_space<vmem>>) attributes {dimension_semantics = [#tpu.dimension_semantics<parallel>, #tpu.dimension_semantics<arbitrary>], iteration_bounds = array<i64: 2, 1>, scalar_prefetch = 0 : i64, scratch_operands = 2 : i64, tpu.core_type = #tpu.core_type<tc>, window_params = [{transform_indices = @transform_0, window_bounds = array<i64: 1, 16, 16, 128>}, {pipeline_mode = #tpu.pipeline_mode<synchronous>, transform_indices = @transform_1, window_bounds = array<i64: 3, 3, 128, 128>}, {pipeline_mode = #tpu.pipeline_mode<synchronous>, transform_indices = @transform_2, window_bounds = array<i64: 1, 128>}, {transform_indices = @transform_3, window_bounds = array<i64: 3, 3, 128, 256>}, {transform_indices = @transform_4, window_bounds = array<i64: 1, 256>}, {transform_indices = @transform_5, window_bounds = array<i64: 1, 16, 16, 256>}]} {
    %c0_i32 = arith.constant 0 : i32
    %0 = arith.cmpi eq, %arg1, %c0_i32 : i32
    %1 = arith.extui %0 : i1 to i32
    %c0_i32_0 = arith.constant 0 : i32
    %2 = arith.cmpi ne, %1, %c0_i32_0 : i32
    scf.if %2 {
      %c0_85 = arith.constant 0 : index
      %c0_86 = arith.constant 0 : index
      %c0_87 = arith.constant 0 : index
      %c0_88 = arith.constant 0 : index
      %73 = vector.load %arg2[%c0_85, %c0_86, %c0_87, %c0_88] : memref<1x16x16x128xbf16, #tpu.memory_space<vmem>>, vector<1x16x16x128xbf16>
      %cst_89 = arith.constant 0.000000e+00 : bf16
      %74 = vector.broadcast %cst_89 : bf16 to vector<1x1x18x128xbf16>
      %c0_90 = arith.constant 0 : index
      %c0_91 = arith.constant 0 : index
      %c0_92 = arith.constant 0 : index
      %c0_93 = arith.constant 0 : index
      %75 = vector.load %arg8[%c0_90, %c0_91, %c0_92, %c0_93] : memref<1x18x18x128xbf16, #tpu.memory_space<vmem>>, vector<1x1x18x128xbf16>
      tpu.vector_store %arg8[%c0_90, %c0_91, %c0_92, %c0_93], %74 {strides = array<i32>} : memref<1x18x18x128xbf16, #tpu.memory_space<vmem>>, vector<1x1x18x128xbf16>,
      %c0_94 = arith.constant 0 : index
      %c17 = arith.constant 17 : index
      %c0_95 = arith.constant 0 : index
      %c0_96 = arith.constant 0 : index
      %76 = vector.load %arg8[%c0_94, %c17, %c0_95, %c0_96] : memref<1x18x18x128xbf16, #tpu.memory_space<vmem>>, vector<1x1x18x128xbf16>
      tpu.vector_store %arg8[%c0_94, %c17, %c0_95, %c0_96], %74 {strides = array<i32>} : memref<1x18x18x128xbf16, #tpu.memory_space<vmem>>, vector<1x1x18x128xbf16>,
      %cst_97 = arith.constant 0.000000e+00 : bf16
      %77 = vector.broadcast %cst_97 : bf16 to vector<1x16x1x128xbf16>
      %c0_98 = arith.constant 0 : index
      %c1_99 = arith.constant 1 : index
      %c0_100 = arith.constant 0 : index
      %c0_101 = arith.constant 0 : index
      %78 = vector.load %arg8[%c0_98, %c1_99, %c0_100, %c0_101] : memref<1x18x18x128xbf16, #tpu.memory_space<vmem>>, vector<1x16x1x128xbf16>
      tpu.vector_store %arg8[%c0_98, %c1_99, %c0_100, %c0_101], %77 {strides = array<i32>} : memref<1x18x18x128xbf16, #tpu.memory_space<vmem>>, vector<1x16x1x128xbf16>,
      %c0_102 = arith.constant 0 : index
      %c1_103 = arith.constant 1 : index
      %c17_104 = arith.constant 17 : index
      %c0_105 = arith.constant 0 : index
      %79 = vector.load %arg8[%c0_102, %c1_103, %c17_104, %c0_105] : memref<1x18x18x128xbf16, #tpu.memory_space<vmem>>, vector<1x16x1x128xbf16>
      tpu.vector_store %arg8[%c0_102, %c1_103, %c17_104, %c0_105], %77 {strides = array<i32>} : memref<1x18x18x128xbf16, #tpu.memory_space<vmem>>, vector<1x16x1x128xbf16>,
      %c0_106 = arith.constant 0 : index
      %c1_107 = arith.constant 1 : index
      %c1_108 = arith.constant 1 : index
      %c0_109 = arith.constant 0 : index
      %80 = vector.load %arg8[%c0_106, %c1_107, %c1_108, %c0_109] : memref<1x18x18x128xbf16, #tpu.memory_space<vmem>>, vector<1x16x16x128xbf16>
      tpu.vector_store %arg8[%c0_106, %c1_107, %c1_108, %c0_109], %73 {strides = array<i32>} : memref<1x18x18x128xbf16, #tpu.memory_space<vmem>>, vector<1x16x16x128xbf16>,
      %cst_110 = arith.constant 0.000000e+00 : f32
      %81 = vector.broadcast %cst_110 : f32 to vector<256x128xf32>
      %c0_111 = arith.constant 0 : index
      %c0_112 = arith.constant 0 : index
      %c0_113 = arith.constant 0 : index
      %c0_114 = arith.constant 0 : index
      %82 = vector.load %arg8[%c0_111, %c0_112, %c0_113, %c0_114] : memref<1x18x18x128xbf16, #tpu.memory_space<vmem>>, vector<1x16x16x128xbf16>
      %83 = vector.shape_cast %82 : vector<1x16x16x128xbf16> to vector<16x16x128xbf16>
      %84 = vector.shape_cast %83 : vector<16x16x128xbf16> to vector<256x128xbf16>
      %c0_115 = arith.constant 0 : index
      %c0_116 = arith.constant 0 : index
      %c0_117 = arith.constant 0 : index
      %c0_118 = arith.constant 0 : index
      %85 = vector.load %arg3[%c0_115, %c0_116, %c0_117, %c0_118] : memref<3x3x128x128xbf16, #tpu.memory_space<vmem>>, vector<1x1x128x128xbf16>
      %86 = vector.shape_cast %85 : vector<1x1x128x128xbf16> to vector<128x128xbf16>
      %cst_119 = arith.constant dense<0.000000e+00> : vector<256x128xf32>
      %87 = tpu.matmul %84, %86, %cst_119 {dimension_numbers = #tpu.dot_dimension_numbers<[1], [0], [0], [1], [0, 0, 1, 1], [], []>} : vector<256x128xbf16>, vector<128x128xbf16>, vector<256x128xf32> -> vector<256x128xf32>
      %88 = arith.addf %81, %87 : vector<256x128xf32>
      %c0_120 = arith.constant 0 : index
      %c0_121 = arith.constant 0 : index
      %c1_122 = arith.constant 1 : index
      %c0_123 = arith.constant 0 : index
      %89 = vector.load %arg8[%c0_120, %c0_121, %c1_122, %c0_123] : memref<1x18x18x128xbf16, #tpu.memory_space<vmem>>, vector<1x16x16x128xbf16>
      %90 = vector.shape_cast %89 : vector<1x16x16x128xbf16> to vector<16x16x128xbf16>
      %91 = vector.shape_cast %90 : vector<16x16x128xbf16> to vector<256x128xbf16>
      %c0_124 = arith.constant 0 : index
      %c1_125 = arith.constant 1 : index
      %c0_126 = arith.constant 0 : index
      %c0_127 = arith.constant 0 : index
      %92 = vector.load %arg3[%c0_124, %c1_125, %c0_126, %c0_127] : memref<3x3x128x128xbf16, #tpu.memory_space<vmem>>, vector<1x1x128x128xbf16>
      %93 = vector.shape_cast %92 : vector<1x1x128x128xbf16> to vector<128x128xbf16>
      %cst_128 = arith.constant dense<0.000000e+00> : vector<256x128xf32>
      %94 = tpu.matmul %91, %93, %cst_128 {dimension_numbers = #tpu.dot_dimension_numbers<[1], [0], [0], [1], [0, 0, 1, 1], [], []>} : vector<256x128xbf16>, vector<128x128xbf16>, vector<256x128xf32> -> vector<256x128xf32>
      %95 = arith.addf %88, %94 : vector<256x128xf32>
      %c0_129 = arith.constant 0 : index
      %c0_130 = arith.constant 0 : index
      %c2_131 = arith.constant 2 : index
      %c0_132 = arith.constant 0 : index
      %96 = vector.load %arg8[%c0_129, %c0_130, %c2_131, %c0_132] : memref<1x18x18x128xbf16, #tpu.memory_space<vmem>>, vector<1x16x16x128xbf16>
      %97 = vector.shape_cast %96 : vector<1x16x16x128xbf16> to vector<16x16x128xbf16>
      %98 = vector.shape_cast %97 : vector<16x16x128xbf16> to vector<256x128xbf16>
      %c0_133 = arith.constant 0 : index
      %c2_134 = arith.constant 2 : index
      %c0_135 = arith.constant 0 : index
      %c0_136 = arith.constant 0 : index
      %99 = vector.load %arg3[%c0_133, %c2_134, %c0_135, %c0_136] : memref<3x3x128x128xbf16, #tpu.memory_space<vmem>>, vector<1x1x128x128xbf16>
      %100 = vector.shape_cast %99 : vector<1x1x128x128xbf16> to vector<128x128xbf16>
      %cst_137 = arith.constant dense<0.000000e+00> : vector<256x128xf32>
      %101 = tpu.matmul %98, %100, %cst_137 {dimension_numbers = #tpu.dot_dimension_numbers<[1], [0], [0], [1], [0, 0, 1, 1], [], []>} : vector<256x128xbf16>, vector<128x128xbf16>, vector<256x128xf32> -> vector<256x128xf32>
      %102 = arith.addf %95, %101 : vector<256x128xf32>
      %c0_138 = arith.constant 0 : index
      %c1_139 = arith.constant 1 : index
      %c0_140 = arith.constant 0 : index
      %c0_141 = arith.constant 0 : index
      %103 = vector.load %arg8[%c0_138, %c1_139, %c0_140, %c0_141] : memref<1x18x18x128xbf16, #tpu.memory_space<vmem>>, vector<1x16x16x128xbf16>
      %104 = vector.shape_cast %103 : vector<1x16x16x128xbf16> to vector<16x16x128xbf16>
      %105 = vector.shape_cast %104 : vector<16x16x128xbf16> to vector<256x128xbf16>
      %c1_142 = arith.constant 1 : index
      %c0_143 = arith.constant 0 : index
      %c0_144 = arith.constant 0 : index
      %c0_145 = arith.constant 0 : index
      %106 = vector.load %arg3[%c1_142, %c0_143, %c0_144, %c0_145] : memref<3x3x128x128xbf16, #tpu.memory_space<vmem>>, vector<1x1x128x128xbf16>
      %107 = vector.shape_cast %106 : vector<1x1x128x128xbf16> to vector<128x128xbf16>
      %cst_146 = arith.constant dense<0.000000e+00> : vector<256x128xf32>
      %108 = tpu.matmul %105, %107, %cst_146 {dimension_numbers = #tpu.dot_dimension_numbers<[1], [0], [0], [1], [0, 0, 1, 1], [], []>} : vector<256x128xbf16>, vector<128x128xbf16>, vector<256x128xf32> -> vector<256x128xf32>
      %109 = arith.addf %102, %108 : vector<256x128xf32>
      %c0_147 = arith.constant 0 : index
      %c1_148 = arith.constant 1 : index
      %c1_149 = arith.constant 1 : index
      %c0_150 = arith.constant 0 : index
      %110 = vector.load %arg8[%c0_147, %c1_148, %c1_149, %c0_150] : memref<1x18x18x128xbf16, #tpu.memory_space<vmem>>, vector<1x16x16x128xbf16>
      %111 = vector.shape_cast %110 : vector<1x16x16x128xbf16> to vector<16x16x128xbf16>
      %112 = vector.shape_cast %111 : vector<16x16x128xbf16> to vector<256x128xbf16>
      %c1_151 = arith.constant 1 : index
      %c1_152 = arith.constant 1 : index
      %c0_153 = arith.constant 0 : index
      %c0_154 = arith.constant 0 : index
      %113 = vector.load %arg3[%c1_151, %c1_152, %c0_153, %c0_154] : memref<3x3x128x128xbf16, #tpu.memory_space<vmem>>, vector<1x1x128x128xbf16>
      %114 = vector.shape_cast %113 : vector<1x1x128x128xbf16> to vector<128x128xbf16>
      %cst_155 = arith.constant dense<0.000000e+00> : vector<256x128xf32>
      %115 = tpu.matmul %112, %114, %cst_155 {dimension_numbers = #tpu.dot_dimension_numbers<[1], [0], [0], [1], [0, 0, 1, 1], [], []>} : vector<256x128xbf16>, vector<128x128xbf16>, vector<256x128xf32> -> vector<256x128xf32>
      %116 = arith.addf %109, %115 : vector<256x128xf32>
      %c0_156 = arith.constant 0 : index
      %c1_157 = arith.constant 1 : index
      %c2_158 = arith.constant 2 : index
      %c0_159 = arith.constant 0 : index
      %117 = vector.load %arg8[%c0_156, %c1_157, %c2_158, %c0_159] : memref<1x18x18x128xbf16, #tpu.memory_space<vmem>>, vector<1x16x16x128xbf16>
      %118 = vector.shape_cast %117 : vector<1x16x16x128xbf16> to vector<16x16x128xbf16>
      %119 = vector.shape_cast %118 : vector<16x16x128xbf16> to vector<256x128xbf16>
      %c1_160 = arith.constant 1 : index
      %c2_161 = arith.constant 2 : index
      %c0_162 = arith.constant 0 : index
      %c0_163 = arith.constant 0 : index
      %120 = vector.load %arg3[%c1_160, %c2_161, %c0_162, %c0_163] : memref<3x3x128x128xbf16, #tpu.memory_space<vmem>>, vector<1x1x128x128xbf16>
      %121 = vector.shape_cast %120 : vector<1x1x128x128xbf16> to vector<128x128xbf16>
      %cst_164 = arith.constant dense<0.000000e+00> : vector<256x128xf32>
      %122 = tpu.matmul %119, %121, %cst_164 {dimension_numbers = #tpu.dot_dimension_numbers<[1], [0], [0], [1], [0, 0, 1, 1], [], []>} : vector<256x128xbf16>, vector<128x128xbf16>, vector<256x128xf32> -> vector<256x128xf32>
      %123 = arith.addf %116, %122 : vector<256x128xf32>
      %c0_165 = arith.constant 0 : index
      %c2_166 = arith.constant 2 : index
      %c0_167 = arith.constant 0 : index
      %c0_168 = arith.constant 0 : index
      %124 = vector.load %arg8[%c0_165, %c2_166, %c0_167, %c0_168] : memref<1x18x18x128xbf16, #tpu.memory_space<vmem>>, vector<1x16x16x128xbf16>
      %125 = vector.shape_cast %124 : vector<1x16x16x128xbf16> to vector<16x16x128xbf16>
      %126 = vector.shape_cast %125 : vector<16x16x128xbf16> to vector<256x128xbf16>
      %c2_169 = arith.constant 2 : index
      %c0_170 = arith.constant 0 : index
      %c0_171 = arith.constant 0 : index
      %c0_172 = arith.constant 0 : index
      %127 = vector.load %arg3[%c2_169, %c0_170, %c0_171, %c0_172] : memref<3x3x128x128xbf16, #tpu.memory_space<vmem>>, vector<1x1x128x128xbf16>
      %128 = vector.shape_cast %127 : vector<1x1x128x128xbf16> to vector<128x128xbf16>
      %cst_173 = arith.constant dense<0.000000e+00> : vector<256x128xf32>
      %129 = tpu.matmul %126, %128, %cst_173 {dimension_numbers = #tpu.dot_dimension_numbers<[1], [0], [0], [1], [0, 0, 1, 1], [], []>} : vector<256x128xbf16>, vector<128x128xbf16>, vector<256x128xf32> -> vector<256x128xf32>
      %130 = arith.addf %123, %129 : vector<256x128xf32>
      %c0_174 = arith.constant 0 : index
      %c2_175 = arith.constant 2 : index
      %c1_176 = arith.constant 1 : index
      %c0_177 = arith.constant 0 : index
      %131 = vector.load %arg8[%c0_174, %c2_175, %c1_176, %c0_177] : memref<1x18x18x128xbf16, #tpu.memory_space<vmem>>, vector<1x16x16x128xbf16>
      %132 = vector.shape_cast %131 : vector<1x16x16x128xbf16> to vector<16x16x128xbf16>
      %133 = vector.shape_cast %132 : vector<16x16x128xbf16> to vector<256x128xbf16>
      %c2_178 = arith.constant 2 : index
      %c1_179 = arith.constant 1 : index
      %c0_180 = arith.constant 0 : index
      %c0_181 = arith.constant 0 : index
      %134 = vector.load %arg3[%c2_178, %c1_179, %c0_180, %c0_181] : memref<3x3x128x128xbf16, #tpu.memory_space<vmem>>, vector<1x1x128x128xbf16>
      %135 = vector.shape_cast %134 : vector<1x1x128x128xbf16> to vector<128x128xbf16>
      %cst_182 = arith.constant dense<0.000000e+00> : vector<256x128xf32>
      %136 = tpu.matmul %133, %135, %cst_182 {dimension_numbers = #tpu.dot_dimension_numbers<[1], [0], [0], [1], [0, 0, 1, 1], [], []>} : vector<256x128xbf16>, vector<128x128xbf16>, vector<256x128xf32> -> vector<256x128xf32>
      %137 = arith.addf %130, %136 : vector<256x128xf32>
      %c0_183 = arith.constant 0 : index
      %c2_184 = arith.constant 2 : index
      %c2_185 = arith.constant 2 : index
      %c0_186 = arith.constant 0 : index
      %138 = vector.load %arg8[%c0_183, %c2_184, %c2_185, %c0_186] : memref<1x18x18x128xbf16, #tpu.memory_space<vmem>>, vector<1x16x16x128xbf16>
      %139 = vector.shape_cast %138 : vector<1x16x16x128xbf16> to vector<16x16x128xbf16>
      %140 = vector.shape_cast %139 : vector<16x16x128xbf16> to vector<256x128xbf16>
      %c2_187 = arith.constant 2 : index
      %c2_188 = arith.constant 2 : index
      %c0_189 = arith.constant 0 : index
      %c0_190 = arith.constant 0 : index
      %141 = vector.load %arg3[%c2_187, %c2_188, %c0_189, %c0_190] : memref<3x3x128x128xbf16, #tpu.memory_space<vmem>>, vector<1x1x128x128xbf16>
      %142 = vector.shape_cast %141 : vector<1x1x128x128xbf16> to vector<128x128xbf16>
      %cst_191 = arith.constant dense<0.000000e+00> : vector<256x128xf32>
      %143 = tpu.matmul %140, %142, %cst_191 {dimension_numbers = #tpu.dot_dimension_numbers<[1], [0], [0], [1], [0, 0, 1, 1], [], []>} : vector<256x128xbf16>, vector<128x128xbf16>, vector<256x128xf32> -> vector<256x128xf32>
      %144 = arith.addf %137, %143 : vector<256x128xf32>
      %c0_192 = arith.constant 0 : index
      %c0_193 = arith.constant 0 : index
      %145 = vector.load %arg4[%c0_192, %c0_193] : memref<1x128xf32, #tpu.memory_space<vmem>>, vector<1x128xf32>
      %146 = vector.broadcast %145 : vector<1x128xf32> to vector<256x128xf32>
      %147 = arith.addf %144, %146 : vector<256x128xf32>
      %cst_194 = arith.constant 0.000000e+00 : f32
      %148 = vector.broadcast %cst_194 : f32 to vector<256x128xf32>
      %149 = arith.maximumf %147, %148 : vector<256x128xf32>
      %150 = vector.shape_cast %149 : vector<256x128xf32> to vector<1x16x16x128xf32>
      %cst_195 = arith.constant 0.000000e+00 : bf16
      %151 = vector.broadcast %cst_195 : bf16 to vector<1x1x18x128xbf16>
      %c0_196 = arith.constant 0 : index
      %c0_197 = arith.constant 0 : index
      %c0_198 = arith.constant 0 : index
      %c0_199 = arith.constant 0 : index
      %152 = vector.load %arg9[%c0_196, %c0_197, %c0_198, %c0_199] : memref<1x18x18x128xbf16, #tpu.memory_space<vmem>>, vector<1x1x18x128xbf16>
      tpu.vector_store %arg9[%c0_196, %c0_197, %c0_198, %c0_199], %151 {strides = array<i32>} : memref<1x18x18x128xbf16, #tpu.memory_space<vmem>>, vector<1x1x18x128xbf16>,
      %c0_200 = arith.constant 0 : index
      %c17_201 = arith.constant 17 : index
      %c0_202 = arith.constant 0 : index
      %c0_203 = arith.constant 0 : index
      %153 = vector.load %arg9[%c0_200, %c17_201, %c0_202, %c0_203] : memref<1x18x18x128xbf16, #tpu.memory_space<vmem>>, vector<1x1x18x128xbf16>
      tpu.vector_store %arg9[%c0_200, %c17_201, %c0_202, %c0_203], %151 {strides = array<i32>} : memref<1x18x18x128xbf16, #tpu.memory_space<vmem>>, vector<1x1x18x128xbf16>,
      %cst_204 = arith.constant 0.000000e+00 : bf16
      %154 = vector.broadcast %cst_204 : bf16 to vector<1x16x1x128xbf16>
      %c0_205 = arith.constant 0 : index
      %c1_206 = arith.constant 1 : index
      %c0_207 = arith.constant 0 : index
      %c0_208 = arith.constant 0 : index
      %155 = vector.load %arg9[%c0_205, %c1_206, %c0_207, %c0_208] : memref<1x18x18x128xbf16, #tpu.memory_space<vmem>>, vector<1x16x1x128xbf16>
      tpu.vector_store %arg9[%c0_205, %c1_206, %c0_207, %c0_208], %154 {strides = array<i32>} : memref<1x18x18x128xbf16, #tpu.memory_space<vmem>>, vector<1x16x1x128xbf16>,
      %c0_209 = arith.constant 0 : index
      %c1_210 = arith.constant 1 : index
      %c17_211 = arith.constant 17 : index
      %c0_212 = arith.constant 0 : index
      %156 = vector.load %arg9[%c0_209, %c1_210, %c17_211, %c0_212] : memref<1x18x18x128xbf16, #tpu.memory_space<vmem>>, vector<1x16x1x128xbf16>
      tpu.vector_store %arg9[%c0_209, %c1_210, %c17_211, %c0_212], %154 {strides = array<i32>} : memref<1x18x18x128xbf16, #tpu.memory_space<vmem>>, vector<1x16x1x128xbf16>,
      %157 = arith.truncf %150 : vector<1x16x16x128xf32> to vector<1x16x16x128xbf16>
      %c0_213 = arith.constant 0 : index
      %c1_214 = arith.constant 1 : index
      %c1_215 = arith.constant 1 : index
      %c0_216 = arith.constant 0 : index
      %158 = vector.load %arg9[%c0_213, %c1_214, %c1_215, %c0_216] : memref<1x18x18x128xbf16, #tpu.memory_space<vmem>>, vector<1x16x16x128xbf16>
      tpu.vector_store %arg9[%c0_213, %c1_214, %c1_215, %c0_216], %157 {strides = array<i32>} : memref<1x18x18x128xbf16, #tpu.memory_space<vmem>>, vector<1x16x16x128xbf16>,
    } else {
    }
    %cst = arith.constant 0.000000e+00 : f32
    %3 = vector.broadcast %cst : f32 to vector<256x256xf32>
    %c0 = arith.constant 0 : index
    %c0_1 = arith.constant 0 : index
    %c0_2 = arith.constant 0 : index
    %c0_3 = arith.constant 0 : index
    %4 = vector.load %arg9[%c0, %c0_1, %c0_2, %c0_3] : memref<1x18x18x128xbf16, #tpu.memory_space<vmem>>, vector<1x16x16x128xbf16>
    %5 = vector.shape_cast %4 : vector<1x16x16x128xbf16> to vector<16x16x128xbf16>
    %6 = vector.shape_cast %5 : vector<16x16x128xbf16> to vector<256x128xbf16>
    %c0_4 = arith.constant 0 : index
    %c0_5 = arith.constant 0 : index
    %c0_6 = arith.constant 0 : index
    %c0_7 = arith.constant 0 : index
    %7 = vector.load %arg5[%c0_4, %c0_5, %c0_6, %c0_7] : memref<3x3x128x256xbf16, #tpu.memory_space<vmem>>, vector<1x1x128x256xbf16>
    %8 = vector.shape_cast %7 : vector<1x1x128x256xbf16> to vector<128x256xbf16>
    %cst_8 = arith.constant dense<0.000000e+00> : vector<256x256xf32>
    %9 = tpu.matmul %6, %8, %cst_8 {dimension_numbers = #tpu.dot_dimension_numbers<[1], [0], [0], [1], [0, 0, 1, 1], [], []>} : vector<256x128xbf16>, vector<128x256xbf16>, vector<256x256xf32> -> vector<256x256xf32>
    %10 = arith.addf %3, %9 : vector<256x256xf32>
    %c0_9 = arith.constant 0 : index
    %c0_10 = arith.constant 0 : index
    %c1 = arith.constant 1 : index
    %c0_11 = arith.constant 0 : index
    %11 = vector.load %arg9[%c0_9, %c0_10, %c1, %c0_11] : memref<1x18x18x128xbf16, #tpu.memory_space<vmem>>, vector<1x16x16x128xbf16>
    %12 = vector.shape_cast %11 : vector<1x16x16x128xbf16> to vector<16x16x128xbf16>
    %13 = vector.shape_cast %12 : vector<16x16x128xbf16> to vector<256x128xbf16>
    %c0_12 = arith.constant 0 : index
    %c1_13 = arith.constant 1 : index
    %c0_14 = arith.constant 0 : index
    %c0_15 = arith.constant 0 : index
    %14 = vector.load %arg5[%c0_12, %c1_13, %c0_14, %c0_15] : memref<3x3x128x256xbf16, #tpu.memory_space<vmem>>, vector<1x1x128x256xbf16>
    %15 = vector.shape_cast %14 : vector<1x1x128x256xbf16> to vector<128x256xbf16>
    %cst_16 = arith.constant dense<0.000000e+00> : vector<256x256xf32>
    %16 = tpu.matmul %13, %15, %cst_16 {dimension_numbers = #tpu.dot_dimension_numbers<[1], [0], [0], [1], [0, 0, 1, 1], [], []>} : vector<256x128xbf16>, vector<128x256xbf16>, vector<256x256xf32> -> vector<256x256xf32>
    %17 = arith.addf %10, %16 : vector<256x256xf32>
    %c0_17 = arith.constant 0 : index
    %c0_18 = arith.constant 0 : index
    %c2 = arith.constant 2 : index
    %c0_19 = arith.constant 0 : index
    %18 = vector.load %arg9[%c0_17, %c0_18, %c2, %c0_19] : memref<1x18x18x128xbf16, #tpu.memory_space<vmem>>, vector<1x16x16x128xbf16>
    %19 = vector.shape_cast %18 : vector<1x16x16x128xbf16> to vector<16x16x128xbf16>
    %20 = vector.shape_cast %19 : vector<16x16x128xbf16> to vector<256x128xbf16>
    %c0_20 = arith.constant 0 : index
    %c2_21 = arith.constant 2 : index
    %c0_22 = arith.constant 0 : index
    %c0_23 = arith.constant 0 : index
    %21 = vector.load %arg5[%c0_20, %c2_21, %c0_22, %c0_23] : memref<3x3x128x256xbf16, #tpu.memory_space<vmem>>, vector<1x1x128x256xbf16>
    %22 = vector.shape_cast %21 : vector<1x1x128x256xbf16> to vector<128x256xbf16>
    %cst_24 = arith.constant dense<0.000000e+00> : vector<256x256xf32>
    %23 = tpu.matmul %20, %22, %cst_24 {dimension_numbers = #tpu.dot_dimension_numbers<[1], [0], [0], [1], [0, 0, 1, 1], [], []>} : vector<256x128xbf16>, vector<128x256xbf16>, vector<256x256xf32> -> vector<256x256xf32>
    %24 = arith.addf %17, %23 : vector<256x256xf32>
    %c0_25 = arith.constant 0 : index
    %c1_26 = arith.constant 1 : index
    %c0_27 = arith.constant 0 : index
    %c0_28 = arith.constant 0 : index
    %25 = vector.load %arg9[%c0_25, %c1_26, %c0_27, %c0_28] : memref<1x18x18x128xbf16, #tpu.memory_space<vmem>>, vector<1x16x16x128xbf16>
    %26 = vector.shape_cast %25 : vector<1x16x16x128xbf16> to vector<16x16x128xbf16>
    %27 = vector.shape_cast %26 : vector<16x16x128xbf16> to vector<256x128xbf16>
    %c1_29 = arith.constant 1 : index
    %c0_30 = arith.constant 0 : index
    %c0_31 = arith.constant 0 : index
    %c0_32 = arith.constant 0 : index
    %28 = vector.load %arg5[%c1_29, %c0_30, %c0_31, %c0_32] : memref<3x3x128x256xbf16, #tpu.memory_space<vmem>>, vector<1x1x128x256xbf16>
    %29 = vector.shape_cast %28 : vector<1x1x128x256xbf16> to vector<128x256xbf16>
    %cst_33 = arith.constant dense<0.000000e+00> : vector<256x256xf32>
    %30 = tpu.matmul %27, %29, %cst_33 {dimension_numbers = #tpu.dot_dimension_numbers<[1], [0], [0], [1], [0, 0, 1, 1], [], []>} : vector<256x128xbf16>, vector<128x256xbf16>, vector<256x256xf32> -> vector<256x256xf32>
    %31 = arith.addf %24, %30 : vector<256x256xf32>
    %c0_34 = arith.constant 0 : index
    %c1_35 = arith.constant 1 : index
    %c1_36 = arith.constant 1 : index
    %c0_37 = arith.constant 0 : index
    %32 = vector.load %arg9[%c0_34, %c1_35, %c1_36, %c0_37] : memref<1x18x18x128xbf16, #tpu.memory_space<vmem>>, vector<1x16x16x128xbf16>
    %33 = vector.shape_cast %32 : vector<1x16x16x128xbf16> to vector<16x16x128xbf16>
    %34 = vector.shape_cast %33 : vector<16x16x128xbf16> to vector<256x128xbf16>
    %c1_38 = arith.constant 1 : index
    %c1_39 = arith.constant 1 : index
    %c0_40 = arith.constant 0 : index
    %c0_41 = arith.constant 0 : index
    %35 = vector.load %arg5[%c1_38, %c1_39, %c0_40, %c0_41] : memref<3x3x128x256xbf16, #tpu.memory_space<vmem>>, vector<1x1x128x256xbf16>
    %36 = vector.shape_cast %35 : vector<1x1x128x256xbf16> to vector<128x256xbf16>
    %cst_42 = arith.constant dense<0.000000e+00> : vector<256x256xf32>
    %37 = tpu.matmul %34, %36, %cst_42 {dimension_numbers = #tpu.dot_dimension_numbers<[1], [0], [0], [1], [0, 0, 1, 1], [], []>} : vector<256x128xbf16>, vector<128x256xbf16>, vector<256x256xf32> -> vector<256x256xf32>
    %38 = arith.addf %31, %37 : vector<256x256xf32>
    %c0_43 = arith.constant 0 : index
    %c1_44 = arith.constant 1 : index
    %c2_45 = arith.constant 2 : index
    %c0_46 = arith.constant 0 : index
    %39 = vector.load %arg9[%c0_43, %c1_44, %c2_45, %c0_46] : memref<1x18x18x128xbf16, #tpu.memory_space<vmem>>, vector<1x16x16x128xbf16>
    %40 = vector.shape_cast %39 : vector<1x16x16x128xbf16> to vector<16x16x128xbf16>
    %41 = vector.shape_cast %40 : vector<16x16x128xbf16> to vector<256x128xbf16>
    %c1_47 = arith.constant 1 : index
    %c2_48 = arith.constant 2 : index
    %c0_49 = arith.constant 0 : index
    %c0_50 = arith.constant 0 : index
    %42 = vector.load %arg5[%c1_47, %c2_48, %c0_49, %c0_50] : memref<3x3x128x256xbf16, #tpu.memory_space<vmem>>, vector<1x1x128x256xbf16>
    %43 = vector.shape_cast %42 : vector<1x1x128x256xbf16> to vector<128x256xbf16>
    %cst_51 = arith.constant dense<0.000000e+00> : vector<256x256xf32>
    %44 = tpu.matmul %41, %43, %cst_51 {dimension_numbers = #tpu.dot_dimension_numbers<[1], [0], [0], [1], [0, 0, 1, 1], [], []>} : vector<256x128xbf16>, vector<128x256xbf16>, vector<256x256xf32> -> vector<256x256xf32>
    %45 = arith.addf %38, %44 : vector<256x256xf32>
    %c0_52 = arith.constant 0 : index
    %c2_53 = arith.constant 2 : index
    %c0_54 = arith.constant 0 : index
    %c0_55 = arith.constant 0 : index
    %46 = vector.load %arg9[%c0_52, %c2_53, %c0_54, %c0_55] : memref<1x18x18x128xbf16, #tpu.memory_space<vmem>>, vector<1x16x16x128xbf16>
    %47 = vector.shape_cast %46 : vector<1x16x16x128xbf16> to vector<16x16x128xbf16>
    %48 = vector.shape_cast %47 : vector<16x16x128xbf16> to vector<256x128xbf16>
    %c2_56 = arith.constant 2 : index
    %c0_57 = arith.constant 0 : index
    %c0_58 = arith.constant 0 : index
    %c0_59 = arith.constant 0 : index
    %49 = vector.load %arg5[%c2_56, %c0_57, %c0_58, %c0_59] : memref<3x3x128x256xbf16, #tpu.memory_space<vmem>>, vector<1x1x128x256xbf16>
    %50 = vector.shape_cast %49 : vector<1x1x128x256xbf16> to vector<128x256xbf16>
    %cst_60 = arith.constant dense<0.000000e+00> : vector<256x256xf32>
    %51 = tpu.matmul %48, %50, %cst_60 {dimension_numbers = #tpu.dot_dimension_numbers<[1], [0], [0], [1], [0, 0, 1, 1], [], []>} : vector<256x128xbf16>, vector<128x256xbf16>, vector<256x256xf32> -> vector<256x256xf32>
    %52 = arith.addf %45, %51 : vector<256x256xf32>
    %c0_61 = arith.constant 0 : index
    %c2_62 = arith.constant 2 : index
    %c1_63 = arith.constant 1 : index
    %c0_64 = arith.constant 0 : index
    %53 = vector.load %arg9[%c0_61, %c2_62, %c1_63, %c0_64] : memref<1x18x18x128xbf16, #tpu.memory_space<vmem>>, vector<1x16x16x128xbf16>
    %54 = vector.shape_cast %53 : vector<1x16x16x128xbf16> to vector<16x16x128xbf16>
    %55 = vector.shape_cast %54 : vector<16x16x128xbf16> to vector<256x128xbf16>
    %c2_65 = arith.constant 2 : index
    %c1_66 = arith.constant 1 : index
    %c0_67 = arith.constant 0 : index
    %c0_68 = arith.constant 0 : index
    %56 = vector.load %arg5[%c2_65, %c1_66, %c0_67, %c0_68] : memref<3x3x128x256xbf16, #tpu.memory_space<vmem>>, vector<1x1x128x256xbf16>
    %57 = vector.shape_cast %56 : vector<1x1x128x256xbf16> to vector<128x256xbf16>
    %cst_69 = arith.constant dense<0.000000e+00> : vector<256x256xf32>
    %58 = tpu.matmul %55, %57, %cst_69 {dimension_numbers = #tpu.dot_dimension_numbers<[1], [0], [0], [1], [0, 0, 1, 1], [], []>} : vector<256x128xbf16>, vector<128x256xbf16>, vector<256x256xf32> -> vector<256x256xf32>
    %59 = arith.addf %52, %58 : vector<256x256xf32>
    %c0_70 = arith.constant 0 : index
    %c2_71 = arith.constant 2 : index
    %c2_72 = arith.constant 2 : index
    %c0_73 = arith.constant 0 : index
    %60 = vector.load %arg9[%c0_70, %c2_71, %c2_72, %c0_73] : memref<1x18x18x128xbf16, #tpu.memory_space<vmem>>, vector<1x16x16x128xbf16>
    %61 = vector.shape_cast %60 : vector<1x16x16x128xbf16> to vector<16x16x128xbf16>
    %62 = vector.shape_cast %61 : vector<16x16x128xbf16> to vector<256x128xbf16>
    %c2_74 = arith.constant 2 : index
    %c2_75 = arith.constant 2 : index
    %c0_76 = arith.constant 0 : index
    %c0_77 = arith.constant 0 : index
    %63 = vector.load %arg5[%c2_74, %c2_75, %c0_76, %c0_77] : memref<3x3x128x256xbf16, #tpu.memory_space<vmem>>, vector<1x1x128x256xbf16>
    %64 = vector.shape_cast %63 : vector<1x1x128x256xbf16> to vector<128x256xbf16>
    %cst_78 = arith.constant dense<0.000000e+00> : vector<256x256xf32>
    %65 = tpu.matmul %62, %64, %cst_78 {dimension_numbers = #tpu.dot_dimension_numbers<[1], [0], [0], [1], [0, 0, 1, 1], [], []>} : vector<256x128xbf16>, vector<128x256xbf16>, vector<256x256xf32> -> vector<256x256xf32>
    %66 = arith.addf %59, %65 : vector<256x256xf32>
    %c0_79 = arith.constant 0 : index
    %c0_80 = arith.constant 0 : index
    %67 = vector.load %arg6[%c0_79, %c0_80] : memref<1x256xf32, #tpu.memory_space<vmem>>, vector<1x256xf32>
    %68 = vector.broadcast %67 : vector<1x256xf32> to vector<256x256xf32>
    %69 = arith.addf %66, %68 : vector<256x256xf32>
    %70 = vector.shape_cast %69 : vector<256x256xf32> to vector<1x16x16x256xf32>
    %71 = arith.truncf %70 : vector<1x16x16x256xf32> to vector<1x16x16x256xbf16>
    %c0_81 = arith.constant 0 : index
    %c0_82 = arith.constant 0 : index
    %c0_83 = arith.constant 0 : index
    %c0_84 = arith.constant 0 : index
    %72 = vector.load %arg7[%c0_81, %c0_82, %c0_83, %c0_84] : memref<1x16x16x256xbf16, #tpu.memory_space<vmem>>, vector<1x16x16x256xbf16>
    tpu.vector_store %arg7[%c0_81, %c0_82, %c0_83, %c0_84], %71 {strides = array<i32>} : memref<1x16x16x256xbf16, #tpu.memory_space<vmem>>, vector<1x16x16x256xbf16>,
    return
  }
  func.func @transform_0(%arg0: i32, %arg1: i32) -> (i32, i32, i32, i32) {
    %c0_i32 = arith.constant 0 : i32
    %c0_i32_0 = arith.constant 0 : i32
    %c0_i32_1 = arith.constant 0 : i32
    %c0_i32_2 = arith.constant 0 : i32
    return %arg0, %c0_i32, %c0_i32_0, %c0_i32_1 : i32, i32, i32, i32
  }
  func.func @transform_1(%arg0: i32, %arg1: i32) -> (i32, i32, i32, i32) {
    %c0_i32 = arith.constant 0 : i32
    %c0_i32_0 = arith.constant 0 : i32
    %c0_i32_1 = arith.constant 0 : i32
    %c0_i32_2 = arith.constant 0 : i32
    %c0_i32_3 = arith.constant 0 : i32
    return %c0_i32, %c0_i32_0, %c0_i32_1, %c0_i32_2 : i32, i32, i32, i32
  }
  func.func @transform_2(%arg0: i32, %arg1: i32) -> (i32, i32) {
    %c0_i32 = arith.constant 0 : i32
    %c0_i32_0 = arith.constant 0 : i32
    %c0_i32_1 = arith.constant 0 : i32
    return %c0_i32, %c0_i32_0 : i32, i32
  }
  func.func @transform_3(%arg0: i32, %arg1: i32) -> (i32, i32, i32, i32) {
    %c0_i32 = arith.constant 0 : i32
    %c0_i32_0 = arith.constant 0 : i32
    %c0_i32_1 = arith.constant 0 : i32
    %c0_i32_2 = arith.constant 0 : i32
    return %c0_i32, %c0_i32_0, %c0_i32_1, %arg1 : i32, i32, i32, i32
  }
  func.func @transform_4(%arg0: i32, %arg1: i32) -> (i32, i32) {
    %c0_i32 = arith.constant 0 : i32
    %c0_i32_0 = arith.constant 0 : i32
    return %c0_i32, %arg1 : i32, i32
  }
  func.func @transform_5(%arg0: i32, %arg1: i32) -> (i32, i32, i32, i32) {
    %c0_i32 = arith.constant 0 : i32
    %c0_i32_0 = arith.constant 0 : i32
    %c0_i32_1 = arith.constant 0 : i32
    return %arg0, %c0_i32, %c0_i32_0, %arg1 : i32, i32, i32, i32
  }
}

</mosaic_0001>

<llo_original>
// kernel: tpu_custom_call.1
$region0: #{tpu_custom_call.1}
  #allocation0 [shape = 'u32[]', space=smem, size = 0x4, offset = 0x4, fixed_abs, tag = 'smem constant byte address 0x4 - core index']
  #allocation1 [shape = 'u32[144,128]{1,0:T(1,128)}', space=vmem, size = 0x12000, scoped, tag = 'internal scratch']
  #allocation2 [shape = 'bf16[1,18,18,128]{3,2,1,0:T(8,128)(2,1)}', space=vmem, size = 0x1b000, scoped, tag = 'scratch operand']
  #allocation3 [shape = 'bf16[1,18,18,128]{3,2,1,0:T(8,128)(2,1)}', space=vmem, size = 0x1b000, scoped, tag = 'scratch operand']
  %s0 = inlined_call_operand.hbm [shape: bf16[2,16,16,128], index: 0, kind: input, shape index: {}]
  %s1 = inlined_call_operand.hbm [shape: bf16[3,3,128,128], index: 1, kind: input, shape index: {}]
  %s2 = inlined_call_operand.vmem [shape: f32[1,128], index: 2, kind: input, shape index: {}]
  %s3 = inlined_call_operand.hbm [shape: bf16[3,3,128,256], index: 3, kind: input, shape index: {}]
  %s4 = inlined_call_operand.vmem [shape: f32[1,256], index: 4, kind: input, shape index: {}]
  %s5 = inlined_call_operand.hbm [shape: bf16[2,16,16,256], index: 5, kind: output, shape index: {}]
  %s6 = sld [smem:[#allocation0]]
  $region69: #{tpu_custom_call.1} parent=0
    _
  %s8 = ssub.s32 1, %s6
  %s9 = scalar_select 0, %s8, %s6
  $region1: #{tpu_custom_call.1} parent=0
    #allocation4 [shape = 'u8[131072]{0}', space=vmem, size = 0x20000, scoped, tag = 'input window, operand 0']
    #allocation5 [shape = 's32[2]{0}', space=sflag, size = 0x8, scoped, tag = 'scoped memory for tpu_custom_call.1']
    #allocation6 [shape = 's32[2]{0}', space=sflag, size = 0x8, scoped, tag = 'scoped memory for tpu_custom_call.1']
    #allocation7 [shape = 'u8[294912]{0}', space=vmem, size = 0x48000, scoped, tag = 'input window, operand 1, single buffered']
    #allocation8 [shape = 's32[1]{0}', space=sflag, size = 0x4, scoped, tag = 'scoped memory for tpu_custom_call.1']
    #allocation9 [shape = 'u8[589824]{0}', space=vmem, size = 0x90000, scoped, tag = 'input window, operand 3, single buffered']
    #allocation10 [shape = 'u8[262144]{0}', space=vmem, size = 0x40000, scoped, tag = 'output window, operand 0']
    %10 = vsyncpa [#allocation5], 0
    %s11 = scalar_lea.sflag [#allocation5], 1
    %12 = vsyncpa %s11, 0
    %13 = vsyncpa [#allocation8], 0
    %14 = vsyncpa [#allocation6], 0
    %s15 = scalar_lea.sflag [#allocation6], 1
    %16 = vsyncpa %s15, 0
    loop: start=0, step=1, limit=4
    $region2: #{tpu_custom_call.1} parent=1 // loop_pre_header
      _
    $region3: #{tpu_custom_call.1} parent=1 // loop_header
      %s18 = sphi 0, %s22
      %p19 = scmp.ge.s32.totalorder %s18, 4
      %s25 = sphi 0, %s37
      %s26 = sphi 0, %s33
      %s27 = sphi 0, %s25
      %s28 = sphi 0, %s26
      %s29 = sphi 0, %s27
      %s30 = sphi 0, %s28
      %s40 = sphi 0, %s42
      %s43 = sphi 0, %s40
      %s44 = sphi 0, %s43
      %s60 = sphi 0, %s44
      %s64 = sphi 0, %s64
      %s66 = sphi 0, %s64
      %s67 = sphi 0, %s66
      %s81 = sphi 0, %s67
      %s85 = sphi 0, %s85
      %s87 = sphi 0, %s85
      %s88 = sphi 0, %s87
      %s102 = sphi 0, %s88
      %s108 = sphi 0, %s110
      %s111 = sphi 0, %s108
      %s112 = sphi 0, %s111
      %s128 = sphi 0, %s112
      %s134 = sphi 0, %s136
      %s137 = sphi 0, %s134
      %s138 = sphi 0, %s137
      %s154 = sphi 0, %s138
      %s162 = sphi 0, %s164
      %s165 = sphi 0, %s162
      %s166 = sphi 0, %s165
      %s182 = sphi 0, %s166
    $region4: #{tpu_custom_call.1} parent=1 // loop_header_branch
      %21 = sbr.rel (%p19) target = $region8
    $region5: #{tpu_custom_call.1} parent=1 // loop_body
      %s23 = ssub.s32 %s18, 1
      %s24 = ssub.s32 %s18, 2
      %s31 = sadd.s32 1, %s26
      %p32 = scmp.ge.s32.totalorder %s31, 1
      %s33 = scalar_select %p32, 0, %s31
      %s34 = sadd.s32 1, %s25
      %s35 = scalar_select %p32, %s34, %s25
      %p36 = scmp.ge.s32.totalorder %s35, 2
      %s37 = scalar_select %p36, 0, %s35
      %s38 = ssub.s32 %s25, %s37
      %p39 = scmp.eq.s32.totalorder %s38, 0
      %s41 = sadd.s32 %s40, 1
      %s42 = scalar_select %p39, %s40, %s41
      %p45 = pneg %p39
      %p46 = scmp.eq.s32.totalorder %s18, 1
      %p47 = por %p45, %p46
      %p48 = scmp.ne.s32.totalorder %s40, %s43
      %p49 = scmp.eq.s32.totalorder %s18, 0
      %p50 = por %p48, %p49
      %p51 = scmp.ne.s32.totalorder %s40, %s43
      %p52 = scmp.eq.s32.totalorder %s23, 1
      %p53 = por %p51, %p52
      %p54 = scmp.ne.s32.totalorder %s43, %s44
      %p55 = scmp.eq.s32.totalorder %s23, 0
      %p56 = por %p54, %p55
      %p57 = scmp.ne.s32.totalorder %s43, %s44
      %p58 = scmp.eq.s32.totalorder %s24, 1
      %p59 = por %p57, %p58
      %p61 = scmp.ne.s32.totalorder %s44, %s60
      %p62 = scmp.eq.s32.totalorder %s24, 0
      %p63 = por %p61, %p62
      %s65 = sadd.s32 %s64, 1
      %p68 = scmp.eq.s32.totalorder %s18, 1
      %p69 = scmp.ne.s32.totalorder %s64, %s66
      %p70 = scmp.eq.s32.totalorder %s18, 0
      %p71 = por %p69, %p70
      %p72 = scmp.ne.s32.totalorder %s64, %s66
      %p73 = scmp.eq.s32.totalorder %s23, 1
      %p74 = por %p72, %p73
      %p75 = scmp.ne.s32.totalorder %s66, %s67
      %p76 = scmp.eq.s32.totalorder %s23, 0
      %p77 = por %p75, %p76
      %p78 = scmp.ne.s32.totalorder %s66, %s67
      %p79 = scmp.eq.s32.totalorder %s24, 1
      %p80 = por %p78, %p79
      %p82 = scmp.ne.s32.totalorder %s67, %s81
      %p83 = scmp.eq.s32.totalorder %s24, 0
      %p84 = por %p82, %p83
      %s86 = sadd.s32 %s85, 1
      %p89 = scmp.eq.s32.totalorder %s18, 1
      %p90 = scmp.ne.s32.totalorder %s85, %s87
      %p91 = scmp.eq.s32.totalorder %s18, 0
      %p92 = por %p90, %p91
      %p93 = scmp.ne.s32.totalorder %s85, %s87
      %p94 = scmp.eq.s32.totalorder %s23, 1
      %p95 = por %p93, %p94
      %p96 = scmp.ne.s32.totalorder %s87, %s88
      %p97 = scmp.eq.s32.totalorder %s23, 0
      %p98 = por %p96, %p97
      %p99 = scmp.ne.s32.totalorder %s87, %s88
      %p100 = scmp.eq.s32.totalorder %s24, 1
      %p101 = por %p99, %p100
      %p103 = scmp.ne.s32.totalorder %s88, %s102
      %p104 = scmp.eq.s32.totalorder %s24, 0
      %p105 = por %p103, %p104
      %s106 = ssub.s32 %s26, %s33
      %p107 = scmp.eq.s32.totalorder %s106, 0
      %s109 = sadd.s32 %s108, 1
      %s110 = scalar_select %p107, %s108, %s109
      %p113 = pneg %p107
      %p114 = scmp.eq.s32.totalorder %s18, 1
      %p115 = por %p113, %p114
      %p116 = scmp.ne.s32.totalorder %s108, %s111
      %p117 = scmp.eq.s32.totalorder %s18, 0
      %p118 = por %p116, %p117
      %p119 = scmp.ne.s32.totalorder %s108, %s111
      %p120 = scmp.eq.s32.totalorder %s23, 1
      %p121 = por %p119, %p120
      %p122 = scmp.ne.s32.totalorder %s111, %s112
      %p123 = scmp.eq.s32.totalorder %s23, 0
      %p124 = por %p122, %p123
      %p125 = scmp.ne.s32.totalorder %s111, %s112
      %p126 = scmp.eq.s32.totalorder %s24, 1
      %p127 = por %p125, %p126
      %p129 = scmp.ne.s32.totalorder %s112, %s128
      %p130 = scmp.eq.s32.totalorder %s24, 0
      %p131 = por %p129, %p130
      %s132 = ssub.s32 %s26, %s33
      %p133 = scmp.eq.s32.totalorder %s132, 0
      %s135 = sadd.s32 %s134, 1
      %s136 = scalar_select %p133, %s134, %s135
      %p139 = pneg %p133
      %p140 = scmp.eq.s32.totalorder %s18, 1
      %p141 = por %p139, %p140
      %p142 = scmp.ne.s32.totalorder %s134, %s137
      %p143 = scmp.eq.s32.totalorder %s18, 0
      %p144 = por %p142, %p143
      %p145 = scmp.ne.s32.totalorder %s134, %s137
      %p146 = scmp.eq.s32.totalorder %s23, 1
      %p147 = por %p145, %p146
      %p148 = scmp.ne.s32.totalorder %s137, %s138
      %p149 = scmp.eq.s32.totalorder %s23, 0
      %p150 = por %p148, %p149
      %p151 = scmp.ne.s32.totalorder %s137, %s138
      %p152 = scmp.eq.s32.totalorder %s24, 1
      %p153 = por %p151, %p152
      %p155 = scmp.ne.s32.totalorder %s138, %s154
      %p156 = scmp.eq.s32.totalorder %s24, 0
      %p157 = por %p155, %p156
      %s158 = ssub.s32 %s25, %s37
      %s159 = ssub.s32 %s26, %s33
      %s160 = sor.u32 %s158, %s159
      %p161 = scmp.eq.s32.totalorder %s160, 0
      %s163 = sadd.s32 %s162, 1
      %s164 = scalar_select %p161, %s162, %s163
      %p167 = pneg %p161
      %p168 = scmp.eq.s32.totalorder %s18, 1
      %p169 = por %p167, %p168
      %p170 = scmp.ne.s32.totalorder %s162, %s165
      %p171 = scmp.eq.s32.totalorder %s18, 0
      %p172 = por %p170, %p171
      %p173 = scmp.ne.s32.totalorder %s162, %s165
      %p174 = scmp.eq.s32.totalorder %s23, 1
      %p175 = por %p173, %p174
      %p176 = scmp.ne.s32.totalorder %s165, %s166
      %p177 = scmp.eq.s32.totalorder %s23, 0
      %p178 = por %p176, %p177
      %p179 = scmp.ne.s32.totalorder %s165, %s166
      %p180 = scmp.eq.s32.totalorder %s24, 1
      %p181 = por %p179, %p180
      %p183 = scmp.ne.s32.totalorder %s166, %s182
      %p184 = scmp.eq.s32.totalorder %s24, 0
      %p185 = por %p183, %p184
      %p186 = scmp.le.s32.totalorder 1, %s18
      %p187 = scmp.lt.s32.totalorder %s18, 3
      %p188 = pnand %p186, %p187
      %p189 = pneg %p188
      // Predicated region
      $region9: #{tpu_custom_call.1} parent=5 // pred_check
        _
      $region10: #{tpu_custom_call.1} parent=5 // pred_check_branch
        %191 = sbr.rel (%p188) target = $region12
      $region11: #{tpu_custom_call.1} parent=5 // pred_region
        %s192 = ssub.s32 %s18, 1
        // Predicated region
        $region13: #{tpu_custom_call.1} parent=11 // pred_check
          %p193 = pneg %p77
        $region14: #{tpu_custom_call.1} parent=11 // pred_check_branch
          %195 = sbr.rel (%p193) target = $region16
        $region15: #{tpu_custom_call.1} parent=11 // pred_region
          %s197 = ssub.s32 9216, 9216
          %198 = vsyncadd [#allocation8], %s197
          %s199 = sshll.u32 [#allocation7], 4
          %s200 = int_to_ptr.vmem [resolvable:$true] %s199
          %205 = dma.hbm_to_vmem [thread:$0]  %s1, 9216, %s200, [#allocation8], 64, 64, 4
        $region16: #{tpu_custom_call.1} parent=11 // pred_fallthru
          _
        // Predicated region
        $region17: #{tpu_custom_call.1} parent=11 // pred_check
          %p206 = pneg %p98
        $region18: #{tpu_custom_call.1} parent=11 // pred_check_branch
          %208 = sbr.rel (%p206) target = $region20
        $region19: #{tpu_custom_call.1} parent=11 // pred_region
          _
        $region20: #{tpu_custom_call.1} parent=11 // pred_fallthru
          _
        // Predicated region
        $region21: #{tpu_custom_call.1} parent=11 // pred_check
          %p209 = pneg %p124
        $region22: #{tpu_custom_call.1} parent=11 // pred_check_branch
          %211 = sbr.rel (%p209) target = $region24
        $region23: #{tpu_custom_call.1} parent=11 // pred_region
          %s212 = smul.u32 2, %s28
          %s214 = ssub.s32 18432, 18432
          %215 = vsyncadd [#allocation8], %s214
          %s216 = smul.addr %s212, 64
          %s217 = scalar_lea.hbm %s3, %s216
          %s218 = sshll.u32 [#allocation9], 4
          %s219 = int_to_ptr.vmem [resolvable:$true] %s218
          %224 = dma.hbm_to_vmem [thread:$0]  %s217, 18432, %s219, [#allocation8], 128, 128, 8
        $region24: #{tpu_custom_call.1} parent=11 // pred_fallthru
          _
        // Predicated region
        $region25: #{tpu_custom_call.1} parent=11 // pred_check
          %p225 = pneg %p150
        $region26: #{tpu_custom_call.1} parent=11 // pred_check_branch
          %227 = sbr.rel (%p225) target = $region28
        $region27: #{tpu_custom_call.1} parent=11 // pred_region
          %s228 = smul.u32 2, %s28
          %p229 = scmp.lt.s32.totalorder %s228, 1
          %s230 = scalar_select %p229, %s228, 1
          %s231 = scalar_lea.vmem %s4, %s230
          %s232 = smul.u32 2, %s28
        $region28: #{tpu_custom_call.1} parent=11 // pred_fallthru
          _
      $region12: #{tpu_custom_call.1} parent=5 // pred_fallthru
        _
      %p233 = scmp.lt.s32.totalorder %s18, 2
      // Predicated region
      $region29: #{tpu_custom_call.1} parent=5 // pred_check
        %p234 = pneg %p233
      $region30: #{tpu_custom_call.1} parent=5 // pred_check_branch
        %236 = sbr.rel (%p234) target = $region32
      $region31: #{tpu_custom_call.1} parent=5 // pred_region
        // Predicated region
        $region33: #{tpu_custom_call.1} parent=31 // pred_check
          %p237 = pneg %p50
        $region34: #{tpu_custom_call.1} parent=31 // pred_check_branch
          %239 = sbr.rel (%p237) target = $region36
        $region35: #{tpu_custom_call.1} parent=31 // pred_region
          %s240 = sand.u32 %s40, 1
          %s241 = scalar_lea.sflag [#allocation5], %s240
          %s242 = sand.u32 %s40, 1
          %s243 = smul.addr %s242, 128
          %s244 = scalar_lea.vmem [#allocation4], %s243
          %s246 = ssub.s32 2048, 2048
          %247 = vsyncadd %s241, %s246
          %s248 = smul.addr %s25, 32
          %s249 = smul.addr %s248, 64
          %s250 = scalar_lea.hbm %s0, %s249
          %s251 = sshll.u32 %s244, 4
          %s252 = int_to_ptr.vmem [resolvable:$true] %s251
          %257 = dma.hbm_to_vmem [thread:$0]  %s250, 2048, %s252, %s241, 64, 64, 4
        $region36: #{tpu_custom_call.1} parent=31 // pred_fallthru
          _
      $region32: #{tpu_custom_call.1} parent=5 // pred_fallthru
        _
      %p258 = scmp.le.s32.totalorder 1, %s18
      %p259 = scmp.lt.s32.totalorder %s18, 3
      %p260 = pnand %p258, %p259
      %p261 = pneg %p260
      // Predicated region
      $region37: #{tpu_custom_call.1} parent=5 // pred_check
        _
      $region38: #{tpu_custom_call.1} parent=5 // pred_check_branch
        %263 = sbr.rel (%p260) target = $region40
      $region39: #{tpu_custom_call.1} parent=5 // pred_region
        %s264 = ssub.s32 %s18, 1
        %s265 = sand.u32 %s43, 1
        %s266 = scalar_lea.sflag [#allocation5], %s265
        %s267 = sand.u32 %s43, 1
        %s268 = smul.addr %s267, 128
        %s269 = scalar_lea.vmem [#allocation4], %s268
        // Predicated region
        $region41: #{tpu_custom_call.1} parent=39 // pred_check
          %p270 = pneg %p56
        $region42: #{tpu_custom_call.1} parent=39 // pred_check_branch
          %272 = sbr.rel (%p270) target = $region44
        $region43: #{tpu_custom_call.1} parent=39 // pred_region
          %273 = dma.done %s266, 2048
        $region44: #{tpu_custom_call.1} parent=39 // pred_fallthru
          _
        // Predicated region
        $region45: #{tpu_custom_call.1} parent=39 // pred_check
          %p274 = pneg %p77
        $region46: #{tpu_custom_call.1} parent=39 // pred_check_branch
          %276 = sbr.rel (%p274) target = $region48
        $region47: #{tpu_custom_call.1} parent=39 // pred_region
          %277 = dma.done [#allocation8], 9216
        $region48: #{tpu_custom_call.1} parent=39 // pred_fallthru
          _
        // Predicated region
        $region49: #{tpu_custom_call.1} parent=39 // pred_check
          %p278 = pneg %p124
        $region50: #{tpu_custom_call.1} parent=39 // pred_check_branch
          %280 = sbr.rel (%p278) target = $region52
        $region51: #{tpu_custom_call.1} parent=39 // pred_region
          %281 = dma.done [#allocation8], 18432
        $region52: #{tpu_custom_call.1} parent=39 // pred_fallthru
          _
        %s282 = sand.u32 %s43, 1
        %s283 = scalar_lea.sflag [#allocation5], %s282
        %s284 = sand.u32 %s43, 1
        %s285 = smul.addr %s284, 128
        %s286 = scalar_lea.vmem [#allocation4], %s285
        %p287 = pneg %p56
        %p288 = pneg %p53
        %p289 = pneg %p77
        %p290 = pneg %p74
        %p291 = pneg %p98
        %p292 = pneg %p95
        %p293 = pneg %p124
        %p294 = pneg %p121
        %s295 = smul.u32 2, %s28
        %p296 = scmp.lt.s32.totalorder %s295, 1
        %s297 = scalar_select %p296, %s295, 1
        %s298 = scalar_lea.vmem %s4, %s297
        %p299 = pneg %p150
        %p300 = pneg %p147
        %p301 = pneg %p178
        %p302 = pneg %p175
        %s303 = sand.u32 %s165, 1
        %s304 = scalar_lea.sflag [#allocation6], %s303
        %s305 = sand.u32 %s165, 1
        %s306 = smul.addr %s305, 256
        %s307 = scalar_lea.vmem [#allocation10], %s306
        %s308 = smul.u32 2, %s28
        %s309 = smul.u32 2, %s28
        %p310 = scmp.lt.s32.totalorder %s309, 1
        %s311 = scalar_select %p310, %s309, 1
        %s312 = scalar_lea.vmem %s4, %s311
        %s313 = smul.u32 2, %s28
        %s314 = smul.u32 2, %s28
        %p316 = scmp.eq.s32.totalorder %s28, 0
        // Predicated region
        $region53: #{tpu_custom_call.1} parent=39 // pred_check
          %p317 = pneg %p316
        $region54: #{tpu_custom_call.1} parent=39 // pred_check_branch
          %319 = sbr.rel (%p317) target = $region56
        $region55: #{tpu_custom_call.1} parent=39 // pred_region
          %v320 = vld [vmem:[%s269] sm:$0xf]
          %v321 = vld [vmem:[%s269 + $0x4] sm:$0xf]
          %v322 = vld [vmem:[%s269 + $0x8] sm:$0xf]
          %v323 = vld [vmem:[%s269 + $0xc] sm:$0xf]
          %v324 = vld [vmem:[%s269 + $0x10] sm:$0xf]
          %v325 = vld [vmem:[%s269 + $0x14] sm:$0xf]
          %v326 = vld [vmem:[%s269 + $0x18] sm:$0xf]
          %v327 = vld [vmem:[%s269 + $0x1c] sm:$0xf]
          %v328 = vld [vmem:[%s269 + $0x20] sm:$0xf]
          %v329 = vld [vmem:[%s269 + $0x24] sm:$0xf]
          %v330 = vld [vmem:[%s269 + $0x28] sm:$0xf]
          %v331 = vld [vmem:[%s269 + $0x2c] sm:$0xf]
          %v332 = vld [vmem:[%s269 + $0x30] sm:$0xf]
          %v333 = vld [vmem:[%s269 + $0x34] sm:$0xf]
          %v334 = vld [vmem:[%s269 + $0x38] sm:$0xf]
          %v335 = vld [vmem:[%s269 + $0x3c] sm:$0xf]
          %v336 = vld [vmem:[%s269 + $0x40] sm:$0xf]
          %v337 = vld [vmem:[%s269 + $0x44] sm:$0xf]
          %v338 = vld [vmem:[%s269 + $0x48] sm:$0xf]
          %v339 = vld [vmem:[%s269 + $0x4c] sm:$0xf]
          %v340 = vld [vmem:[%s269 + $0x50] sm:$0xf]
          %v341 = vld [vmem:[%s269 + $0x54] sm:$0xf]
          %v342 = vld [vmem:[%s269 + $0x58] sm:$0xf]
          %v343 = vld [vmem:[%s269 + $0x5c] sm:$0xf]
          %v344 = vld [vmem:[%s269 + $0x60] sm:$0xf]
          %v345 = vld [vmem:[%s269 + $0x64] sm:$0xf]
          %v346 = vld [vmem:[%s269 + $0x68] sm:$0xf]
          %v347 = vld [vmem:[%s269 + $0x6c] sm:$0xf]
          %v348 = vld [vmem:[%s269 + $0x70] sm:$0xf]
          %v349 = vld [vmem:[%s269 + $0x74] sm:$0xf]
          %v350 = vld [vmem:[%s269 + $0x78] sm:$0xf]
          %v351 = vld [vmem:[%s269 + $0x7c] sm:$0xf]
          %352 = vst [vmem:[#allocation2] sm:$0xf] 0
          %353 = vst [vmem:[#allocation2 + $0x4] sm:$0xf] 0
          %354 = vst [vmem:[#allocation2 + $0x8] sm:$0x1] 0
          %s355 = scalar_lea.vmem [#allocation2], 204
          %356 = vst [vmem:[%s355] sm:$0xf] 0
          %357 = vst [vmem:[%s355 + $0x4] sm:$0xf] 0
          %358 = vst [vmem:[%s355 + $0x8] sm:$0x1] 0
          %s359 = scalar_lea.vmem [#allocation2], 12
          %vm360 = vcmask 1040384
          %vm361 = vsmask.f32 256
          %vm362 = vmand %vm360, %vm361
          %v363 = vld [vmem:[%s359] sm:$0x1]
          %v364 = vsel %vm362, 0, %v363
          %365 = vst [vmem:[%s359] sm:$0x1] %v364
          %v366 = vld [vmem:[%s359 + $0xc] sm:$0x1]
          %v367 = vsel %vm362, 0, %v366
          %368 = vst [vmem:[%s359 + $0xc] sm:$0x1] %v367
          %v369 = vld [vmem:[%s359 + $0x18] sm:$0x1]
          %v370 = vsel %vm362, 0, %v369
          %371 = vst [vmem:[%s359 + $0x18] sm:$0x1] %v370
          %v372 = vld [vmem:[%s359 + $0x24] sm:$0x1]
          %v373 = vsel %vm362, 0, %v372
          %374 = vst [vmem:[%s359 + $0x24] sm:$0x1] %v373
          %v375 = vld [vmem:[%s359 + $0x30] sm:$0x1]
          %v376 = vsel %vm362, 0, %v375
          %377 = vst [vmem:[%s359 + $0x30] sm:$0x1] %v376
          %v378 = vld [vmem:[%s359 + $0x3c] sm:$0x1]
          %v379 = vsel %vm362, 0, %v378
          %380 = vst [vmem:[%s359 + $0x3c] sm:$0x1] %v379
          %v381 = vld [vmem:[%s359 + $0x48] sm:$0x1]
          %v382 = vsel %vm362, 0, %v381
          %383 = vst [vmem:[%s359 + $0x48] sm:$0x1] %v382
          %v384 = vld [vmem:[%s359 + $0x54] sm:$0x1]
          %v385 = vsel %vm362, 0, %v384
          %386 = vst [vmem:[%s359 + $0x54] sm:$0x1] %v385
          %v387 = vld [vmem:[%s359 + $0x60] sm:$0x1]
          %v388 = vsel %vm362, 0, %v387
          %389 = vst [vmem:[%s359 + $0x60] sm:$0x1] %v388
          %v390 = vld [vmem:[%s359 + $0x6c] sm:$0x1]
          %v391 = vsel %vm362, 0, %v390
          %392 = vst [vmem:[%s359 + $0x6c] sm:$0x1] %v391
          %v393 = vld [vmem:[%s359 + $0x78] sm:$0x1]
          %v394 = vsel %vm362, 0, %v393
          %395 = vst [vmem:[%s359 + $0x78] sm:$0x1] %v394
          %v396 = vld [vmem:[%s359 + $0x84] sm:$0x1]
          %v397 = vsel %vm362, 0, %v396
          %398 = vst [vmem:[%s359 + $0x84] sm:$0x1] %v397
          %v399 = vld [vmem:[%s359 + $0x90] sm:$0x1]
          %v400 = vsel %vm362, 0, %v399
          %401 = vst [vmem:[%s359 + $0x90] sm:$0x1] %v400
          %v402 = vld [vmem:[%s359 + $0x9c] sm:$0x1]
          %v403 = vsel %vm362, 0, %v402
          %404 = vst [vmem:[%s359 + $0x9c] sm:$0x1] %v403
          %v405 = vld [vmem:[%s359 + $0xa8] sm:$0x1]
          %v406 = vsel %vm362, 0, %v405
          %407 = vst [vmem:[%s359 + $0xa8] sm:$0x1] %v406
          %v408 = vld [vmem:[%s359 + $0xb4] sm:$0x1]
          %v409 = vsel %vm362, 0, %v408
          %410 = vst [vmem:[%s359 + $0xb4] sm:$0x1] %v409
          %vm411 = vsmask.f32 7938
          %vm412 = vmand %vm360, %vm411
          %v413 = vld [vmem:[%s359 + $0x8] sm:$0x1]
          %v414 = vsel %vm412, 0, %v413
          %415 = vst [vmem:[%s359 + $0x8] sm:$0x1] %v414
          %v416 = vld [vmem:[%s359 + $0x14] sm:$0x1]
          %v417 = vsel %vm412, 0, %v416
          %418 = vst [vmem:[%s359 + $0x14] sm:$0x1] %v417
          %v419 = vld [vmem:[%s359 + $0x20] sm:$0x1]
          %v420 = vsel %vm412, 0, %v419
          %421 = vst [vmem:[%s359 + $0x20] sm:$0x1] %v420
          %v422 = vld [vmem:[%s359 + $0x2c] sm:$0x1]
          %v423 = vsel %vm412, 0, %v422
          %424 = vst [vmem:[%s359 + $0x2c] sm:$0x1] %v423
          %v425 = vld [vmem:[%s359 + $0x38] sm:$0x1]
          %v426 = vsel %vm412, 0, %v425
          %427 = vst [vmem:[%s359 + $0x38] sm:$0x1] %v426
          %v428 = vld [vmem:[%s359 + $0x44] sm:$0x1]
          %v429 = vsel %vm412, 0, %v428
          %430 = vst [vmem:[%s359 + $0x44] sm:$0x1] %v429
          %v431 = vld [vmem:[%s359 + $0x50] sm:$0x1]
          %v432 = vsel %vm412, 0, %v431
          %433 = vst [vmem:[%s359 + $0x50] sm:$0x1] %v432
          %v434 = vld [vmem:[%s359 + $0x5c] sm:$0x1]
          %v435 = vsel %vm412, 0, %v434
          %436 = vst [vmem:[%s359 + $0x5c] sm:$0x1] %v435
          %v437 = vld [vmem:[%s359 + $0x68] sm:$0x1]
          %v438 = vsel %vm412, 0, %v437
          %439 = vst [vmem:[%s359 + $0x68] sm:$0x1] %v438
          %v440 = vld [vmem:[%s359 + $0x74] sm:$0x1]
          %v441 = vsel %vm412, 0, %v440
          %442 = vst [vmem:[%s359 + $0x74] sm:$0x1] %v441
          %v443 = vld [vmem:[%s359 + $0x80] sm:$0x1]
          %v444 = vsel %vm412, 0, %v443
          %445 = vst [vmem:[%s359 + $0x80] sm:$0x1] %v444
          %v446 = vld [vmem:[%s359 + $0x8c] sm:$0x1]
          %v447 = vsel %vm412, 0, %v446
          %448 = vst [vmem:[%s359 + $0x8c] sm:$0x1] %v447
          %v449 = vld [vmem:[%s359 + $0x98] sm:$0x1]
          %v450 = vsel %vm412, 0, %v449
          %451 = vst [vmem:[%s359 + $0x98] sm:$0x1] %v450
          %v452 = vld [vmem:[%s359 + $0xa4] sm:$0x1]
          %v453 = vsel %vm412, 0, %v452
          %454 = vst [vmem:[%s359 + $0xa4] sm:$0x1] %v453
          %v455 = vld [vmem:[%s359 + $0xb0] sm:$0x1]
          %v456 = vsel %vm412, 0, %v455
          %457 = vst [vmem:[%s359 + $0xb0] sm:$0x1] %v456
          %v458 = vld [vmem:[%s359 + $0xbc] sm:$0x1]
          %v459 = vsel %vm412, 0, %v458
          %460 = vst [vmem:[%s359 + $0xbc] sm:$0x1] %v459
          %vm461 = vsmask.f32 4368
          %vm462 = vmor %vm361, %vm461
          %v464 = vshrl.u32 %v320, 16
          %v466 = vrot.slane %v464, 7
          %v467 = vshll.u32 %v320, 16
          %v469 = vor.u32 %v466, %v467
          %v470 = vrot.slane %v466, 4
          %v472 = vshrl.u32 %v321, 16
          %v474 = vrot.slane %v472, 7
          %v475 = vshll.u32 %v321, 16
          %v477 = vor.u32 %v474, %v475
          %v478 = vsel %vm462, %v470, %v477
          %v479 = vrot.slane %v474, 4
          %v481 = vshrl.u32 %v322, 16
          %v483 = vrot.slane %v481, 7
          %v484 = vshll.u32 %v322, 16
          %v486 = vor.u32 %v483, %v484
          %v487 = vrot.slane %v483, 4
          %v489 = vshrl.u32 %v323, 16
          %v491 = vrot.slane %v489, 7
          %v492 = vshll.u32 %v323, 16
          %v494 = vor.u32 %v491, %v492
          %v495 = vsel %vm462, %v487, %v494
          %v496 = vrot.slane %v491, 4
          %v498 = vshrl.u32 %v324, 16
          %v500 = vrot.slane %v498, 7
          %v501 = vshll.u32 %v324, 16
          %v503 = vor.u32 %v500, %v501
          %v504 = vrot.slane %v500, 4
          %v506 = vshrl.u32 %v325, 16
          %v508 = vrot.slane %v506, 7
          %v509 = vshll.u32 %v325, 16
          %v511 = vor.u32 %v508, %v509
          %v512 = vsel %vm462, %v504, %v511
          %v513 = vrot.slane %v508, 4
          %v515 = vshrl.u32 %v326, 16
          %v517 = vrot.slane %v515, 7
          %v518 = vshll.u32 %v326, 16
          %v520 = vor.u32 %v517, %v518
          %v521 = vrot.slane %v517, 4
          %v523 = vshrl.u32 %v327, 16
          %v525 = vrot.slane %v523, 7
          %v526 = vshll.u32 %v327, 16
          %v528 = vor.u32 %v525, %v526
          %v529 = vsel %vm462, %v521, %v528
          %v530 = vrot.slane %v525, 4
          %v532 = vshrl.u32 %v328, 16
          %v534 = vrot.slane %v532, 7
          %v535 = vshll.u32 %v328, 16
          %v537 = vor.u32 %v534, %v535
          %v538 = vrot.slane %v534, 4
          %v540 = vshrl.u32 %v329, 16
          %v542 = vrot.slane %v540, 7
          %v543 = vshll.u32 %v329, 16
          %v545 = vor.u32 %v542, %v543
          %v546 = vsel %vm462, %v538, %v545
          %v547 = vrot.slane %v542, 4
          %v549 = vshrl.u32 %v330, 16
          %v551 = vrot.slane %v549, 7
          %v552 = vshll.u32 %v330, 16
          %v554 = vor.u32 %v551, %v552
          %v555 = vrot.slane %v551, 4
          %v557 = vshrl.u32 %v331, 16
          %v559 = vrot.slane %v557, 7
          %v560 = vshll.u32 %v331, 16
          %v562 = vor.u32 %v559, %v560
          %v563 = vsel %vm462, %v555, %v562
          %v564 = vrot.slane %v559, 4
          %v566 = vshrl.u32 %v332, 16
          %v568 = vrot.slane %v566, 7
          %v569 = vshll.u32 %v332, 16
          %v571 = vor.u32 %v568, %v569
          %v572 = vrot.slane %v568, 4
          %v574 = vshrl.u32 %v333, 16
          %v576 = vrot.slane %v574, 7
          %v577 = vshll.u32 %v333, 16
          %v579 = vor.u32 %v576, %v577
          %v580 = vsel %vm462, %v572, %v579
          %v581 = vrot.slane %v576, 4
          %v583 = vshrl.u32 %v334, 16
          %v585 = vrot.slane %v583, 7
          %v586 = vshll.u32 %v334, 16
          %v588 = vor.u32 %v585, %v586
          %v589 = vrot.slane %v585, 4
          %v591 = vshrl.u32 %v335, 16
          %v593 = vrot.slane %v591, 7
          %v594 = vshll.u32 %v335, 16
          %v596 = vor.u32 %v593, %v594
          %v597 = vsel %vm462, %v589, %v596
          %v598 = vrot.slane %v593, 4
          %v600 = vshrl.u32 %v336, 16
          %v602 = vrot.slane %v600, 7
          %v603 = vshll.u32 %v336, 16
          %v605 = vor.u32 %v602, %v603
          %v606 = vrot.slane %v602, 4
          %v608 = vshrl.u32 %v337, 16
          %v610 = vrot.slane %v608, 7
          %v611 = vshll.u32 %v337, 16
          %v613 = vor.u32 %v610, %v611
          %v614 = vsel %vm462, %v606, %v613
          %v615 = vrot.slane %v610, 4
          %v617 = vshrl.u32 %v338, 16
          %v619 = vrot.slane %v617, 7
          %v620 = vshll.u32 %v338, 16
          %v622 = vor.u32 %v619, %v620
          %v623 = vrot.slane %v619, 4
          %v625 = vshrl.u32 %v339, 16
          %v627 = vrot.slane %v625, 7
          %v628 = vshll.u32 %v339, 16
          %v630 = vor.u32 %v627, %v628
          %v631 = vsel %vm462, %v623, %v630
          %v632 = vrot.slane %v627, 4
          %v634 = vshrl.u32 %v340, 16
          %v636 = vrot.slane %v634, 7
          %v637 = vshll.u32 %v340, 16
          %v639 = vor.u32 %v636, %v637
          %v640 = vrot.slane %v636, 4
          %v642 = vshrl.u32 %v341, 16
          %v644 = vrot.slane %v642, 7
          %v645 = vshll.u32 %v341, 16
          %v647 = vor.u32 %v644, %v645
          %v648 = vsel %vm462, %v640, %v647
          %v649 = vrot.slane %v644, 4
          %v651 = vshrl.u32 %v342, 16
          %v653 = vrot.slane %v651, 7
          %v654 = vshll.u32 %v342, 16
          %v656 = vor.u32 %v653, %v654
          %v657 = vrot.slane %v653, 4
          %v659 = vshrl.u32 %v343, 16
          %v661 = vrot.slane %v659, 7
          %v662 = vshll.u32 %v343, 16
          %v664 = vor.u32 %v661, %v662
          %v665 = vsel %vm462, %v657, %v664
          %v666 = vrot.slane %v661, 4
          %v668 = vshrl.u32 %v344, 16
          %v670 = vrot.slane %v668, 7
          %v671 = vshll.u32 %v344, 16
          %v673 = vor.u32 %v670, %v671
          %v674 = vrot.slane %v670, 4
          %v676 = vshrl.u32 %v345, 16
          %v678 = vrot.slane %v676, 7
          %v679 = vshll.u32 %v345, 16
          %v681 = vor.u32 %v678, %v679
          %v682 = vsel %vm462, %v674, %v681
          %v683 = vrot.slane %v678, 4
          %v685 = vshrl.u32 %v346, 16
          %v687 = vrot.slane %v685, 7
          %v688 = vshll.u32 %v346, 16
          %v690 = vor.u32 %v687, %v688
          %v691 = vrot.slane %v687, 4
          %v693 = vshrl.u32 %v347, 16
          %v695 = vrot.slane %v693, 7
          %v696 = vshll.u32 %v347, 16
          %v698 = vor.u32 %v695, %v696
          %v699 = vsel %vm462, %v691, %v698
          %v700 = vrot.slane %v695, 4
          %v702 = vshrl.u32 %v348, 16
          %v704 = vrot.slane %v702, 7
          %v705 = vshll.u32 %v348, 16
          %v707 = vor.u32 %v704, %v705
          %v708 = vrot.slane %v704, 4
          %v710 = vshrl.u32 %v349, 16
          %v712 = vrot.slane %v710, 7
          %v713 = vshll.u32 %v349, 16
          %v715 = vor.u32 %v712, %v713
          %v716 = vsel %vm462, %v708, %v715
          %v717 = vrot.slane %v712, 4
          %v719 = vshrl.u32 %v350, 16
          %v721 = vrot.slane %v719, 7
          %v722 = vshll.u32 %v350, 16
          %v724 = vor.u32 %v721, %v722
          %v725 = vrot.slane %v721, 4
          %v727 = vshrl.u32 %v351, 16
          %v729 = vrot.slane %v727, 7
          %v730 = vshll.u32 %v351, 16
          %v732 = vor.u32 %v729, %v730
          %v733 = vsel %vm462, %v725, %v732
          %v734 = vrot.slane %v729, 4
          %vm783 = vcmask 1043456
          %vm784 = vmand %vm783, %vm411
          %v785 = vld [vmem:[%s359] sm:$0xf]
          %v786 = vsel %vm784, %v469, %v785
          %787 = vst [vmem:[%s359] sm:$0xf] %v786
          %788 = vst [vmem:[%s359 + $0x4] sm:$0xf] %v478
          %v789 = vld [vmem:[%s359 + $0x8] sm:$0x1]
          %v790 = vsel %vm362, %v479, %v789
          %791 = vst [vmem:[%s359 + $0x8] sm:$0x1] %v790
          %v792 = vld [vmem:[%s359 + $0xc] sm:$0xf]
          %v793 = vsel %vm784, %v486, %v792
          %794 = vst [vmem:[%s359 + $0xc] sm:$0xf] %v793
          %795 = vst [vmem:[%s359 + $0x10] sm:$0xf] %v495
          %v796 = vld [vmem:[%s359 + $0x14] sm:$0x1]
          %v797 = vsel %vm362, %v496, %v796
          %798 = vst [vmem:[%s359 + $0x14] sm:$0x1] %v797
          %v799 = vld [vmem:[%s359 + $0x18] sm:$0xf]
          %v800 = vsel %vm784, %v503, %v799
          %801 = vst [vmem:[%s359 + $0x18] sm:$0xf] %v800
          %802 = vst [vmem:[%s359 + $0x1c] sm:$0xf] %v512
          %v803 = vld [vmem:[%s359 + $0x20] sm:$0x1]
          %v804 = vsel %vm362, %v513, %v803
          %805 = vst [vmem:[%s359 + $0x20] sm:$0x1] %v804
          %v806 = vld [vmem:[%s359 + $0x24] sm:$0xf]
          %v807 = vsel %vm784, %v520, %v806
          %808 = vst [vmem:[%s359 + $0x24] sm:$0xf] %v807
          %809 = vst [vmem:[%s359 + $0x28] sm:$0xf] %v529
          %v810 = vld [vmem:[%s359 + $0x2c] sm:$0x1]
          %v811 = vsel %vm362, %v530, %v810
          %812 = vst [vmem:[%s359 + $0x2c] sm:$0x1] %v811
          %v813 = vld [vmem:[%s359 + $0x30] sm:$0xf]
          %v814 = vsel %vm784, %v537, %v813
          %815 = vst [vmem:[%s359 + $0x30] sm:$0xf] %v814
          %816 = vst [vmem:[%s359 + $0x34] sm:$0xf] %v546
          %v817 = vld [vmem:[%s359 + $0x38] sm:$0x1]
          %v818 = vsel %vm362, %v547, %v817
          %819 = vst [vmem:[%s359 + $0x38] sm:$0x1] %v818
          %v820 = vld [vmem:[%s359 + $0x3c] sm:$0xf]
          %v821 = vsel %vm784, %v554, %v820
          %822 = vst [vmem:[%s359 + $0x3c] sm:$0xf] %v821
          %823 = vst [vmem:[%s359 + $0x40] sm:$0xf] %v563
          %v824 = vld [vmem:[%s359 + $0x44] sm:$0x1]
          %v825 = vsel %vm362, %v564, %v824
          %826 = vst [vmem:[%s359 + $0x44] sm:$0x1] %v825
          %v827 = vld [vmem:[%s359 + $0x48] sm:$0xf]
          %v828 = vsel %vm784, %v571, %v827
          %829 = vst [vmem:[%s359 + $0x48] sm:$0xf] %v828
          %830 = vst [vmem:[%s359 + $0x4c] sm:$0xf] %v580
          %v831 = vld [vmem:[%s359 + $0x50] sm:$0x1]
          %v832 = vsel %vm362, %v581, %v831
          %833 = vst [vmem:[%s359 + $0x50] sm:$0x1] %v832
          %v834 = vld [vmem:[%s359 + $0x54] sm:$0xf]
          %v835 = vsel %vm784, %v588, %v834
          %836 = vst [vmem:[%s359 + $0x54] sm:$0xf] %v835
          %837 = vst [vmem:[%s359 + $0x58] sm:$0xf] %v597
          %v838 = vld [vmem:[%s359 + $0x5c] sm:$0x1]
          %v839 = vsel %vm362, %v598, %v838
          %840 = vst [vmem:[%s359 + $0x5c] sm:$0x1] %v839
          %v841 = vld [vmem:[%s359 + $0x60] sm:$0xf]
          %v842 = vsel %vm784, %v605, %v841
          %843 = vst [vmem:[%s359 + $0x60] sm:$0xf] %v842
          %844 = vst [vmem:[%s359 + $0x64] sm:$0xf] %v614
          %v845 = vld [vmem:[%s359 + $0x68] sm:$0x1]
          %v846 = vsel %vm362, %v615, %v845
          %847 = vst [vmem:[%s359 + $0x68] sm:$0x1] %v846
          %v848 = vld [vmem:[%s359 + $0x6c] sm:$0xf]
          %v849 = vsel %vm784, %v622, %v848
          %850 = vst [vmem:[%s359 + $0x6c] sm:$0xf] %v849
          %851 = vst [vmem:[%s359 + $0x70] sm:$0xf] %v631
          %v852 = vld [vmem:[%s359 + $0x74] sm:$0x1]
          %v853 = vsel %vm362, %v632, %v852
          %854 = vst [vmem:[%s359 + $0x74] sm:$0x1] %v853
          %v855 = vld [vmem:[%s359 + $0x78] sm:$0xf]
          %v856 = vsel %vm784, %v639, %v855
          %857 = vst [vmem:[%s359 + $0x78] sm:$0xf] %v856
          %858 = vst [vmem:[%s359 + $0x7c] sm:$0xf] %v648
          %v859 = vld [vmem:[%s359 + $0x80] sm:$0x1]
          %v860 = vsel %vm362, %v649, %v859
          %861 = vst [vmem:[%s359 + $0x80] sm:$0x1] %v860
          %v862 = vld [vmem:[%s359 + $0x84] sm:$0xf]
          %v863 = vsel %vm784, %v656, %v862
          %864 = vst [vmem:[%s359 + $0x84] sm:$0xf] %v863
          %865 = vst [vmem:[%s359 + $0x88] sm:$0xf] %v665
          %v866 = vld [vmem:[%s359 + $0x8c] sm:$0x1]
          %v867 = vsel %vm362, %v666, %v866
          %868 = vst [vmem:[%s359 + $0x8c] sm:$0x1] %v867
          %v869 = vld [vmem:[%s359 + $0x90] sm:$0xf]
          %v870 = vsel %vm784, %v673, %v869
          %871 = vst [vmem:[%s359 + $0x90] sm:$0xf] %v870
          %872 = vst [vmem:[%s359 + $0x94] sm:$0xf] %v682
          %v873 = vld [vmem:[%s359 + $0x98] sm:$0x1]
          %v874 = vsel %vm362, %v683, %v873
          %875 = vst [vmem:[%s359 + $0x98] sm:$0x1] %v874
          %v876 = vld [vmem:[%s359 + $0x9c] sm:$0xf]
          %v877 = vsel %vm784, %v690, %v876
          %878 = vst [vmem:[%s359 + $0x9c] sm:$0xf] %v877
          %879 = vst [vmem:[%s359 + $0xa0] sm:$0xf] %v699
          %v880 = vld [vmem:[%s359 + $0xa4] sm:$0x1]
          %v881 = vsel %vm362, %v700, %v880
          %882 = vst [vmem:[%s359 + $0xa4] sm:$0x1] %v881
          %v883 = vld [vmem:[%s359 + $0xa8] sm:$0xf]
          %v884 = vsel %vm784, %v707, %v883
          %885 = vst [vmem:[%s359 + $0xa8] sm:$0xf] %v884
          %886 = vst [vmem:[%s359 + $0xac] sm:$0xf] %v716
          %v887 = vld [vmem:[%s359 + $0xb0] sm:$0x1]
          %v888 = vsel %vm362, %v717, %v887
          %889 = vst [vmem:[%s359 + $0xb0] sm:$0x1] %v888
          %v890 = vld [vmem:[%s359 + $0xb4] sm:$0xf]
          %v891 = vsel %vm784, %v724, %v890
          %892 = vst [vmem:[%s359 + $0xb4] sm:$0xf] %v891
          %893 = vst [vmem:[%s359 + $0xb8] sm:$0xf] %v733
          %v894 = vld [vmem:[%s359 + $0xbc] sm:$0x1]
          %v895 = vsel %vm362, %v734, %v894
          %896 = vst [vmem:[%s359 + $0xbc] sm:$0x1] %v895
          %v897 = vld [vmem:[#allocation2] sm:$0xf]
          %v898 = vld [vmem:[#allocation2 + $0x4] sm:$0xf]
          %v899 = vld [vmem:[#allocation2 + $0xc] sm:$0xf]
          %v900 = vld [vmem:[#allocation2 + $0x10] sm:$0xf]
          %v901 = vld [vmem:[#allocation2 + $0x18] sm:$0xf]
          %v902 = vld [vmem:[#allocation2 + $0x1c] sm:$0xf]
          %v903 = vld [vmem:[#allocation2 + $0x24] sm:$0xf]
          %v904 = vld [vmem:[#allocation2 + $0x28] sm:$0xf]
          %v905 = vld [vmem:[#allocation2 + $0x30] sm:$0xf]
          %v906 = vld [vmem:[#allocation2 + $0x34] sm:$0xf]
          %v907 = vld [vmem:[#allocation2 + $0x3c] sm:$0xf]
          %v908 = vld [vmem:[#allocation2 + $0x40] sm:$0xf]
          %v909 = vld [vmem:[#allocation2 + $0x48] sm:$0xf]
          %v910 = vld [vmem:[#allocation2 + $0x4c] sm:$0xf]
          %v911 = vld [vmem:[#allocation2 + $0x54] sm:$0xf]
          %v912 = vld [vmem:[#allocation2 + $0x58] sm:$0xf]
          %v913 = vld [vmem:[#allocation2 + $0x60] sm:$0xf]
          %v914 = vld [vmem:[#allocation2 + $0x64] sm:$0xf]
          %v915 = vld [vmem:[#allocation2 + $0x6c] sm:$0xf]
          %v916 = vld [vmem:[#allocation2 + $0x70] sm:$0xf]
          %v917 = vld [vmem:[#allocation2 + $0x78] sm:$0xf]
          %v918 = vld [vmem:[#allocation2 + $0x7c] sm:$0xf]
          %v919 = vld [vmem:[#allocation2 + $0x84] sm:$0xf]
          %v920 = vld [vmem:[#allocation2 + $0x88] sm:$0xf]
          %v921 = vld [vmem:[#allocation2 + $0x90] sm:$0xf]
          %v922 = vld [vmem:[#allocation2 + $0x94] sm:$0xf]
          %v923 = vld [vmem:[#allocation2 + $0x9c] sm:$0xf]
          %v924 = vld [vmem:[#allocation2 + $0xa0] sm:$0xf]
          %v925 = vld [vmem:[#allocation2 + $0xa8] sm:$0xf]
          %v926 = vld [vmem:[#allocation2 + $0xac] sm:$0xf]
          %v927 = vld [vmem:[#allocation2 + $0xb4] sm:$0xf]
          %v928 = vld [vmem:[#allocation2 + $0xb8] sm:$0xf]
          %v929 = vld [vmem:[#allocation7] sm:$0xf]
          %v930 = vld [vmem:[#allocation7 + $0x4] sm:$0xf]
          %v931 = vld [vmem:[#allocation7 + $0x8] sm:$0xf]
          %v932 = vld [vmem:[#allocation7 + $0xc] sm:$0xf]
          %v933 = vld [vmem:[#allocation7 + $0x10] sm:$0xf]
          %v934 = vld [vmem:[#allocation7 + $0x14] sm:$0xf]
          %v935 = vld [vmem:[#allocation7 + $0x18] sm:$0xf]
          %v936 = vld [vmem:[#allocation7 + $0x1c] sm:$0xf]
          %v937 = vld [vmem:[#allocation7 + $0x20] sm:$0xf]
          %v938 = vld [vmem:[#allocation7 + $0x24] sm:$0xf]
          %v939 = vld [vmem:[#allocation7 + $0x28] sm:$0xf]
          %v940 = vld [vmem:[#allocation7 + $0x2c] sm:$0xf]
          %v941 = vld [vmem:[#allocation7 + $0x30] sm:$0xf]
          %v942 = vld [vmem:[#allocation7 + $0x34] sm:$0xf]
          %v943 = vld [vmem:[#allocation7 + $0x38] sm:$0xf]
          %v944 = vld [vmem:[#allocation7 + $0x3c] sm:$0xf]
          %v945 = vld [vmem:[#allocation2 + $0x8] sm:$0x1]
          %v946 = vld [vmem:[#allocation2 + $0x14] sm:$0x1]
          %v947 = vld [vmem:[#allocation2 + $0x20] sm:$0x1]
          %v948 = vld [vmem:[#allocation2 + $0x2c] sm:$0x1]
          %v949 = vld [vmem:[#allocation2 + $0x38] sm:$0x1]
          %v950 = vld [vmem:[#allocation2 + $0x44] sm:$0x1]
          %v951 = vld [vmem:[#allocation2 + $0x50] sm:$0x1]
          %v952 = vld [vmem:[#allocation2 + $0x5c] sm:$0x1]
          %v953 = vld [vmem:[#allocation2 + $0x68] sm:$0x1]
          %v954 = vld [vmem:[#allocation2 + $0x74] sm:$0x1]
          %v955 = vld [vmem:[#allocation2 + $0x80] sm:$0x1]
          %v956 = vld [vmem:[#allocation2 + $0x8c] sm:$0x1]
          %v957 = vld [vmem:[#allocation2 + $0x98] sm:$0x1]
          %v958 = vld [vmem:[#allocation2 + $0xa4] sm:$0x1]
          %v959 = vld [vmem:[#allocation2 + $0xb0] sm:$0x1]
          %v960 = vld [vmem:[#allocation2 + $0xbc] sm:$0x1]
          %vm961 = vsmask.f32 3328
          %vm962 = vsmask.f32 7440
          %vm963 = vmor %vm961, %vm962
          %v965 = vshrl.u32 %v897, 16
          %v967 = vrot.slane %v965, 4
          %v968 = vshll.u32 %v897, 16
          %v970 = vrot.slane %v968, 5
          %v971 = vor.u32 %v967, %v970
          %v972 = vrot.slane %v971, 4
          %v974 = vshll.u32 %v898, 16
          %v976 = vrot.slane %v974, 5
          %v977 = vsel %vm963, %v972, %v976
          %v978 = vshrl.u32 %v898, 16
          %v980 = vrot.slane %v978, 4
          %v981 = vor.u32 %v980, %v976
          %v982 = vrot.slane %v981, 4
          %v984 = vshll.u32 %v945, 16
          %v986 = vrot.slane %v984, 5
          %v987 = vsel %vm963, %v982, %v986
          %v989 = vshrl.u32 %v899, 16
          %v991 = vrot.slane %v989, 4
          %v992 = vshll.u32 %v899, 16
          %v994 = vrot.slane %v992, 5
          %v995 = vor.u32 %v991, %v994
          %v996 = vrot.slane %v995, 4
          %v998 = vshll.u32 %v900, 16
          %v1000 = vrot.slane %v998, 5
          %v1001 = vsel %vm963, %v996, %v1000
          %v1002 = vshrl.u32 %v900, 16
          %v1004 = vrot.slane %v1002, 4
          %v1005 = vor.u32 %v1004, %v1000
          %v1006 = vrot.slane %v1005, 4
          %v1008 = vshll.u32 %v946, 16
          %v1010 = vrot.slane %v1008, 5
          %v1011 = vsel %vm963, %v1006, %v1010
          %v1013 = vshrl.u32 %v901, 16
          %v1015 = vrot.slane %v1013, 4
          %v1016 = vshll.u32 %v901, 16
          %v1018 = vrot.slane %v1016, 5
          %v1019 = vor.u32 %v1015, %v1018
          %v1020 = vrot.slane %v1019, 4
          %v1022 = vshll.u32 %v902, 16
          %v1024 = vrot.slane %v1022, 5
          %v1025 = vsel %vm963, %v1020, %v1024
          %v1026 = vshrl.u32 %v902, 16
          %v1028 = vrot.slane %v1026, 4
          %v1029 = vor.u32 %v1028, %v1024
          %v1030 = vrot.slane %v1029, 4
          %v1032 = vshll.u32 %v947, 16
          %v1034 = vrot.slane %v1032, 5
          %v1035 = vsel %vm963, %v1030, %v1034
          %v1037 = vshrl.u32 %v903, 16
          %v1039 = vrot.slane %v1037, 4
          %v1040 = vshll.u32 %v903, 16
          %v1042 = vrot.slane %v1040, 5
          %v1043 = vor.u32 %v1039, %v1042
          %v1044 = vrot.slane %v1043, 4
          %v1046 = vshll.u32 %v904, 16
          %v1048 = vrot.slane %v1046, 5
          %v1049 = vsel %vm963, %v1044, %v1048
          %v1050 = vshrl.u32 %v904, 16
          %v1052 = vrot.slane %v1050, 4
          %v1053 = vor.u32 %v1052, %v1048
          %v1054 = vrot.slane %v1053, 4
          %v1056 = vshll.u32 %v948, 16
          %v1058 = vrot.slane %v1056, 5
          %v1059 = vsel %vm963, %v1054, %v1058
          %v1061 = vshrl.u32 %v905, 16
          %v1063 = vrot.slane %v1061, 4
          %v1064 = vshll.u32 %v905, 16
          %v1066 = vrot.slane %v1064, 5
          %v1067 = vor.u32 %v1063, %v1066
          %v1068 = vrot.slane %v1067, 4
          %v1070 = vshll.u32 %v906, 16
          %v1072 = vrot.slane %v1070, 5
          %v1073 = vsel %vm963, %v1068, %v1072
          %v1074 = vshrl.u32 %v906, 16
          %v1076 = vrot.slane %v1074, 4
          %v1077 = vor.u32 %v1076, %v1072
          %v1078 = vrot.slane %v1077, 4
          %v1080 = vshll.u32 %v949, 16
          %v1082 = vrot.slane %v1080, 5
          %v1083 = vsel %vm963, %v1078, %v1082
          %v1085 = vshrl.u32 %v907, 16
          %v1087 = vrot.slane %v1085, 4
          %v1088 = vshll.u32 %v907, 16
          %v1090 = vrot.slane %v1088, 5
          %v1091 = vor.u32 %v1087, %v1090
          %v1092 = vrot.slane %v1091, 4
          %v1094 = vshll.u32 %v908, 16
          %v1096 = vrot.slane %v1094, 5
          %v1097 = vsel %vm963, %v1092, %v1096
          %v1098 = vshrl.u32 %v908, 16
          %v1100 = vrot.slane %v1098, 4
          %v1101 = vor.u32 %v1100, %v1096
          %v1102 = vrot.slane %v1101, 4
          %v1104 = vshll.u32 %v950, 16
          %v1106 = vrot.slane %v1104, 5
          %v1107 = vsel %vm963, %v1102, %v1106
          %v1109 = vshrl.u32 %v909, 16
          %v1111 = vrot.slane %v1109, 4
          %v1112 = vshll.u32 %v909, 16
          %v1114 = vrot.slane %v1112, 5
          %v1115 = vor.u32 %v1111, %v1114
          %v1116 = vrot.slane %v1115, 4
          %v1118 = vshll.u32 %v910, 16
          %v1120 = vrot.slane %v1118, 5
          %v1121 = vsel %vm963, %v1116, %v1120
          %v1122 = vshrl.u32 %v910, 16
          %v1124 = vrot.slane %v1122, 4
          %v1125 = vor.u32 %v1124, %v1120
          %v1126 = vrot.slane %v1125, 4
          %v1128 = vshll.u32 %v951, 16
          %v1130 = vrot.slane %v1128, 5
          %v1131 = vsel %vm963, %v1126, %v1130
          %v1133 = vshrl.u32 %v911, 16
          %v1135 = vrot.slane %v1133, 4
          %v1136 = vshll.u32 %v911, 16
          %v1138 = vrot.slane %v1136, 5
          %v1139 = vor.u32 %v1135, %v1138
          %v1140 = vrot.slane %v1139, 4
          %v1142 = vshll.u32 %v912, 16
          %v1144 = vrot.slane %v1142, 5
          %v1145 = vsel %vm963, %v1140, %v1144
          %v1146 = vshrl.u32 %v912, 16
          %v1148 = vrot.slane %v1146, 4
          %v1149 = vor.u32 %v1148, %v1144
          %v1150 = vrot.slane %v1149, 4
          %v1152 = vshll.u32 %v952, 16
          %v1154 = vrot.slane %v1152, 5
          %v1155 = vsel %vm963, %v1150, %v1154
          %v1157 = vshrl.u32 %v913, 16
          %v1159 = vrot.slane %v1157, 4
          %v1160 = vshll.u32 %v913, 16
          %v1162 = vrot.slane %v1160, 5
          %v1163 = vor.u32 %v1159, %v1162
          %v1164 = vrot.slane %v1163, 4
          %v1166 = vshll.u32 %v914, 16
          %v1168 = vrot.slane %v1166, 5
          %v1169 = vsel %vm963, %v1164, %v1168
          %v1170 = vshrl.u32 %v914, 16
          %v1172 = vrot.slane %v1170, 4
          %v1173 = vor.u32 %v1172, %v1168
          %v1174 = vrot.slane %v1173, 4
          %v1176 = vshll.u32 %v953, 16
          %v1178 = vrot.slane %v1176, 5
          %v1179 = vsel %vm963, %v1174, %v1178
          %v1181 = vshrl.u32 %v915, 16
          %v1183 = vrot.slane %v1181, 4
          %v1184 = vshll.u32 %v915, 16
          %v1186 = vrot.slane %v1184, 5
          %v1187 = vor.u32 %v1183, %v1186
          %v1188 = vrot.slane %v1187, 4
          %v1190 = vshll.u32 %v916, 16
          %v1192 = vrot.slane %v1190, 5
          %v1193 = vsel %vm963, %v1188, %v1192
          %v1194 = vshrl.u32 %v916, 16
          %v1196 = vrot.slane %v1194, 4
          %v1197 = vor.u32 %v1196, %v1192
          %v1198 = vrot.slane %v1197, 4
          %v1200 = vshll.u32 %v954, 16
          %v1202 = vrot.slane %v1200, 5
          %v1203 = vsel %vm963, %v1198, %v1202
          %v1205 = vshrl.u32 %v917, 16
          %v1207 = vrot.slane %v1205, 4
          %v1208 = vshll.u32 %v917, 16
          %v1210 = vrot.slane %v1208, 5
          %v1211 = vor.u32 %v1207, %v1210
          %v1212 = vrot.slane %v1211, 4
          %v1214 = vshll.u32 %v918, 16
          %v1216 = vrot.slane %v1214, 5
          %v1217 = vsel %vm963, %v1212, %v1216
          %v1218 = vshrl.u32 %v918, 16
          %v1220 = vrot.slane %v1218, 4
          %v1221 = vor.u32 %v1220, %v1216
          %v1222 = vrot.slane %v1221, 4
          %v1224 = vshll.u32 %v955, 16
          %v1226 = vrot.slane %v1224, 5
          %v1227 = vsel %vm963, %v1222, %v1226
          %v1229 = vshrl.u32 %v919, 16
          %v1231 = vrot.slane %v1229, 4
          %v1232 = vshll.u32 %v919, 16
          %v1234 = vrot.slane %v1232, 5
          %v1235 = vor.u32 %v1231, %v1234
          %v1236 = vrot.slane %v1235, 4
          %v1238 = vshll.u32 %v920, 16
          %v1240 = vrot.slane %v1238, 5
          %v1241 = vsel %vm963, %v1236, %v1240
          %v1242 = vshrl.u32 %v920, 16
          %v1244 = vrot.slane %v1242, 4
          %v1245 = vor.u32 %v1244, %v1240
          %v1246 = vrot.slane %v1245, 4
          %v1248 = vshll.u32 %v956, 16
          %v1250 = vrot.slane %v1248, 5
          %v1251 = vsel %vm963, %v1246, %v1250
          %v1253 = vshrl.u32 %v921, 16
          %v1255 = vrot.slane %v1253, 4
          %v1256 = vshll.u32 %v921, 16
          %v1258 = vrot.slane %v1256, 5
          %v1259 = vor.u32 %v1255, %v1258
          %v1260 = vrot.slane %v1259, 4
          %v1262 = vshll.u32 %v922, 16
          %v1264 = vrot.slane %v1262, 5
          %v1265 = vsel %vm963, %v1260, %v1264
          %v1266 = vshrl.u32 %v922, 16
          %v1268 = vrot.slane %v1266, 4
          %v1269 = vor.u32 %v1268, %v1264
          %v1270 = vrot.slane %v1269, 4
          %v1272 = vshll.u32 %v957, 16
          %v1274 = vrot.slane %v1272, 5
          %v1275 = vsel %vm963, %v1270, %v1274
          %v1277 = vshrl.u32 %v923, 16
          %v1279 = vrot.slane %v1277, 4
          %v1280 = vshll.u32 %v923, 16
          %v1282 = vrot.slane %v1280, 5
          %v1283 = vor.u32 %v1279, %v1282
          %v1284 = vrot.slane %v1283, 4
          %v1286 = vshll.u32 %v924, 16
          %v1288 = vrot.slane %v1286, 5
          %v1289 = vsel %vm963, %v1284, %v1288
          %v1290 = vshrl.u32 %v924, 16
          %v1292 = vrot.slane %v1290, 4
          %v1293 = vor.u32 %v1292, %v1288
          %v1294 = vrot.slane %v1293, 4
          %v1296 = vshll.u32 %v958, 16
          %v1298 = vrot.slane %v1296, 5
          %v1299 = vsel %vm963, %v1294, %v1298
          %v1301 = vshrl.u32 %v925, 16
          %v1303 = vrot.slane %v1301, 4
          %v1304 = vshll.u32 %v925, 16
          %v1306 = vrot.slane %v1304, 5
          %v1307 = vor.u32 %v1303, %v1306
          %v1308 = vrot.slane %v1307, 4
          %v1310 = vshll.u32 %v926, 16
          %v1312 = vrot.slane %v1310, 5
          %v1313 = vsel %vm963, %v1308, %v1312
          %v1314 = vshrl.u32 %v926, 16
          %v1316 = vrot.slane %v1314, 4
          %v1317 = vor.u32 %v1316, %v1312
          %v1318 = vrot.slane %v1317, 4
          %v1320 = vshll.u32 %v959, 16
          %v1322 = vrot.slane %v1320, 5
          %v1323 = vsel %vm963, %v1318, %v1322
          %v1325 = vshrl.u32 %v927, 16
          %v1327 = vrot.slane %v1325, 4
          %v1328 = vshll.u32 %v927, 16
          %v1330 = vrot.slane %v1328, 5
          %v1331 = vor.u32 %v1327, %v1330
          %v1332 = vrot.slane %v1331, 4
          %v1334 = vshll.u32 %v928, 16
          %v1336 = vrot.slane %v1334, 5
          %v1337 = vsel %vm963, %v1332, %v1336
          %v1338 = vshrl.u32 %v928, 16
          %v1340 = vrot.slane %v1338, 4
          %v1341 = vor.u32 %v1340, %v1336
          %v1342 = vrot.slane %v1341, 4
          %v1344 = vshll.u32 %v960, 16
          %v1346 = vrot.slane %v1344, 5
          %v1347 = vsel %vm963, %v1342, %v1346
          %s1348 = scalar_lea.vmem [#allocation7], 64
          %v1349 = vld [vmem:[%s1348] sm:$0xf]
          %v1350 = vld [vmem:[%s1348 + $0x4] sm:$0xf]
          %v1351 = vld [vmem:[%s1348 + $0x8] sm:$0xf]
          %v1352 = vld [vmem:[%s1348 + $0xc] sm:$0xf]
          %v1353 = vld [vmem:[%s1348 + $0x10] sm:$0xf]
          %v1354 = vld [vmem:[%s1348 + $0x14] sm:$0xf]
          %v1355 = vld [vmem:[%s1348 + $0x18] sm:$0xf]
          %v1356 = vld [vmem:[%s1348 + $0x1c] sm:$0xf]
          %v1357 = vld [vmem:[%s1348 + $0x20] sm:$0xf]
          %v1358 = vld [vmem:[%s1348 + $0x24] sm:$0xf]
          %v1359 = vld [vmem:[%s1348 + $0x28] sm:$0xf]
          %v1360 = vld [vmem:[%s1348 + $0x2c] sm:$0xf]
          %v1361 = vld [vmem:[%s1348 + $0x30] sm:$0xf]
          %v1362 = vld [vmem:[%s1348 + $0x34] sm:$0xf]
          %v1363 = vld [vmem:[%s1348 + $0x38] sm:$0xf]
          %v1364 = vld [vmem:[%s1348 + $0x3c] sm:$0xf]
          %v1365 = vunpack.c.l.b16 %v977
          %v1366 = vunpack.c.l.b16 %v987
          %v1367 = vunpack.c.l.b16 %v1001
          %v1368 = vunpack.c.l.b16 %v1011
          %v1369 = vunpack.c.l.b16 %v1025
          %v1370 = vunpack.c.l.b16 %v1035
          %v1371 = vunpack.c.l.b16 %v1049
          %v1372 = vunpack.c.l.b16 %v1059
          %v1373 = vunpack.c.l.b16 %v1073
          %v1374 = vunpack.c.l.b16 %v1083
          %v1375 = vunpack.c.l.b16 %v1097
          %v1376 = vunpack.c.l.b16 %v1107
          %v1377 = vunpack.c.l.b16 %v1121
          %v1378 = vunpack.c.l.b16 %v1131
          %v1379 = vunpack.c.l.b16 %v1145
          %v1380 = vunpack.c.l.b16 %v1155
          %v1381 = vunpack.c.l.b16 %v1169
          %v1382 = vunpack.c.l.b16 %v1179
          %v1383 = vunpack.c.l.b16 %v1193
          %v1384 = vunpack.c.l.b16 %v1203
          %v1385 = vunpack.c.l.b16 %v1217
          %v1386 = vunpack.c.l.b16 %v1227
          %v1387 = vunpack.c.l.b16 %v1241
          %v1388 = vunpack.c.l.b16 %v1251
          %v1389 = vunpack.c.l.b16 %v1265
          %v1390 = vunpack.c.l.b16 %v1275
          %v1391 = vunpack.c.l.b16 %v1289
          %v1392 = vunpack.c.l.b16 %v1299
          %v1393 = vunpack.c.l.b16 %v1313
          %v1394 = vunpack.c.l.b16 %v1323
          %v1395 = vunpack.c.l.b16 %v1337
          %v1396 = vunpack.c.l.b16 %v1347
          %v1397 = vpack.c.b16 %v1366, %v1365
          %v1398 = vpack.c.b16 %v1368, %v1367
          %v1399 = vpack.c.b16 %v1370, %v1369
          %v1400 = vpack.c.b16 %v1372, %v1371
          %v1401 = vpack.c.b16 %v1374, %v1373
          %v1402 = vpack.c.b16 %v1376, %v1375
          %v1403 = vpack.c.b16 %v1378, %v1377
          %v1404 = vpack.c.b16 %v1380, %v1379
          %v1405 = vpack.c.b16 %v1382, %v1381
          %v1406 = vpack.c.b16 %v1384, %v1383
          %v1407 = vpack.c.b16 %v1386, %v1385
          %v1408 = vpack.c.b16 %v1388, %v1387
          %v1409 = vpack.c.b16 %v1390, %v1389
          %v1410 = vpack.c.b16 %v1392, %v1391
          %v1411 = vpack.c.b16 %v1394, %v1393
          %v1412 = vpack.c.b16 %v1396, %v1395
          %v1445 = vunpack.c.l.b16 %v1349
          %v1446 = vunpack.c.l.b16 %v1350
          %v1447 = vunpack.c.l.b16 %v1351
          %v1448 = vunpack.c.l.b16 %v1352
          %v1449 = vunpack.c.l.b16 %v1353
          %v1450 = vunpack.c.l.b16 %v1354
          %v1451 = vunpack.c.l.b16 %v1355
          %v1452 = vunpack.c.l.b16 %v1356
          %v1453 = vunpack.c.l.b16 %v1357
          %v1454 = vunpack.c.l.b16 %v1358
          %v1455 = vunpack.c.l.b16 %v1359
          %v1456 = vunpack.c.l.b16 %v1360
          %v1457 = vunpack.c.l.b16 %v1361
          %v1458 = vunpack.c.l.b16 %v1362
          %v1459 = vunpack.c.l.b16 %v1363
          %v1460 = vunpack.c.l.b16 %v1364
          %v1461 = vpack.c.b16 %v1446, %v1445
          %v1462 = vpack.c.b16 %v1448, %v1447
          %v1463 = vpack.c.b16 %v1450, %v1449
          %v1464 = vpack.c.b16 %v1452, %v1451
          %v1465 = vpack.c.b16 %v1454, %v1453
          %v1466 = vpack.c.b16 %v1456, %v1455
          %v1467 = vpack.c.b16 %v1458, %v1457
          %v1468 = vpack.c.b16 %v1460, %v1459
          %1477 = vmatprep.subr.bf16.mxu0 0
          %1478 = vmatpush1.bf16.msra.mxu0 %v1461
          %1479 = vmatprep.subr.bf16.mxu0 0
          %1480 = vmatpush1.bf16.msra.mxu0 %v1462
          %1481 = vmatprep.subr.bf16.mxu0 0
          %1482 = vmatpush1.bf16.msra.mxu0 %v1463
          %1483 = vmatprep.subr.bf16.mxu0 0
          %1484 = vmatpush1.bf16.msra.mxu0 %v1464
          %1485 = vmatprep.subr.bf16.mxu0 0
          %1486 = vmatpush1.bf16.msra.mxu0 %v1465
          %1487 = vmatprep.subr.bf16.mxu0 0
          %1488 = vmatpush1.bf16.msra.mxu0 %v1466
          %1489 = vmatprep.subr.bf16.mxu0 0
          %1490 = vmatpush1.bf16.msra.mxu0 %v1467
          %1491 = vmatprep.subr.bf16.mxu0 0
          %1492 = vmatpush1.bf16.msra.mxu0 %v1468
          %1493 = vmatprep.subr.bf16.mxu0 0
          %1494 = vmatpush1.bf16.msra.mxu0 0
          %1495 = vmatprep.subr.bf16.mxu0 0
          %1496 = vmatpush1.bf16.msra.mxu0 0
          %1497 = vmatprep.subr.bf16.mxu0 0
          %1498 = vmatpush1.bf16.msra.mxu0 0
          %1499 = vmatprep.subr.bf16.mxu0 0
          %1500 = vmatpush1.bf16.msra.mxu0 0
          %1501 = vmatprep.subr.bf16.mxu0 0
          %1502 = vmatpush1.bf16.msra.mxu0 0
          %1503 = vmatprep.subr.bf16.mxu0 0
          %1504 = vmatpush1.bf16.msra.mxu0 0
          %1505 = vmatprep.subr.bf16.mxu0 0
          %1506 = vmatpush1.bf16.msra.mxu0 0
          %1507 = vmatprep.subr.bf16.mxu0 0
          %1508 = vmatpush1.bf16.msra.mxu0 0
          %1509 = vmatprep.mubr.bf16.mxu0 0
          %1510 = vmatmul.mubr.bf16.gmra.mrb[0].mxu0 %v1397
          %v1511 = vpop.f32.mrb[0].mxu0
          %v1512 = vadd.f32 0.0, %v1511
          %v1513 = vpop.f32.mrb[0].mxu0
          %v1514 = vpop.f32.mrb[0].mxu0
          %v1515 = vadd.f32 0.0, %v1514
          %v1516 = vpop.f32.mrb[0].mxu0
          %1517 = vmatprep.mubr.bf16.mxu0 0
          %1518 = vmatmul.mubr.bf16.gmra.mrb[0].mxu0 %v1398
          %v1519 = vpop.f32.mrb[0].mxu0
          %v1520 = vadd.f32 0.0, %v1519
          %v1521 = vpop.f32.mrb[0].mxu0
          %v1522 = vpop.f32.mrb[0].mxu0
          %v1523 = vadd.f32 0.0, %v1522
          %v1524 = vpop.f32.mrb[0].mxu0
          %1525 = vmatprep.mubr.bf16.mxu0 0
          %1526 = vmatmul.mubr.bf16.gmra.mrb[0].mxu0 %v1399
          %v1527 = vpop.f32.mrb[0].mxu0
          %v1528 = vadd.f32 0.0, %v1527
          %v1529 = vpop.f32.mrb[0].mxu0
          %v1530 = vpop.f32.mrb[0].mxu0
          %v1531 = vadd.f32 0.0, %v1530
          %v1532 = vpop.f32.mrb[0].mxu0
          %1533 = vmatprep.mubr.bf16.mxu0 0
          %1534 = vmatmul.mubr.bf16.gmra.mrb[0].mxu0 %v1400
          %v1535 = vpop.f32.mrb[0].mxu0
          %v1536 = vadd.f32 0.0, %v1535
          %v1537 = vpop.f32.mrb[0].mxu0
          %v1538 = vpop.f32.mrb[0].mxu0
          %v1539 = vadd.f32 0.0, %v1538
          %v1540 = vpop.f32.mrb[0].mxu0
          %1541 = vmatprep.mubr.bf16.mxu0 0
          %1542 = vmatmul.mubr.bf16.gmra.mrb[0].mxu0 %v1401
          %v1543 = vpop.f32.mrb[0].mxu0
          %v1544 = vadd.f32 0.0, %v1543
          %v1545 = vpop.f32.mrb[0].mxu0
          %v1546 = vpop.f32.mrb[0].mxu0
          %v1547 = vadd.f32 0.0, %v1546
          %v1548 = vpop.f32.mrb[0].mxu0
          %1549 = vmatprep.mubr.bf16.mxu0 0
          %1550 = vmatmul.mubr.bf16.gmra.mrb[0].mxu0 %v1402
          %v1551 = vpop.f32.mrb[0].mxu0
          %v1552 = vadd.f32 0.0, %v1551
          %v1553 = vpop.f32.mrb[0].mxu0
          %v1554 = vpop.f32.mrb[0].mxu0
          %v1555 = vadd.f32 0.0, %v1554
          %v1556 = vpop.f32.mrb[0].mxu0
          %1557 = vmatprep.mubr.bf16.mxu0 0
          %1558 = vmatmul.mubr.bf16.gmra.mrb[0].mxu0 %v1403
          %v1559 = vpop.f32.mrb[0].mxu0
          %v1560 = vadd.f32 0.0, %v1559
          %v1561 = vpop.f32.mrb[0].mxu0
          %v1562 = vpop.f32.mrb[0].mxu0
          %v1563 = vadd.f32 0.0, %v1562
          %v1564 = vpop.f32.mrb[0].mxu0
          %1565 = vmatprep.mubr.bf16.mxu0 0
          %1566 = vmatmul.mubr.bf16.gmra.mrb[0].mxu0 %v1404
          %v1567 = vpop.f32.mrb[0].mxu0
          %v1568 = vadd.f32 0.0, %v1567
          %v1569 = vpop.f32.mrb[0].mxu0
          %v1570 = vpop.f32.mrb[0].mxu0
          %v1571 = vadd.f32 0.0, %v1570
          %v1572 = vpop.f32.mrb[0].mxu0
          %1573 = vmatprep.mubr.bf16.mxu0 0
          %1574 = vmatmul.mubr.bf16.gmra.mrb[0].mxu0 %v1405
          %v1575 = vpop.f32.mrb[0].mxu0
          %v1576 = vadd.f32 0.0, %v1575
          %v1577 = vpop.f32.mrb[0].mxu0
          %v1578 = vpop.f32.mrb[0].mxu0
          %v1579 = vadd.f32 0.0, %v1578
          %v1580 = vpop.f32.mrb[0].mxu0
          %1581 = vmatprep.mubr.bf16.mxu0 0
          %1582 = vmatmul.mubr.bf16.gmra.mrb[0].mxu0 %v1406
          %v1583 = vpop.f32.mrb[0].mxu0
          %v1584 = vadd.f32 0.0, %v1583
          %v1585 = vpop.f32.mrb[0].mxu0
          %v1586 = vpop.f32.mrb[0].mxu0
          %v1587 = vadd.f32 0.0, %v1586
          %v1588 = vpop.f32.mrb[0].mxu0
          %1589 = vmatprep.mubr.bf16.mxu0 0
          %1590 = vmatmul.mubr.bf16.gmra.mrb[0].mxu0 %v1407
          %v1591 = vpop.f32.mrb[0].mxu0
          %v1592 = vadd.f32 0.0, %v1591
          %v1593 = vpop.f32.mrb[0].mxu0
          %v1594 = vpop.f32.mrb[0].mxu0
          %v1595 = vadd.f32 0.0, %v1594
          %v1596 = vpop.f32.mrb[0].mxu0
          %1597 = vmatprep.mubr.bf16.mxu0 0
          %1598 = vmatmul.mubr.bf16.gmra.mrb[0].mxu0 %v1408
          %v1599 = vpop.f32.mrb[0].mxu0
          %v1600 = vadd.f32 0.0, %v1599
          %v1601 = vpop.f32.mrb[0].mxu0
          %v1602 = vpop.f32.mrb[0].mxu0
          %v1603 = vadd.f32 0.0, %v1602
          %v1604 = vpop.f32.mrb[0].mxu0
          %1605 = vmatprep.mubr.bf16.mxu0 0
          %1606 = vmatmul.mubr.bf16.gmra.mrb[0].mxu0 %v1409
          %v1607 = vpop.f32.mrb[0].mxu0
          %v1608 = vadd.f32 0.0, %v1607
          %v1609 = vpop.f32.mrb[0].mxu0
          %v1610 = vpop.f32.mrb[0].mxu0
          %v1611 = vadd.f32 0.0, %v1610
          %v1612 = vpop.f32.mrb[0].mxu0
          %1613 = vmatprep.mubr.bf16.mxu0 0
          %1614 = vmatmul.mubr.bf16.gmra.mrb[0].mxu0 %v1410
          %v1615 = vpop.f32.mrb[0].mxu0
          %v1616 = vadd.f32 0.0, %v1615
          %v1617 = vpop.f32.mrb[0].mxu0
          %v1618 = vpop.f32.mrb[0].mxu0
          %v1619 = vadd.f32 0.0, %v1618
          %v1620 = vpop.f32.mrb[0].mxu0
          %1621 = vmatprep.mubr.bf16.mxu0 0
          %1622 = vmatmul.mubr.bf16.gmra.mrb[0].mxu0 %v1411
          %v1623 = vpop.f32.mrb[0].mxu0
          %v1624 = vadd.f32 0.0, %v1623
          %v1625 = vpop.f32.mrb[0].mxu0
          %v1626 = vpop.f32.mrb[0].mxu0
          %v1627 = vadd.f32 0.0, %v1626
          %v1628 = vpop.f32.mrb[0].mxu0
          %1629 = vmatprep.mubr.bf16.mxu0 0
          %1630 = vmatmul.mubr.bf16.gmra.mrb[0].mxu0 %v1412
          %v1631 = vpop.f32.mrb[0].mxu0
          %v1632 = vadd.f32 0.0, %v1631
          %v1633 = vpop.f32.mrb[0].mxu0
          %v1634 = vpop.f32.mrb[0].mxu0
          %v1635 = vadd.f32 0.0, %v1634
          %v1636 = vpop.f32.mrb[0].mxu0
          %1637 = vdwg.mxu0
          %v1670 = vunpack.c.l.b16 %v897
          %v1671 = vunpack.c.l.b16 %v898
          %v1672 = vunpack.c.l.b16 %v899
          %v1673 = vunpack.c.l.b16 %v900
          %v1674 = vunpack.c.l.b16 %v901
          %v1675 = vunpack.c.l.b16 %v902
          %v1676 = vunpack.c.l.b16 %v903
          %v1677 = vunpack.c.l.b16 %v904
          %v1678 = vunpack.c.l.b16 %v905
          %v1679 = vunpack.c.l.b16 %v906
          %v1680 = vunpack.c.l.b16 %v907
          %v1681 = vunpack.c.l.b16 %v908
          %v1682 = vunpack.c.l.b16 %v909
          %v1683 = vunpack.c.l.b16 %v910
          %v1684 = vunpack.c.l.b16 %v911
          %v1685 = vunpack.c.l.b16 %v912
          %v1686 = vunpack.c.l.b16 %v913
          %v1687 = vunpack.c.l.b16 %v914
          %v1688 = vunpack.c.l.b16 %v915
          %v1689 = vunpack.c.l.b16 %v916
          %v1690 = vunpack.c.l.b16 %v917
          %v1691 = vunpack.c.l.b16 %v918
          %v1692 = vunpack.c.l.b16 %v919
          %v1693 = vunpack.c.l.b16 %v920
          %v1694 = vunpack.c.l.b16 %v921
          %v1695 = vunpack.c.l.b16 %v922
          %v1696 = vunpack.c.l.b16 %v923
          %v1697 = vunpack.c.l.b16 %v924
          %v1698 = vunpack.c.l.b16 %v925
          %v1699 = vunpack.c.l.b16 %v926
          %v1700 = vunpack.c.l.b16 %v927
          %v1701 = vunpack.c.l.b16 %v928
          %v1702 = vpack.c.b16 %v1671, %v1670
          %v1703 = vpack.c.b16 %v1673, %v1672
          %v1704 = vpack.c.b16 %v1675, %v1674
          %v1705 = vpack.c.b16 %v1677, %v1676
          %v1706 = vpack.c.b16 %v1679, %v1678
          %v1707 = vpack.c.b16 %v1681, %v1680
          %v1708 = vpack.c.b16 %v1683, %v1682
          %v1709 = vpack.c.b16 %v1685, %v1684
          %v1710 = vpack.c.b16 %v1687, %v1686
          %v1711 = vpack.c.b16 %v1689, %v1688
          %v1712 = vpack.c.b16 %v1691, %v1690
          %v1713 = vpack.c.b16 %v1693, %v1692
          %v1714 = vpack.c.b16 %v1695, %v1694
          %v1715 = vpack.c.b16 %v1697, %v1696
          %v1716 = vpack.c.b16 %v1699, %v1698
          %v1717 = vpack.c.b16 %v1701, %v1700
          %v1750 = vunpack.c.l.b16 %v929
          %v1751 = vunpack.c.l.b16 %v930
          %v1752 = vunpack.c.l.b16 %v931
          %v1753 = vunpack.c.l.b16 %v932
          %v1754 = vunpack.c.l.b16 %v933
          %v1755 = vunpack.c.l.b16 %v934
          %v1756 = vunpack.c.l.b16 %v935
          %v1757 = vunpack.c.l.b16 %v936
          %v1758 = vunpack.c.l.b16 %v937
          %v1759 = vunpack.c.l.b16 %v938
          %v1760 = vunpack.c.l.b16 %v939
          %v1761 = vunpack.c.l.b16 %v940
          %v1762 = vunpack.c.l.b16 %v941
          %v1763 = vunpack.c.l.b16 %v942
          %v1764 = vunpack.c.l.b16 %v943
          %v1765 = vunpack.c.l.b16 %v944
          %v1766 = vpack.c.b16 %v1751, %v1750
          %v1767 = vpack.c.b16 %v1753, %v1752
          %v1768 = vpack.c.b16 %v1755, %v1754
          %v1769 = vpack.c.b16 %v1757, %v1756
          %v1770 = vpack.c.b16 %v1759, %v1758
          %v1771 = vpack.c.b16 %v1761, %v1760
          %v1772 = vpack.c.b16 %v1763, %v1762
          %v1773 = vpack.c.b16 %v1765, %v1764
          %1782 = vmatprep.subr.bf16.mxu0 0
          %1783 = vmatpush1.bf16.msra.mxu0 %v1766
          %1784 = vmatprep.subr.bf16.mxu0 0
          %1785 = vmatpush1.bf16.msra.mxu0 %v1767
          %1786 = vmatprep.subr.bf16.mxu0 0
          %1787 = vmatpush1.bf16.msra.mxu0 %v1768
          %1788 = vmatprep.subr.bf16.mxu0 0
          %1789 = vmatpush1.bf16.msra.mxu0 %v1769
          %1790 = vmatprep.subr.bf16.mxu0 0
          %1791 = vmatpush1.bf16.msra.mxu0 %v1770
          %1792 = vmatprep.subr.bf16.mxu0 0
          %1793 = vmatpush1.bf16.msra.mxu0 %v1771
          %1794 = vmatprep.subr.bf16.mxu0 0
          %1795 = vmatpush1.bf16.msra.mxu0 %v1772
          %1796 = vmatprep.subr.bf16.mxu0 0
          %1797 = vmatpush1.bf16.msra.mxu0 %v1773
          %1798 = vmatprep.subr.bf16.mxu0 0
          %1799 = vmatpush1.bf16.msra.mxu0 0
          %1800 = vmatprep.subr.bf16.mxu0 0
          %1801 = vmatpush1.bf16.msra.mxu0 0
          %1802 = vmatprep.subr.bf16.mxu0 0
          %1803 = vmatpush1.bf16.msra.mxu0 0
          %1804 = vmatprep.subr.bf16.mxu0 0
          %1805 = vmatpush1.bf16.msra.mxu0 0
          %1806 = vmatprep.subr.bf16.mxu0 0
          %1807 = vmatpush1.bf16.msra.mxu0 0
          %1808 = vmatprep.subr.bf16.mxu0 0
          %1809 = vmatpush1.bf16.msra.mxu0 0
          %1810 = vmatprep.subr.bf16.mxu0 0
          %1811 = vmatpush1.bf16.msra.mxu0 0
          %1812 = vmatprep.subr.bf16.mxu0 0
          %1813 = vmatpush1.bf16.msra.mxu0 0
          %1814 = vmatprep.mubr.bf16.mxu0 0
          %1815 = vmatmul.mubr.bf16.gmra.mrb[0].mxu0 %v1702
          %v1816 = vpop.f32.mrb[0].mxu0
          %v1817 = vadd.f32 %v1512, %v1816
          %v1818 = vpop.f32.mrb[0].mxu0
          %v1819 = vpop.f32.mrb[0].mxu0
          %v1820 = vadd.f32 %v1515, %v1819
          %v1821 = vpop.f32.mrb[0].mxu0
          %1822 = vmatprep.mubr.bf16.mxu0 0
          %1823 = vmatmul.mubr.bf16.gmra.mrb[0].mxu0 %v1703
          %v1824 = vpop.f32.mrb[0].mxu0
          %v1825 = vadd.f32 %v1520, %v1824
          %v1826 = vpop.f32.mrb[0].mxu0
          %v1827 = vpop.f32.mrb[0].mxu0
          %v1828 = vadd.f32 %v1523, %v1827
          %v1829 = vpop.f32.mrb[0].mxu0
          %1830 = vmatprep.mubr.bf16.mxu0 0
          %1831 = vmatmul.mubr.bf16.gmra.mrb[0].mxu0 %v1704
          %v1832 = vpop.f32.mrb[0].mxu0
          %v1833 = vadd.f32 %v1528, %v1832
          %v1834 = vpop.f32.mrb[0].mxu0
          %v1835 = vpop.f32.mrb[0].mxu0
          %v1836 = vadd.f32 %v1531, %v1835
          %v1837 = vpop.f32.mrb[0].mxu0
          %1838 = vmatprep.mubr.bf16.mxu0 0
          %1839 = vmatmul.mubr.bf16.gmra.mrb[0].mxu0 %v1705
          %v1840 = vpop.f32.mrb[0].mxu0
          %v1841 = vadd.f32 %v1536, %v1840
          %v1842 = vpop.f32.mrb[0].mxu0
          %v1843 = vpop.f32.mrb[0].mxu0
          %v1844 = vadd.f32 %v1539, %v1843
          %v1845 = vpop.f32.mrb[0].mxu0
          %1846 = vmatprep.mubr.bf16.mxu0 0
          %1847 = vmatmul.mubr.bf16.gmra.mrb[0].mxu0 %v1706
          %v1848 = vpop.f32.mrb[0].mxu0
          %v1849 = vadd.f32 %v1544, %v1848
          %v1850 = vpop.f32.mrb[0].mxu0
          %v1851 = vpop.f32.mrb[0].mxu0
          %v1852 = vadd.f32 %v1547, %v1851
          %v1853 = vpop.f32.mrb[0].mxu0
          %1854 = vmatprep.mubr.bf16.mxu0 0
          %1855 = vmatmul.mubr.bf16.gmra.mrb[0].mxu0 %v1707
          %v1856 = vpop.f32.mrb[0].mxu0
          %v1857 = vadd.f32 %v1552, %v1856
          %v1858 = vpop.f32.mrb[0].mxu0
          %v1859 = vpop.f32.mrb[0].mxu0
          %v1860 = vadd.f32 %v1555, %v1859
          %v1861 = vpop.f32.mrb[0].mxu0
          %1862 = vmatprep.mubr.bf16.mxu0 0
          %1863 = vmatmul.mubr.bf16.gmra.mrb[0].mxu0 %v1708
          %v1864 = vpop.f32.mrb[0].mxu0
          %v1865 = vadd.f32 %v1560, %v1864
          %v1866 = vpop.f32.mrb[0].mxu0
          %v1867 = vpop.f32.mrb[0].mxu0
          %v1868 = vadd.f32 %v1563, %v1867
          %v1869 = vpop.f32.mrb[0].mxu0
          %1870 = vmatprep.mubr.bf16.mxu0 0
          %1871 = vmatmul.mubr.bf16.gmra.mrb[0].mxu0 %v1709
          %v1872 = vpop.f32.mrb[0].mxu0
          %v1873 = vadd.f32 %v1568, %v1872
          %v1874 = vpop.f32.mrb[0].mxu0
          %v1875 = vpop.f32.mrb[0].mxu0
          %v1876 = vadd.f32 %v1571, %v1875
          %v1877 = vpop.f32.mrb[0].mxu0
          %1878 = vmatprep.mubr.bf16.mxu0 0
          %1879 = vmatmul.mubr.bf16.gmra.mrb[0].mxu0 %v1710
          %v1880 = vpop.f32.mrb[0].mxu0
          %v1881 = vadd.f32 %v1576, %v1880
          %v1882 = vpop.f32.mrb[0].mxu0
          %v1883 = vpop.f32.mrb[0].mxu0
          %v1884 = vadd.f32 %v1579, %v1883
          %v1885 = vpop.f32.mrb[0].mxu0
          %1886 = vmatprep.mubr.bf16.mxu0 0
          %1887 = vmatmul.mubr.bf16.gmra.mrb[0].mxu0 %v1711
          %v1888 = vpop.f32.mrb[0].mxu0
          %v1889 = vadd.f32 %v1584, %v1888
          %v1890 = vpop.f32.mrb[0].mxu0
          %v1891 = vpop.f32.mrb[0].mxu0
          %v1892 = vadd.f32 %v1587, %v1891
          %v1893 = vpop.f32.mrb[0].mxu0
          %1894 = vmatprep.mubr.bf16.mxu0 0
          %1895 = vmatmul.mubr.bf16.gmra.mrb[0].mxu0 %v1712
          %v1896 = vpop.f32.mrb[0].mxu0
          %v1897 = vadd.f32 %v1592, %v1896
          %v1898 = vpop.f32.mrb[0].mxu0
          %v1899 = vpop.f32.mrb[0].mxu0
          %v1900 = vadd.f32 %v1595, %v1899
          %v1901 = vpop.f32.mrb[0].mxu0
          %1902 = vmatprep.mubr.bf16.mxu0 0
          %1903 = vmatmul.mubr.bf16.gmra.mrb[0].mxu0 %v1713
          %v1904 = vpop.f32.mrb[0].mxu0
          %v1905 = vadd.f32 %v1600, %v1904
          %v1906 = vpop.f32.mrb[0].mxu0
          %v1907 = vpop.f32.mrb[0].mxu0
          %v1908 = vadd.f32 %v1603, %v1907
          %v1909 = vpop.f32.mrb[0].mxu0
          %1910 = vmatprep.mubr.bf16.mxu0 0
          %1911 = vmatmul.mubr.bf16.gmra.mrb[0].mxu0 %v1714
          %v1912 = vpop.f32.mrb[0].mxu0
          %v1913 = vadd.f32 %v1608, %v1912
          %v1914 = vpop.f32.mrb[0].mxu0
          %v1915 = vpop.f32.mrb[0].mxu0
          %v1916 = vadd.f32 %v1611, %v1915
          %v1917 = vpop.f32.mrb[0].mxu0
          %1918 = vmatprep.mubr.bf16.mxu0 0
          %1919 = vmatmul.mubr.bf16.gmra.mrb[0].mxu0 %v1715
          %v1920 = vpop.f32.mrb[0].mxu0
          %v1921 = vadd.f32 %v1616, %v1920
          %v1922 = vpop.f32.mrb[0].mxu0
          %v1923 = vpop.f32.mrb[0].mxu0
          %v1924 = vadd.f32 %v1619, %v1923
          %v1925 = vpop.f32.mrb[0].mxu0
          %1926 = vmatprep.mubr.bf16.mxu0 0
          %1927 = vmatmul.mubr.bf16.gmra.mrb[0].mxu0 %v1716
          %v1928 = vpop.f32.mrb[0].mxu0
          %v1929 = vadd.f32 %v1624, %v1928
          %v1930 = vpop.f32.mrb[0].mxu0
          %v1931 = vpop.f32.mrb[0].mxu0
          %v1932 = vadd.f32 %v1627, %v1931
          %v1933 = vpop.f32.mrb[0].mxu0
          %1934 = vmatprep.mubr.bf16.mxu0 0
          %1935 = vmatmul.mubr.bf16.gmra.mrb[0].mxu0 %v1717
          %v1936 = vpop.f32.mrb[0].mxu0
          %v1937 = vadd.f32 %v1632, %v1936
          %v1938 = vpop.f32.mrb[0].mxu0
          %v1939 = vpop.f32.mrb[0].mxu0
          %v1940 = vadd.f32 %v1635, %v1939
          %v1941 = vpop.f32.mrb[0].mxu0
          %1942 = vdwg.mxu0
          %v1943 = vld [vmem:[#allocation2] sm:$0xe]
          %v1944 = vld [vmem:[#allocation2 + $0xc] sm:$0xe]
          %v1945 = vld [vmem:[#allocation2 + $0x18] sm:$0xe]
          %v1946 = vld [vmem:[#allocation2 + $0x24] sm:$0xe]
          %v1947 = vld [vmem:[#allocation2 + $0x30] sm:$0xe]
          %v1948 = vld [vmem:[#allocation2 + $0x3c] sm:$0xe]
          %v1949 = vld [vmem:[#allocation2 + $0x48] sm:$0xe]
          %v1950 = vld [vmem:[#allocation2 + $0x54] sm:$0xe]
          %v1951 = vld [vmem:[#allocation2 + $0x60] sm:$0xe]
          %v1952 = vld [vmem:[#allocation2 + $0x6c] sm:$0xe]
          %v1953 = vld [vmem:[#allocation2 + $0x78] sm:$0xe]
          %v1954 = vld [vmem:[#allocation2 + $0x84] sm:$0xe]
          %v1955 = vld [vmem:[#allocation2 + $0x90] sm:$0xe]
          %v1956 = vld [vmem:[#allocation2 + $0x9c] sm:$0xe]
          %v1957 = vld [vmem:[#allocation2 + $0xa8] sm:$0xe]
          %v1958 = vld [vmem:[#allocation2 + $0xb4] sm:$0xe]
          %vm1991 = vcmask 1042432
          %vm1992 = vcmask 1046532
          %vm1993 = vmor %vm1991, %vm1992
          %v1994 = vrot.slane %v1943, 5
          %v1995 = vrot.slane %v1994, 4
          %v1996 = vrot.slane %v898, 5
          %v1997 = vsel %vm1993, %v1995, %v1996
          %v1998 = vrot.slane %v1996, 4
          %v1999 = vrot.slane %v945, 5
          %v2000 = vsel %vm1993, %v1998, %v1999
          %v2001 = vrot.slane %v1944, 5
          %v2002 = vrot.slane %v2001, 4
          %v2003 = vrot.slane %v900, 5
          %v2004 = vsel %vm1993, %v2002, %v2003
          %v2005 = vrot.slane %v2003, 4
          %v2006 = vrot.slane %v946, 5
          %v2007 = vsel %vm1993, %v2005, %v2006
          %v2008 = vrot.slane %v1945, 5
          %v2009 = vrot.slane %v2008, 4
          %v2010 = vrot.slane %v902, 5
          %v2011 = vsel %vm1993, %v2009, %v2010
          %v2012 = vrot.slane %v2010, 4
          %v2013 = vrot.slane %v947, 5
          %v2014 = vsel %vm1993, %v2012, %v2013
          %v2015 = vrot.slane %v1946, 5
          %v2016 = vrot.slane %v2015, 4
          %v2017 = vrot.slane %v904, 5
          %v2018 = vsel %vm1993, %v2016, %v2017
          %v2019 = vrot.slane %v2017, 4
          %v2020 = vrot.slane %v948, 5
          %v2021 = vsel %vm1993, %v2019, %v2020
          %v2022 = vrot.slane %v1947, 5
          %v2023 = vrot.slane %v2022, 4
          %v2024 = vrot.slane %v906, 5
          %v2025 = vsel %vm1993, %v2023, %v2024
          %v2026 = vrot.slane %v2024, 4
          %v2027 = vrot.slane %v949, 5
          %v2028 = vsel %vm1993, %v2026, %v2027
          %v2029 = vrot.slane %v1948, 5
          %v2030 = vrot.slane %v2029, 4
          %v2031 = vrot.slane %v908, 5
          %v2032 = vsel %vm1993, %v2030, %v2031
          %v2033 = vrot.slane %v2031, 4
          %v2034 = vrot.slane %v950, 5
          %v2035 = vsel %vm1993, %v2033, %v2034
          %v2036 = vrot.slane %v1949, 5
          %v2037 = vrot.slane %v2036, 4
          %v2038 = vrot.slane %v910, 5
          %v2039 = vsel %vm1993, %v2037, %v2038
          %v2040 = vrot.slane %v2038, 4
          %v2041 = vrot.slane %v951, 5
          %v2042 = vsel %vm1993, %v2040, %v2041
          %v2043 = vrot.slane %v1950, 5
          %v2044 = vrot.slane %v2043, 4
          %v2045 = vrot.slane %v912, 5
          %v2046 = vsel %vm1993, %v2044, %v2045
          %v2047 = vrot.slane %v2045, 4
          %v2048 = vrot.slane %v952, 5
          %v2049 = vsel %vm1993, %v2047, %v2048
          %v2050 = vrot.slane %v1951, 5
          %v2051 = vrot.slane %v2050, 4
          %v2052 = vrot.slane %v914, 5
          %v2053 = vsel %vm1993, %v2051, %v2052
          %v2054 = vrot.slane %v2052, 4
          %v2055 = vrot.slane %v953, 5
          %v2056 = vsel %vm1993, %v2054, %v2055
          %v2057 = vrot.slane %v1952, 5
          %v2058 = vrot.slane %v2057, 4
          %v2059 = vrot.slane %v916, 5
          %v2060 = vsel %vm1993, %v2058, %v2059
          %v2061 = vrot.slane %v2059, 4
          %v2062 = vrot.slane %v954, 5
          %v2063 = vsel %vm1993, %v2061, %v2062
          %v2064 = vrot.slane %v1953, 5
          %v2065 = vrot.slane %v2064, 4
          %v2066 = vrot.slane %v918, 5
          %v2067 = vsel %vm1993, %v2065, %v2066
          %v2068 = vrot.slane %v2066, 4
          %v2069 = vrot.slane %v955, 5
          %v2070 = vsel %vm1993, %v2068, %v2069
          %v2071 = vrot.slane %v1954, 5
          %v2072 = vrot.slane %v2071, 4
          %v2073 = vrot.slane %v920, 5
          %v2074 = vsel %vm1993, %v2072, %v2073
          %v2075 = vrot.slane %v2073, 4
          %v2076 = vrot.slane %v956, 5
          %v2077 = vsel %vm1993, %v2075, %v2076
          %v2078 = vrot.slane %v1955, 5
          %v2079 = vrot.slane %v2078, 4
          %v2080 = vrot.slane %v922, 5
          %v2081 = vsel %vm1993, %v2079, %v2080
          %v2082 = vrot.slane %v2080, 4
          %v2083 = vrot.slane %v957, 5
          %v2084 = vsel %vm1993, %v2082, %v2083
          %v2085 = vrot.slane %v1956, 5
          %v2086 = vrot.slane %v2085, 4
          %v2087 = vrot.slane %v924, 5
          %v2088 = vsel %vm1993, %v2086, %v2087
          %v2089 = vrot.slane %v2087, 4
          %v2090 = vrot.slane %v958, 5
          %v2091 = vsel %vm1993, %v2089, %v2090
          %v2092 = vrot.slane %v1957, 5
          %v2093 = vrot.slane %v2092, 4
          %v2094 = vrot.slane %v926, 5
          %v2095 = vsel %vm1993, %v2093, %v2094
          %v2096 = vrot.slane %v2094, 4
          %v2097 = vrot.slane %v959, 5
          %v2098 = vsel %vm1993, %v2096, %v2097
          %v2099 = vrot.slane %v1958, 5
          %v2100 = vrot.slane %v2099, 4
          %v2101 = vrot.slane %v928, 5
          %v2102 = vsel %vm1993, %v2100, %v2101
          %v2103 = vrot.slane %v2101, 4
          %v2104 = vrot.slane %v960, 5
          %v2105 = vsel %vm1993, %v2103, %v2104
          %s2106 = scalar_lea.vmem [#allocation7], 128
          %v2107 = vld [vmem:[%s2106] sm:$0xf]
          %v2108 = vld [vmem:[%s2106 + $0x4] sm:$0xf]
          %v2109 = vld [vmem:[%s2106 + $0x8] sm:$0xf]
          %v2110 = vld [vmem:[%s2106 + $0xc] sm:$0xf]
          %v2111 = vld [vmem:[%s2106 + $0x10] sm:$0xf]
          %v2112 = vld [vmem:[%s2106 + $0x14] sm:$0xf]
          %v2113 = vld [vmem:[%s2106 + $0x18] sm:$0xf]
          %v2114 = vld [vmem:[%s2106 + $0x1c] sm:$0xf]
          %v2115 = vld [vmem:[%s2106 + $0x20] sm:$0xf]
          %v2116 = vld [vmem:[%s2106 + $0x24] sm:$0xf]
          %v2117 = vld [vmem:[%s2106 + $0x28] sm:$0xf]
          %v2118 = vld [vmem:[%s2106 + $0x2c] sm:$0xf]
          %v2119 = vld [vmem:[%s2106 + $0x30] sm:$0xf]
          %v2120 = vld [vmem:[%s2106 + $0x34] sm:$0xf]
          %v2121 = vld [vmem:[%s2106 + $0x38] sm:$0xf]
          %v2122 = vld [vmem:[%s2106 + $0x3c] sm:$0xf]
          %v2123 = vunpack.c.l.b16 %v1997
          %v2124 = vunpack.c.l.b16 %v2000
          %v2125 = vunpack.c.l.b16 %v2004
          %v2126 = vunpack.c.l.b16 %v2007
          %v2127 = vunpack.c.l.b16 %v2011
          %v2128 = vunpack.c.l.b16 %v2014
          %v2129 = vunpack.c.l.b16 %v2018
          %v2130 = vunpack.c.l.b16 %v2021
          %v2131 = vunpack.c.l.b16 %v2025
          %v2132 = vunpack.c.l.b16 %v2028
          %v2133 = vunpack.c.l.b16 %v2032
          %v2134 = vunpack.c.l.b16 %v2035
          %v2135 = vunpack.c.l.b16 %v2039
          %v2136 = vunpack.c.l.b16 %v2042
          %v2137 = vunpack.c.l.b16 %v2046
          %v2138 = vunpack.c.l.b16 %v2049
          %v2139 = vunpack.c.l.b16 %v2053
          %v2140 = vunpack.c.l.b16 %v2056
          %v2141 = vunpack.c.l.b16 %v2060
          %v2142 = vunpack.c.l.b16 %v2063
          %v2143 = vunpack.c.l.b16 %v2067
          %v2144 = vunpack.c.l.b16 %v2070
          %v2145 = vunpack.c.l.b16 %v2074
          %v2146 = vunpack.c.l.b16 %v2077
          %v2147 = vunpack.c.l.b16 %v2081
          %v2148 = vunpack.c.l.b16 %v2084
          %v2149 = vunpack.c.l.b16 %v2088
          %v2150 = vunpack.c.l.b16 %v2091
          %v2151 = vunpack.c.l.b16 %v2095
          %v2152 = vunpack.c.l.b16 %v2098
          %v2153 = vunpack.c.l.b16 %v2102
          %v2154 = vunpack.c.l.b16 %v2105
          %v2155 = vpack.c.b16 %v2124, %v2123
          %v2156 = vpack.c.b16 %v2126, %v2125
          %v2157 = vpack.c.b16 %v2128, %v2127
          %v2158 = vpack.c.b16 %v2130, %v2129
          %v2159 = vpack.c.b16 %v2132, %v2131
          %v2160 = vpack.c.b16 %v2134, %v2133
          %v2161 = vpack.c.b16 %v2136, %v2135
          %v2162 = vpack.c.b16 %v2138, %v2137
          %v2163 = vpack.c.b16 %v2140, %v2139
          %v2164 = vpack.c.b16 %v2142, %v2141
          %v2165 = vpack.c.b16 %v2144, %v2143
          %v2166 = vpack.c.b16 %v2146, %v2145
          %v2167 = vpack.c.b16 %v2148, %v2147
          %v2168 = vpack.c.b16 %v2150, %v2149
          %v2169 = vpack.c.b16 %v2152, %v2151
          %v2170 = vpack.c.b16 %v2154, %v2153
          %v2203 = vunpack.c.l.b16 %v2107
          %v2204 = vunpack.c.l.b16 %v2108
          %v2205 = vunpack.c.l.b16 %v2109
          %v2206 = vunpack.c.l.b16 %v2110
          %v2207 = vunpack.c.l.b16 %v2111
          %v2208 = vunpack.c.l.b16 %v2112
          %v2209 = vunpack.c.l.b16 %v2113
          %v2210 = vunpack.c.l.b16 %v2114
          %v2211 = vunpack.c.l.b16 %v2115
          %v2212 = vunpack.c.l.b16 %v2116
          %v2213 = vunpack.c.l.b16 %v2117
          %v2214 = vunpack.c.l.b16 %v2118
          %v2215 = vunpack.c.l.b16 %v2119
          %v2216 = vunpack.c.l.b16 %v2120
          %v2217 = vunpack.c.l.b16 %v2121
          %v2218 = vunpack.c.l.b16 %v2122
          %v2219 = vpack.c.b16 %v2204, %v2203
          %v2220 = vpack.c.b16 %v2206, %v2205
          %v2221 = vpack.c.b16 %v2208, %v2207
          %v2222 = vpack.c.b16 %v2210, %v2209
          %v2223 = vpack.c.b16 %v2212, %v2211
          %v2224 = vpack.c.b16 %v2214, %v2213
          %v2225 = vpack.c.b16 %v2216, %v2215
          %v2226 = vpack.c.b16 %v2218, %v2217
          %2235 = vmatprep.subr.bf16.mxu0 0
          %2236 = vmatpush1.bf16.msra.mxu0 %v2219
          %2237 = vmatprep.subr.bf16.mxu0 0
          %2238 = vmatpush1.bf16.msra.mxu0 %v2220
          %2239 = vmatprep.subr.bf16.mxu0 0
          %2240 = vmatpush1.bf16.msra.mxu0 %v2221
          %2241 = vmatprep.subr.bf16.mxu0 0
          %2242 = vmatpush1.bf16.msra.mxu0 %v2222
          %2243 = vmatprep.subr.bf16.mxu0 0
          %2244 = vmatpush1.bf16.msra.mxu0 %v2223
          %2245 = vmatprep.subr.bf16.mxu0 0
          %2246 = vmatpush1.bf16.msra.mxu0 %v2224
          %2247 = vmatprep.subr.bf16.mxu0 0
          %2248 = vmatpush1.bf16.msra.mxu0 %v2225
          %2249 = vmatprep.subr.bf16.mxu0 0
          %2250 = vmatpush1.bf16.msra.mxu0 %v2226
          %2251 = vmatprep.subr.bf16.mxu0 0
          %2252 = vmatpush1.bf16.msra.mxu0 0
          %2253 = vmatprep.subr.bf16.mxu0 0
          %2254 = vmatpush1.bf16.msra.mxu0 0
          %2255 = vmatprep.subr.bf16.mxu0 0
          %2256 = vmatpush1.bf16.msra.mxu0 0
          %2257 = vmatprep.subr.bf16.mxu0 0
          %2258 = vmatpush1.bf16.msra.mxu0 0
          %2259 = vmatprep.subr.bf16.mxu0 0
          %2260 = vmatpush1.bf16.msra.mxu0 0
          %2261 = vmatprep.subr.bf16.mxu0 0
          %2262 = vmatpush1.bf16.msra.mxu0 0
          %2263 = vmatprep.subr.bf16.mxu0 0
          %2264 = vmatpush1.bf16.msra.mxu0 0
          %2265 = vmatprep.subr.bf16.mxu0 0
          %2266 = vmatpush1.bf16.msra.mxu0 0
          %2267 = vmatprep.mubr.bf16.mxu0 0
          %2268 = vmatmul.mubr.bf16.gmra.mrb[0].mxu0 %v2155
          %v2269 = vpop.f32.mrb[0].mxu0
          %v2270 = vadd.f32 0.0, %v2269
          %v2271 = vpop.f32.mrb[0].mxu0
          %v2272 = vpop.f32.mrb[0].mxu0
          %v2273 = vadd.f32 0.0, %v2272
          %v2274 = vpop.f32.mrb[0].mxu0
          %2275 = vmatprep.mubr.bf16.mxu0 0
          %2276 = vmatmul.mubr.bf16.gmra.mrb[0].mxu0 %v2156
          %v2277 = vpop.f32.mrb[0].mxu0
          %v2278 = vadd.f32 0.0, %v2277
          %v2279 = vpop.f32.mrb[0].mxu0
          %v2280 = vpop.f32.mrb[0].mxu0
          %v2281 = vadd.f32 0.0, %v2280
          %v2282 = vpop.f32.mrb[0].mxu0
          %2283 = vmatprep.mubr.bf16.mxu0 0
          %2284 = vmatmul.mubr.bf16.gmra.mrb[0].mxu0 %v2157
          %v2285 = vpop.f32.mrb[0].mxu0
          %v2286 = vadd.f32 0.0, %v2285
          %v2287 = vpop.f32.mrb[0].mxu0
          %v2288 = vpop.f32.mrb[0].mxu0
          %v2289 = vadd.f32 0.0, %v2288
          %v2290 = vpop.f32.mrb[0].mxu0
          %2291 = vmatprep.mubr.bf16.mxu0 0
          %2292 = vmatmul.mubr.bf16.gmra.mrb[0].mxu0 %v2158
          %v2293 = vpop.f32.mrb[0].mxu0
          %v2294 = vadd.f32 0.0, %v2293
          %v2295 = vpop.f32.mrb[0].mxu0
          %v2296 = vpop.f32.mrb[0].mxu0
          %v2297 = vadd.f32 0.0, %v2296
          %v2298 = vpop.f32.mrb[0].mxu0
          %2299 = vmatprep.mubr.bf16.mxu0 0
          %2300 = vmatmul.mubr.bf16.gmra.mrb[0].mxu0 %v2159
          %v2301 = vpop.f32.mrb[0].mxu0
          %v2302 = vadd.f32 0.0, %v2301
          %v2303 = vpop.f32.mrb[0].mxu0
          %v2304 = vpop.f32.mrb[0].mxu0
          %v2305 = vadd.f32 0.0, %v2304
          %v2306 = vpop.f32.mrb[0].mxu0
          %2307 = vmatprep.mubr.bf16.mxu0 0
          %2308 = vmatmul.mubr.bf16.gmra.mrb[0].mxu0 %v2160
          %v2309 = vpop.f32.mrb[0].mxu0
          %v2310 = vadd.f32 0.0, %v2309
          %v2311 = vpop.f32.mrb[0].mxu0
          %v2312 = vpop.f32.mrb[0].mxu0
          %v2313 = vadd.f32 0.0, %v2312
          %v2314 = vpop.f32.mrb[0].mxu0
          %2315 = vmatprep.mubr.bf16.mxu0 0
          %2316 = vmatmul.mubr.bf16.gmra.mrb[0].mxu0 %v2161
          %v2317 = vpop.f32.mrb[0].mxu0
          %v2318 = vadd.f32 0.0, %v2317
          %v2319 = vpop.f32.mrb[0].mxu0
          %v2320 = vpop.f32.mrb[0].mxu0
          %v2321 = vadd.f32 0.0, %v2320
          %v2322 = vpop.f32.mrb[0].mxu0
          %2323 = vmatprep.mubr.bf16.mxu0 0
          %2324 = vmatmul.mubr.bf16.gmra.mrb[0].mxu0 %v2162
          %v2325 = vpop.f32.mrb[0].mxu0
          %v2326 = vadd.f32 0.0, %v2325
          %v2327 = vpop.f32.mrb[0].mxu0
          %v2328 = vpop.f32.mrb[0].mxu0
          %v2329 = vadd.f32 0.0, %v2328
          %v2330 = vpop.f32.mrb[0].mxu0
          %2331 = vmatprep.mubr.bf16.mxu0 0
          %2332 = vmatmul.mubr.bf16.gmra.mrb[0].mxu0 %v2163
          %v2333 = vpop.f32.mrb[0].mxu0
          %v2334 = vadd.f32 0.0, %v2333
          %v2335 = vpop.f32.mrb[0].mxu0
          %v2336 = vpop.f32.mrb[0].mxu0
          %v2337 = vadd.f32 0.0, %v2336
          %v2338 = vpop.f32.mrb[0].mxu0
          %2339 = vmatprep.mubr.bf16.mxu0 0
          %2340 = vmatmul.mubr.bf16.gmra.mrb[0].mxu0 %v2164
          %v2341 = vpop.f32.mrb[0].mxu0
          %v2342 = vadd.f32 0.0, %v2341
          %v2343 = vpop.f32.mrb[0].mxu0
          %v2344 = vpop.f32.mrb[0].mxu0
          %v2345 = vadd.f32 0.0, %v2344
          %v2346 = vpop.f32.mrb[0].mxu0
          %2347 = vmatprep.mubr.bf16.mxu0 0
          %2348 = vmatmul.mubr.bf16.gmra.mrb[0].mxu0 %v2165
          %v2349 = vpop.f32.mrb[0].mxu0
          %v2350 = vadd.f32 0.0, %v2349
          %v2351 = vpop.f32.mrb[0].mxu0
          %v2352 = vpop.f32.mrb[0].mxu0
          %v2353 = vadd.f32 0.0, %v2352
          %v2354 = vpop.f32.mrb[0].mxu0
          %2355 = vmatprep.mubr.bf16.mxu0 0
          %2356 = vmatmul.mubr.bf16.gmra.mrb[0].mxu0 %v2166
          %v2357 = vpop.f32.mrb[0].mxu0
          %v2358 = vadd.f32 0.0, %v2357
          %v2359 = vpop.f32.mrb[0].mxu0
          %v2360 = vpop.f32.mrb[0].mxu0
          %v2361 = vadd.f32 0.0, %v2360
          %v2362 = vpop.f32.mrb[0].mxu0
          %2363 = vmatprep.mubr.bf16.mxu0 0
          %2364 = vmatmul.mubr.bf16.gmra.mrb[0].mxu0 %v2167
          %v2365 = vpop.f32.mrb[0].mxu0
          %v2366 = vadd.f32 0.0, %v2365
          %v2367 = vpop.f32.mrb[0].mxu0
          %v2368 = vpop.f32.mrb[0].mxu0
          %v2369 = vadd.f32 0.0, %v2368
          %v2370 = vpop.f32.mrb[0].mxu0
          %2371 = vmatprep.mubr.bf16.mxu0 0
          %2372 = vmatmul.mubr.bf16.gmra.mrb[0].mxu0 %v2168
          %v2373 = vpop.f32.mrb[0].mxu0
          %v2374 = vadd.f32 0.0, %v2373
          %v2375 = vpop.f32.mrb[0].mxu0
          %v2376 = vpop.f32.mrb[0].mxu0
          %v2377 = vadd.f32 0.0, %v2376
          %v2378 = vpop.f32.mrb[0].mxu0
          %2379 = vmatprep.mubr.bf16.mxu0 0
          %2380 = vmatmul.mubr.bf16.gmra.mrb[0].mxu0 %v2169
          %v2381 = vpop.f32.mrb[0].mxu0
          %v2382 = vadd.f32 0.0, %v2381
          %v2383 = vpop.f32.mrb[0].mxu0
          %v2384 = vpop.f32.mrb[0].mxu0
          %v2385 = vadd.f32 0.0, %v2384
          %v2386 = vpop.f32.mrb[0].mxu0
          %2387 = vmatprep.mubr.bf16.mxu0 0
          %2388 = vmatmul.mubr.bf16.gmra.mrb[0].mxu0 %v2170
          %v2389 = vpop.f32.mrb[0].mxu0
          %v2390 = vadd.f32 0.0, %v2389
          %v2391 = vpop.f32.mrb[0].mxu0
          %v2392 = vpop.f32.mrb[0].mxu0
          %v2393 = vadd.f32 0.0, %v2392
          %v2394 = vpop.f32.mrb[0].mxu0
          %2395 = vdwg.mxu0
          %v2396 = vadd.f32 %v1817, %v2270
          %v2397 = vadd.f32 %v1820, %v2273
          %v2398 = vadd.f32 %v1825, %v2278
          %v2399 = vadd.f32 %v1828, %v2281
          %v2400 = vadd.f32 %v1833, %v2286
          %v2401 = vadd.f32 %v1836, %v2289
          %v2402 = vadd.f32 %v1841, %v2294
          %v2403 = vadd.f32 %v1844, %v2297
          %v2404 = vadd.f32 %v1849, %v2302
          %v2405 = vadd.f32 %v1852, %v2305
          %v2406 = vadd.f32 %v1857, %v2310
          %v2407 = vadd.f32 %v1860, %v2313
          %v2408 = vadd.f32 %v1865, %v2318
          %v2409 = vadd.f32 %v1868, %v2321
          %v2410 = vadd.f32 %v1873, %v2326
          %v2411 = vadd.f32 %v1876, %v2329
          %v2412 = vadd.f32 %v1881, %v2334
          %v2413 = vadd.f32 %v1884, %v2337
          %v2414 = vadd.f32 %v1889, %v2342
          %v2415 = vadd.f32 %v1892, %v2345
          %v2416 = vadd.f32 %v1897, %v2350
          %v2417 = vadd.f32 %v1900, %v2353
          %v2418 = vadd.f32 %v1905, %v2358
          %v2419 = vadd.f32 %v1908, %v2361
          %v2420 = vadd.f32 %v1913, %v2366
          %v2421 = vadd.f32 %v1916, %v2369
          %v2422 = vadd.f32 %v1921, %v2374
          %v2423 = vadd.f32 %v1924, %v2377
          %v2424 = vadd.f32 %v1929, %v2382
          %v2425 = vadd.f32 %v1932, %v2385
          %v2426 = vadd.f32 %v1937, %v2390
          %v2427 = vadd.f32 %v1940, %v2393
          %v2428 = vld [vmem:[%s359] sm:$0xf]
          %v2429 = vld [vmem:[%s359 + $0x4] sm:$0xf]
          %v2430 = vld [vmem:[%s359 + $0xc] sm:$0xf]
          %v2431 = vld [vmem:[%s359 + $0x10] sm:$0xf]
          %v2432 = vld [vmem:[%s359 + $0x18] sm:$0xf]
          %v2433 = vld [vmem:[%s359 + $0x1c] sm:$0xf]
          %v2434 = vld [vmem:[%s359 + $0x24] sm:$0xf]
          %v2435 = vld [vmem:[%s359 + $0x28] sm:$0xf]
          %v2436 = vld [vmem:[%s359 + $0x30] sm:$0xf]
          %v2437 = vld [vmem:[%s359 + $0x34] sm:$0xf]
          %v2438 = vld [vmem:[%s359 + $0x3c] sm:$0xf]
          %v2439 = vld [vmem:[%s359 + $0x40] sm:$0xf]
          %v2440 = vld [vmem:[%s359 + $0x48] sm:$0xf]
          %v2441 = vld [vmem:[%s359 + $0x4c] sm:$0xf]
          %v2442 = vld [vmem:[%s359 + $0x54] sm:$0xf]
          %v2443 = vld [vmem:[%s359 + $0x58] sm:$0xf]
          %v2444 = vld [vmem:[%s359 + $0x60] sm:$0xf]
          %v2445 = vld [vmem:[%s359 + $0x64] sm:$0xf]
          %v2446 = vld [vmem:[%s359 + $0x6c] sm:$0xf]
          %v2447 = vld [vmem:[%s359 + $0x70] sm:$0xf]
          %v2448 = vld [vmem:[%s359 + $0x78] sm:$0xf]
          %v2449 = vld [vmem:[%s359 + $0x7c] sm:$0xf]
          %v2450 = vld [vmem:[%s359 + $0x84] sm:$0xf]
          %v2451 = vld [vmem:[%s359 + $0x88] sm:$0xf]
          %v2452 = vld [vmem:[%s359 + $0x90] sm:$0xf]
          %v2453 = vld [vmem:[%s359 + $0x94] sm:$0xf]
          %v2454 = vld [vmem:[%s359 + $0x9c] sm:$0xf]
          %v2455 = vld [vmem:[%s359 + $0xa0] sm:$0xf]
          %v2456 = vld [vmem:[%s359 + $0xa8] sm:$0xf]
          %v2457 = vld [vmem:[%s359 + $0xac] sm:$0xf]
          %v2458 = vld [vmem:[%s359 + $0xb4] sm:$0xf]
          %v2459 = vld [vmem:[%s359 + $0xb8] sm:$0xf]
          %s2460 = scalar_lea.vmem [#allocation7], 192
          %v2461 = vld [vmem:[%s2460] sm:$0xf]
          %v2462 = vld [vmem:[%s2460 + $0x4] sm:$0xf]
          %v2463 = vld [vmem:[%s2460 + $0x8] sm:$0xf]
          %v2464 = vld [vmem:[%s2460 + $0xc] sm:$0xf]
          %v2465 = vld [vmem:[%s2460 + $0x10] sm:$0xf]
          %v2466 = vld [vmem:[%s2460 + $0x14] sm:$0xf]
          %v2467 = vld [vmem:[%s2460 + $0x18] sm:$0xf]
          %v2468 = vld [vmem:[%s2460 + $0x1c] sm:$0xf]
          %v2469 = vld [vmem:[%s2460 + $0x20] sm:$0xf]
          %v2470 = vld [vmem:[%s2460 + $0x24] sm:$0xf]
          %v2471 = vld [vmem:[%s2460 + $0x28] sm:$0xf]
          %v2472 = vld [vmem:[%s2460 + $0x2c] sm:$0xf]
          %v2473 = vld [vmem:[%s2460 + $0x30] sm:$0xf]
          %v2474 = vld [vmem:[%s2460 + $0x34] sm:$0xf]
          %v2475 = vld [vmem:[%s2460 + $0x38] sm:$0xf]
          %v2476 = vld [vmem:[%s2460 + $0x3c] sm:$0xf]
          %v2509 = vunpack.c.l.b16 %v2428
          %v2510 = vunpack.c.l.b16 %v2429
          %v2511 = vunpack.c.l.b16 %v2430
          %v2512 = vunpack.c.l.b16 %v2431
          %v2513 = vunpack.c.l.b16 %v2432
          %v2514 = vunpack.c.l.b16 %v2433
          %v2515 = vunpack.c.l.b16 %v2434
          %v2516 = vunpack.c.l.b16 %v2435
          %v2517 = vunpack.c.l.b16 %v2436
          %v2518 = vunpack.c.l.b16 %v2437
          %v2519 = vunpack.c.l.b16 %v2438
          %v2520 = vunpack.c.l.b16 %v2439
          %v2521 = vunpack.c.l.b16 %v2440
          %v2522 = vunpack.c.l.b16 %v2441
          %v2523 = vunpack.c.l.b16 %v2442
          %v2524 = vunpack.c.l.b16 %v2443
          %v2525 = vunpack.c.l.b16 %v2444
          %v2526 = vunpack.c.l.b16 %v2445
          %v2527 = vunpack.c.l.b16 %v2446
          %v2528 = vunpack.c.l.b16 %v2447
          %v2529 = vunpack.c.l.b16 %v2448
          %v2530 = vunpack.c.l.b16 %v2449
          %v2531 = vunpack.c.l.b16 %v2450
          %v2532 = vunpack.c.l.b16 %v2451
          %v2533 = vunpack.c.l.b16 %v2452
          %v2534 = vunpack.c.l.b16 %v2453
          %v2535 = vunpack.c.l.b16 %v2454
          %v2536 = vunpack.c.l.b16 %v2455
          %v2537 = vunpack.c.l.b16 %v2456
          %v2538 = vunpack.c.l.b16 %v2457
          %v2539 = vunpack.c.l.b16 %v2458
          %v2540 = vunpack.c.l.b16 %v2459
          %v2541 = vpack.c.b16 %v2510, %v2509
          %v2542 = vpack.c.b16 %v2512, %v2511
          %v2543 = vpack.c.b16 %v2514, %v2513
          %v2544 = vpack.c.b16 %v2516, %v2515
          %v2545 = vpack.c.b16 %v2518, %v2517
          %v2546 = vpack.c.b16 %v2520, %v2519
          %v2547 = vpack.c.b16 %v2522, %v2521
          %v2548 = vpack.c.b16 %v2524, %v2523
          %v2549 = vpack.c.b16 %v2526, %v2525
          %v2550 = vpack.c.b16 %v2528, %v2527
          %v2551 = vpack.c.b16 %v2530, %v2529
          %v2552 = vpack.c.b16 %v2532, %v2531
          %v2553 = vpack.c.b16 %v2534, %v2533
          %v2554 = vpack.c.b16 %v2536, %v2535
          %v2555 = vpack.c.b16 %v2538, %v2537
          %v2556 = vpack.c.b16 %v2540, %v2539
          %v2589 = vunpack.c.l.b16 %v2461
          %v2590 = vunpack.c.l.b16 %v2462
          %v2591 = vunpack.c.l.b16 %v2463
          %v2592 = vunpack.c.l.b16 %v2464
          %v2593 = vunpack.c.l.b16 %v2465
          %v2594 = vunpack.c.l.b16 %v2466
          %v2595 = vunpack.c.l.b16 %v2467
          %v2596 = vunpack.c.l.b16 %v2468
          %v2597 = vunpack.c.l.b16 %v2469
          %v2598 = vunpack.c.l.b16 %v2470
          %v2599 = vunpack.c.l.b16 %v2471
          %v2600 = vunpack.c.l.b16 %v2472
          %v2601 = vunpack.c.l.b16 %v2473
          %v2602 = vunpack.c.l.b16 %v2474
          %v2603 = vunpack.c.l.b16 %v2475
          %v2604 = vunpack.c.l.b16 %v2476
          %v2605 = vpack.c.b16 %v2590, %v2589
          %v2606 = vpack.c.b16 %v2592, %v2591
          %v2607 = vpack.c.b16 %v2594, %v2593
          %v2608 = vpack.c.b16 %v2596, %v2595
          %v2609 = vpack.c.b16 %v2598, %v2597
          %v2610 = vpack.c.b16 %v2600, %v2599
          %v2611 = vpack.c.b16 %v2602, %v2601
          %v2612 = vpack.c.b16 %v2604, %v2603
          %2621 = vmatprep.subr.bf16.mxu0 0
          %2622 = vmatpush1.bf16.msra.mxu0 %v2605
          %2623 = vmatprep.subr.bf16.mxu0 0
          %2624 = vmatpush1.bf16.msra.mxu0 %v2606
          %2625 = vmatprep.subr.bf16.mxu0 0
          %2626 = vmatpush1.bf16.msra.mxu0 %v2607
          %2627 = vmatprep.subr.bf16.mxu0 0
          %2628 = vmatpush1.bf16.msra.mxu0 %v2608
          %2629 = vmatprep.subr.bf16.mxu0 0
          %2630 = vmatpush1.bf16.msra.mxu0 %v2609
          %2631 = vmatprep.subr.bf16.mxu0 0
          %2632 = vmatpush1.bf16.msra.mxu0 %v2610
          %2633 = vmatprep.subr.bf16.mxu0 0
          %2634 = vmatpush1.bf16.msra.mxu0 %v2611
          %2635 = vmatprep.subr.bf16.mxu0 0
          %2636 = vmatpush1.bf16.msra.mxu0 %v2612
          %2637 = vmatprep.subr.bf16.mxu0 0
          %2638 = vmatpush1.bf16.msra.mxu0 0
          %2639 = vmatprep.subr.bf16.mxu0 0
          %2640 = vmatpush1.bf16.msra.mxu0 0
          %2641 = vmatprep.subr.bf16.mxu0 0
          %2642 = vmatpush1.bf16.msra.mxu0 0
          %2643 = vmatprep.subr.bf16.mxu0 0
          %2644 = vmatpush1.bf16.msra.mxu0 0
          %2645 = vmatprep.subr.bf16.mxu0 0
          %2646 = vmatpush1.bf16.msra.mxu0 0
          %2647 = vmatprep.subr.bf16.mxu0 0
          %2648 = vmatpush1.bf16.msra.mxu0 0
          %2649 = vmatprep.subr.bf16.mxu0 0
          %2650 = vmatpush1.bf16.msra.mxu0 0
          %2651 = vmatprep.subr.bf16.mxu0 0
          %2652 = vmatpush1.bf16.msra.mxu0 0
          %2653 = vmatprep.mubr.bf16.mxu0 0
          %2654 = vmatmul.mubr.bf16.gmra.mrb[0].mxu0 %v2541
          %v2655 = vpop.f32.mrb[0].mxu0
          %v2656 = vadd.f32 0.0, %v2655
          %v2657 = vpop.f32.mrb[0].mxu0
          %v2658 = vpop.f32.mrb[0].mxu0
          %v2659 = vadd.f32 0.0, %v2658
          %v2660 = vpop.f32.mrb[0].mxu0
          %2661 = vmatprep.mubr.bf16.mxu0 0
          %2662 = vmatmul.mubr.bf16.gmra.mrb[0].mxu0 %v2542
          %v2663 = vpop.f32.mrb[0].mxu0
          %v2664 = vadd.f32 0.0, %v2663
          %v2665 = vpop.f32.mrb[0].mxu0
          %v2666 = vpop.f32.mrb[0].mxu0
          %v2667 = vadd.f32 0.0, %v2666
          %v2668 = vpop.f32.mrb[0].mxu0
          %2669 = vmatprep.mubr.bf16.mxu0 0
          %2670 = vmatmul.mubr.bf16.gmra.mrb[0].mxu0 %v2543
          %v2671 = vpop.f32.mrb[0].mxu0
          %v2672 = vadd.f32 0.0, %v2671
          %v2673 = vpop.f32.mrb[0].mxu0
          %v2674 = vpop.f32.mrb[0].mxu0
          %v2675 = vadd.f32 0.0, %v2674
          %v2676 = vpop.f32.mrb[0].mxu0
          %2677 = vmatprep.mubr.bf16.mxu0 0
          %2678 = vmatmul.mubr.bf16.gmra.mrb[0].mxu0 %v2544
          %v2679 = vpop.f32.mrb[0].mxu0
          %v2680 = vadd.f32 0.0, %v2679
          %v2681 = vpop.f32.mrb[0].mxu0
          %v2682 = vpop.f32.mrb[0].mxu0
          %v2683 = vadd.f32 0.0, %v2682
          %v2684 = vpop.f32.mrb[0].mxu0
          %2685 = vmatprep.mubr.bf16.mxu0 0
          %2686 = vmatmul.mubr.bf16.gmra.mrb[0].mxu0 %v2545
          %v2687 = vpop.f32.mrb[0].mxu0
          %v2688 = vadd.f32 0.0, %v2687
          %v2689 = vpop.f32.mrb[0].mxu0
          %v2690 = vpop.f32.mrb[0].mxu0
          %v2691 = vadd.f32 0.0, %v2690
          %v2692 = vpop.f32.mrb[0].mxu0
          %2693 = vmatprep.mubr.bf16.mxu0 0
          %2694 = vmatmul.mubr.bf16.gmra.mrb[0].mxu0 %v2546
          %v2695 = vpop.f32.mrb[0].mxu0
          %v2696 = vadd.f32 0.0, %v2695
          %v2697 = vpop.f32.mrb[0].mxu0
          %v2698 = vpop.f32.mrb[0].mxu0
          %v2699 = vadd.f32 0.0, %v2698
          %v2700 = vpop.f32.mrb[0].mxu0
          %2701 = vmatprep.mubr.bf16.mxu0 0
          %2702 = vmatmul.mubr.bf16.gmra.mrb[0].mxu0 %v2547
          %v2703 = vpop.f32.mrb[0].mxu0
          %v2704 = vadd.f32 0.0, %v2703
          %v2705 = vpop.f32.mrb[0].mxu0
          %v2706 = vpop.f32.mrb[0].mxu0
          %v2707 = vadd.f32 0.0, %v2706
          %v2708 = vpop.f32.mrb[0].mxu0
          %2709 = vmatprep.mubr.bf16.mxu0 0
          %2710 = vmatmul.mubr.bf16.gmra.mrb[0].mxu0 %v2548
          %v2711 = vpop.f32.mrb[0].mxu0
          %v2712 = vadd.f32 0.0, %v2711
          %v2713 = vpop.f32.mrb[0].mxu0
          %v2714 = vpop.f32.mrb[0].mxu0
          %v2715 = vadd.f32 0.0, %v2714
          %v2716 = vpop.f32.mrb[0].mxu0
          %2717 = vmatprep.mubr.bf16.mxu0 0
          %2718 = vmatmul.mubr.bf16.gmra.mrb[0].mxu0 %v2549
          %v2719 = vpop.f32.mrb[0].mxu0
          %v2720 = vadd.f32 0.0, %v2719
          %v2721 = vpop.f32.mrb[0].mxu0
          %v2722 = vpop.f32.mrb[0].mxu0
          %v2723 = vadd.f32 0.0, %v2722
          %v2724 = vpop.f32.mrb[0].mxu0
          %2725 = vmatprep.mubr.bf16.mxu0 0
          %2726 = vmatmul.mubr.bf16.gmra.mrb[0].mxu0 %v2550
          %v2727 = vpop.f32.mrb[0].mxu0
          %v2728 = vadd.f32 0.0, %v2727
          %v2729 = vpop.f32.mrb[0].mxu0
          %v2730 = vpop.f32.mrb[0].mxu0
          %v2731 = vadd.f32 0.0, %v2730
          %v2732 = vpop.f32.mrb[0].mxu0
          %2733 = vmatprep.mubr.bf16.mxu0 0
          %2734 = vmatmul.mubr.bf16.gmra.mrb[0].mxu0 %v2551
          %v2735 = vpop.f32.mrb[0].mxu0
          %v2736 = vadd.f32 0.0, %v2735
          %v2737 = vpop.f32.mrb[0].mxu0
          %v2738 = vpop.f32.mrb[0].mxu0
          %v2739 = vadd.f32 0.0, %v2738
          %v2740 = vpop.f32.mrb[0].mxu0
          %2741 = vmatprep.mubr.bf16.mxu0 0
          %2742 = vmatmul.mubr.bf16.gmra.mrb[0].mxu0 %v2552
          %v2743 = vpop.f32.mrb[0].mxu0
          %v2744 = vadd.f32 0.0, %v2743
          %v2745 = vpop.f32.mrb[0].mxu0
          %v2746 = vpop.f32.mrb[0].mxu0
          %v2747 = vadd.f32 0.0, %v2746
          %v2748 = vpop.f32.mrb[0].mxu0
          %2749 = vmatprep.mubr.bf16.mxu0 0
          %2750 = vmatmul.mubr.bf16.gmra.mrb[0].mxu0 %v2553
          %v2751 = vpop.f32.mrb[0].mxu0
          %v2752 = vadd.f32 0.0, %v2751
          %v2753 = vpop.f32.mrb[0].mxu0
          %v2754 = vpop.f32.mrb[0].mxu0
          %v2755 = vadd.f32 0.0, %v2754
          %v2756 = vpop.f32.mrb[0].mxu0
          %2757 = vmatprep.mubr.bf16.mxu0 0
          %2758 = vmatmul.mubr.bf16.gmra.mrb[0].mxu0 %v2554
          %v2759 = vpop.f32.mrb[0].mxu0
          %v2760 = vadd.f32 0.0, %v2759
          %v2761 = vpop.f32.mrb[0].mxu0
          %v2762 = vpop.f32.mrb[0].mxu0
          %v2763 = vadd.f32 0.0, %v2762
          %v2764 = vpop.f32.mrb[0].mxu0
          %2765 = vmatprep.mubr.bf16.mxu0 0
          %2766 = vmatmul.mubr.bf16.gmra.mrb[0].mxu0 %v2555
          %v2767 = vpop.f32.mrb[0].mxu0
          %v2768 = vadd.f32 0.0, %v2767
          %v2769 = vpop.f32.mrb[0].mxu0
          %v2770 = vpop.f32.mrb[0].mxu0
          %v2771 = vadd.f32 0.0, %v2770
          %v2772 = vpop.f32.mrb[0].mxu0
          %2773 = vmatprep.mubr.bf16.mxu0 0
          %2774 = vmatmul.mubr.bf16.gmra.mrb[0].mxu0 %v2556
          %v2775 = vpop.f32.mrb[0].mxu0
          %v2776 = vadd.f32 0.0, %v2775
          %v2777 = vpop.f32.mrb[0].mxu0
          %v2778 = vpop.f32.mrb[0].mxu0
          %v2779 = vadd.f32 0.0, %v2778
          %v2780 = vpop.f32.mrb[0].mxu0
          %2781 = vdwg.mxu0
          %v2782 = vadd.f32 %v2396, %v2656
          %v2783 = vadd.f32 %v2397, %v2659
          %v2784 = vadd.f32 %v2398, %v2664
          %v2785 = vadd.f32 %v2399, %v2667
          %v2786 = vadd.f32 %v2400, %v2672
          %v2787 = vadd.f32 %v2401, %v2675
          %v2788 = vadd.f32 %v2402, %v2680
          %v2789 = vadd.f32 %v2403, %v2683
          %v2790 = vadd.f32 %v2404, %v2688
          %v2791 = vadd.f32 %v2405, %v2691
          %v2792 = vadd.f32 %v2406, %v2696
          %v2793 = vadd.f32 %v2407, %v2699
          %v2794 = vadd.f32 %v2408, %v2704
          %v2795 = vadd.f32 %v2409, %v2707
          %v2796 = vadd.f32 %v2410, %v2712
          %v2797 = vadd.f32 %v2411, %v2715
          %v2798 = vadd.f32 %v2412, %v2720
          %v2799 = vadd.f32 %v2413, %v2723
          %v2800 = vadd.f32 %v2414, %v2728
          %v2801 = vadd.f32 %v2415, %v2731
          %v2802 = vadd.f32 %v2416, %v2736
          %v2803 = vadd.f32 %v2417, %v2739
          %v2804 = vadd.f32 %v2418, %v2744
          %v2805 = vadd.f32 %v2419, %v2747
          %v2806 = vadd.f32 %v2420, %v2752
          %v2807 = vadd.f32 %v2421, %v2755
          %v2808 = vadd.f32 %v2422, %v2760
          %v2809 = vadd.f32 %v2423, %v2763
          %v2810 = vadd.f32 %v2424, %v2768
          %v2811 = vadd.f32 %v2425, %v2771
          %v2812 = vadd.f32 %v2426, %v2776
          %v2813 = vadd.f32 %v2427, %v2779
          %v2814 = vld [vmem:[%s359] sm:$0xf]
          %v2815 = vld [vmem:[%s359 + $0x4] sm:$0xf]
          %v2816 = vld [vmem:[%s359 + $0x8] sm:$0x1]
          %v2817 = vld [vmem:[%s359 + $0xc] sm:$0xf]
          %v2818 = vld [vmem:[%s359 + $0x10] sm:$0xf]
          %v2819 = vld [vmem:[%s359 + $0x14] sm:$0x1]
          %v2820 = vld [vmem:[%s359 + $0x18] sm:$0xf]
          %v2821 = vld [vmem:[%s359 + $0x1c] sm:$0xf]
          %v2822 = vld [vmem:[%s359 + $0x20] sm:$0x1]
          %v2823 = vld [vmem:[%s359 + $0x24] sm:$0xf]
          %v2824 = vld [vmem:[%s359 + $0x28] sm:$0xf]
          %v2825 = vld [vmem:[%s359 + $0x2c] sm:$0x1]
          %v2826 = vld [vmem:[%s359 + $0x30] sm:$0xf]
          %v2827 = vld [vmem:[%s359 + $0x34] sm:$0xf]
          %v2828 = vld [vmem:[%s359 + $0x38] sm:$0x1]
          %v2829 = vld [vmem:[%s359 + $0x3c] sm:$0xf]
          %v2830 = vld [vmem:[%s359 + $0x40] sm:$0xf]
          %v2831 = vld [vmem:[%s359 + $0x44] sm:$0x1]
          %v2832 = vld [vmem:[%s359 + $0x48] sm:$0xf]
          %v2833 = vld [vmem:[%s359 + $0x4c] sm:$0xf]
          %v2834 = vld [vmem:[%s359 + $0x50] sm:$0x1]
          %v2835 = vld [vmem:[%s359 + $0x54] sm:$0xf]
          %v2836 = vld [vmem:[%s359 + $0x58] sm:$0xf]
          %v2837 = vld [vmem:[%s359 + $0x5c] sm:$0x1]
          %v2838 = vld [vmem:[%s359 + $0x60] sm:$0xf]
          %v2839 = vld [vmem:[%s359 + $0x64] sm:$0xf]
          %v2840 = vld [vmem:[%s359 + $0x68] sm:$0x1]
          %v2841 = vld [vmem:[%s359 + $0x6c] sm:$0xf]
          %v2842 = vld [vmem:[%s359 + $0x70] sm:$0xf]
          %v2843 = vld [vmem:[%s359 + $0x74] sm:$0x1]
          %v2844 = vld [vmem:[%s359 + $0x78] sm:$0xf]
          %v2845 = vld [vmem:[%s359 + $0x7c] sm:$0xf]
          %v2846 = vld [vmem:[%s359 + $0x80] sm:$0x1]
          %v2847 = vld [vmem:[%s359 + $0x84] sm:$0xf]
          %v2848 = vld [vmem:[%s359 + $0x88] sm:$0xf]
          %v2849 = vld [vmem:[%s359 + $0x8c] sm:$0x1]
          %v2850 = vld [vmem:[%s359 + $0x90] sm:$0xf]
          %v2851 = vld [vmem:[%s359 + $0x94] sm:$0xf]
          %v2852 = vld [vmem:[%s359 + $0x98] sm:$0x1]
          %v2853 = vld [vmem:[%s359 + $0x9c] sm:$0xf]
          %v2854 = vld [vmem:[%s359 + $0xa0] sm:$0xf]
          %v2855 = vld [vmem:[%s359 + $0xa4] sm:$0x1]
          %v2856 = vld [vmem:[%s359 + $0xa8] sm:$0xf]
          %v2857 = vld [vmem:[%s359 + $0xac] sm:$0xf]
          %v2858 = vld [vmem:[%s359 + $0xb0] sm:$0x1]
          %v2859 = vld [vmem:[%s359 + $0xb4] sm:$0xf]
          %v2860 = vld [vmem:[%s359 + $0xb8] sm:$0xf]
          %v2861 = vld [vmem:[%s359 + $0xbc] sm:$0x1]
          %v2863 = vshrl.u32 %v2814, 16
          %v2865 = vrot.slane %v2863, 4
          %v2866 = vshll.u32 %v2814, 16
          %v2868 = vrot.slane %v2866, 5
          %v2869 = vor.u32 %v2865, %v2868
          %v2870 = vrot.slane %v2869, 4
          %v2872 = vshll.u32 %v2815, 16
          %v2874 = vrot.slane %v2872, 5
          %v2875 = vsel %vm963, %v2870, %v2874
          %v2876 = vshrl.u32 %v2815, 16
          %v2878 = vrot.slane %v2876, 4
          %v2879 = vor.u32 %v2878, %v2874
          %v2880 = vrot.slane %v2879, 4
          %v2882 = vshll.u32 %v2816, 16
          %v2884 = vrot.slane %v2882, 5
          %v2885 = vsel %vm963, %v2880, %v2884
          %v2887 = vshrl.u32 %v2817, 16
          %v2889 = vrot.slane %v2887, 4
          %v2890 = vshll.u32 %v2817, 16
          %v2892 = vrot.slane %v2890, 5
          %v2893 = vor.u32 %v2889, %v2892
          %v2894 = vrot.slane %v2893, 4
          %v2896 = vshll.u32 %v2818, 16
          %v2898 = vrot.slane %v2896, 5
          %v2899 = vsel %vm963, %v2894, %v2898
          %v2900 = vshrl.u32 %v2818, 16
          %v2902 = vrot.slane %v2900, 4
          %v2903 = vor.u32 %v2902, %v2898
          %v2904 = vrot.slane %v2903, 4
          %v2906 = vshll.u32 %v2819, 16
          %v2908 = vrot.slane %v2906, 5
          %v2909 = vsel %vm963, %v2904, %v2908
          %v2911 = vshrl.u32 %v2820, 16
          %v2913 = vrot.slane %v2911, 4
          %v2914 = vshll.u32 %v2820, 16
          %v2916 = vrot.slane %v2914, 5
          %v2917 = vor.u32 %v2913, %v2916
          %v2918 = vrot.slane %v2917, 4
          %v2920 = vshll.u32 %v2821, 16
          %v2922 = vrot.slane %v2920, 5
          %v2923 = vsel %vm963, %v2918, %v2922
          %v2924 = vshrl.u32 %v2821, 16
          %v2926 = vrot.slane %v2924, 4
          %v2927 = vor.u32 %v2926, %v2922
          %v2928 = vrot.slane %v2927, 4
          %v2930 = vshll.u32 %v2822, 16
          %v2932 = vrot.slane %v2930, 5
          %v2933 = vsel %vm963, %v2928, %v2932
          %v2935 = vshrl.u32 %v2823, 16
          %v2937 = vrot.slane %v2935, 4
          %v2938 = vshll.u32 %v2823, 16
          %v2940 = vrot.slane %v2938, 5
          %v2941 = vor.u32 %v2937, %v2940
          %v2942 = vrot.slane %v2941, 4
          %v2944 = vshll.u32 %v2824, 16
          %v2946 = vrot.slane %v2944, 5
          %v2947 = vsel %vm963, %v2942, %v2946
          %v2948 = vshrl.u32 %v2824, 16
          %v2950 = vrot.slane %v2948, 4
          %v2951 = vor.u32 %v2950, %v2946
          %v2952 = vrot.slane %v2951, 4
          %v2954 = vshll.u32 %v2825, 16
          %v2956 = vrot.slane %v2954, 5
          %v2957 = vsel %vm963, %v2952, %v2956
          %v2959 = vshrl.u32 %v2826, 16
          %v2961 = vrot.slane %v2959, 4
          %v2962 = vshll.u32 %v2826, 16
          %v2964 = vrot.slane %v2962, 5
          %v2965 = vor.u32 %v2961, %v2964
          %v2966 = vrot.slane %v2965, 4
          %v2968 = vshll.u32 %v2827, 16
          %v2970 = vrot.slane %v2968, 5
          %v2971 = vsel %vm963, %v2966, %v2970
          %v2972 = vshrl.u32 %v2827, 16
          %v2974 = vrot.slane %v2972, 4
          %v2975 = vor.u32 %v2974, %v2970
          %v2976 = vrot.slane %v2975, 4
          %v2978 = vshll.u32 %v2828, 16
          %v2980 = vrot.slane %v2978, 5
          %v2981 = vsel %vm963, %v2976, %v2980
          %v2983 = vshrl.u32 %v2829, 16
          %v2985 = vrot.slane %v2983, 4
          %v2986 = vshll.u32 %v2829, 16
          %v2988 = vrot.slane %v2986, 5
          %v2989 = vor.u32 %v2985, %v2988
          %v2990 = vrot.slane %v2989, 4
          %v2992 = vshll.u32 %v2830, 16
          %v2994 = vrot.slane %v2992, 5
          %v2995 = vsel %vm963, %v2990, %v2994
          %v2996 = vshrl.u32 %v2830, 16
          %v2998 = vrot.slane %v2996, 4
          %v2999 = vor.u32 %v2998, %v2994
          %v3000 = vrot.slane %v2999, 4
          %v3002 = vshll.u32 %v2831, 16
          %v3004 = vrot.slane %v3002, 5
          %v3005 = vsel %vm963, %v3000, %v3004
          %v3007 = vshrl.u32 %v2832, 16
          %v3009 = vrot.slane %v3007, 4
          %v3010 = vshll.u32 %v2832, 16
          %v3012 = vrot.slane %v3010, 5
          %v3013 = vor.u32 %v3009, %v3012
          %v3014 = vrot.slane %v3013, 4
          %v3016 = vshll.u32 %v2833, 16
          %v3018 = vrot.slane %v3016, 5
          %v3019 = vsel %vm963, %v3014, %v3018
          %v3020 = vshrl.u32 %v2833, 16
          %v3022 = vrot.slane %v3020, 4
          %v3023 = vor.u32 %v3022, %v3018
          %v3024 = vrot.slane %v3023, 4
          %v3026 = vshll.u32 %v2834, 16
          %v3028 = vrot.slane %v3026, 5
          %v3029 = vsel %vm963, %v3024, %v3028
          %v3031 = vshrl.u32 %v2835, 16
          %v3033 = vrot.slane %v3031, 4
          %v3034 = vshll.u32 %v2835, 16
          %v3036 = vrot.slane %v3034, 5
          %v3037 = vor.u32 %v3033, %v3036
          %v3038 = vrot.slane %v3037, 4
          %v3040 = vshll.u32 %v2836, 16
          %v3042 = vrot.slane %v3040, 5
          %v3043 = vsel %vm963, %v3038, %v3042
          %v3044 = vshrl.u32 %v2836, 16
          %v3046 = vrot.slane %v3044, 4
          %v3047 = vor.u32 %v3046, %v3042
          %v3048 = vrot.slane %v3047, 4
          %v3050 = vshll.u32 %v2837, 16
          %v3052 = vrot.slane %v3050, 5
          %v3053 = vsel %vm963, %v3048, %v3052
          %v3055 = vshrl.u32 %v2838, 16
          %v3057 = vrot.slane %v3055, 4
          %v3058 = vshll.u32 %v2838, 16
          %v3060 = vrot.slane %v3058, 5
          %v3061 = vor.u32 %v3057, %v3060
          %v3062 = vrot.slane %v3061, 4
          %v3064 = vshll.u32 %v2839, 16
          %v3066 = vrot.slane %v3064, 5
          %v3067 = vsel %vm963, %v3062, %v3066
          %v3068 = vshrl.u32 %v2839, 16
          %v3070 = vrot.slane %v3068, 4
          %v3071 = vor.u32 %v3070, %v3066
          %v3072 = vrot.slane %v3071, 4
          %v3074 = vshll.u32 %v2840, 16
          %v3076 = vrot.slane %v3074, 5
          %v3077 = vsel %vm963, %v3072, %v3076
          %v3079 = vshrl.u32 %v2841, 16
          %v3081 = vrot.slane %v3079, 4
          %v3082 = vshll.u32 %v2841, 16
          %v3084 = vrot.slane %v3082, 5
          %v3085 = vor.u32 %v3081, %v3084
          %v3086 = vrot.slane %v3085, 4
          %v3088 = vshll.u32 %v2842, 16
          %v3090 = vrot.slane %v3088, 5
          %v3091 = vsel %vm963, %v3086, %v3090
          %v3092 = vshrl.u32 %v2842, 16
          %v3094 = vrot.slane %v3092, 4
          %v3095 = vor.u32 %v3094, %v3090
          %v3096 = vrot.slane %v3095, 4
          %v3098 = vshll.u32 %v2843, 16
          %v3100 = vrot.slane %v3098, 5
          %v3101 = vsel %vm963, %v3096, %v3100
          %v3103 = vshrl.u32 %v2844, 16
          %v3105 = vrot.slane %v3103, 4
          %v3106 = vshll.u32 %v2844, 16
          %v3108 = vrot.slane %v3106, 5
          %v3109 = vor.u32 %v3105, %v3108
          %v3110 = vrot.slane %v3109, 4
          %v3112 = vshll.u32 %v2845, 16
          %v3114 = vrot.slane %v3112, 5
          %v3115 = vsel %vm963, %v3110, %v3114
          %v3116 = vshrl.u32 %v2845, 16
          %v3118 = vrot.slane %v3116, 4
          %v3119 = vor.u32 %v3118, %v3114
          %v3120 = vrot.slane %v3119, 4
          %v3122 = vshll.u32 %v2846, 16
          %v3124 = vrot.slane %v3122, 5
          %v3125 = vsel %vm963, %v3120, %v3124
          %v3127 = vshrl.u32 %v2847, 16
          %v3129 = vrot.slane %v3127, 4
          %v3130 = vshll.u32 %v2847, 16
          %v3132 = vrot.slane %v3130, 5
          %v3133 = vor.u32 %v3129, %v3132
          %v3134 = vrot.slane %v3133, 4
          %v3136 = vshll.u32 %v2848, 16
          %v3138 = vrot.slane %v3136, 5
          %v3139 = vsel %vm963, %v3134, %v3138
          %v3140 = vshrl.u32 %v2848, 16
          %v3142 = vrot.slane %v3140, 4
          %v3143 = vor.u32 %v3142, %v3138
          %v3144 = vrot.slane %v3143, 4
          %v3146 = vshll.u32 %v2849, 16
          %v3148 = vrot.slane %v3146, 5
          %v3149 = vsel %vm963, %v3144, %v3148
          %v3151 = vshrl.u32 %v2850, 16
          %v3153 = vrot.slane %v3151, 4
          %v3154 = vshll.u32 %v2850, 16
          %v3156 = vrot.slane %v3154, 5
          %v3157 = vor.u32 %v3153, %v3156
          %v3158 = vrot.slane %v3157, 4
          %v3160 = vshll.u32 %v2851, 16
          %v3162 = vrot.slane %v3160, 5
          %v3163 = vsel %vm963, %v3158, %v3162
          %v3164 = vshrl.u32 %v2851, 16
          %v3166 = vrot.slane %v3164, 4
          %v3167 = vor.u32 %v3166, %v3162
          %v3168 = vrot.slane %v3167, 4
          %v3170 = vshll.u32 %v2852, 16
          %v3172 = vrot.slane %v3170, 5
          %v3173 = vsel %vm963, %v3168, %v3172
          %v3175 = vshrl.u32 %v2853, 16
          %v3177 = vrot.slane %v3175, 4
          %v3178 = vshll.u32 %v2853, 16
          %v3180 = vrot.slane %v3178, 5
          %v3181 = vor.u32 %v3177, %v3180
          %v3182 = vrot.slane %v3181, 4
          %v3184 = vshll.u32 %v2854, 16
          %v3186 = vrot.slane %v3184, 5
          %v3187 = vsel %vm963, %v3182, %v3186
          %v3188 = vshrl.u32 %v2854, 16
          %v3190 = vrot.slane %v3188, 4
          %v3191 = vor.u32 %v3190, %v3186
          %v3192 = vrot.slane %v3191, 4
          %v3194 = vshll.u32 %v2855, 16
          %v3196 = vrot.slane %v3194, 5
          %v3197 = vsel %vm963, %v3192, %v3196
          %v3199 = vshrl.u32 %v2856, 16
          %v3201 = vrot.slane %v3199, 4
          %v3202 = vshll.u32 %v2856, 16
          %v3204 = vrot.slane %v3202, 5
          %v3205 = vor.u32 %v3201, %v3204
          %v3206 = vrot.slane %v3205, 4
          %v3208 = vshll.u32 %v2857, 16
          %v3210 = vrot.slane %v3208, 5
          %v3211 = vsel %vm963, %v3206, %v3210
          %v3212 = vshrl.u32 %v2857, 16
          %v3214 = vrot.slane %v3212, 4
          %v3215 = vor.u32 %v3214, %v3210
          %v3216 = vrot.slane %v3215, 4
          %v3218 = vshll.u32 %v2858, 16
          %v3220 = vrot.slane %v3218, 5
          %v3221 = vsel %vm963, %v3216, %v3220
          %v3223 = vshrl.u32 %v2859, 16
          %v3225 = vrot.slane %v3223, 4
          %v3226 = vshll.u32 %v2859, 16
          %v3228 = vrot.slane %v3226, 5
          %v3229 = vor.u32 %v3225, %v3228
          %v3230 = vrot.slane %v3229, 4
          %v3232 = vshll.u32 %v2860, 16
          %v3234 = vrot.slane %v3232, 5
          %v3235 = vsel %vm963, %v3230, %v3234
          %v3236 = vshrl.u32 %v2860, 16
          %v3238 = vrot.slane %v3236, 4
          %v3239 = vor.u32 %v3238, %v3234
          %v3240 = vrot.slane %v3239, 4
          %v3242 = vshll.u32 %v2861, 16
          %v3244 = vrot.slane %v3242, 5
          %v3245 = vsel %vm963, %v3240, %v3244
          %s3246 = scalar_lea.vmem [#allocation7], 256
          %v3247 = vld [vmem:[%s3246] sm:$0xf]
          %v3248 = vld [vmem:[%s3246 + $0x4] sm:$0xf]
          %v3249 = vld [vmem:[%s3246 + $0x8] sm:$0xf]
          %v3250 = vld [vmem:[%s3246 + $0xc] sm:$0xf]
          %v3251 = vld [vmem:[%s3246 + $0x10] sm:$0xf]
          %v3252 = vld [vmem:[%s3246 + $0x14] sm:$0xf]
          %v3253 = vld [vmem:[%s3246 + $0x18] sm:$0xf]
          %v3254 = vld [vmem:[%s3246 + $0x1c] sm:$0xf]
          %v3255 = vld [vmem:[%s3246 + $0x20] sm:$0xf]
          %v3256 = vld [vmem:[%s3246 + $0x24] sm:$0xf]
          %v3257 = vld [vmem:[%s3246 + $0x28] sm:$0xf]
          %v3258 = vld [vmem:[%s3246 + $0x2c] sm:$0xf]
          %v3259 = vld [vmem:[%s3246 + $0x30] sm:$0xf]
          %v3260 = vld [vmem:[%s3246 + $0x34] sm:$0xf]
          %v3261 = vld [vmem:[%s3246 + $0x38] sm:$0xf]
          %v3262 = vld [vmem:[%s3246 + $0x3c] sm:$0xf]
          %v3263 = vunpack.c.l.b16 %v2875
          %v3264 = vunpack.c.l.b16 %v2885
          %v3265 = vunpack.c.l.b16 %v2899
          %v3266 = vunpack.c.l.b16 %v2909
          %v3267 = vunpack.c.l.b16 %v2923
          %v3268 = vunpack.c.l.b16 %v2933
          %v3269 = vunpack.c.l.b16 %v2947
          %v3270 = vunpack.c.l.b16 %v2957
          %v3271 = vunpack.c.l.b16 %v2971
          %v3272 = vunpack.c.l.b16 %v2981
          %v3273 = vunpack.c.l.b16 %v2995
          %v3274 = vunpack.c.l.b16 %v3005
          %v3275 = vunpack.c.l.b16 %v3019
          %v3276 = vunpack.c.l.b16 %v3029
          %v3277 = vunpack.c.l.b16 %v3043
          %v3278 = vunpack.c.l.b16 %v3053
          %v3279 = vunpack.c.l.b16 %v3067
          %v3280 = vunpack.c.l.b16 %v3077
          %v3281 = vunpack.c.l.b16 %v3091
          %v3282 = vunpack.c.l.b16 %v3101
          %v3283 = vunpack.c.l.b16 %v3115
          %v3284 = vunpack.c.l.b16 %v3125
          %v3285 = vunpack.c.l.b16 %v3139
          %v3286 = vunpack.c.l.b16 %v3149
          %v3287 = vunpack.c.l.b16 %v3163
          %v3288 = vunpack.c.l.b16 %v3173
          %v3289 = vunpack.c.l.b16 %v3187
          %v3290 = vunpack.c.l.b16 %v3197
          %v3291 = vunpack.c.l.b16 %v3211
          %v3292 = vunpack.c.l.b16 %v3221
          %v3293 = vunpack.c.l.b16 %v3235
          %v3294 = vunpack.c.l.b16 %v3245
          %v3295 = vpack.c.b16 %v3264, %v3263
          %v3296 = vpack.c.b16 %v3266, %v3265
          %v3297 = vpack.c.b16 %v3268, %v3267
          %v3298 = vpack.c.b16 %v3270, %v3269
          %v3299 = vpack.c.b16 %v3272, %v3271
          %v3300 = vpack.c.b16 %v3274, %v3273
          %v3301 = vpack.c.b16 %v3276, %v3275
          %v3302 = vpack.c.b16 %v3278, %v3277
          %v3303 = vpack.c.b16 %v3280, %v3279
          %v3304 = vpack.c.b16 %v3282, %v3281
          %v3305 = vpack.c.b16 %v3284, %v3283
          %v3306 = vpack.c.b16 %v3286, %v3285
          %v3307 = vpack.c.b16 %v3288, %v3287
          %v3308 = vpack.c.b16 %v3290, %v3289
          %v3309 = vpack.c.b16 %v3292, %v3291
          %v3310 = vpack.c.b16 %v3294, %v3293
          %v3343 = vunpack.c.l.b16 %v3247
          %v3344 = vunpack.c.l.b16 %v3248
          %v3345 = vunpack.c.l.b16 %v3249
          %v3346 = vunpack.c.l.b16 %v3250
          %v3347 = vunpack.c.l.b16 %v3251
          %v3348 = vunpack.c.l.b16 %v3252
          %v3349 = vunpack.c.l.b16 %v3253
          %v3350 = vunpack.c.l.b16 %v3254
          %v3351 = vunpack.c.l.b16 %v3255
          %v3352 = vunpack.c.l.b16 %v3256
          %v3353 = vunpack.c.l.b16 %v3257
          %v3354 = vunpack.c.l.b16 %v3258
          %v3355 = vunpack.c.l.b16 %v3259
          %v3356 = vunpack.c.l.b16 %v3260
          %v3357 = vunpack.c.l.b16 %v3261
          %v3358 = vunpack.c.l.b16 %v3262
          %v3359 = vpack.c.b16 %v3344, %v3343
          %v3360 = vpack.c.b16 %v3346, %v3345
          %v3361 = vpack.c.b16 %v3348, %v3347
          %v3362 = vpack.c.b16 %v3350, %v3349
          %v3363 = vpack.c.b16 %v3352, %v3351
          %v3364 = vpack.c.b16 %v3354, %v3353
          %v3365 = vpack.c.b16 %v3356, %v3355
          %v3366 = vpack.c.b16 %v3358, %v3357
          %3375 = vmatprep.subr.bf16.mxu0 0
          %3376 = vmatpush1.bf16.msra.mxu0 %v3359
          %3377 = vmatprep.subr.bf16.mxu0 0
          %3378 = vmatpush1.bf16.msra.mxu0 %v3360
          %3379 = vmatprep.subr.bf16.mxu0 0
          %3380 = vmatpush1.bf16.msra.mxu0 %v3361
          %3381 = vmatprep.subr.bf16.mxu0 0
          %3382 = vmatpush1.bf16.msra.mxu0 %v3362
          %3383 = vmatprep.subr.bf16.mxu0 0
          %3384 = vmatpush1.bf16.msra.mxu0 %v3363
          %3385 = vmatprep.subr.bf16.mxu0 0
          %3386 = vmatpush1.bf16.msra.mxu0 %v3364
          %3387 = vmatprep.subr.bf16.mxu0 0
          %3388 = vmatpush1.bf16.msra.mxu0 %v3365
          %3389 = vmatprep.subr.bf16.mxu0 0
          %3390 = vmatpush1.bf16.msra.mxu0 %v3366
          %3391 = vmatprep.subr.bf16.mxu0 0
          %3392 = vmatpush1.bf16.msra.mxu0 0
          %3393 = vmatprep.subr.bf16.mxu0 0
          %3394 = vmatpush1.bf16.msra.mxu0 0
          %3395 = vmatprep.subr.bf16.mxu0 0
          %3396 = vmatpush1.bf16.msra.mxu0 0
          %3397 = vmatprep.subr.bf16.mxu0 0
          %3398 = vmatpush1.bf16.msra.mxu0 0
          %3399 = vmatprep.subr.bf16.mxu0 0
          %3400 = vmatpush1.bf16.msra.mxu0 0
          %3401 = vmatprep.subr.bf16.mxu0 0
          %3402 = vmatpush1.bf16.msra.mxu0 0
          %3403 = vmatprep.subr.bf16.mxu0 0
          %3404 = vmatpush1.bf16.msra.mxu0 0
          %3405 = vmatprep.subr.bf16.mxu0 0
          %3406 = vmatpush1.bf16.msra.mxu0 0
          %3407 = vmatprep.mubr.bf16.mxu0 0
          %3408 = vmatmul.mubr.bf16.gmra.mrb[0].mxu0 %v3295
          %v3409 = vpop.f32.mrb[0].mxu0
          %v3410 = vadd.f32 0.0, %v3409
          %v3411 = vpop.f32.mrb[0].mxu0
          %v3412 = vpop.f32.mrb[0].mxu0
          %v3413 = vadd.f32 0.0, %v3412
          %v3414 = vpop.f32.mrb[0].mxu0
          %3415 = vmatprep.mubr.bf16.mxu0 0
          %3416 = vmatmul.mubr.bf16.gmra.mrb[0].mxu0 %v3296
          %v3417 = vpop.f32.mrb[0].mxu0
          %v3418 = vadd.f32 0.0, %v3417
          %v3419 = vpop.f32.mrb[0].mxu0
          %v3420 = vpop.f32.mrb[0].mxu0
          %v3421 = vadd.f32 0.0, %v3420
          %v3422 = vpop.f32.mrb[0].mxu0
          %3423 = vmatprep.mubr.bf16.mxu0 0
          %3424 = vmatmul.mubr.bf16.gmra.mrb[0].mxu0 %v3297
          %v3425 = vpop.f32.mrb[0].mxu0
          %v3426 = vadd.f32 0.0, %v3425
          %v3427 = vpop.f32.mrb[0].mxu0
          %v3428 = vpop.f32.mrb[0].mxu0
          %v3429 = vadd.f32 0.0, %v3428
          %v3430 = vpop.f32.mrb[0].mxu0
          %3431 = vmatprep.mubr.bf16.mxu0 0
          %3432 = vmatmul.mubr.bf16.gmra.mrb[0].mxu0 %v3298
          %v3433 = vpop.f32.mrb[0].mxu0
          %v3434 = vadd.f32 0.0, %v3433
          %v3435 = vpop.f32.mrb[0].mxu0
          %v3436 = vpop.f32.mrb[0].mxu0
          %v3437 = vadd.f32 0.0, %v3436
          %v3438 = vpop.f32.mrb[0].mxu0
          %3439 = vmatprep.mubr.bf16.mxu0 0
          %3440 = vmatmul.mubr.bf16.gmra.mrb[0].mxu0 %v3299
          %v3441 = vpop.f32.mrb[0].mxu0
          %v3442 = vadd.f32 0.0, %v3441
          %v3443 = vpop.f32.mrb[0].mxu0
          %v3444 = vpop.f32.mrb[0].mxu0
          %v3445 = vadd.f32 0.0, %v3444
          %v3446 = vpop.f32.mrb[0].mxu0
          %3447 = vmatprep.mubr.bf16.mxu0 0
          %3448 = vmatmul.mubr.bf16.gmra.mrb[0].mxu0 %v3300
          %v3449 = vpop.f32.mrb[0].mxu0
          %v3450 = vadd.f32 0.0, %v3449
          %v3451 = vpop.f32.mrb[0].mxu0
          %v3452 = vpop.f32.mrb[0].mxu0
          %v3453 = vadd.f32 0.0, %v3452
          %v3454 = vpop.f32.mrb[0].mxu0
          %3455 = vmatprep.mubr.bf16.mxu0 0
          %3456 = vmatmul.mubr.bf16.gmra.mrb[0].mxu0 %v3301
          %v3457 = vpop.f32.mrb[0].mxu0
          %v3458 = vadd.f32 0.0, %v3457
          %v3459 = vpop.f32.mrb[0].mxu0
          %v3460 = vpop.f32.mrb[0].mxu0
          %v3461 = vadd.f32 0.0, %v3460
          %v3462 = vpop.f32.mrb[0].mxu0
          %3463 = vmatprep.mubr.bf16.mxu0 0
          %3464 = vmatmul.mubr.bf16.gmra.mrb[0].mxu0 %v3302
          %v3465 = vpop.f32.mrb[0].mxu0
          %v3466 = vadd.f32 0.0, %v3465
          %v3467 = vpop.f32.mrb[0].mxu0
          %v3468 = vpop.f32.mrb[0].mxu0
          %v3469 = vadd.f32 0.0, %v3468
          %v3470 = vpop.f32.mrb[0].mxu0
          %3471 = vmatprep.mubr.bf16.mxu0 0
          %3472 = vmatmul.mubr.bf16.gmra.mrb[0].mxu0 %v3303
          %v3473 = vpop.f32.mrb[0].mxu0
          %v3474 = vadd.f32 0.0, %v3473
          %v3475 = vpop.f32.mrb[0].mxu0
          %v3476 = vpop.f32.mrb[0].mxu0
          %v3477 = vadd.f32 0.0, %v3476
          %v3478 = vpop.f32.mrb[0].mxu0
          %3479 = vmatprep.mubr.bf16.mxu0 0
          %3480 = vmatmul.mubr.bf16.gmra.mrb[0].mxu0 %v3304
          %v3481 = vpop.f32.mrb[0].mxu0
          %v3482 = vadd.f32 0.0, %v3481
          %v3483 = vpop.f32.mrb[0].mxu0
          %v3484 = vpop.f32.mrb[0].mxu0
          %v3485 = vadd.f32 0.0, %v3484
          %v3486 = vpop.f32.mrb[0].mxu0
          %3487 = vmatprep.mubr.bf16.mxu0 0
          %3488 = vmatmul.mubr.bf16.gmra.mrb[0].mxu0 %v3305
          %v3489 = vpop.f32.mrb[0].mxu0
          %v3490 = vadd.f32 0.0, %v3489
          %v3491 = vpop.f32.mrb[0].mxu0
          %v3492 = vpop.f32.mrb[0].mxu0
          %v3493 = vadd.f32 0.0, %v3492
          %v3494 = vpop.f32.mrb[0].mxu0
          %3495 = vmatprep.mubr.bf16.mxu0 0
          %3496 = vmatmul.mubr.bf16.gmra.mrb[0].mxu0 %v3306
          %v3497 = vpop.f32.mrb[0].mxu0
          %v3498 = vadd.f32 0.0, %v3497
          %v3499 = vpop.f32.mrb[0].mxu0
          %v3500 = vpop.f32.mrb[0].mxu0
          %v3501 = vadd.f32 0.0, %v3500
          %v3502 = vpop.f32.mrb[0].mxu0
          %3503 = vmatprep.mubr.bf16.mxu0 0
          %3504 = vmatmul.mubr.bf16.gmra.mrb[0].mxu0 %v3307
          %v3505 = vpop.f32.mrb[0].mxu0
          %v3506 = vadd.f32 0.0, %v3505
          %v3507 = vpop.f32.mrb[0].mxu0
          %v3508 = vpop.f32.mrb[0].mxu0
          %v3509 = vadd.f32 0.0, %v3508
          %v3510 = vpop.f32.mrb[0].mxu0
          %3511 = vmatprep.mubr.bf16.mxu0 0
          %3512 = vmatmul.mubr.bf16.gmra.mrb[0].mxu0 %v3308
          %v3513 = vpop.f32.mrb[0].mxu0
          %v3514 = vadd.f32 0.0, %v3513
          %v3515 = vpop.f32.mrb[0].mxu0
          %v3516 = vpop.f32.mrb[0].mxu0
          %v3517 = vadd.f32 0.0, %v3516
          %v3518 = vpop.f32.mrb[0].mxu0
          %3519 = vmatprep.mubr.bf16.mxu0 0
          %3520 = vmatmul.mubr.bf16.gmra.mrb[0].mxu0 %v3309
          %v3521 = vpop.f32.mrb[0].mxu0
          %v3522 = vadd.f32 0.0, %v3521
          %v3523 = vpop.f32.mrb[0].mxu0
          %v3524 = vpop.f32.mrb[0].mxu0
          %v3525 = vadd.f32 0.0, %v3524
          %v3526 = vpop.f32.mrb[0].mxu0
          %3527 = vmatprep.mubr.bf16.mxu0 0
          %3528 = vmatmul.mubr.bf16.gmra.mrb[0].mxu0 %v3310
          %v3529 = vpop.f32.mrb[0].mxu0
          %v3530 = vadd.f32 0.0, %v3529
          %v3531 = vpop.f32.mrb[0].mxu0
          %v3532 = vpop.f32.mrb[0].mxu0
          %v3533 = vadd.f32 0.0, %v3532
          %v3534 = vpop.f32.mrb[0].mxu0
          %3535 = vdwg.mxu0
          %v3536 = vadd.f32 %v2782, %v3410
          %v3537 = vadd.f32 %v2783, %v3413
          %v3538 = vadd.f32 %v2784, %v3418
          %v3539 = vadd.f32 %v2785, %v3421
          %v3540 = vadd.f32 %v2786, %v3426
          %v3541 = vadd.f32 %v2787, %v3429
          %v3542 = vadd.f32 %v2788, %v3434
          %v3543 = vadd.f32 %v2789, %v3437
          %v3544 = vadd.f32 %v2790, %v3442
          %v3545 = vadd.f32 %v2791, %v3445
          %v3546 = vadd.f32 %v2792, %v3450
          %v3547 = vadd.f32 %v2793, %v3453
          %v3548 = vadd.f32 %v2794, %v3458
          %v3549 = vadd.f32 %v2795, %v3461
          %v3550 = vadd.f32 %v2796, %v3466
          %v3551 = vadd.f32 %v2797, %v3469
          %v3552 = vadd.f32 %v2798, %v3474
          %v3553 = vadd.f32 %v2799, %v3477
          %v3554 = vadd.f32 %v2800, %v3482
          %v3555 = vadd.f32 %v2801, %v3485
          %v3556 = vadd.f32 %v2802, %v3490
          %v3557 = vadd.f32 %v2803, %v3493
          %v3558 = vadd.f32 %v2804, %v3498
          %v3559 = vadd.f32 %v2805, %v3501
          %v3560 = vadd.f32 %v2806, %v3506
          %v3561 = vadd.f32 %v2807, %v3509
          %v3562 = vadd.f32 %v2808, %v3514
          %v3563 = vadd.f32 %v2809, %v3517
          %v3564 = vadd.f32 %v2810, %v3522
          %v3565 = vadd.f32 %v2811, %v3525
          %v3566 = vadd.f32 %v2812, %v3530
          %v3567 = vadd.f32 %v2813, %v3533
          %v3568 = vld [vmem:[%s359] sm:$0xe]
          %v3569 = vld [vmem:[%s359 + $0xc] sm:$0xe]
          %v3570 = vld [vmem:[%s359 + $0x18] sm:$0xe]
          %v3571 = vld [vmem:[%s359 + $0x24] sm:$0xe]
          %v3572 = vld [vmem:[%s359 + $0x30] sm:$0xe]
          %v3573 = vld [vmem:[%s359 + $0x3c] sm:$0xe]
          %v3574 = vld [vmem:[%s359 + $0x48] sm:$0xe]
          %v3575 = vld [vmem:[%s359 + $0x54] sm:$0xe]
          %v3576 = vld [vmem:[%s359 + $0x60] sm:$0xe]
          %v3577 = vld [vmem:[%s359 + $0x6c] sm:$0xe]
          %v3578 = vld [vmem:[%s359 + $0x78] sm:$0xe]
          %v3579 = vld [vmem:[%s359 + $0x84] sm:$0xe]
          %v3580 = vld [vmem:[%s359 + $0x90] sm:$0xe]
          %v3581 = vld [vmem:[%s359 + $0x9c] sm:$0xe]
          %v3582 = vld [vmem:[%s359 + $0xa8] sm:$0xe]
          %v3583 = vld [vmem:[%s359 + $0xb4] sm:$0xe]
          %v3632 = vrot.slane %v3568, 5
          %v3633 = vrot.slane %v3632, 4
          %v3634 = vrot.slane %v2815, 5
          %v3635 = vsel %vm1993, %v3633, %v3634
          %v3636 = vrot.slane %v3634, 4
          %v3637 = vrot.slane %v2816, 5
          %v3638 = vsel %vm1993, %v3636, %v3637
          %v3639 = vrot.slane %v3569, 5
          %v3640 = vrot.slane %v3639, 4
          %v3641 = vrot.slane %v2818, 5
          %v3642 = vsel %vm1993, %v3640, %v3641
          %v3643 = vrot.slane %v3641, 4
          %v3644 = vrot.slane %v2819, 5
          %v3645 = vsel %vm1993, %v3643, %v3644
          %v3646 = vrot.slane %v3570, 5
          %v3647 = vrot.slane %v3646, 4
          %v3648 = vrot.slane %v2821, 5
          %v3649 = vsel %vm1993, %v3647, %v3648
          %v3650 = vrot.slane %v3648, 4
          %v3651 = vrot.slane %v2822, 5
          %v3652 = vsel %vm1993, %v3650, %v3651
          %v3653 = vrot.slane %v3571, 5
          %v3654 = vrot.slane %v3653, 4
          %v3655 = vrot.slane %v2824, 5
          %v3656 = vsel %vm1993, %v3654, %v3655
          %v3657 = vrot.slane %v3655, 4
          %v3658 = vrot.slane %v2825, 5
          %v3659 = vsel %vm1993, %v3657, %v3658
          %v3660 = vrot.slane %v3572, 5
          %v3661 = vrot.slane %v3660, 4
          %v3662 = vrot.slane %v2827, 5
          %v3663 = vsel %vm1993, %v3661, %v3662
          %v3664 = vrot.slane %v3662, 4
          %v3665 = vrot.slane %v2828, 5
          %v3666 = vsel %vm1993, %v3664, %v3665
          %v3667 = vrot.slane %v3573, 5
          %v3668 = vrot.slane %v3667, 4
          %v3669 = vrot.slane %v2830, 5
          %v3670 = vsel %vm1993, %v3668, %v3669
          %v3671 = vrot.slane %v3669, 4
          %v3672 = vrot.slane %v2831, 5
          %v3673 = vsel %vm1993, %v3671, %v3672
          %v3674 = vrot.slane %v3574, 5
          %v3675 = vrot.slane %v3674, 4
          %v3676 = vrot.slane %v2833, 5
          %v3677 = vsel %vm1993, %v3675, %v3676
          %v3678 = vrot.slane %v3676, 4
          %v3679 = vrot.slane %v2834, 5
          %v3680 = vsel %vm1993, %v3678, %v3679
          %v3681 = vrot.slane %v3575, 5
          %v3682 = vrot.slane %v3681, 4
          %v3683 = vrot.slane %v2836, 5
          %v3684 = vsel %vm1993, %v3682, %v3683
          %v3685 = vrot.slane %v3683, 4
          %v3686 = vrot.slane %v2837, 5
          %v3687 = vsel %vm1993, %v3685, %v3686
          %v3688 = vrot.slane %v3576, 5
          %v3689 = vrot.slane %v3688, 4
          %v3690 = vrot.slane %v2839, 5
          %v3691 = vsel %vm1993, %v3689, %v3690
          %v3692 = vrot.slane %v3690, 4
          %v3693 = vrot.slane %v2840, 5
          %v3694 = vsel %vm1993, %v3692, %v3693
          %v3695 = vrot.slane %v3577, 5
          %v3696 = vrot.slane %v3695, 4
          %v3697 = vrot.slane %v2842, 5
          %v3698 = vsel %vm1993, %v3696, %v3697
          %v3699 = vrot.slane %v3697, 4
          %v3700 = vrot.slane %v2843, 5
          %v3701 = vsel %vm1993, %v3699, %v3700
          %v3702 = vrot.slane %v3578, 5
          %v3703 = vrot.slane %v3702, 4
          %v3704 = vrot.slane %v2845, 5
          %v3705 = vsel %vm1993, %v3703, %v3704
          %v3706 = vrot.slane %v3704, 4
          %v3707 = vrot.slane %v2846, 5
          %v3708 = vsel %vm1993, %v3706, %v3707
          %v3709 = vrot.slane %v3579, 5
          %v3710 = vrot.slane %v3709, 4
          %v3711 = vrot.slane %v2848, 5
          %v3712 = vsel %vm1993, %v3710, %v3711
          %v3713 = vrot.slane %v3711, 4
          %v3714 = vrot.slane %v2849, 5
          %v3715 = vsel %vm1993, %v3713, %v3714
          %v3716 = vrot.slane %v3580, 5
          %v3717 = vrot.slane %v3716, 4
          %v3718 = vrot.slane %v2851, 5
          %v3719 = vsel %vm1993, %v3717, %v3718
          %v3720 = vrot.slane %v3718, 4
          %v3721 = vrot.slane %v2852, 5
          %v3722 = vsel %vm1993, %v3720, %v3721
          %v3723 = vrot.slane %v3581, 5
          %v3724 = vrot.slane %v3723, 4
          %v3725 = vrot.slane %v2854, 5
          %v3726 = vsel %vm1993, %v3724, %v3725
          %v3727 = vrot.slane %v3725, 4
          %v3728 = vrot.slane %v2855, 5
          %v3729 = vsel %vm1993, %v3727, %v3728
          %v3730 = vrot.slane %v3582, 5
          %v3731 = vrot.slane %v3730, 4
          %v3732 = vrot.slane %v2857, 5
          %v3733 = vsel %vm1993, %v3731, %v3732
          %v3734 = vrot.slane %v3732, 4
          %v3735 = vrot.slane %v2858, 5
          %v3736 = vsel %vm1993, %v3734, %v3735
          %v3737 = vrot.slane %v3583, 5
          %v3738 = vrot.slane %v3737, 4
          %v3739 = vrot.slane %v2860, 5
          %v3740 = vsel %vm1993, %v3738, %v3739
          %v3741 = vrot.slane %v3739, 4
          %v3742 = vrot.slane %v2861, 5
          %v3743 = vsel %vm1993, %v3741, %v3742
          %s3744 = scalar_lea.vmem [#allocation7], 320
          %v3745 = vld [vmem:[%s3744] sm:$0xf]
          %v3746 = vld [vmem:[%s3744 + $0x4] sm:$0xf]
          %v3747 = vld [vmem:[%s3744 + $0x8] sm:$0xf]
          %v3748 = vld [vmem:[%s3744 + $0xc] sm:$0xf]
          %v3749 = vld [vmem:[%s3744 + $0x10] sm:$0xf]
          %v3750 = vld [vmem:[%s3744 + $0x14] sm:$0xf]
          %v3751 = vld [vmem:[%s3744 + $0x18] sm:$0xf]
          %v3752 = vld [vmem:[%s3744 + $0x1c] sm:$0xf]
          %v3753 = vld [vmem:[%s3744 + $0x20] sm:$0xf]
          %v3754 = vld [vmem:[%s3744 + $0x24] sm:$0xf]
          %v3755 = vld [vmem:[%s3744 + $0x28] sm:$0xf]
          %v3756 = vld [vmem:[%s3744 + $0x2c] sm:$0xf]
          %v3757 = vld [vmem:[%s3744 + $0x30] sm:$0xf]
          %v3758 = vld [vmem:[%s3744 + $0x34] sm:$0xf]
          %v3759 = vld [vmem:[%s3744 + $0x38] sm:$0xf]
          %v3760 = vld [vmem:[%s3744 + $0x3c] sm:$0xf]
          %v3761 = vunpack.c.l.b16 %v3635
          %v3762 = vunpack.c.l.b16 %v3638
          %v3763 = vunpack.c.l.b16 %v3642
          %v3764 = vunpack.c.l.b16 %v3645
          %v3765 = vunpack.c.l.b16 %v3649
          %v3766 = vunpack.c.l.b16 %v3652
          %v3767 = vunpack.c.l.b16 %v3656
          %v3768 = vunpack.c.l.b16 %v3659
          %v3769 = vunpack.c.l.b16 %v3663
          %v3770 = vunpack.c.l.b16 %v3666
          %v3771 = vunpack.c.l.b16 %v3670
          %v3772 = vunpack.c.l.b16 %v3673
          %v3773 = vunpack.c.l.b16 %v3677
          %v3774 = vunpack.c.l.b16 %v3680
          %v3775 = vunpack.c.l.b16 %v3684
          %v3776 = vunpack.c.l.b16 %v3687
          %v3777 = vunpack.c.l.b16 %v3691
          %v3778 = vunpack.c.l.b16 %v3694
          %v3779 = vunpack.c.l.b16 %v3698
          %v3780 = vunpack.c.l.b16 %v3701
          %v3781 = vunpack.c.l.b16 %v3705
          %v3782 = vunpack.c.l.b16 %v3708
          %v3783 = vunpack.c.l.b16 %v3712
          %v3784 = vunpack.c.l.b16 %v3715
          %v3785 = vunpack.c.l.b16 %v3719
          %v3786 = vunpack.c.l.b16 %v3722
          %v3787 = vunpack.c.l.b16 %v3726
          %v3788 = vunpack.c.l.b16 %v3729
          %v3789 = vunpack.c.l.b16 %v3733
          %v3790 = vunpack.c.l.b16 %v3736
          %v3791 = vunpack.c.l.b16 %v3740
          %v3792 = vunpack.c.l.b16 %v3743
          %v3793 = vpack.c.b16 %v3762, %v3761
          %v3794 = vpack.c.b16 %v3764, %v3763
          %v3795 = vpack.c.b16 %v3766, %v3765
          %v3796 = vpack.c.b16 %v3768, %v3767
          %v3797 = vpack.c.b16 %v3770, %v3769
          %v3798 = vpack.c.b16 %v3772, %v3771
          %v3799 = vpack.c.b16 %v3774, %v3773
          %v3800 = vpack.c.b16 %v3776, %v3775
          %v3801 = vpack.c.b16 %v3778, %v3777
          %v3802 = vpack.c.b16 %v3780, %v3779
          %v3803 = vpack.c.b16 %v3782, %v3781
          %v3804 = vpack.c.b16 %v3784, %v3783
          %v3805 = vpack.c.b16 %v3786, %v3785
          %v3806 = vpack.c.b16 %v3788, %v3787
          %v3807 = vpack.c.b16 %v3790, %v3789
          %v3808 = vpack.c.b16 %v3792, %v3791
          %v3841 = vunpack.c.l.b16 %v3745
          %v3842 = vunpack.c.l.b16 %v3746
          %v3843 = vunpack.c.l.b16 %v3747
          %v3844 = vunpack.c.l.b16 %v3748
          %v3845 = vunpack.c.l.b16 %v3749
          %v3846 = vunpack.c.l.b16 %v3750
          %v3847 = vunpack.c.l.b16 %v3751
          %v3848 = vunpack.c.l.b16 %v3752
          %v3849 = vunpack.c.l.b16 %v3753
          %v3850 = vunpack.c.l.b16 %v3754
          %v3851 = vunpack.c.l.b16 %v3755
          %v3852 = vunpack.c.l.b16 %v3756
          %v3853 = vunpack.c.l.b16 %v3757
          %v3854 = vunpack.c.l.b16 %v3758
          %v3855 = vunpack.c.l.b16 %v3759
          %v3856 = vunpack.c.l.b16 %v3760
          %v3857 = vpack.c.b16 %v3842, %v3841
          %v3858 = vpack.c.b16 %v3844, %v3843
          %v3859 = vpack.c.b16 %v3846, %v3845
          %v3860 = vpack.c.b16 %v3848, %v3847
          %v3861 = vpack.c.b16 %v3850, %v3849
          %v3862 = vpack.c.b16 %v3852, %v3851
          %v3863 = vpack.c.b16 %v3854, %v3853
          %v3864 = vpack.c.b16 %v3856, %v3855
          %3873 = vmatprep.subr.bf16.mxu0 0
          %3874 = vmatpush1.bf16.msra.mxu0 %v3857
          %3875 = vmatprep.subr.bf16.mxu0 0
          %3876 = vmatpush1.bf16.msra.mxu0 %v3858
          %3877 = vmatprep.subr.bf16.mxu0 0
          %3878 = vmatpush1.bf16.msra.mxu0 %v3859
          %3879 = vmatprep.subr.bf16.mxu0 0
          %3880 = vmatpush1.bf16.msra.mxu0 %v3860
          %3881 = vmatprep.subr.bf16.mxu0 0
          %3882 = vmatpush1.bf16.msra.mxu0 %v3861
          %3883 = vmatprep.subr.bf16.mxu0 0
          %3884 = vmatpush1.bf16.msra.mxu0 %v3862
          %3885 = vmatprep.subr.bf16.mxu0 0
          %3886 = vmatpush1.bf16.msra.mxu0 %v3863
          %3887 = vmatprep.subr.bf16.mxu0 0
          %3888 = vmatpush1.bf16.msra.mxu0 %v3864
          %3889 = vmatprep.subr.bf16.mxu0 0
          %3890 = vmatpush1.bf16.msra.mxu0 0
          %3891 = vmatprep.subr.bf16.mxu0 0
          %3892 = vmatpush1.bf16.msra.mxu0 0
          %3893 = vmatprep.subr.bf16.mxu0 0
          %3894 = vmatpush1.bf16.msra.mxu0 0
          %3895 = vmatprep.subr.bf16.mxu0 0
          %3896 = vmatpush1.bf16.msra.mxu0 0
          %3897 = vmatprep.subr.bf16.mxu0 0
          %3898 = vmatpush1.bf16.msra.mxu0 0
          %3899 = vmatprep.subr.bf16.mxu0 0
          %3900 = vmatpush1.bf16.msra.mxu0 0
          %3901 = vmatprep.subr.bf16.mxu0 0
          %3902 = vmatpush1.bf16.msra.mxu0 0
          %3903 = vmatprep.subr.bf16.mxu0 0
          %3904 = vmatpush1.bf16.msra.mxu0 0
          %3905 = vmatprep.mubr.bf16.mxu0 0
          %3906 = vmatmul.mubr.bf16.gmra.mrb[0].mxu0 %v3793
          %v3907 = vpop.f32.mrb[0].mxu0
          %v3908 = vadd.f32 0.0, %v3907
          %v3909 = vpop.f32.mrb[0].mxu0
          %v3910 = vpop.f32.mrb[0].mxu0
          %v3911 = vadd.f32 0.0, %v3910
          %v3912 = vpop.f32.mrb[0].mxu0
          %3913 = vmatprep.mubr.bf16.mxu0 0
          %3914 = vmatmul.mubr.bf16.gmra.mrb[0].mxu0 %v3794
          %v3915 = vpop.f32.mrb[0].mxu0
          %v3916 = vadd.f32 0.0, %v3915
          %v3917 = vpop.f32.mrb[0].mxu0
          %v3918 = vpop.f32.mrb[0].mxu0
          %v3919 = vadd.f32 0.0, %v3918
          %v3920 = vpop.f32.mrb[0].mxu0
          %3921 = vmatprep.mubr.bf16.mxu0 0
          %3922 = vmatmul.mubr.bf16.gmra.mrb[0].mxu0 %v3795
          %v3923 = vpop.f32.mrb[0].mxu0
          %v3924 = vadd.f32 0.0, %v3923
          %v3925 = vpop.f32.mrb[0].mxu0
          %v3926 = vpop.f32.mrb[0].mxu0
          %v3927 = vadd.f32 0.0, %v3926
          %v3928 = vpop.f32.mrb[0].mxu0
          %3929 = vmatprep.mubr.bf16.mxu0 0
          %3930 = vmatmul.mubr.bf16.gmra.mrb[0].mxu0 %v3796
          %v3931 = vpop.f32.mrb[0].mxu0
          %v3932 = vadd.f32 0.0, %v3931
          %v3933 = vpop.f32.mrb[0].mxu0
          %v3934 = vpop.f32.mrb[0].mxu0
          %v3935 = vadd.f32 0.0, %v3934
          %v3936 = vpop.f32.mrb[0].mxu0
          %3937 = vmatprep.mubr.bf16.mxu0 0
          %3938 = vmatmul.mubr.bf16.gmra.mrb[0].mxu0 %v3797
          %v3939 = vpop.f32.mrb[0].mxu0
          %v3940 = vadd.f32 0.0, %v3939
          %v3941 = vpop.f32.mrb[0].mxu0
          %v3942 = vpop.f32.mrb[0].mxu0
          %v3943 = vadd.f32 0.0, %v3942
          %v3944 = vpop.f32.mrb[0].mxu0
          %3945 = vmatprep.mubr.bf16.mxu0 0
          %3946 = vmatmul.mubr.bf16.gmra.mrb[0].mxu0 %v3798
          %v3947 = vpop.f32.mrb[0].mxu0
          %v3948 = vadd.f32 0.0, %v3947
          %v3949 = vpop.f32.mrb[0].mxu0
          %v3950 = vpop.f32.mrb[0].mxu0
          %v3951 = vadd.f32 0.0, %v3950
          %v3952 = vpop.f32.mrb[0].mxu0
          %3953 = vmatprep.mubr.bf16.mxu0 0
          %3954 = vmatmul.mubr.bf16.gmra.mrb[0].mxu0 %v3799
          %v3955 = vpop.f32.mrb[0].mxu0
          %v3956 = vadd.f32 0.0, %v3955
          %v3957 = vpop.f32.mrb[0].mxu0
          %v3958 = vpop.f32.mrb[0].mxu0
          %v3959 = vadd.f32 0.0, %v3958
          %v3960 = vpop.f32.mrb[0].mxu0
          %3961 = vmatprep.mubr.bf16.mxu0 0
          %3962 = vmatmul.mubr.bf16.gmra.mrb[0].mxu0 %v3800
          %v3963 = vpop.f32.mrb[0].mxu0
          %v3964 = vadd.f32 0.0, %v3963
          %v3965 = vpop.f32.mrb[0].mxu0
          %v3966 = vpop.f32.mrb[0].mxu0
          %v3967 = vadd.f32 0.0, %v3966
          %v3968 = vpop.f32.mrb[0].mxu0
          %3969 = vmatprep.mubr.bf16.mxu0 0
          %3970 = vmatmul.mubr.bf16.gmra.mrb[0].mxu0 %v3801
          %v3971 = vpop.f32.mrb[0].mxu0
          %v3972 = vadd.f32 0.0, %v3971
          %v3973 = vpop.f32.mrb[0].mxu0
          %v3974 = vpop.f32.mrb[0].mxu0
          %v3975 = vadd.f32 0.0, %v3974
          %v3976 = vpop.f32.mrb[0].mxu0
          %3977 = vmatprep.mubr.bf16.mxu0 0
          %3978 = vmatmul.mubr.bf16.gmra.mrb[0].mxu0 %v3802
          %v3979 = vpop.f32.mrb[0].mxu0
          %v3980 = vadd.f32 0.0, %v3979
          %v3981 = vpop.f32.mrb[0].mxu0
          %v3982 = vpop.f32.mrb[0].mxu0
          %v3983 = vadd.f32 0.0, %v3982
          %v3984 = vpop.f32.mrb[0].mxu0
          %3985 = vmatprep.mubr.bf16.mxu0 0
          %3986 = vmatmul.mubr.bf16.gmra.mrb[0].mxu0 %v3803
          %v3987 = vpop.f32.mrb[0].mxu0
          %v3988 = vadd.f32 0.0, %v3987
          %v3989 = vpop.f32.mrb[0].mxu0
          %v3990 = vpop.f32.mrb[0].mxu0
          %v3991 = vadd.f32 0.0, %v3990
          %v3992 = vpop.f32.mrb[0].mxu0
          %3993 = vmatprep.mubr.bf16.mxu0 0
          %3994 = vmatmul.mubr.bf16.gmra.mrb[0].mxu0 %v3804
          %v3995 = vpop.f32.mrb[0].mxu0
          %v3996 = vadd.f32 0.0, %v3995
          %v3997 = vpop.f32.mrb[0].mxu0
          %v3998 = vpop.f32.mrb[0].mxu0
          %v3999 = vadd.f32 0.0, %v3998
          %v4000 = vpop.f32.mrb[0].mxu0
          %4001 = vmatprep.mubr.bf16.mxu0 0
          %4002 = vmatmul.mubr.bf16.gmra.mrb[0].mxu0 %v3805
          %v4003 = vpop.f32.mrb[0].mxu0
          %v4004 = vadd.f32 0.0, %v4003
          %v4005 = vpop.f32.mrb[0].mxu0
          %v4006 = vpop.f32.mrb[0].mxu0
          %v4007 = vadd.f32 0.0, %v4006
          %v4008 = vpop.f32.mrb[0].mxu0
          %4009 = vmatprep.mubr.bf16.mxu0 0
          %4010 = vmatmul.mubr.bf16.gmra.mrb[0].mxu0 %v3806
          %v4011 = vpop.f32.mrb[0].mxu0
          %v4012 = vadd.f32 0.0, %v4011
          %v4013 = vpop.f32.mrb[0].mxu0
          %v4014 = vpop.f32.mrb[0].mxu0
          %v4015 = vadd.f32 0.0, %v4014
          %v4016 = vpop.f32.mrb[0].mxu0
          %4017 = vmatprep.mubr.bf16.mxu0 0
          %4018 = vmatmul.mubr.bf16.gmra.mrb[0].mxu0 %v3807
          %v4019 = vpop.f32.mrb[0].mxu0
          %v4020 = vadd.f32 0.0, %v4019
          %v4021 = vpop.f32.mrb[0].mxu0
          %v4022 = vpop.f32.mrb[0].mxu0
          %v4023 = vadd.f32 0.0, %v4022
          %v4024 = vpop.f32.mrb[0].mxu0
          %4025 = vmatprep.mubr.bf16.mxu0 0
          %4026 = vmatmul.mubr.bf16.gmra.mrb[0].mxu0 %v3808
          %v4027 = vpop.f32.mrb[0].mxu0
          %v4028 = vadd.f32 0.0, %v4027
          %v4029 = vpop.f32.mrb[0].mxu0
          %v4030 = vpop.f32.mrb[0].mxu0
          %v4031 = vadd.f32 0.0, %v4030
          %v4032 = vpop.f32.mrb[0].mxu0
          %4033 = vdwg.mxu0
          %v4034 = vadd.f32 %v3536, %v3908
          %v4035 = vadd.f32 %v3537, %v3911
          %v4036 = vadd.f32 %v3538, %v3916
          %v4037 = vadd.f32 %v3539, %v3919
          %v4038 = vadd.f32 %v3540, %v3924
          %v4039 = vadd.f32 %v3541, %v3927
          %v4040 = vadd.f32 %v3542, %v3932
          %v4041 = vadd.f32 %v3543, %v3935
          %v4042 = vadd.f32 %v3544, %v3940
          %v4043 = vadd.f32 %v3545, %v3943
          %v4044 = vadd.f32 %v3546, %v3948
          %v4045 = vadd.f32 %v3547, %v3951
          %v4046 = vadd.f32 %v3548, %v3956
          %v4047 = vadd.f32 %v3549, %v3959
          %v4048 = vadd.f32 %v3550, %v3964
          %v4049 = vadd.f32 %v3551, %v3967
          %v4050 = vadd.f32 %v3552, %v3972
          %v4051 = vadd.f32 %v3553, %v3975
          %v4052 = vadd.f32 %v3554, %v3980
          %v4053 = vadd.f32 %v3555, %v3983
          %v4054 = vadd.f32 %v3556, %v3988
          %v4055 = vadd.f32 %v3557, %v3991
          %v4056 = vadd.f32 %v3558, %v3996
          %v4057 = vadd.f32 %v3559, %v3999
          %v4058 = vadd.f32 %v3560, %v4004
          %v4059 = vadd.f32 %v3561, %v4007
          %v4060 = vadd.f32 %v3562, %v4012
          %v4061 = vadd.f32 %v3563, %v4015
          %v4062 = vadd.f32 %v3564, %v4020
          %v4063 = vadd.f32 %v3565, %v4023
          %v4064 = vadd.f32 %v3566, %v4028
          %v4065 = vadd.f32 %v3567, %v4031
          %s4066 = scalar_lea.vmem [#allocation2], 24
          %v4067 = vld [vmem:[%s4066] sm:$0xf]
          %v4068 = vld [vmem:[%s4066 + $0x4] sm:$0xf]
          %v4069 = vld [vmem:[%s4066 + $0xc] sm:$0xf]
          %v4070 = vld [vmem:[%s4066 + $0x10] sm:$0xf]
          %v4071 = vld [vmem:[%s4066 + $0x18] sm:$0xf]
          %v4072 = vld [vmem:[%s4066 + $0x1c] sm:$0xf]
          %v4073 = vld [vmem:[%s4066 + $0x24] sm:$0xf]
          %v4074 = vld [vmem:[%s4066 + $0x28] sm:$0xf]
          %v4075 = vld [vmem:[%s4066 + $0x30] sm:$0xf]
          %v4076 = vld [vmem:[%s4066 + $0x34] sm:$0xf]
          %v4077 = vld [vmem:[%s4066 + $0x3c] sm:$0xf]
          %v4078 = vld [vmem:[%s4066 + $0x40] sm:$0xf]
          %v4079 = vld [vmem:[%s4066 + $0x48] sm:$0xf]
          %v4080 = vld [vmem:[%s4066 + $0x4c] sm:$0xf]
          %v4081 = vld [vmem:[%s4066 + $0x54] sm:$0xf]
          %v4082 = vld [vmem:[%s4066 + $0x58] sm:$0xf]
          %v4083 = vld [vmem:[%s4066 + $0x60] sm:$0xf]
          %v4084 = vld [vmem:[%s4066 + $0x64] sm:$0xf]
          %v4085 = vld [vmem:[%s4066 + $0x6c] sm:$0xf]
          %v4086 = vld [vmem:[%s4066 + $0x70] sm:$0xf]
          %v4087 = vld [vmem:[%s4066 + $0x78] sm:$0xf]
          %v4088 = vld [vmem:[%s4066 + $0x7c] sm:$0xf]
          %v4089 = vld [vmem:[%s4066 + $0x84] sm:$0xf]
          %v4090 = vld [vmem:[%s4066 + $0x88] sm:$0xf]
          %v4091 = vld [vmem:[%s4066 + $0x90] sm:$0xf]
          %v4092 = vld [vmem:[%s4066 + $0x94] sm:$0xf]
          %v4093 = vld [vmem:[%s4066 + $0x9c] sm:$0xf]
          %v4094 = vld [vmem:[%s4066 + $0xa0] sm:$0xf]
          %v4095 = vld [vmem:[%s4066 + $0xa8] sm:$0xf]
          %v4096 = vld [vmem:[%s4066 + $0xac] sm:$0xf]
          %v4097 = vld [vmem:[%s4066 + $0xb4] sm:$0xf]
          %v4098 = vld [vmem:[%s4066 + $0xb8] sm:$0xf]
          %s4099 = scalar_lea.vmem [#allocation7], 384
          %v4100 = vld [vmem:[%s4099] sm:$0xf]
          %v4101 = vld [vmem:[%s4099 + $0x4] sm:$0xf]
          %v4102 = vld [vmem:[%s4099 + $0x8] sm:$0xf]
          %v4103 = vld [vmem:[%s4099 + $0xc] sm:$0xf]
          %v4104 = vld [vmem:[%s4099 + $0x10] sm:$0xf]
          %v4105 = vld [vmem:[%s4099 + $0x14] sm:$0xf]
          %v4106 = vld [vmem:[%s4099 + $0x18] sm:$0xf]
          %v4107 = vld [vmem:[%s4099 + $0x1c] sm:$0xf]
          %v4108 = vld [vmem:[%s4099 + $0x20] sm:$0xf]
          %v4109 = vld [vmem:[%s4099 + $0x24] sm:$0xf]
          %v4110 = vld [vmem:[%s4099 + $0x28] sm:$0xf]
          %v4111 = vld [vmem:[%s4099 + $0x2c] sm:$0xf]
          %v4112 = vld [vmem:[%s4099 + $0x30] sm:$0xf]
          %v4113 = vld [vmem:[%s4099 + $0x34] sm:$0xf]
          %v4114 = vld [vmem:[%s4099 + $0x38] sm:$0xf]
          %v4115 = vld [vmem:[%s4099 + $0x3c] sm:$0xf]
          %v4148 = vunpack.c.l.b16 %v4067
          %v4149 = vunpack.c.l.b16 %v4068
          %v4150 = vunpack.c.l.b16 %v4069
          %v4151 = vunpack.c.l.b16 %v4070
          %v4152 = vunpack.c.l.b16 %v4071
          %v4153 = vunpack.c.l.b16 %v4072
          %v4154 = vunpack.c.l.b16 %v4073
          %v4155 = vunpack.c.l.b16 %v4074
          %v4156 = vunpack.c.l.b16 %v4075
          %v4157 = vunpack.c.l.b16 %v4076
          %v4158 = vunpack.c.l.b16 %v4077
          %v4159 = vunpack.c.l.b16 %v4078
          %v4160 = vunpack.c.l.b16 %v4079
          %v4161 = vunpack.c.l.b16 %v4080
          %v4162 = vunpack.c.l.b16 %v4081
          %v4163 = vunpack.c.l.b16 %v4082
          %v4164 = vunpack.c.l.b16 %v4083
          %v4165 = vunpack.c.l.b16 %v4084
          %v4166 = vunpack.c.l.b16 %v4085
          %v4167 = vunpack.c.l.b16 %v4086
          %v4168 = vunpack.c.l.b16 %v4087
          %v4169 = vunpack.c.l.b16 %v4088
          %v4170 = vunpack.c.l.b16 %v4089
          %v4171 = vunpack.c.l.b16 %v4090
          %v4172 = vunpack.c.l.b16 %v4091
          %v4173 = vunpack.c.l.b16 %v4092
          %v4174 = vunpack.c.l.b16 %v4093
          %v4175 = vunpack.c.l.b16 %v4094
          %v4176 = vunpack.c.l.b16 %v4095
          %v4177 = vunpack.c.l.b16 %v4096
          %v4178 = vunpack.c.l.b16 %v4097
          %v4179 = vunpack.c.l.b16 %v4098
          %v4180 = vpack.c.b16 %v4149, %v4148
          %v4181 = vpack.c.b16 %v4151, %v4150
          %v4182 = vpack.c.b16 %v4153, %v4152
          %v4183 = vpack.c.b16 %v4155, %v4154
          %v4184 = vpack.c.b16 %v4157, %v4156
          %v4185 = vpack.c.b16 %v4159, %v4158
          %v4186 = vpack.c.b16 %v4161, %v4160
          %v4187 = vpack.c.b16 %v4163, %v4162
          %v4188 = vpack.c.b16 %v4165, %v4164
          %v4189 = vpack.c.b16 %v4167, %v4166
          %v4190 = vpack.c.b16 %v4169, %v4168
          %v4191 = vpack.c.b16 %v4171, %v4170
          %v4192 = vpack.c.b16 %v4173, %v4172
          %v4193 = vpack.c.b16 %v4175, %v4174
          %v4194 = vpack.c.b16 %v4177, %v4176
          %v4195 = vpack.c.b16 %v4179, %v4178
          %v4228 = vunpack.c.l.b16 %v4100
          %v4229 = vunpack.c.l.b16 %v4101
          %v4230 = vunpack.c.l.b16 %v4102
          %v4231 = vunpack.c.l.b16 %v4103
          %v4232 = vunpack.c.l.b16 %v4104
          %v4233 = vunpack.c.l.b16 %v4105
          %v4234 = vunpack.c.l.b16 %v4106
          %v4235 = vunpack.c.l.b16 %v4107
          %v4236 = vunpack.c.l.b16 %v4108
          %v4237 = vunpack.c.l.b16 %v4109
          %v4238 = vunpack.c.l.b16 %v4110
          %v4239 = vunpack.c.l.b16 %v4111
          %v4240 = vunpack.c.l.b16 %v4112
          %v4241 = vunpack.c.l.b16 %v4113
          %v4242 = vunpack.c.l.b16 %v4114
          %v4243 = vunpack.c.l.b16 %v4115
          %v4244 = vpack.c.b16 %v4229, %v4228
          %v4245 = vpack.c.b16 %v4231, %v4230
          %v4246 = vpack.c.b16 %v4233, %v4232
          %v4247 = vpack.c.b16 %v4235, %v4234
          %v4248 = vpack.c.b16 %v4237, %v4236
          %v4249 = vpack.c.b16 %v4239, %v4238
          %v4250 = vpack.c.b16 %v4241, %v4240
          %v4251 = vpack.c.b16 %v4243, %v4242
          %4260 = vmatprep.subr.bf16.mxu0 0
          %4261 = vmatpush1.bf16.msra.mxu0 %v4244
          %4262 = vmatprep.subr.bf16.mxu0 0
          %4263 = vmatpush1.bf16.msra.mxu0 %v4245
          %4264 = vmatprep.subr.bf16.mxu0 0
          %4265 = vmatpush1.bf16.msra.mxu0 %v4246
          %4266 = vmatprep.subr.bf16.mxu0 0
          %4267 = vmatpush1.bf16.msra.mxu0 %v4247
          %4268 = vmatprep.subr.bf16.mxu0 0
          %4269 = vmatpush1.bf16.msra.mxu0 %v4248
          %4270 = vmatprep.subr.bf16.mxu0 0
          %4271 = vmatpush1.bf16.msra.mxu0 %v4249
          %4272 = vmatprep.subr.bf16.mxu0 0
          %4273 = vmatpush1.bf16.msra.mxu0 %v4250
          %4274 = vmatprep.subr.bf16.mxu0 0
          %4275 = vmatpush1.bf16.msra.mxu0 %v4251
          %4276 = vmatprep.subr.bf16.mxu0 0
          %4277 = vmatpush1.bf16.msra.mxu0 0
          %4278 = vmatprep.subr.bf16.mxu0 0
          %4279 = vmatpush1.bf16.msra.mxu0 0
          %4280 = vmatprep.subr.bf16.mxu0 0
          %4281 = vmatpush1.bf16.msra.mxu0 0
          %4282 = vmatprep.subr.bf16.mxu0 0
          %4283 = vmatpush1.bf16.msra.mxu0 0
          %4284 = vmatprep.subr.bf16.mxu0 0
          %4285 = vmatpush1.bf16.msra.mxu0 0
          %4286 = vmatprep.subr.bf16.mxu0 0
          %4287 = vmatpush1.bf16.msra.mxu0 0
          %4288 = vmatprep.subr.bf16.mxu0 0
          %4289 = vmatpush1.bf16.msra.mxu0 0
          %4290 = vmatprep.subr.bf16.mxu0 0
          %4291 = vmatpush1.bf16.msra.mxu0 0
          %4292 = vmatprep.mubr.bf16.mxu0 0
          %4293 = vmatmul.mubr.bf16.gmra.mrb[0].mxu0 %v4180
          %v4294 = vpop.f32.mrb[0].mxu0
          %v4295 = vadd.f32 0.0, %v4294
          %v4296 = vpop.f32.mrb[0].mxu0
          %v4297 = vpop.f32.mrb[0].mxu0
          %v4298 = vadd.f32 0.0, %v4297
          %v4299 = vpop.f32.mrb[0].mxu0
          %4300 = vmatprep.mubr.bf16.mxu0 0
          %4301 = vmatmul.mubr.bf16.gmra.mrb[0].mxu0 %v4181
          %v4302 = vpop.f32.mrb[0].mxu0
          %v4303 = vadd.f32 0.0, %v4302
          %v4304 = vpop.f32.mrb[0].mxu0
          %v4305 = vpop.f32.mrb[0].mxu0
          %v4306 = vadd.f32 0.0, %v4305
          %v4307 = vpop.f32.mrb[0].mxu0
          %4308 = vmatprep.mubr.bf16.mxu0 0
          %4309 = vmatmul.mubr.bf16.gmra.mrb[0].mxu0 %v4182
          %v4310 = vpop.f32.mrb[0].mxu0
          %v4311 = vadd.f32 0.0, %v4310
          %v4312 = vpop.f32.mrb[0].mxu0
          %v4313 = vpop.f32.mrb[0].mxu0
          %v4314 = vadd.f32 0.0, %v4313
          %v4315 = vpop.f32.mrb[0].mxu0
          %4316 = vmatprep.mubr.bf16.mxu0 0
          %4317 = vmatmul.mubr.bf16.gmra.mrb[0].mxu0 %v4183
          %v4318 = vpop.f32.mrb[0].mxu0
          %v4319 = vadd.f32 0.0, %v4318
          %v4320 = vpop.f32.mrb[0].mxu0
          %v4321 = vpop.f32.mrb[0].mxu0
          %v4322 = vadd.f32 0.0, %v4321
          %v4323 = vpop.f32.mrb[0].mxu0
          %4324 = vmatprep.mubr.bf16.mxu0 0
          %4325 = vmatmul.mubr.bf16.gmra.mrb[0].mxu0 %v4184
          %v4326 = vpop.f32.mrb[0].mxu0
          %v4327 = vadd.f32 0.0, %v4326
          %v4328 = vpop.f32.mrb[0].mxu0
          %v4329 = vpop.f32.mrb[0].mxu0
          %v4330 = vadd.f32 0.0, %v4329
          %v4331 = vpop.f32.mrb[0].mxu0
          %4332 = vmatprep.mubr.bf16.mxu0 0
          %4333 = vmatmul.mubr.bf16.gmra.mrb[0].mxu0 %v4185
          %v4334 = vpop.f32.mrb[0].mxu0
          %v4335 = vadd.f32 0.0, %v4334
          %v4336 = vpop.f32.mrb[0].mxu0
          %v4337 = vpop.f32.mrb[0].mxu0
          %v4338 = vadd.f32 0.0, %v4337
          %v4339 = vpop.f32.mrb[0].mxu0
          %4340 = vmatprep.mubr.bf16.mxu0 0
          %4341 = vmatmul.mubr.bf16.gmra.mrb[0].mxu0 %v4186
          %v4342 = vpop.f32.mrb[0].mxu0
          %v4343 = vadd.f32 0.0, %v4342
          %v4344 = vpop.f32.mrb[0].mxu0
          %v4345 = vpop.f32.mrb[0].mxu0
          %v4346 = vadd.f32 0.0, %v4345
          %v4347 = vpop.f32.mrb[0].mxu0
          %4348 = vmatprep.mubr.bf16.mxu0 0
          %4349 = vmatmul.mubr.bf16.gmra.mrb[0].mxu0 %v4187
          %v4350 = vpop.f32.mrb[0].mxu0
          %v4351 = vadd.f32 0.0, %v4350
          %v4352 = vpop.f32.mrb[0].mxu0
          %v4353 = vpop.f32.mrb[0].mxu0
          %v4354 = vadd.f32 0.0, %v4353
          %v4355 = vpop.f32.mrb[0].mxu0
          %4356 = vmatprep.mubr.bf16.mxu0 0
          %4357 = vmatmul.mubr.bf16.gmra.mrb[0].mxu0 %v4188
          %v4358 = vpop.f32.mrb[0].mxu0
          %v4359 = vadd.f32 0.0, %v4358
          %v4360 = vpop.f32.mrb[0].mxu0
          %v4361 = vpop.f32.mrb[0].mxu0
          %v4362 = vadd.f32 0.0, %v4361
          %v4363 = vpop.f32.mrb[0].mxu0
          %4364 = vmatprep.mubr.bf16.mxu0 0
          %4365 = vmatmul.mubr.bf16.gmra.mrb[0].mxu0 %v4189
          %v4366 = vpop.f32.mrb[0].mxu0
          %v4367 = vadd.f32 0.0, %v4366
          %v4368 = vpop.f32.mrb[0].mxu0
          %v4369 = vpop.f32.mrb[0].mxu0
          %v4370 = vadd.f32 0.0, %v4369
          %v4371 = vpop.f32.mrb[0].mxu0
          %4372 = vmatprep.mubr.bf16.mxu0 0
          %4373 = vmatmul.mubr.bf16.gmra.mrb[0].mxu0 %v4190
          %v4374 = vpop.f32.mrb[0].mxu0
          %v4375 = vadd.f32 0.0, %v4374
          %v4376 = vpop.f32.mrb[0].mxu0
          %v4377 = vpop.f32.mrb[0].mxu0
          %v4378 = vadd.f32 0.0, %v4377
          %v4379 = vpop.f32.mrb[0].mxu0
          %4380 = vmatprep.mubr.bf16.mxu0 0
          %4381 = vmatmul.mubr.bf16.gmra.mrb[0].mxu0 %v4191
          %v4382 = vpop.f32.mrb[0].mxu0
          %v4383 = vadd.f32 0.0, %v4382
          %v4384 = vpop.f32.mrb[0].mxu0
          %v4385 = vpop.f32.mrb[0].mxu0
          %v4386 = vadd.f32 0.0, %v4385
          %v4387 = vpop.f32.mrb[0].mxu0
          %4388 = vmatprep.mubr.bf16.mxu0 0
          %4389 = vmatmul.mubr.bf16.gmra.mrb[0].mxu0 %v4192
          %v4390 = vpop.f32.mrb[0].mxu0
          %v4391 = vadd.f32 0.0, %v4390
          %v4392 = vpop.f32.mrb[0].mxu0
          %v4393 = vpop.f32.mrb[0].mxu0
          %v4394 = vadd.f32 0.0, %v4393
          %v4395 = vpop.f32.mrb[0].mxu0
          %4396 = vmatprep.mubr.bf16.mxu0 0
          %4397 = vmatmul.mubr.bf16.gmra.mrb[0].mxu0 %v4193
          %v4398 = vpop.f32.mrb[0].mxu0
          %v4399 = vadd.f32 0.0, %v4398
          %v4400 = vpop.f32.mrb[0].mxu0
          %v4401 = vpop.f32.mrb[0].mxu0
          %v4402 = vadd.f32 0.0, %v4401
          %v4403 = vpop.f32.mrb[0].mxu0
          %4404 = vmatprep.mubr.bf16.mxu0 0
          %4405 = vmatmul.mubr.bf16.gmra.mrb[0].mxu0 %v4194
          %v4406 = vpop.f32.mrb[0].mxu0
          %v4407 = vadd.f32 0.0, %v4406
          %v4408 = vpop.f32.mrb[0].mxu0
          %v4409 = vpop.f32.mrb[0].mxu0
          %v4410 = vadd.f32 0.0, %v4409
          %v4411 = vpop.f32.mrb[0].mxu0
          %4412 = vmatprep.mubr.bf16.mxu0 0
          %4413 = vmatmul.mubr.bf16.gmra.mrb[0].mxu0 %v4195
          %v4414 = vpop.f32.mrb[0].mxu0
          %v4415 = vadd.f32 0.0, %v4414
          %v4416 = vpop.f32.mrb[0].mxu0
          %v4417 = vpop.f32.mrb[0].mxu0
          %v4418 = vadd.f32 0.0, %v4417
          %v4419 = vpop.f32.mrb[0].mxu0
          %4420 = vdwg.mxu0
          %v4421 = vadd.f32 %v4034, %v4295
          %v4422 = vadd.f32 %v4035, %v4298
          %v4423 = vadd.f32 %v4036, %v4303
          %v4424 = vadd.f32 %v4037, %v4306
          %v4425 = vadd.f32 %v4038, %v4311
          %v4426 = vadd.f32 %v4039, %v4314
          %v4427 = vadd.f32 %v4040, %v4319
          %v4428 = vadd.f32 %v4041, %v4322
          %v4429 = vadd.f32 %v4042, %v4327
          %v4430 = vadd.f32 %v4043, %v4330
          %v4431 = vadd.f32 %v4044, %v4335
          %v4432 = vadd.f32 %v4045, %v4338
          %v4433 = vadd.f32 %v4046, %v4343
          %v4434 = vadd.f32 %v4047, %v4346
          %v4435 = vadd.f32 %v4048, %v4351
          %v4436 = vadd.f32 %v4049, %v4354
          %v4437 = vadd.f32 %v4050, %v4359
          %v4438 = vadd.f32 %v4051, %v4362
          %v4439 = vadd.f32 %v4052, %v4367
          %v4440 = vadd.f32 %v4053, %v4370
          %v4441 = vadd.f32 %v4054, %v4375
          %v4442 = vadd.f32 %v4055, %v4378
          %v4443 = vadd.f32 %v4056, %v4383
          %v4444 = vadd.f32 %v4057, %v4386
          %v4445 = vadd.f32 %v4058, %v4391
          %v4446 = vadd.f32 %v4059, %v4394
          %v4447 = vadd.f32 %v4060, %v4399
          %v4448 = vadd.f32 %v4061, %v4402
          %v4449 = vadd.f32 %v4062, %v4407
          %v4450 = vadd.f32 %v4063, %v4410
          %v4451 = vadd.f32 %v4064, %v4415
          %v4452 = vadd.f32 %v4065, %v4418
          %v4453 = vld [vmem:[%s4066] sm:$0xf]
          %v4454 = vld [vmem:[%s4066 + $0x4] sm:$0xf]
          %v4455 = vld [vmem:[%s4066 + $0x8] sm:$0x1]
          %v4456 = vld [vmem:[%s4066 + $0xc] sm:$0xf]
          %v4457 = vld [vmem:[%s4066 + $0x10] sm:$0xf]
          %v4458 = vld [vmem:[%s4066 + $0x14] sm:$0x1]
          %v4459 = vld [vmem:[%s4066 + $0x18] sm:$0xf]
          %v4460 = vld [vmem:[%s4066 + $0x1c] sm:$0xf]
          %v4461 = vld [vmem:[%s4066 + $0x20] sm:$0x1]
          %v4462 = vld [vmem:[%s4066 + $0x24] sm:$0xf]
          %v4463 = vld [vmem:[%s4066 + $0x28] sm:$0xf]
          %v4464 = vld [vmem:[%s4066 + $0x2c] sm:$0x1]
          %v4465 = vld [vmem:[%s4066 + $0x30] sm:$0xf]
          %v4466 = vld [vmem:[%s4066 + $0x34] sm:$0xf]
          %v4467 = vld [vmem:[%s4066 + $0x38] sm:$0x1]
          %v4468 = vld [vmem:[%s4066 + $0x3c] sm:$0xf]
          %v4469 = vld [vmem:[%s4066 + $0x40] sm:$0xf]
          %v4470 = vld [vmem:[%s4066 + $0x44] sm:$0x1]
          %v4471 = vld [vmem:[%s4066 + $0x48] sm:$0xf]
          %v4472 = vld [vmem:[%s4066 + $0x4c] sm:$0xf]
          %v4473 = vld [vmem:[%s4066 + $0x50] sm:$0x1]
          %v4474 = vld [vmem:[%s4066 + $0x54] sm:$0xf]
          %v4475 = vld [vmem:[%s4066 + $0x58] sm:$0xf]
          %v4476 = vld [vmem:[%s4066 + $0x5c] sm:$0x1]
          %v4477 = vld [vmem:[%s4066 + $0x60] sm:$0xf]
          %v4478 = vld [vmem:[%s4066 + $0x64] sm:$0xf]
          %v4479 = vld [vmem:[%s4066 + $0x68] sm:$0x1]
          %v4480 = vld [vmem:[%s4066 + $0x6c] sm:$0xf]
          %v4481 = vld [vmem:[%s4066 + $0x70] sm:$0xf]
          %v4482 = vld [vmem:[%s4066 + $0x74] sm:$0x1]
          %v4483 = vld [vmem:[%s4066 + $0x78] sm:$0xf]
          %v4484 = vld [vmem:[%s4066 + $0x7c] sm:$0xf]
          %v4485 = vld [vmem:[%s4066 + $0x80] sm:$0x1]
          %v4486 = vld [vmem:[%s4066 + $0x84] sm:$0xf]
          %v4487 = vld [vmem:[%s4066 + $0x88] sm:$0xf]
          %v4488 = vld [vmem:[%s4066 + $0x8c] sm:$0x1]
          %v4489 = vld [vmem:[%s4066 + $0x90] sm:$0xf]
          %v4490 = vld [vmem:[%s4066 + $0x94] sm:$0xf]
          %v4491 = vld [vmem:[%s4066 + $0x98] sm:$0x1]
          %v4492 = vld [vmem:[%s4066 + $0x9c] sm:$0xf]
          %v4493 = vld [vmem:[%s4066 + $0xa0] sm:$0xf]
          %v4494 = vld [vmem:[%s4066 + $0xa4] sm:$0x1]
          %v4495 = vld [vmem:[%s4066 + $0xa8] sm:$0xf]
          %v4496 = vld [vmem:[%s4066 + $0xac] sm:$0xf]
          %v4497 = vld [vmem:[%s4066 + $0xb0] sm:$0x1]
          %v4498 = vld [vmem:[%s4066 + $0xb4] sm:$0xf]
          %v4499 = vld [vmem:[%s4066 + $0xb8] sm:$0xf]
          %v4500 = vld [vmem:[%s4066 + $0xbc] sm:$0x1]
          %v4502 = vshrl.u32 %v4453, 16
          %v4504 = vrot.slane %v4502, 4
          %v4505 = vshll.u32 %v4453, 16
          %v4507 = vrot.slane %v4505, 5
          %v4508 = vor.u32 %v4504, %v4507
          %v4509 = vrot.slane %v4508, 4
          %v4511 = vshll.u32 %v4454, 16
          %v4513 = vrot.slane %v4511, 5
          %v4514 = vsel %vm963, %v4509, %v4513
          %v4515 = vshrl.u32 %v4454, 16
          %v4517 = vrot.slane %v4515, 4
          %v4518 = vor.u32 %v4517, %v4513
          %v4519 = vrot.slane %v4518, 4
          %v4521 = vshll.u32 %v4455, 16
          %v4523 = vrot.slane %v4521, 5
          %v4524 = vsel %vm963, %v4519, %v4523
          %v4526 = vshrl.u32 %v4456, 16
          %v4528 = vrot.slane %v4526, 4
          %v4529 = vshll.u32 %v4456, 16
          %v4531 = vrot.slane %v4529, 5
          %v4532 = vor.u32 %v4528, %v4531
          %v4533 = vrot.slane %v4532, 4
          %v4535 = vshll.u32 %v4457, 16
          %v4537 = vrot.slane %v4535, 5
          %v4538 = vsel %vm963, %v4533, %v4537
          %v4539 = vshrl.u32 %v4457, 16
          %v4541 = vrot.slane %v4539, 4
          %v4542 = vor.u32 %v4541, %v4537
          %v4543 = vrot.slane %v4542, 4
          %v4545 = vshll.u32 %v4458, 16
          %v4547 = vrot.slane %v4545, 5
          %v4548 = vsel %vm963, %v4543, %v4547
          %v4550 = vshrl.u32 %v4459, 16
          %v4552 = vrot.slane %v4550, 4
          %v4553 = vshll.u32 %v4459, 16
          %v4555 = vrot.slane %v4553, 5
          %v4556 = vor.u32 %v4552, %v4555
          %v4557 = vrot.slane %v4556, 4
          %v4559 = vshll.u32 %v4460, 16
          %v4561 = vrot.slane %v4559, 5
          %v4562 = vsel %vm963, %v4557, %v4561
          %v4563 = vshrl.u32 %v4460, 16
          %v4565 = vrot.slane %v4563, 4
          %v4566 = vor.u32 %v4565, %v4561
          %v4567 = vrot.slane %v4566, 4
          %v4569 = vshll.u32 %v4461, 16
          %v4571 = vrot.slane %v4569, 5
          %v4572 = vsel %vm963, %v4567, %v4571
          %v4574 = vshrl.u32 %v4462, 16
          %v4576 = vrot.slane %v4574, 4
          %v4577 = vshll.u32 %v4462, 16
          %v4579 = vrot.slane %v4577, 5
          %v4580 = vor.u32 %v4576, %v4579
          %v4581 = vrot.slane %v4580, 4
          %v4583 = vshll.u32 %v4463, 16
          %v4585 = vrot.slane %v4583, 5
          %v4586 = vsel %vm963, %v4581, %v4585
          %v4587 = vshrl.u32 %v4463, 16
          %v4589 = vrot.slane %v4587, 4
          %v4590 = vor.u32 %v4589, %v4585
          %v4591 = vrot.slane %v4590, 4
          %v4593 = vshll.u32 %v4464, 16
          %v4595 = vrot.slane %v4593, 5
          %v4596 = vsel %vm963, %v4591, %v4595
          %v4598 = vshrl.u32 %v4465, 16
          %v4600 = vrot.slane %v4598, 4
          %v4601 = vshll.u32 %v4465, 16
          %v4603 = vrot.slane %v4601, 5
          %v4604 = vor.u32 %v4600, %v4603
          %v4605 = vrot.slane %v4604, 4
          %v4607 = vshll.u32 %v4466, 16
          %v4609 = vrot.slane %v4607, 5
          %v4610 = vsel %vm963, %v4605, %v4609
          %v4611 = vshrl.u32 %v4466, 16
          %v4613 = vrot.slane %v4611, 4
          %v4614 = vor.u32 %v4613, %v4609
          %v4615 = vrot.slane %v4614, 4
          %v4617 = vshll.u32 %v4467, 16
          %v4619 = vrot.slane %v4617, 5
          %v4620 = vsel %vm963, %v4615, %v4619
          %v4622 = vshrl.u32 %v4468, 16
          %v4624 = vrot.slane %v4622, 4
          %v4625 = vshll.u32 %v4468, 16
          %v4627 = vrot.slane %v4625, 5
          %v4628 = vor.u32 %v4624, %v4627
          %v4629 = vrot.slane %v4628, 4
          %v4631 = vshll.u32 %v4469, 16
          %v4633 = vrot.slane %v4631, 5
          %v4634 = vsel %vm963, %v4629, %v4633
          %v4635 = vshrl.u32 %v4469, 16
          %v4637 = vrot.slane %v4635, 4
          %v4638 = vor.u32 %v4637, %v4633
          %v4639 = vrot.slane %v4638, 4
          %v4641 = vshll.u32 %v4470, 16
          %v4643 = vrot.slane %v4641, 5
          %v4644 = vsel %vm963, %v4639, %v4643
          %v4646 = vshrl.u32 %v4471, 16
          %v4648 = vrot.slane %v4646, 4
          %v4649 = vshll.u32 %v4471, 16
          %v4651 = vrot.slane %v4649, 5
          %v4652 = vor.u32 %v4648, %v4651
          %v4653 = vrot.slane %v4652, 4
          %v4655 = vshll.u32 %v4472, 16
          %v4657 = vrot.slane %v4655, 5
          %v4658 = vsel %vm963, %v4653, %v4657
          %v4659 = vshrl.u32 %v4472, 16
          %v4661 = vrot.slane %v4659, 4
          %v4662 = vor.u32 %v4661, %v4657
          %v4663 = vrot.slane %v4662, 4
          %v4665 = vshll.u32 %v4473, 16
          %v4667 = vrot.slane %v4665, 5
          %v4668 = vsel %vm963, %v4663, %v4667
          %v4670 = vshrl.u32 %v4474, 16
          %v4672 = vrot.slane %v4670, 4
          %v4673 = vshll.u32 %v4474, 16
          %v4675 = vrot.slane %v4673, 5
          %v4676 = vor.u32 %v4672, %v4675
          %v4677 = vrot.slane %v4676, 4
          %v4679 = vshll.u32 %v4475, 16
          %v4681 = vrot.slane %v4679, 5
          %v4682 = vsel %vm963, %v4677, %v4681
          %v4683 = vshrl.u32 %v4475, 16
          %v4685 = vrot.slane %v4683, 4
          %v4686 = vor.u32 %v4685, %v4681
          %v4687 = vrot.slane %v4686, 4
          %v4689 = vshll.u32 %v4476, 16
          %v4691 = vrot.slane %v4689, 5
          %v4692 = vsel %vm963, %v4687, %v4691
          %v4694 = vshrl.u32 %v4477, 16
          %v4696 = vrot.slane %v4694, 4
          %v4697 = vshll.u32 %v4477, 16
          %v4699 = vrot.slane %v4697, 5
          %v4700 = vor.u32 %v4696, %v4699
          %v4701 = vrot.slane %v4700, 4
          %v4703 = vshll.u32 %v4478, 16
          %v4705 = vrot.slane %v4703, 5
          %v4706 = vsel %vm963, %v4701, %v4705
          %v4707 = vshrl.u32 %v4478, 16
          %v4709 = vrot.slane %v4707, 4
          %v4710 = vor.u32 %v4709, %v4705
          %v4711 = vrot.slane %v4710, 4
          %v4713 = vshll.u32 %v4479, 16
          %v4715 = vrot.slane %v4713, 5
          %v4716 = vsel %vm963, %v4711, %v4715
          %v4718 = vshrl.u32 %v4480, 16
          %v4720 = vrot.slane %v4718, 4
          %v4721 = vshll.u32 %v4480, 16
          %v4723 = vrot.slane %v4721, 5
          %v4724 = vor.u32 %v4720, %v4723
          %v4725 = vrot.slane %v4724, 4
          %v4727 = vshll.u32 %v4481, 16
          %v4729 = vrot.slane %v4727, 5
          %v4730 = vsel %vm963, %v4725, %v4729
          %v4731 = vshrl.u32 %v4481, 16
          %v4733 = vrot.slane %v4731, 4
          %v4734 = vor.u32 %v4733, %v4729
          %v4735 = vrot.slane %v4734, 4
          %v4737 = vshll.u32 %v4482, 16
          %v4739 = vrot.slane %v4737, 5
          %v4740 = vsel %vm963, %v4735, %v4739
          %v4742 = vshrl.u32 %v4483, 16
          %v4744 = vrot.slane %v4742, 4
          %v4745 = vshll.u32 %v4483, 16
          %v4747 = vrot.slane %v4745, 5
          %v4748 = vor.u32 %v4744, %v4747
          %v4749 = vrot.slane %v4748, 4
          %v4751 = vshll.u32 %v4484, 16
          %v4753 = vrot.slane %v4751, 5
          %v4754 = vsel %vm963, %v4749, %v4753
          %v4755 = vshrl.u32 %v4484, 16
          %v4757 = vrot.slane %v4755, 4
          %v4758 = vor.u32 %v4757, %v4753
          %v4759 = vrot.slane %v4758, 4
          %v4761 = vshll.u32 %v4485, 16
          %v4763 = vrot.slane %v4761, 5
          %v4764 = vsel %vm963, %v4759, %v4763
          %v4766 = vshrl.u32 %v4486, 16
          %v4768 = vrot.slane %v4766, 4
          %v4769 = vshll.u32 %v4486, 16
          %v4771 = vrot.slane %v4769, 5
          %v4772 = vor.u32 %v4768, %v4771
          %v4773 = vrot.slane %v4772, 4
          %v4775 = vshll.u32 %v4487, 16
          %v4777 = vrot.slane %v4775, 5
          %v4778 = vsel %vm963, %v4773, %v4777
          %v4779 = vshrl.u32 %v4487, 16
          %v4781 = vrot.slane %v4779, 4
          %v4782 = vor.u32 %v4781, %v4777
          %v4783 = vrot.slane %v4782, 4
          %v4785 = vshll.u32 %v4488, 16
          %v4787 = vrot.slane %v4785, 5
          %v4788 = vsel %vm963, %v4783, %v4787
          %v4790 = vshrl.u32 %v4489, 16
          %v4792 = vrot.slane %v4790, 4
          %v4793 = vshll.u32 %v4489, 16
          %v4795 = vrot.slane %v4793, 5
          %v4796 = vor.u32 %v4792, %v4795
          %v4797 = vrot.slane %v4796, 4
          %v4799 = vshll.u32 %v4490, 16
          %v4801 = vrot.slane %v4799, 5
          %v4802 = vsel %vm963, %v4797, %v4801
          %v4803 = vshrl.u32 %v4490, 16
          %v4805 = vrot.slane %v4803, 4
          %v4806 = vor.u32 %v4805, %v4801
          %v4807 = vrot.slane %v4806, 4
          %v4809 = vshll.u32 %v4491, 16
          %v4811 = vrot.slane %v4809, 5
          %v4812 = vsel %vm963, %v4807, %v4811
          %v4814 = vshrl.u32 %v4492, 16
          %v4816 = vrot.slane %v4814, 4
          %v4817 = vshll.u32 %v4492, 16
          %v4819 = vrot.slane %v4817, 5
          %v4820 = vor.u32 %v4816, %v4819
          %v4821 = vrot.slane %v4820, 4
          %v4823 = vshll.u32 %v4493, 16
          %v4825 = vrot.slane %v4823, 5
          %v4826 = vsel %vm963, %v4821, %v4825
          %v4827 = vshrl.u32 %v4493, 16
          %v4829 = vrot.slane %v4827, 4
          %v4830 = vor.u32 %v4829, %v4825
          %v4831 = vrot.slane %v4830, 4
          %v4833 = vshll.u32 %v4494, 16
          %v4835 = vrot.slane %v4833, 5
          %v4836 = vsel %vm963, %v4831, %v4835
          %v4838 = vshrl.u32 %v4495, 16
          %v4840 = vrot.slane %v4838, 4
          %v4841 = vshll.u32 %v4495, 16
          %v4843 = vrot.slane %v4841, 5
          %v4844 = vor.u32 %v4840, %v4843
          %v4845 = vrot.slane %v4844, 4
          %v4847 = vshll.u32 %v4496, 16
          %v4849 = vrot.slane %v4847, 5
          %v4850 = vsel %vm963, %v4845, %v4849
          %v4851 = vshrl.u32 %v4496, 16
          %v4853 = vrot.slane %v4851, 4
          %v4854 = vor.u32 %v4853, %v4849
          %v4855 = vrot.slane %v4854, 4
          %v4857 = vshll.u32 %v4497, 16
          %v4859 = vrot.slane %v4857, 5
          %v4860 = vsel %vm963, %v4855, %v4859
          %v4862 = vshrl.u32 %v4498, 16
          %v4864 = vrot.slane %v4862, 4
          %v4865 = vshll.u32 %v4498, 16
          %v4867 = vrot.slane %v4865, 5
          %v4868 = vor.u32 %v4864, %v4867
          %v4869 = vrot.slane %v4868, 4
          %v4871 = vshll.u32 %v4499, 16
          %v4873 = vrot.slane %v4871, 5
          %v4874 = vsel %vm963, %v4869, %v4873
          %v4875 = vshrl.u32 %v4499, 16
          %v4877 = vrot.slane %v4875, 4
          %v4878 = vor.u32 %v4877, %v4873
          %v4879 = vrot.slane %v4878, 4
          %v4881 = vshll.u32 %v4500, 16
          %v4883 = vrot.slane %v4881, 5
          %v4884 = vsel %vm963, %v4879, %v4883
          %s4885 = scalar_lea.vmem [#allocation7], 448
          %v4886 = vld [vmem:[%s4885] sm:$0xf]
          %v4887 = vld [vmem:[%s4885 + $0x4] sm:$0xf]
          %v4888 = vld [vmem:[%s4885 + $0x8] sm:$0xf]
          %v4889 = vld [vmem:[%s4885 + $0xc] sm:$0xf]
          %v4890 = vld [vmem:[%s4885 + $0x10] sm:$0xf]
          %v4891 = vld [vmem:[%s4885 + $0x14] sm:$0xf]
          %v4892 = vld [vmem:[%s4885 + $0x18] sm:$0xf]
          %v4893 = vld [vmem:[%s4885 + $0x1c] sm:$0xf]
          %v4894 = vld [vmem:[%s4885 + $0x20] sm:$0xf]
          %v4895 = vld [vmem:[%s4885 + $0x24] sm:$0xf]
          %v4896 = vld [vmem:[%s4885 + $0x28] sm:$0xf]
          %v4897 = vld [vmem:[%s4885 + $0x2c] sm:$0xf]
          %v4898 = vld [vmem:[%s4885 + $0x30] sm:$0xf]
          %v4899 = vld [vmem:[%s4885 + $0x34] sm:$0xf]
          %v4900 = vld [vmem:[%s4885 + $0x38] sm:$0xf]
          %v4901 = vld [vmem:[%s4885 + $0x3c] sm:$0xf]
          %v4902 = vunpack.c.l.b16 %v4514
          %v4903 = vunpack.c.l.b16 %v4524
          %v4904 = vunpack.c.l.b16 %v4538
          %v4905 = vunpack.c.l.b16 %v4548
          %v4906 = vunpack.c.l.b16 %v4562
          %v4907 = vunpack.c.l.b16 %v4572
          %v4908 = vunpack.c.l.b16 %v4586
          %v4909 = vunpack.c.l.b16 %v4596
          %v4910 = vunpack.c.l.b16 %v4610
          %v4911 = vunpack.c.l.b16 %v4620
          %v4912 = vunpack.c.l.b16 %v4634
          %v4913 = vunpack.c.l.b16 %v4644
          %v4914 = vunpack.c.l.b16 %v4658
          %v4915 = vunpack.c.l.b16 %v4668
          %v4916 = vunpack.c.l.b16 %v4682
          %v4917 = vunpack.c.l.b16 %v4692
          %v4918 = vunpack.c.l.b16 %v4706
          %v4919 = vunpack.c.l.b16 %v4716
          %v4920 = vunpack.c.l.b16 %v4730
          %v4921 = vunpack.c.l.b16 %v4740
          %v4922 = vunpack.c.l.b16 %v4754
          %v4923 = vunpack.c.l.b16 %v4764
          %v4924 = vunpack.c.l.b16 %v4778
          %v4925 = vunpack.c.l.b16 %v4788
          %v4926 = vunpack.c.l.b16 %v4802
          %v4927 = vunpack.c.l.b16 %v4812
          %v4928 = vunpack.c.l.b16 %v4826
          %v4929 = vunpack.c.l.b16 %v4836
          %v4930 = vunpack.c.l.b16 %v4850
          %v4931 = vunpack.c.l.b16 %v4860
          %v4932 = vunpack.c.l.b16 %v4874
          %v4933 = vunpack.c.l.b16 %v4884
          %v4934 = vpack.c.b16 %v4903, %v4902
          %v4935 = vpack.c.b16 %v4905, %v4904
          %v4936 = vpack.c.b16 %v4907, %v4906
          %v4937 = vpack.c.b16 %v4909, %v4908
          %v4938 = vpack.c.b16 %v4911, %v4910
          %v4939 = vpack.c.b16 %v4913, %v4912
          %v4940 = vpack.c.b16 %v4915, %v4914
          %v4941 = vpack.c.b16 %v4917, %v4916
          %v4942 = vpack.c.b16 %v4919, %v4918
          %v4943 = vpack.c.b16 %v4921, %v4920
          %v4944 = vpack.c.b16 %v4923, %v4922
          %v4945 = vpack.c.b16 %v4925, %v4924
          %v4946 = vpack.c.b16 %v4927, %v4926
          %v4947 = vpack.c.b16 %v4929, %v4928
          %v4948 = vpack.c.b16 %v4931, %v4930
          %v4949 = vpack.c.b16 %v4933, %v4932
          %v4982 = vunpack.c.l.b16 %v4886
          %v4983 = vunpack.c.l.b16 %v4887
          %v4984 = vunpack.c.l.b16 %v4888
          %v4985 = vunpack.c.l.b16 %v4889
          %v4986 = vunpack.c.l.b16 %v4890
          %v4987 = vunpack.c.l.b16 %v4891
          %v4988 = vunpack.c.l.b16 %v4892
          %v4989 = vunpack.c.l.b16 %v4893
          %v4990 = vunpack.c.l.b16 %v4894
          %v4991 = vunpack.c.l.b16 %v4895
          %v4992 = vunpack.c.l.b16 %v4896
          %v4993 = vunpack.c.l.b16 %v4897
          %v4994 = vunpack.c.l.b16 %v4898
          %v4995 = vunpack.c.l.b16 %v4899
          %v4996 = vunpack.c.l.b16 %v4900
          %v4997 = vunpack.c.l.b16 %v4901
          %v4998 = vpack.c.b16 %v4983, %v4982
          %v4999 = vpack.c.b16 %v4985, %v4984
          %v5000 = vpack.c.b16 %v4987, %v4986
          %v5001 = vpack.c.b16 %v4989, %v4988
          %v5002 = vpack.c.b16 %v4991, %v4990
          %v5003 = vpack.c.b16 %v4993, %v4992
          %v5004 = vpack.c.b16 %v4995, %v4994
          %v5005 = vpack.c.b16 %v4997, %v4996
          %5014 = vmatprep.subr.bf16.mxu0 0
          %5015 = vmatpush1.bf16.msra.mxu0 %v4998
          %5016 = vmatprep.subr.bf16.mxu0 0
          %5017 = vmatpush1.bf16.msra.mxu0 %v4999
          %5018 = vmatprep.subr.bf16.mxu0 0
          %5019 = vmatpush1.bf16.msra.mxu0 %v5000
          %5020 = vmatprep.subr.bf16.mxu0 0
          %5021 = vmatpush1.bf16.msra.mxu0 %v5001
          %5022 = vmatprep.subr.bf16.mxu0 0
          %5023 = vmatpush1.bf16.msra.mxu0 %v5002
          %5024 = vmatprep.subr.bf16.mxu0 0
          %5025 = vmatpush1.bf16.msra.mxu0 %v5003
          %5026 = vmatprep.subr.bf16.mxu0 0
          %5027 = vmatpush1.bf16.msra.mxu0 %v5004
          %5028 = vmatprep.subr.bf16.mxu0 0
          %5029 = vmatpush1.bf16.msra.mxu0 %v5005
          %5030 = vmatprep.subr.bf16.mxu0 0
          %5031 = vmatpush1.bf16.msra.mxu0 0
          %5032 = vmatprep.subr.bf16.mxu0 0
          %5033 = vmatpush1.bf16.msra.mxu0 0
          %5034 = vmatprep.subr.bf16.mxu0 0
          %5035 = vmatpush1.bf16.msra.mxu0 0
          %5036 = vmatprep.subr.bf16.mxu0 0
          %5037 = vmatpush1.bf16.msra.mxu0 0
          %5038 = vmatprep.subr.bf16.mxu0 0
          %5039 = vmatpush1.bf16.msra.mxu0 0
          %5040 = vmatprep.subr.bf16.mxu0 0
          %5041 = vmatpush1.bf16.msra.mxu0 0
          %5042 = vmatprep.subr.bf16.mxu0 0
          %5043 = vmatpush1.bf16.msra.mxu0 0
          %5044 = vmatprep.subr.bf16.mxu0 0
          %5045 = vmatpush1.bf16.msra.mxu0 0
          %5046 = vmatprep.mubr.bf16.mxu0 0
          %5047 = vmatmul.mubr.bf16.gmra.mrb[0].mxu0 %v4934
          %v5048 = vpop.f32.mrb[0].mxu0
          %v5049 = vadd.f32 0.0, %v5048
          %v5050 = vpop.f32.mrb[0].mxu0
          %v5051 = vpop.f32.mrb[0].mxu0
          %v5052 = vadd.f32 0.0, %v5051
          %v5053 = vpop.f32.mrb[0].mxu0
          %5054 = vmatprep.mubr.bf16.mxu0 0
          %5055 = vmatmul.mubr.bf16.gmra.mrb[0].mxu0 %v4935
          %v5056 = vpop.f32.mrb[0].mxu0
          %v5057 = vadd.f32 0.0, %v5056
          %v5058 = vpop.f32.mrb[0].mxu0
          %v5059 = vpop.f32.mrb[0].mxu0
          %v5060 = vadd.f32 0.0, %v5059
          %v5061 = vpop.f32.mrb[0].mxu0
          %5062 = vmatprep.mubr.bf16.mxu0 0
          %5063 = vmatmul.mubr.bf16.gmra.mrb[0].mxu0 %v4936
          %v5064 = vpop.f32.mrb[0].mxu0
          %v5065 = vadd.f32 0.0, %v5064
          %v5066 = vpop.f32.mrb[0].mxu0
          %v5067 = vpop.f32.mrb[0].mxu0
          %v5068 = vadd.f32 0.0, %v5067
          %v5069 = vpop.f32.mrb[0].mxu0
          %5070 = vmatprep.mubr.bf16.mxu0 0
          %5071 = vmatmul.mubr.bf16.gmra.mrb[0].mxu0 %v4937
          %v5072 = vpop.f32.mrb[0].mxu0
          %v5073 = vadd.f32 0.0, %v5072
          %v5074 = vpop.f32.mrb[0].mxu0
          %v5075 = vpop.f32.mrb[0].mxu0
          %v5076 = vadd.f32 0.0, %v5075
          %v5077 = vpop.f32.mrb[0].mxu0
          %5078 = vmatprep.mubr.bf16.mxu0 0
          %5079 = vmatmul.mubr.bf16.gmra.mrb[0].mxu0 %v4938
          %v5080 = vpop.f32.mrb[0].mxu0
          %v5081 = vadd.f32 0.0, %v5080
          %v5082 = vpop.f32.mrb[0].mxu0
          %v5083 = vpop.f32.mrb[0].mxu0
          %v5084 = vadd.f32 0.0, %v5083
          %v5085 = vpop.f32.mrb[0].mxu0
          %5086 = vmatprep.mubr.bf16.mxu0 0
          %5087 = vmatmul.mubr.bf16.gmra.mrb[0].mxu0 %v4939
          %v5088 = vpop.f32.mrb[0].mxu0
          %v5089 = vadd.f32 0.0, %v5088
          %v5090 = vpop.f32.mrb[0].mxu0
          %v5091 = vpop.f32.mrb[0].mxu0
          %v5092 = vadd.f32 0.0, %v5091
          %v5093 = vpop.f32.mrb[0].mxu0
          %5094 = vmatprep.mubr.bf16.mxu0 0
          %5095 = vmatmul.mubr.bf16.gmra.mrb[0].mxu0 %v4940
          %v5096 = vpop.f32.mrb[0].mxu0
          %v5097 = vadd.f32 0.0, %v5096
          %v5098 = vpop.f32.mrb[0].mxu0
          %v5099 = vpop.f32.mrb[0].mxu0
          %v5100 = vadd.f32 0.0, %v5099
          %v5101 = vpop.f32.mrb[0].mxu0
          %5102 = vmatprep.mubr.bf16.mxu0 0
          %5103 = vmatmul.mubr.bf16.gmra.mrb[0].mxu0 %v4941
          %v5104 = vpop.f32.mrb[0].mxu0
          %v5105 = vadd.f32 0.0, %v5104
          %v5106 = vpop.f32.mrb[0].mxu0
          %v5107 = vpop.f32.mrb[0].mxu0
          %v5108 = vadd.f32 0.0, %v5107
          %v5109 = vpop.f32.mrb[0].mxu0
          %5110 = vmatprep.mubr.bf16.mxu0 0
          %5111 = vmatmul.mubr.bf16.gmra.mrb[0].mxu0 %v4942
          %v5112 = vpop.f32.mrb[0].mxu0
          %v5113 = vadd.f32 0.0, %v5112
          %v5114 = vpop.f32.mrb[0].mxu0
          %v5115 = vpop.f32.mrb[0].mxu0
          %v5116 = vadd.f32 0.0, %v5115
          %v5117 = vpop.f32.mrb[0].mxu0
          %5118 = vmatprep.mubr.bf16.mxu0 0
          %5119 = vmatmul.mubr.bf16.gmra.mrb[0].mxu0 %v4943
          %v5120 = vpop.f32.mrb[0].mxu0
          %v5121 = vadd.f32 0.0, %v5120
          %v5122 = vpop.f32.mrb[0].mxu0
          %v5123 = vpop.f32.mrb[0].mxu0
          %v5124 = vadd.f32 0.0, %v5123
          %v5125 = vpop.f32.mrb[0].mxu0
          %5126 = vmatprep.mubr.bf16.mxu0 0
          %5127 = vmatmul.mubr.bf16.gmra.mrb[0].mxu0 %v4944
          %v5128 = vpop.f32.mrb[0].mxu0
          %v5129 = vadd.f32 0.0, %v5128
          %v5130 = vpop.f32.mrb[0].mxu0
          %v5131 = vpop.f32.mrb[0].mxu0
          %v5132 = vadd.f32 0.0, %v5131
          %v5133 = vpop.f32.mrb[0].mxu0
          %5134 = vmatprep.mubr.bf16.mxu0 0
          %5135 = vmatmul.mubr.bf16.gmra.mrb[0].mxu0 %v4945
          %v5136 = vpop.f32.mrb[0].mxu0
          %v5137 = vadd.f32 0.0, %v5136
          %v5138 = vpop.f32.mrb[0].mxu0
          %v5139 = vpop.f32.mrb[0].mxu0
          %v5140 = vadd.f32 0.0, %v5139
          %v5141 = vpop.f32.mrb[0].mxu0
          %5142 = vmatprep.mubr.bf16.mxu0 0
          %5143 = vmatmul.mubr.bf16.gmra.mrb[0].mxu0 %v4946
          %v5144 = vpop.f32.mrb[0].mxu0
          %v5145 = vadd.f32 0.0, %v5144
          %v5146 = vpop.f32.mrb[0].mxu0
          %v5147 = vpop.f32.mrb[0].mxu0
          %v5148 = vadd.f32 0.0, %v5147
          %v5149 = vpop.f32.mrb[0].mxu0
          %5150 = vmatprep.mubr.bf16.mxu0 0
          %5151 = vmatmul.mubr.bf16.gmra.mrb[0].mxu0 %v4947
          %v5152 = vpop.f32.mrb[0].mxu0
          %v5153 = vadd.f32 0.0, %v5152
          %v5154 = vpop.f32.mrb[0].mxu0
          %v5155 = vpop.f32.mrb[0].mxu0
          %v5156 = vadd.f32 0.0, %v5155
          %v5157 = vpop.f32.mrb[0].mxu0
          %5158 = vmatprep.mubr.bf16.mxu0 0
          %5159 = vmatmul.mubr.bf16.gmra.mrb[0].mxu0 %v4948
          %v5160 = vpop.f32.mrb[0].mxu0
          %v5161 = vadd.f32 0.0, %v5160
          %v5162 = vpop.f32.mrb[0].mxu0
          %v5163 = vpop.f32.mrb[0].mxu0
          %v5164 = vadd.f32 0.0, %v5163
          %v5165 = vpop.f32.mrb[0].mxu0
          %5166 = vmatprep.mubr.bf16.mxu0 0
          %5167 = vmatmul.mubr.bf16.gmra.mrb[0].mxu0 %v4949
          %v5168 = vpop.f32.mrb[0].mxu0
          %v5169 = vadd.f32 0.0, %v5168
          %v5170 = vpop.f32.mrb[0].mxu0
          %v5171 = vpop.f32.mrb[0].mxu0
          %v5172 = vadd.f32 0.0, %v5171
          %v5173 = vpop.f32.mrb[0].mxu0
          %5174 = vdwg.mxu0
          %v5175 = vadd.f32 %v4421, %v5049
          %v5176 = vadd.f32 %v4422, %v5052
          %v5177 = vadd.f32 %v4423, %v5057
          %v5178 = vadd.f32 %v4424, %v5060
          %v5179 = vadd.f32 %v4425, %v5065
          %v5180 = vadd.f32 %v4426, %v5068
          %v5181 = vadd.f32 %v4427, %v5073
          %v5182 = vadd.f32 %v4428, %v5076
          %v5183 = vadd.f32 %v4429, %v5081
          %v5184 = vadd.f32 %v4430, %v5084
          %v5185 = vadd.f32 %v4431, %v5089
          %v5186 = vadd.f32 %v4432, %v5092
          %v5187 = vadd.f32 %v4433, %v5097
          %v5188 = vadd.f32 %v4434, %v5100
          %v5189 = vadd.f32 %v4435, %v5105
          %v5190 = vadd.f32 %v4436, %v5108
          %v5191 = vadd.f32 %v4437, %v5113
          %v5192 = vadd.f32 %v4438, %v5116
          %v5193 = vadd.f32 %v4439, %v5121
          %v5194 = vadd.f32 %v4440, %v5124
          %v5195 = vadd.f32 %v4441, %v5129
          %v5196 = vadd.f32 %v4442, %v5132
          %v5197 = vadd.f32 %v4443, %v5137
          %v5198 = vadd.f32 %v4444, %v5140
          %v5199 = vadd.f32 %v4445, %v5145
          %v5200 = vadd.f32 %v4446, %v5148
          %v5201 = vadd.f32 %v4447, %v5153
          %v5202 = vadd.f32 %v4448, %v5156
          %v5203 = vadd.f32 %v4449, %v5161
          %v5204 = vadd.f32 %v4450, %v5164
          %v5205 = vadd.f32 %v4451, %v5169
          %v5206 = vadd.f32 %v4452, %v5172
          %v5207 = vld [vmem:[%s4066] sm:$0xe]
          %v5208 = vld [vmem:[%s4066 + $0xc] sm:$0xe]
          %v5209 = vld [vmem:[%s4066 + $0x18] sm:$0xe]
          %v5210 = vld [vmem:[%s4066 + $0x24] sm:$0xe]
          %v5211 = vld [vmem:[%s4066 + $0x30] sm:$0xe]
          %v5212 = vld [vmem:[%s4066 + $0x3c] sm:$0xe]
          %v5213 = vld [vmem:[%s4066 + $0x48] sm:$0xe]
          %v5214 = vld [vmem:[%s4066 + $0x54] sm:$0xe]
          %v5215 = vld [vmem:[%s4066 + $0x60] sm:$0xe]
          %v5216 = vld [vmem:[%s4066 + $0x6c] sm:$0xe]
          %v5217 = vld [vmem:[%s4066 + $0x78] sm:$0xe]
          %v5218 = vld [vmem:[%s4066 + $0x84] sm:$0xe]
          %v5219 = vld [vmem:[%s4066 + $0x90] sm:$0xe]
          %v5220 = vld [vmem:[%s4066 + $0x9c] sm:$0xe]
          %v5221 = vld [vmem:[%s4066 + $0xa8] sm:$0xe]
          %v5222 = vld [vmem:[%s4066 + $0xb4] sm:$0xe]
          %v5271 = vrot.slane %v5207, 5
          %v5272 = vrot.slane %v5271, 4
          %v5273 = vrot.slane %v4454, 5
          %v5274 = vsel %vm1993, %v5272, %v5273
          %v5275 = vrot.slane %v5273, 4
          %v5276 = vrot.slane %v4455, 5
          %v5277 = vsel %vm1993, %v5275, %v5276
          %v5278 = vrot.slane %v5208, 5
          %v5279 = vrot.slane %v5278, 4
          %v5280 = vrot.slane %v4457, 5
          %v5281 = vsel %vm1993, %v5279, %v5280
          %v5282 = vrot.slane %v5280, 4
          %v5283 = vrot.slane %v4458, 5
          %v5284 = vsel %vm1993, %v5282, %v5283
          %v5285 = vrot.slane %v5209, 5
          %v5286 = vrot.slane %v5285, 4
          %v5287 = vrot.slane %v4460, 5
          %v5288 = vsel %vm1993, %v5286, %v5287
          %v5289 = vrot.slane %v5287, 4
          %v5290 = vrot.slane %v4461, 5
          %v5291 = vsel %vm1993, %v5289, %v5290
          %v5292 = vrot.slane %v5210, 5
          %v5293 = vrot.slane %v5292, 4
          %v5294 = vrot.slane %v4463, 5
          %v5295 = vsel %vm1993, %v5293, %v5294
          %v5296 = vrot.slane %v5294, 4
          %v5297 = vrot.slane %v4464, 5
          %v5298 = vsel %vm1993, %v5296, %v5297
          %v5299 = vrot.slane %v5211, 5
          %v5300 = vrot.slane %v5299, 4
          %v5301 = vrot.slane %v4466, 5
          %v5302 = vsel %vm1993, %v5300, %v5301
          %v5303 = vrot.slane %v5301, 4
          %v5304 = vrot.slane %v4467, 5
          %v5305 = vsel %vm1993, %v5303, %v5304
          %v5306 = vrot.slane %v5212, 5
          %v5307 = vrot.slane %v5306, 4
          %v5308 = vrot.slane %v4469, 5
          %v5309 = vsel %vm1993, %v5307, %v5308
          %v5310 = vrot.slane %v5308, 4
          %v5311 = vrot.slane %v4470, 5
          %v5312 = vsel %vm1993, %v5310, %v5311
          %v5313 = vrot.slane %v5213, 5
          %v5314 = vrot.slane %v5313, 4
          %v5315 = vrot.slane %v4472, 5
          %v5316 = vsel %vm1993, %v5314, %v5315
          %v5317 = vrot.slane %v5315, 4
          %v5318 = vrot.slane %v4473, 5
          %v5319 = vsel %vm1993, %v5317, %v5318
          %v5320 = vrot.slane %v5214, 5
          %v5321 = vrot.slane %v5320, 4
          %v5322 = vrot.slane %v4475, 5
          %v5323 = vsel %vm1993, %v5321, %v5322
          %v5324 = vrot.slane %v5322, 4
          %v5325 = vrot.slane %v4476, 5
          %v5326 = vsel %vm1993, %v5324, %v5325
          %v5327 = vrot.slane %v5215, 5
          %v5328 = vrot.slane %v5327, 4
          %v5329 = vrot.slane %v4478, 5
          %v5330 = vsel %vm1993, %v5328, %v5329
          %v5331 = vrot.slane %v5329, 4
          %v5332 = vrot.slane %v4479, 5
          %v5333 = vsel %vm1993, %v5331, %v5332
          %v5334 = vrot.slane %v5216, 5
          %v5335 = vrot.slane %v5334, 4
          %v5336 = vrot.slane %v4481, 5
          %v5337 = vsel %vm1993, %v5335, %v5336
          %v5338 = vrot.slane %v5336, 4
          %v5339 = vrot.slane %v4482, 5
          %v5340 = vsel %vm1993, %v5338, %v5339
          %v5341 = vrot.slane %v5217, 5
          %v5342 = vrot.slane %v5341, 4
          %v5343 = vrot.slane %v4484, 5
          %v5344 = vsel %vm1993, %v5342, %v5343
          %v5345 = vrot.slane %v5343, 4
          %v5346 = vrot.slane %v4485, 5
          %v5347 = vsel %vm1993, %v5345, %v5346
          %v5348 = vrot.slane %v5218, 5
          %v5349 = vrot.slane %v5348, 4
          %v5350 = vrot.slane %v4487, 5
          %v5351 = vsel %vm1993, %v5349, %v5350
          %v5352 = vrot.slane %v5350, 4
          %v5353 = vrot.slane %v4488, 5
          %v5354 = vsel %vm1993, %v5352, %v5353
          %v5355 = vrot.slane %v5219, 5
          %v5356 = vrot.slane %v5355, 4
          %v5357 = vrot.slane %v4490, 5
          %v5358 = vsel %vm1993, %v5356, %v5357
          %v5359 = vrot.slane %v5357, 4
          %v5360 = vrot.slane %v4491, 5
          %v5361 = vsel %vm1993, %v5359, %v5360
          %v5362 = vrot.slane %v5220, 5
          %v5363 = vrot.slane %v5362, 4
          %v5364 = vrot.slane %v4493, 5
          %v5365 = vsel %vm1993, %v5363, %v5364
          %v5366 = vrot.slane %v5364, 4
          %v5367 = vrot.slane %v4494, 5
          %v5368 = vsel %vm1993, %v5366, %v5367
          %v5369 = vrot.slane %v5221, 5
          %v5370 = vrot.slane %v5369, 4
          %v5371 = vrot.slane %v4496, 5
          %v5372 = vsel %vm1993, %v5370, %v5371
          %v5373 = vrot.slane %v5371, 4
          %v5374 = vrot.slane %v4497, 5
          %v5375 = vsel %vm1993, %v5373, %v5374
          %v5376 = vrot.slane %v5222, 5
          %v5377 = vrot.slane %v5376, 4
          %v5378 = vrot.slane %v4499, 5
          %v5379 = vsel %vm1993, %v5377, %v5378
          %v5380 = vrot.slane %v5378, 4
          %v5381 = vrot.slane %v4500, 5
          %v5382 = vsel %vm1993, %v5380, %v5381
          %s5383 = scalar_lea.vmem [#allocation7], 512
          %v5384 = vld [vmem:[%s5383] sm:$0xf]
          %v5385 = vld [vmem:[%s5383 + $0x4] sm:$0xf]
          %v5386 = vld [vmem:[%s5383 + $0x8] sm:$0xf]
          %v5387 = vld [vmem:[%s5383 + $0xc] sm:$0xf]
          %v5388 = vld [vmem:[%s5383 + $0x10] sm:$0xf]
          %v5389 = vld [vmem:[%s5383 + $0x14] sm:$0xf]
          %v5390 = vld [vmem:[%s5383 + $0x18] sm:$0xf]
          %v5391 = vld [vmem:[%s5383 + $0x1c] sm:$0xf]
          %v5392 = vld [vmem:[%s5383 + $0x20] sm:$0xf]
          %v5393 = vld [vmem:[%s5383 + $0x24] sm:$0xf]
          %v5394 = vld [vmem:[%s5383 + $0x28] sm:$0xf]
          %v5395 = vld [vmem:[%s5383 + $0x2c] sm:$0xf]
          %v5396 = vld [vmem:[%s5383 + $0x30] sm:$0xf]
          %v5397 = vld [vmem:[%s5383 + $0x34] sm:$0xf]
          %v5398 = vld [vmem:[%s5383 + $0x38] sm:$0xf]
          %v5399 = vld [vmem:[%s5383 + $0x3c] sm:$0xf]
          %v5400 = vunpack.c.l.b16 %v5274
          %v5401 = vunpack.c.l.b16 %v5277
          %v5402 = vunpack.c.l.b16 %v5281
          %v5403 = vunpack.c.l.b16 %v5284
          %v5404 = vunpack.c.l.b16 %v5288
          %v5405 = vunpack.c.l.b16 %v5291
          %v5406 = vunpack.c.l.b16 %v5295
          %v5407 = vunpack.c.l.b16 %v5298
          %v5408 = vunpack.c.l.b16 %v5302
          %v5409 = vunpack.c.l.b16 %v5305
          %v5410 = vunpack.c.l.b16 %v5309
          %v5411 = vunpack.c.l.b16 %v5312
          %v5412 = vunpack.c.l.b16 %v5316
          %v5413 = vunpack.c.l.b16 %v5319
          %v5414 = vunpack.c.l.b16 %v5323
          %v5415 = vunpack.c.l.b16 %v5326
          %v5416 = vunpack.c.l.b16 %v5330
          %v5417 = vunpack.c.l.b16 %v5333
          %v5418 = vunpack.c.l.b16 %v5337
          %v5419 = vunpack.c.l.b16 %v5340
          %v5420 = vunpack.c.l.b16 %v5344
          %v5421 = vunpack.c.l.b16 %v5347
          %v5422 = vunpack.c.l.b16 %v5351
          %v5423 = vunpack.c.l.b16 %v5354
          %v5424 = vunpack.c.l.b16 %v5358
          %v5425 = vunpack.c.l.b16 %v5361
          %v5426 = vunpack.c.l.b16 %v5365
          %v5427 = vunpack.c.l.b16 %v5368
          %v5428 = vunpack.c.l.b16 %v5372
          %v5429 = vunpack.c.l.b16 %v5375
          %v5430 = vunpack.c.l.b16 %v5379
          %v5431 = vunpack.c.l.b16 %v5382
          %v5432 = vpack.c.b16 %v5401, %v5400
          %v5433 = vpack.c.b16 %v5403, %v5402
          %v5434 = vpack.c.b16 %v5405, %v5404
          %v5435 = vpack.c.b16 %v5407, %v5406
          %v5436 = vpack.c.b16 %v5409, %v5408
          %v5437 = vpack.c.b16 %v5411, %v5410
          %v5438 = vpack.c.b16 %v5413, %v5412
          %v5439 = vpack.c.b16 %v5415, %v5414
          %v5440 = vpack.c.b16 %v5417, %v5416
          %v5441 = vpack.c.b16 %v5419, %v5418
          %v5442 = vpack.c.b16 %v5421, %v5420
          %v5443 = vpack.c.b16 %v5423, %v5422
          %v5444 = vpack.c.b16 %v5425, %v5424
          %v5445 = vpack.c.b16 %v5427, %v5426
          %v5446 = vpack.c.b16 %v5429, %v5428
          %v5447 = vpack.c.b16 %v5431, %v5430
          %v5480 = vunpack.c.l.b16 %v5384
          %v5481 = vunpack.c.l.b16 %v5385
          %v5482 = vunpack.c.l.b16 %v5386
          %v5483 = vunpack.c.l.b16 %v5387
          %v5484 = vunpack.c.l.b16 %v5388
          %v5485 = vunpack.c.l.b16 %v5389
          %v5486 = vunpack.c.l.b16 %v5390
          %v5487 = vunpack.c.l.b16 %v5391
          %v5488 = vunpack.c.l.b16 %v5392
          %v5489 = vunpack.c.l.b16 %v5393
          %v5490 = vunpack.c.l.b16 %v5394
          %v5491 = vunpack.c.l.b16 %v5395
          %v5492 = vunpack.c.l.b16 %v5396
          %v5493 = vunpack.c.l.b16 %v5397
          %v5494 = vunpack.c.l.b16 %v5398
          %v5495 = vunpack.c.l.b16 %v5399
          %v5496 = vpack.c.b16 %v5481, %v5480
          %v5497 = vpack.c.b16 %v5483, %v5482
          %v5498 = vpack.c.b16 %v5485, %v5484
          %v5499 = vpack.c.b16 %v5487, %v5486
          %v5500 = vpack.c.b16 %v5489, %v5488
          %v5501 = vpack.c.b16 %v5491, %v5490
          %v5502 = vpack.c.b16 %v5493, %v5492
          %v5503 = vpack.c.b16 %v5495, %v5494
          %5512 = vmatprep.subr.bf16.mxu0 0
          %5513 = vmatpush1.bf16.msra.mxu0 %v5496
          %5514 = vmatprep.subr.bf16.mxu0 0
          %5515 = vmatpush1.bf16.msra.mxu0 %v5497
          %5516 = vmatprep.subr.bf16.mxu0 0
          %5517 = vmatpush1.bf16.msra.mxu0 %v5498
          %5518 = vmatprep.subr.bf16.mxu0 0
          %5519 = vmatpush1.bf16.msra.mxu0 %v5499
          %5520 = vmatprep.subr.bf16.mxu0 0
          %5521 = vmatpush1.bf16.msra.mxu0 %v5500
          %5522 = vmatprep.subr.bf16.mxu0 0
          %5523 = vmatpush1.bf16.msra.mxu0 %v5501
          %5524 = vmatprep.subr.bf16.mxu0 0
          %5525 = vmatpush1.bf16.msra.mxu0 %v5502
          %5526 = vmatprep.subr.bf16.mxu0 0
          %5527 = vmatpush1.bf16.msra.mxu0 %v5503
          %5528 = vmatprep.subr.bf16.mxu0 0
          %5529 = vmatpush1.bf16.msra.mxu0 0
          %5530 = vmatprep.subr.bf16.mxu0 0
          %5531 = vmatpush1.bf16.msra.mxu0 0
          %5532 = vmatprep.subr.bf16.mxu0 0
          %5533 = vmatpush1.bf16.msra.mxu0 0
          %5534 = vmatprep.subr.bf16.mxu0 0
          %5535 = vmatpush1.bf16.msra.mxu0 0
          %5536 = vmatprep.subr.bf16.mxu0 0
          %5537 = vmatpush1.bf16.msra.mxu0 0
          %5538 = vmatprep.subr.bf16.mxu0 0
          %5539 = vmatpush1.bf16.msra.mxu0 0
          %5540 = vmatprep.subr.bf16.mxu0 0
          %5541 = vmatpush1.bf16.msra.mxu0 0
          %5542 = vmatprep.subr.bf16.mxu0 0
          %5543 = vmatpush1.bf16.msra.mxu0 0
          %5544 = vmatprep.mubr.bf16.mxu0 0
          %5545 = vmatmul.mubr.bf16.gmra.mrb[0].mxu0 %v5432
          %v5546 = vpop.f32.mrb[0].mxu0
          %v5547 = vadd.f32 0.0, %v5546
          %v5548 = vpop.f32.mrb[0].mxu0
          %v5549 = vpop.f32.mrb[0].mxu0
          %v5550 = vadd.f32 0.0, %v5549
          %v5551 = vpop.f32.mrb[0].mxu0
          %5552 = vmatprep.mubr.bf16.mxu0 0
          %5553 = vmatmul.mubr.bf16.gmra.mrb[0].mxu0 %v5433
          %v5554 = vpop.f32.mrb[0].mxu0
          %v5555 = vadd.f32 0.0, %v5554
          %v5556 = vpop.f32.mrb[0].mxu0
          %v5557 = vpop.f32.mrb[0].mxu0
          %v5558 = vadd.f32 0.0, %v5557
          %v5559 = vpop.f32.mrb[0].mxu0
          %5560 = vmatprep.mubr.bf16.mxu0 0
          %5561 = vmatmul.mubr.bf16.gmra.mrb[0].mxu0 %v5434
          %v5562 = vpop.f32.mrb[0].mxu0
          %v5563 = vadd.f32 0.0, %v5562
          %v5564 = vpop.f32.mrb[0].mxu0
          %v5565 = vpop.f32.mrb[0].mxu0
          %v5566 = vadd.f32 0.0, %v5565
          %v5567 = vpop.f32.mrb[0].mxu0
          %5568 = vmatprep.mubr.bf16.mxu0 0
          %5569 = vmatmul.mubr.bf16.gmra.mrb[0].mxu0 %v5435
          %v5570 = vpop.f32.mrb[0].mxu0
          %v5571 = vadd.f32 0.0, %v5570
          %v5572 = vpop.f32.mrb[0].mxu0
          %v5573 = vpop.f32.mrb[0].mxu0
          %v5574 = vadd.f32 0.0, %v5573
          %v5575 = vpop.f32.mrb[0].mxu0
          %5576 = vmatprep.mubr.bf16.mxu0 0
          %5577 = vmatmul.mubr.bf16.gmra.mrb[0].mxu0 %v5436
          %v5578 = vpop.f32.mrb[0].mxu0
          %v5579 = vadd.f32 0.0, %v5578
          %v5580 = vpop.f32.mrb[0].mxu0
          %v5581 = vpop.f32.mrb[0].mxu0
          %v5582 = vadd.f32 0.0, %v5581
          %v5583 = vpop.f32.mrb[0].mxu0
          %5584 = vmatprep.mubr.bf16.mxu0 0
          %5585 = vmatmul.mubr.bf16.gmra.mrb[0].mxu0 %v5437
          %v5586 = vpop.f32.mrb[0].mxu0
          %v5587 = vadd.f32 0.0, %v5586
          %v5588 = vpop.f32.mrb[0].mxu0
          %v5589 = vpop.f32.mrb[0].mxu0
          %v5590 = vadd.f32 0.0, %v5589
          %v5591 = vpop.f32.mrb[0].mxu0
          %5592 = vmatprep.mubr.bf16.mxu0 0
          %5593 = vmatmul.mubr.bf16.gmra.mrb[0].mxu0 %v5438
          %v5594 = vpop.f32.mrb[0].mxu0
          %v5595 = vadd.f32 0.0, %v5594
          %v5596 = vpop.f32.mrb[0].mxu0
          %v5597 = vpop.f32.mrb[0].mxu0
          %v5598 = vadd.f32 0.0, %v5597
          %v5599 = vpop.f32.mrb[0].mxu0
          %5600 = vmatprep.mubr.bf16.mxu0 0
          %5601 = vmatmul.mubr.bf16.gmra.mrb[0].mxu0 %v5439
          %v5602 = vpop.f32.mrb[0].mxu0
          %v5603 = vadd.f32 0.0, %v5602
          %v5604 = vpop.f32.mrb[0].mxu0
          %v5605 = vpop.f32.mrb[0].mxu0
          %v5606 = vadd.f32 0.0, %v5605
          %v5607 = vpop.f32.mrb[0].mxu0
          %5608 = vmatprep.mubr.bf16.mxu0 0
          %5609 = vmatmul.mubr.bf16.gmra.mrb[0].mxu0 %v5440
          %v5610 = vpop.f32.mrb[0].mxu0
          %v5611 = vadd.f32 0.0, %v5610
          %v5612 = vpop.f32.mrb[0].mxu0
          %v5613 = vpop.f32.mrb[0].mxu0
          %v5614 = vadd.f32 0.0, %v5613
          %v5615 = vpop.f32.mrb[0].mxu0
          %5616 = vmatprep.mubr.bf16.mxu0 0
          %5617 = vmatmul.mubr.bf16.gmra.mrb[0].mxu0 %v5441
          %v5618 = vpop.f32.mrb[0].mxu0
          %v5619 = vadd.f32 0.0, %v5618
          %v5620 = vpop.f32.mrb[0].mxu0
          %v5621 = vpop.f32.mrb[0].mxu0
          %v5622 = vadd.f32 0.0, %v5621
          %v5623 = vpop.f32.mrb[0].mxu0
          %5624 = vmatprep.mubr.bf16.mxu0 0
          %5625 = vmatmul.mubr.bf16.gmra.mrb[0].mxu0 %v5442
          %v5626 = vpop.f32.mrb[0].mxu0
          %v5627 = vadd.f32 0.0, %v5626
          %v5628 = vpop.f32.mrb[0].mxu0
          %v5629 = vpop.f32.mrb[0].mxu0
          %v5630 = vadd.f32 0.0, %v5629
          %v5631 = vpop.f32.mrb[0].mxu0
          %5632 = vmatprep.mubr.bf16.mxu0 0
          %5633 = vmatmul.mubr.bf16.gmra.mrb[0].mxu0 %v5443
          %v5634 = vpop.f32.mrb[0].mxu0
          %v5635 = vadd.f32 0.0, %v5634
          %v5636 = vpop.f32.mrb[0].mxu0
          %v5637 = vpop.f32.mrb[0].mxu0
          %v5638 = vadd.f32 0.0, %v5637
          %v5639 = vpop.f32.mrb[0].mxu0
          %5640 = vmatprep.mubr.bf16.mxu0 0
          %5641 = vmatmul.mubr.bf16.gmra.mrb[0].mxu0 %v5444
          %v5642 = vpop.f32.mrb[0].mxu0
          %v5643 = vadd.f32 0.0, %v5642
          %v5644 = vpop.f32.mrb[0].mxu0
          %v5645 = vpop.f32.mrb[0].mxu0
          %v5646 = vadd.f32 0.0, %v5645
          %v5647 = vpop.f32.mrb[0].mxu0
          %5648 = vmatprep.mubr.bf16.mxu0 0
          %5649 = vmatmul.mubr.bf16.gmra.mrb[0].mxu0 %v5445
          %v5650 = vpop.f32.mrb[0].mxu0
          %v5651 = vadd.f32 0.0, %v5650
          %v5652 = vpop.f32.mrb[0].mxu0
          %v5653 = vpop.f32.mrb[0].mxu0
          %v5654 = vadd.f32 0.0, %v5653
          %v5655 = vpop.f32.mrb[0].mxu0
          %5656 = vmatprep.mubr.bf16.mxu0 0
          %5657 = vmatmul.mubr.bf16.gmra.mrb[0].mxu0 %v5446
          %v5658 = vpop.f32.mrb[0].mxu0
          %v5659 = vadd.f32 0.0, %v5658
          %v5660 = vpop.f32.mrb[0].mxu0
          %v5661 = vpop.f32.mrb[0].mxu0
          %v5662 = vadd.f32 0.0, %v5661
          %v5663 = vpop.f32.mrb[0].mxu0
          %5664 = vmatprep.mubr.bf16.mxu0 0
          %5665 = vmatmul.mubr.bf16.gmra.mrb[0].mxu0 %v5447
          %v5666 = vpop.f32.mrb[0].mxu0
          %v5667 = vadd.f32 0.0, %v5666
          %v5668 = vpop.f32.mrb[0].mxu0
          %v5669 = vpop.f32.mrb[0].mxu0
          %v5670 = vadd.f32 0.0, %v5669
          %v5671 = vpop.f32.mrb[0].mxu0
          %5672 = vdwg.mxu0
          %v5673 = vadd.f32 %v5175, %v5547
          %v5674 = vadd.f32 %v5176, %v5550
          %v5675 = vadd.f32 %v5177, %v5555
          %v5676 = vadd.f32 %v5178, %v5558
          %v5677 = vadd.f32 %v5179, %v5563
          %v5678 = vadd.f32 %v5180, %v5566
          %v5679 = vadd.f32 %v5181, %v5571
          %v5680 = vadd.f32 %v5182, %v5574
          %v5681 = vadd.f32 %v5183, %v5579
          %v5682 = vadd.f32 %v5184, %v5582
          %v5683 = vadd.f32 %v5185, %v5587
          %v5684 = vadd.f32 %v5186, %v5590
          %v5685 = vadd.f32 %v5187, %v5595
          %v5686 = vadd.f32 %v5188, %v5598
          %v5687 = vadd.f32 %v5189, %v5603
          %v5688 = vadd.f32 %v5190, %v5606
          %v5689 = vadd.f32 %v5191, %v5611
          %v5690 = vadd.f32 %v5192, %v5614
          %v5691 = vadd.f32 %v5193, %v5619
          %v5692 = vadd.f32 %v5194, %v5622
          %v5693 = vadd.f32 %v5195, %v5627
          %v5694 = vadd.f32 %v5196, %v5630
          %v5695 = vadd.f32 %v5197, %v5635
          %v5696 = vadd.f32 %v5198, %v5638
          %v5697 = vadd.f32 %v5199, %v5643
          %v5698 = vadd.f32 %v5200, %v5646
          %v5699 = vadd.f32 %v5201, %v5651
          %v5700 = vadd.f32 %v5202, %v5654
          %v5701 = vadd.f32 %v5203, %v5659
          %v5702 = vadd.f32 %v5204, %v5662
          %v5703 = vadd.f32 %v5205, %v5667
          %v5704 = vadd.f32 %v5206, %v5670
          %v5705 = vld [vmem:[%s2] sm:$0x1]
          %v5707 = vlaneseq
          %v5708 = vshrl.u32 %v5707, 7
          %v5709 = vsub.s32 0, %v5708
          %v5710 = vrot.slane %v5705, %v5709
          %v5712 = vadd.f32 %v5673, %v5710
          %v5713 = vadd.f32 %v5674, %v5710
          %v5714 = vadd.f32 %v5675, %v5710
          %v5715 = vadd.f32 %v5676, %v5710
          %v5716 = vadd.f32 %v5677, %v5710
          %v5717 = vadd.f32 %v5678, %v5710
          %v5718 = vadd.f32 %v5679, %v5710
          %v5719 = vadd.f32 %v5680, %v5710
          %v5720 = vadd.f32 %v5681, %v5710
          %v5721 = vadd.f32 %v5682, %v5710
          %v5722 = vadd.f32 %v5683, %v5710
          %v5723 = vadd.f32 %v5684, %v5710
          %v5724 = vadd.f32 %v5685, %v5710
          %v5725 = vadd.f32 %v5686, %v5710
          %v5726 = vadd.f32 %v5687, %v5710
          %v5727 = vadd.f32 %v5688, %v5710
          %v5728 = vadd.f32 %v5689, %v5710
          %v5729 = vadd.f32 %v5690, %v5710
          %v5730 = vadd.f32 %v5691, %v5710
          %v5731 = vadd.f32 %v5692, %v5710
          %v5732 = vadd.f32 %v5693, %v5710
          %v5733 = vadd.f32 %v5694, %v5710
          %v5734 = vadd.f32 %v5695, %v5710
          %v5735 = vadd.f32 %v5696, %v5710
          %v5736 = vadd.f32 %v5697, %v5710
          %v5737 = vadd.f32 %v5698, %v5710
          %v5738 = vadd.f32 %v5699, %v5710
          %v5739 = vadd.f32 %v5700, %v5710
          %v5740 = vadd.f32 %v5701, %v5710
          %v5741 = vadd.f32 %v5702, %v5710
          %v5742 = vadd.f32 %v5703, %v5710
          %v5743 = vadd.f32 %v5704, %v5710
          %v5744 = vmax.f32 %v5712, 0.0
          %v5745 = vmax.f32 %v5713, 0.0
          %v5746 = vmax.f32 %v5714, 0.0
          %v5747 = vmax.f32 %v5715, 0.0
          %v5748 = vmax.f32 %v5716, 0.0
          %v5749 = vmax.f32 %v5717, 0.0
          %v5750 = vmax.f32 %v5718, 0.0
          %v5751 = vmax.f32 %v5719, 0.0
          %v5752 = vmax.f32 %v5720, 0.0
          %v5753 = vmax.f32 %v5721, 0.0
          %v5754 = vmax.f32 %v5722, 0.0
          %v5755 = vmax.f32 %v5723, 0.0
          %v5756 = vmax.f32 %v5724, 0.0
          %v5757 = vmax.f32 %v5725, 0.0
          %v5758 = vmax.f32 %v5726, 0.0
          %v5759 = vmax.f32 %v5727, 0.0
          %v5760 = vmax.f32 %v5728, 0.0
          %v5761 = vmax.f32 %v5729, 0.0
          %v5762 = vmax.f32 %v5730, 0.0
          %v5763 = vmax.f32 %v5731, 0.0
          %v5764 = vmax.f32 %v5732, 0.0
          %v5765 = vmax.f32 %v5733, 0.0
          %v5766 = vmax.f32 %v5734, 0.0
          %v5767 = vmax.f32 %v5735, 0.0
          %v5768 = vmax.f32 %v5736, 0.0
          %v5769 = vmax.f32 %v5737, 0.0
          %v5770 = vmax.f32 %v5738, 0.0
          %v5771 = vmax.f32 %v5739, 0.0
          %v5772 = vmax.f32 %v5740, 0.0
          %v5773 = vmax.f32 %v5741, 0.0
          %v5774 = vmax.f32 %v5742, 0.0
          %v5775 = vmax.f32 %v5743, 0.0
          %5776 = vst [vmem:[#allocation3] sm:$0xf] 0
          %5777 = vst [vmem:[#allocation3 + $0x4] sm:$0xf] 0
          %5778 = vst [vmem:[#allocation3 + $0x8] sm:$0x1] 0
          %s5779 = scalar_lea.vmem [#allocation3], 204
          %5780 = vst [vmem:[%s5779] sm:$0xf] 0
          %5781 = vst [vmem:[%s5779 + $0x4] sm:$0xf] 0
          %5782 = vst [vmem:[%s5779 + $0x8] sm:$0x1] 0
          %s5783 = scalar_lea.vmem [#allocation3], 12
          %v5784 = vld [vmem:[%s5783] sm:$0x1]
          %v5785 = vsel %vm362, 0, %v5784
          %5786 = vst [vmem:[%s5783] sm:$0x1] %v5785
          %v5787 = vld [vmem:[%s5783 + $0xc] sm:$0x1]
          %v5788 = vsel %vm362, 0, %v5787
          %5789 = vst [vmem:[%s5783 + $0xc] sm:$0x1] %v5788
          %v5790 = vld [vmem:[%s5783 + $0x18] sm:$0x1]
          %v5791 = vsel %vm362, 0, %v5790
          %5792 = vst [vmem:[%s5783 + $0x18] sm:$0x1] %v5791
          %v5793 = vld [vmem:[%s5783 + $0x24] sm:$0x1]
          %v5794 = vsel %vm362, 0, %v5793
          %5795 = vst [vmem:[%s5783 + $0x24] sm:$0x1] %v5794
          %v5796 = vld [vmem:[%s5783 + $0x30] sm:$0x1]
          %v5797 = vsel %vm362, 0, %v5796
          %5798 = vst [vmem:[%s5783 + $0x30] sm:$0x1] %v5797
          %v5799 = vld [vmem:[%s5783 + $0x3c] sm:$0x1]
          %v5800 = vsel %vm362, 0, %v5799
          %5801 = vst [vmem:[%s5783 + $0x3c] sm:$0x1] %v5800
          %v5802 = vld [vmem:[%s5783 + $0x48] sm:$0x1]
          %v5803 = vsel %vm362, 0, %v5802
          %5804 = vst [vmem:[%s5783 + $0x48] sm:$0x1] %v5803
          %v5805 = vld [vmem:[%s5783 + $0x54] sm:$0x1]
          %v5806 = vsel %vm362, 0, %v5805
          %5807 = vst [vmem:[%s5783 + $0x54] sm:$0x1] %v5806
          %v5808 = vld [vmem:[%s5783 + $0x60] sm:$0x1]
          %v5809 = vsel %vm362, 0, %v5808
          %5810 = vst [vmem:[%s5783 + $0x60] sm:$0x1] %v5809
          %v5811 = vld [vmem:[%s5783 + $0x6c] sm:$0x1]
          %v5812 = vsel %vm362, 0, %v5811
          %5813 = vst [vmem:[%s5783 + $0x6c] sm:$0x1] %v5812
          %v5814 = vld [vmem:[%s5783 + $0x78] sm:$0x1]
          %v5815 = vsel %vm362, 0, %v5814
          %5816 = vst [vmem:[%s5783 + $0x78] sm:$0x1] %v5815
          %v5817 = vld [vmem:[%s5783 + $0x84] sm:$0x1]
          %v5818 = vsel %vm362, 0, %v5817
          %5819 = vst [vmem:[%s5783 + $0x84] sm:$0x1] %v5818
          %v5820 = vld [vmem:[%s5783 + $0x90] sm:$0x1]
          %v5821 = vsel %vm362, 0, %v5820
          %5822 = vst [vmem:[%s5783 + $0x90] sm:$0x1] %v5821
          %v5823 = vld [vmem:[%s5783 + $0x9c] sm:$0x1]
          %v5824 = vsel %vm362, 0, %v5823
          %5825 = vst [vmem:[%s5783 + $0x9c] sm:$0x1] %v5824
          %v5826 = vld [vmem:[%s5783 + $0xa8] sm:$0x1]
          %v5827 = vsel %vm362, 0, %v5826
          %5828 = vst [vmem:[%s5783 + $0xa8] sm:$0x1] %v5827
          %v5829 = vld [vmem:[%s5783 + $0xb4] sm:$0x1]
          %v5830 = vsel %vm362, 0, %v5829
          %5831 = vst [vmem:[%s5783 + $0xb4] sm:$0x1] %v5830
          %v5832 = vld [vmem:[%s5783 + $0x8] sm:$0x1]
          %v5833 = vsel %vm412, 0, %v5832
          %5834 = vst [vmem:[%s5783 + $0x8] sm:$0x1] %v5833
          %v5835 = vld [vmem:[%s5783 + $0x14] sm:$0x1]
          %v5836 = vsel %vm412, 0, %v5835
          %5837 = vst [vmem:[%s5783 + $0x14] sm:$0x1] %v5836
          %v5838 = vld [vmem:[%s5783 + $0x20] sm:$0x1]
          %v5839 = vsel %vm412, 0, %v5838
          %5840 = vst [vmem:[%s5783 + $0x20] sm:$0x1] %v5839
          %v5841 = vld [vmem:[%s5783 + $0x2c] sm:$0x1]
          %v5842 = vsel %vm412, 0, %v5841
          %5843 = vst [vmem:[%s5783 + $0x2c] sm:$0x1] %v5842
          %v5844 = vld [vmem:[%s5783 + $0x38] sm:$0x1]
          %v5845 = vsel %vm412, 0, %v5844
          %5846 = vst [vmem:[%s5783 + $0x38] sm:$0x1] %v5845
          %v5847 = vld [vmem:[%s5783 + $0x44] sm:$0x1]
          %v5848 = vsel %vm412, 0, %v5847
          %5849 = vst [vmem:[%s5783 + $0x44] sm:$0x1] %v5848
          %v5850 = vld [vmem:[%s5783 + $0x50] sm:$0x1]
          %v5851 = vsel %vm412, 0, %v5850
          %5852 = vst [vmem:[%s5783 + $0x50] sm:$0x1] %v5851
          %v5853 = vld [vmem:[%s5783 + $0x5c] sm:$0x1]
          %v5854 = vsel %vm412, 0, %v5853
          %5855 = vst [vmem:[%s5783 + $0x5c] sm:$0x1] %v5854
          %v5856 = vld [vmem:[%s5783 + $0x68] sm:$0x1]
          %v5857 = vsel %vm412, 0, %v5856
          %5858 = vst [vmem:[%s5783 + $0x68] sm:$0x1] %v5857
          %v5859 = vld [vmem:[%s5783 + $0x74] sm:$0x1]
          %v5860 = vsel %vm412, 0, %v5859
          %5861 = vst [vmem:[%s5783 + $0x74] sm:$0x1] %v5860
          %v5862 = vld [vmem:[%s5783 + $0x80] sm:$0x1]
          %v5863 = vsel %vm412, 0, %v5862
          %5864 = vst [vmem:[%s5783 + $0x80] sm:$0x1] %v5863
          %v5865 = vld [vmem:[%s5783 + $0x8c] sm:$0x1]
          %v5866 = vsel %vm412, 0, %v5865
          %5867 = vst [vmem:[%s5783 + $0x8c] sm:$0x1] %v5866
          %v5868 = vld [vmem:[%s5783 + $0x98] sm:$0x1]
          %v5869 = vsel %vm412, 0, %v5868
          %5870 = vst [vmem:[%s5783 + $0x98] sm:$0x1] %v5869
          %v5871 = vld [vmem:[%s5783 + $0xa4] sm:$0x1]
          %v5872 = vsel %vm412, 0, %v5871
          %5873 = vst [vmem:[%s5783 + $0xa4] sm:$0x1] %v5872
          %v5874 = vld [vmem:[%s5783 + $0xb0] sm:$0x1]
          %v5875 = vsel %vm412, 0, %v5874
          %5876 = vst [vmem:[%s5783 + $0xb0] sm:$0x1] %v5875
          %v5877 = vld [vmem:[%s5783 + $0xbc] sm:$0x1]
          %v5878 = vsel %vm412, 0, %v5877
          %5879 = vst [vmem:[%s5783 + $0xbc] sm:$0x1] %v5878
          %v5880 = vpack.c.bf16 %v5745, %v5744
          %v5881 = vpack.c.bf16 %v5747, %v5746
          %v5882 = vpack.c.bf16 %v5749, %v5748
          %v5883 = vpack.c.bf16 %v5751, %v5750
          %v5884 = vpack.c.bf16 %v5753, %v5752
          %v5885 = vpack.c.bf16 %v5755, %v5754
          %v5886 = vpack.c.bf16 %v5757, %v5756
          %v5887 = vpack.c.bf16 %v5759, %v5758
          %v5888 = vpack.c.bf16 %v5761, %v5760
          %v5889 = vpack.c.bf16 %v5763, %v5762
          %v5890 = vpack.c.bf16 %v5765, %v5764
          %v5891 = vpack.c.bf16 %v5767, %v5766
          %v5892 = vpack.c.bf16 %v5769, %v5768
          %v5893 = vpack.c.bf16 %v5771, %v5770
          %v5894 = vpack.c.bf16 %v5773, %v5772
          %v5895 = vpack.c.bf16 %v5775, %v5774
          %v5912 = vunpack.c.l.b16 %v5880
          %v5913 = vunpack.c.h.b16 %v5880
          %v5914 = vunpack.c.l.b16 %v5881
          %v5915 = vunpack.c.h.b16 %v5881
          %v5916 = vunpack.c.l.b16 %v5882
          %v5917 = vunpack.c.h.b16 %v5882
          %v5918 = vunpack.c.l.b16 %v5883
          %v5919 = vunpack.c.h.b16 %v5883
          %v5920 = vunpack.c.l.b16 %v5884
          %v5921 = vunpack.c.h.b16 %v5884
          %v5922 = vunpack.c.l.b16 %v5885
          %v5923 = vunpack.c.h.b16 %v5885
          %v5924 = vunpack.c.l.b16 %v5886
          %v5925 = vunpack.c.h.b16 %v5886
          %v5926 = vunpack.c.l.b16 %v5887
          %v5927 = vunpack.c.h.b16 %v5887
          %v5928 = vunpack.c.l.b16 %v5888
          %v5929 = vunpack.c.h.b16 %v5888
          %v5930 = vunpack.c.l.b16 %v5889
          %v5931 = vunpack.c.h.b16 %v5889
          %v5932 = vunpack.c.l.b16 %v5890
          %v5933 = vunpack.c.h.b16 %v5890
          %v5934 = vunpack.c.l.b16 %v5891
          %v5935 = vunpack.c.h.b16 %v5891
          %v5936 = vunpack.c.l.b16 %v5892
          %v5937 = vunpack.c.h.b16 %v5892
          %v5938 = vunpack.c.l.b16 %v5893
          %v5939 = vunpack.c.h.b16 %v5893
          %v5940 = vunpack.c.l.b16 %v5894
          %v5941 = vunpack.c.h.b16 %v5894
          %v5942 = vunpack.c.l.b16 %v5895
          %v5943 = vunpack.c.h.b16 %v5895
          %v5944 = vpack.c.b16 %v5912, %v5912
          %v5945 = vpack.c.b16 %v5913, %v5913
          %v5946 = vpack.c.b16 %v5914, %v5914
          %v5947 = vpack.c.b16 %v5915, %v5915
          %v5948 = vpack.c.b16 %v5916, %v5916
          %v5949 = vpack.c.b16 %v5917, %v5917
          %v5950 = vpack.c.b16 %v5918, %v5918
          %v5951 = vpack.c.b16 %v5919, %v5919
          %v5952 = vpack.c.b16 %v5920, %v5920
          %v5953 = vpack.c.b16 %v5921, %v5921
          %v5954 = vpack.c.b16 %v5922, %v5922
          %v5955 = vpack.c.b16 %v5923, %v5923
          %v5956 = vpack.c.b16 %v5924, %v5924
          %v5957 = vpack.c.b16 %v5925, %v5925
          %v5958 = vpack.c.b16 %v5926, %v5926
          %v5959 = vpack.c.b16 %v5927, %v5927
          %v5960 = vpack.c.b16 %v5928, %v5928
          %v5961 = vpack.c.b16 %v5929, %v5929
          %v5962 = vpack.c.b16 %v5930, %v5930
          %v5963 = vpack.c.b16 %v5931, %v5931
          %v5964 = vpack.c.b16 %v5932, %v5932
          %v5965 = vpack.c.b16 %v5933, %v5933
          %v5966 = vpack.c.b16 %v5934, %v5934
          %v5967 = vpack.c.b16 %v5935, %v5935
          %v5968 = vpack.c.b16 %v5936, %v5936
          %v5969 = vpack.c.b16 %v5937, %v5937
          %v5970 = vpack.c.b16 %v5938, %v5938
          %v5971 = vpack.c.b16 %v5939, %v5939
          %v5972 = vpack.c.b16 %v5940, %v5940
          %v5973 = vpack.c.b16 %v5941, %v5941
          %v5974 = vpack.c.b16 %v5942, %v5942
          %v5975 = vpack.c.b16 %v5943, %v5943
          %v5977 = vshrl.u32 %v5944, 16
          %v5979 = vrot.slane %v5977, 7
          %v5980 = vshll.u32 %v5944, 16
          %v5982 = vor.u32 %v5979, %v5980
          %v5983 = vrot.slane %v5979, 4
          %v5985 = vshrl.u32 %v5945, 16
          %v5987 = vrot.slane %v5985, 7
          %v5988 = vshll.u32 %v5945, 16
          %v5990 = vor.u32 %v5987, %v5988
          %v5991 = vsel %vm462, %v5983, %v5990
          %v5992 = vrot.slane %v5987, 4
          %v5994 = vshrl.u32 %v5946, 16
          %v5996 = vrot.slane %v5994, 7
          %v5997 = vshll.u32 %v5946, 16
          %v5999 = vor.u32 %v5996, %v5997
          %v6000 = vrot.slane %v5996, 4
          %v6002 = vshrl.u32 %v5947, 16
          %v6004 = vrot.slane %v6002, 7
          %v6005 = vshll.u32 %v5947, 16
          %v6007 = vor.u32 %v6004, %v6005
          %v6008 = vsel %vm462, %v6000, %v6007
          %v6009 = vrot.slane %v6004, 4
          %v6011 = vshrl.u32 %v5948, 16
          %v6013 = vrot.slane %v6011, 7
          %v6014 = vshll.u32 %v5948, 16
          %v6016 = vor.u32 %v6013, %v6014
          %v6017 = vrot.slane %v6013, 4
          %v6019 = vshrl.u32 %v5949, 16
          %v6021 = vrot.slane %v6019, 7
          %v6022 = vshll.u32 %v5949, 16
          %v6024 = vor.u32 %v6021, %v6022
          %v6025 = vsel %vm462, %v6017, %v6024
          %v6026 = vrot.slane %v6021, 4
          %v6028 = vshrl.u32 %v5950, 16
          %v6030 = vrot.slane %v6028, 7
          %v6031 = vshll.u32 %v5950, 16
          %v6033 = vor.u32 %v6030, %v6031
          %v6034 = vrot.slane %v6030, 4
          %v6036 = vshrl.u32 %v5951, 16
          %v6038 = vrot.slane %v6036, 7
          %v6039 = vshll.u32 %v5951, 16
          %v6041 = vor.u32 %v6038, %v6039
          %v6042 = vsel %vm462, %v6034, %v6041
          %v6043 = vrot.slane %v6038, 4
          %v6045 = vshrl.u32 %v5952, 16
          %v6047 = vrot.slane %v6045, 7
          %v6048 = vshll.u32 %v5952, 16
          %v6050 = vor.u32 %v6047, %v6048
          %v6051 = vrot.slane %v6047, 4
          %v6053 = vshrl.u32 %v5953, 16
          %v6055 = vrot.slane %v6053, 7
          %v6056 = vshll.u32 %v5953, 16
          %v6058 = vor.u32 %v6055, %v6056
          %v6059 = vsel %vm462, %v6051, %v6058
          %v6060 = vrot.slane %v6055, 4
          %v6062 = vshrl.u32 %v5954, 16
          %v6064 = vrot.slane %v6062, 7
          %v6065 = vshll.u32 %v5954, 16
          %v6067 = vor.u32 %v6064, %v6065
          %v6068 = vrot.slane %v6064, 4
          %v6070 = vshrl.u32 %v5955, 16
          %v6072 = vrot.slane %v6070, 7
          %v6073 = vshll.u32 %v5955, 16
          %v6075 = vor.u32 %v6072, %v6073
          %v6076 = vsel %vm462, %v6068, %v6075
          %v6077 = vrot.slane %v6072, 4
          %v6079 = vshrl.u32 %v5956, 16
          %v6081 = vrot.slane %v6079, 7
          %v6082 = vshll.u32 %v5956, 16
          %v6084 = vor.u32 %v6081, %v6082
          %v6085 = vrot.slane %v6081, 4
          %v6087 = vshrl.u32 %v5957, 16
          %v6089 = vrot.slane %v6087, 7
          %v6090 = vshll.u32 %v5957, 16
          %v6092 = vor.u32 %v6089, %v6090
          %v6093 = vsel %vm462, %v6085, %v6092
          %v6094 = vrot.slane %v6089, 4
          %v6096 = vshrl.u32 %v5958, 16
          %v6098 = vrot.slane %v6096, 7
          %v6099 = vshll.u32 %v5958, 16
          %v6101 = vor.u32 %v6098, %v6099
          %v6102 = vrot.slane %v6098, 4
          %v6104 = vshrl.u32 %v5959, 16
          %v6106 = vrot.slane %v6104, 7
          %v6107 = vshll.u32 %v5959, 16
          %v6109 = vor.u32 %v6106, %v6107
          %v6110 = vsel %vm462, %v6102, %v6109
          %v6111 = vrot.slane %v6106, 4
          %v6113 = vshrl.u32 %v5960, 16
          %v6115 = vrot.slane %v6113, 7
          %v6116 = vshll.u32 %v5960, 16
          %v6118 = vor.u32 %v6115, %v6116
          %v6119 = vrot.slane %v6115, 4
          %v6121 = vshrl.u32 %v5961, 16
          %v6123 = vrot.slane %v6121, 7
          %v6124 = vshll.u32 %v5961, 16
          %v6126 = vor.u32 %v6123, %v6124
          %v6127 = vsel %vm462, %v6119, %v6126
          %v6128 = vrot.slane %v6123, 4
          %v6130 = vshrl.u32 %v5962, 16
          %v6132 = vrot.slane %v6130, 7
          %v6133 = vshll.u32 %v5962, 16
          %v6135 = vor.u32 %v6132, %v6133
          %v6136 = vrot.slane %v6132, 4
          %v6138 = vshrl.u32 %v5963, 16
          %v6140 = vrot.slane %v6138, 7
          %v6141 = vshll.u32 %v5963, 16
          %v6143 = vor.u32 %v6140, %v6141
          %v6144 = vsel %vm462, %v6136, %v6143
          %v6145 = vrot.slane %v6140, 4
          %v6147 = vshrl.u32 %v5964, 16
          %v6149 = vrot.slane %v6147, 7
          %v6150 = vshll.u32 %v5964, 16
          %v6152 = vor.u32 %v6149, %v6150
          %v6153 = vrot.slane %v6149, 4
          %v6155 = vshrl.u32 %v5965, 16
          %v6157 = vrot.slane %v6155, 7
          %v6158 = vshll.u32 %v5965, 16
          %v6160 = vor.u32 %v6157, %v6158
          %v6161 = vsel %vm462, %v6153, %v6160
          %v6162 = vrot.slane %v6157, 4
          %v6164 = vshrl.u32 %v5966, 16
          %v6166 = vrot.slane %v6164, 7
          %v6167 = vshll.u32 %v5966, 16
          %v6169 = vor.u32 %v6166, %v6167
          %v6170 = vrot.slane %v6166, 4
          %v6172 = vshrl.u32 %v5967, 16
          %v6174 = vrot.slane %v6172, 7
          %v6175 = vshll.u32 %v5967, 16
          %v6177 = vor.u32 %v6174, %v6175
          %v6178 = vsel %vm462, %v6170, %v6177
          %v6179 = vrot.slane %v6174, 4
          %v6181 = vshrl.u32 %v5968, 16
          %v6183 = vrot.slane %v6181, 7
          %v6184 = vshll.u32 %v5968, 16
          %v6186 = vor.u32 %v6183, %v6184
          %v6187 = vrot.slane %v6183, 4
          %v6189 = vshrl.u32 %v5969, 16
          %v6191 = vrot.slane %v6189, 7
          %v6192 = vshll.u32 %v5969, 16
          %v6194 = vor.u32 %v6191, %v6192
          %v6195 = vsel %vm462, %v6187, %v6194
          %v6196 = vrot.slane %v6191, 4
          %v6198 = vshrl.u32 %v5970, 16
          %v6200 = vrot.slane %v6198, 7
          %v6201 = vshll.u32 %v5970, 16
          %v6203 = vor.u32 %v6200, %v6201
          %v6204 = vrot.slane %v6200, 4
          %v6206 = vshrl.u32 %v5971, 16
          %v6208 = vrot.slane %v6206, 7
          %v6209 = vshll.u32 %v5971, 16
          %v6211 = vor.u32 %v6208, %v6209
          %v6212 = vsel %vm462, %v6204, %v6211
          %v6213 = vrot.slane %v6208, 4
          %v6215 = vshrl.u32 %v5972, 16
          %v6217 = vrot.slane %v6215, 7
          %v6218 = vshll.u32 %v5972, 16
          %v6220 = vor.u32 %v6217, %v6218
          %v6221 = vrot.slane %v6217, 4
          %v6223 = vshrl.u32 %v5973, 16
          %v6225 = vrot.slane %v6223, 7
          %v6226 = vshll.u32 %v5973, 16
          %v6228 = vor.u32 %v6225, %v6226
          %v6229 = vsel %vm462, %v6221, %v6228
          %v6230 = vrot.slane %v6225, 4
          %v6232 = vshrl.u32 %v5974, 16
          %v6234 = vrot.slane %v6232, 7
          %v6235 = vshll.u32 %v5974, 16
          %v6237 = vor.u32 %v6234, %v6235
          %v6238 = vrot.slane %v6234, 4
          %v6240 = vshrl.u32 %v5975, 16
          %v6242 = vrot.slane %v6240, 7
          %v6243 = vshll.u32 %v5975, 16
          %v6245 = vor.u32 %v6242, %v6243
          %v6246 = vsel %vm462, %v6238, %v6245
          %v6247 = vrot.slane %v6242, 4
          %v6296 = vld [vmem:[%s5783] sm:$0xf]
          %v6297 = vsel %vm784, %v5982, %v6296
          %6298 = vst [vmem:[%s5783] sm:$0xf] %v6297
          %6299 = vst [vmem:[%s5783 + $0x4] sm:$0xf] %v5991
          %v6300 = vld [vmem:[%s5783 + $0x8] sm:$0x1]
          %v6301 = vsel %vm362, %v5992, %v6300
          %6302 = vst [vmem:[%s5783 + $0x8] sm:$0x1] %v6301
          %v6303 = vld [vmem:[%s5783 + $0xc] sm:$0xf]
          %v6304 = vsel %vm784, %v5999, %v6303
          %6305 = vst [vmem:[%s5783 + $0xc] sm:$0xf] %v6304
          %6306 = vst [vmem:[%s5783 + $0x10] sm:$0xf] %v6008
          %v6307 = vld [vmem:[%s5783 + $0x14] sm:$0x1]
          %v6308 = vsel %vm362, %v6009, %v6307
          %6309 = vst [vmem:[%s5783 + $0x14] sm:$0x1] %v6308
          %v6310 = vld [vmem:[%s5783 + $0x18] sm:$0xf]
          %v6311 = vsel %vm784, %v6016, %v6310
          %6312 = vst [vmem:[%s5783 + $0x18] sm:$0xf] %v6311
          %6313 = vst [vmem:[%s5783 + $0x1c] sm:$0xf] %v6025
          %v6314 = vld [vmem:[%s5783 + $0x20] sm:$0x1]
          %v6315 = vsel %vm362, %v6026, %v6314
          %6316 = vst [vmem:[%s5783 + $0x20] sm:$0x1] %v6315
          %v6317 = vld [vmem:[%s5783 + $0x24] sm:$0xf]
          %v6318 = vsel %vm784, %v6033, %v6317
          %6319 = vst [vmem:[%s5783 + $0x24] sm:$0xf] %v6318
          %6320 = vst [vmem:[%s5783 + $0x28] sm:$0xf] %v6042
          %v6321 = vld [vmem:[%s5783 + $0x2c] sm:$0x1]
          %v6322 = vsel %vm362, %v6043, %v6321
          %6323 = vst [vmem:[%s5783 + $0x2c] sm:$0x1] %v6322
          %v6324 = vld [vmem:[%s5783 + $0x30] sm:$0xf]
          %v6325 = vsel %vm784, %v6050, %v6324
          %6326 = vst [vmem:[%s5783 + $0x30] sm:$0xf] %v6325
          %6327 = vst [vmem:[%s5783 + $0x34] sm:$0xf] %v6059
          %v6328 = vld [vmem:[%s5783 + $0x38] sm:$0x1]
          %v6329 = vsel %vm362, %v6060, %v6328
          %6330 = vst [vmem:[%s5783 + $0x38] sm:$0x1] %v6329
          %v6331 = vld [vmem:[%s5783 + $0x3c] sm:$0xf]
          %v6332 = vsel %vm784, %v6067, %v6331
          %6333 = vst [vmem:[%s5783 + $0x3c] sm:$0xf] %v6332
          %6334 = vst [vmem:[%s5783 + $0x40] sm:$0xf] %v6076
          %v6335 = vld [vmem:[%s5783 + $0x44] sm:$0x1]
          %v6336 = vsel %vm362, %v6077, %v6335
          %6337 = vst [vmem:[%s5783 + $0x44] sm:$0x1] %v6336
          %v6338 = vld [vmem:[%s5783 + $0x48] sm:$0xf]
          %v6339 = vsel %vm784, %v6084, %v6338
          %6340 = vst [vmem:[%s5783 + $0x48] sm:$0xf] %v6339
          %6341 = vst [vmem:[%s5783 + $0x4c] sm:$0xf] %v6093
          %v6342 = vld [vmem:[%s5783 + $0x50] sm:$0x1]
          %v6343 = vsel %vm362, %v6094, %v6342
          %6344 = vst [vmem:[%s5783 + $0x50] sm:$0x1] %v6343
          %v6345 = vld [vmem:[%s5783 + $0x54] sm:$0xf]
          %v6346 = vsel %vm784, %v6101, %v6345
          %6347 = vst [vmem:[%s5783 + $0x54] sm:$0xf] %v6346
          %6348 = vst [vmem:[%s5783 + $0x58] sm:$0xf] %v6110
          %v6349 = vld [vmem:[%s5783 + $0x5c] sm:$0x1]
          %v6350 = vsel %vm362, %v6111, %v6349
          %6351 = vst [vmem:[%s5783 + $0x5c] sm:$0x1] %v6350
          %v6352 = vld [vmem:[%s5783 + $0x60] sm:$0xf]
          %v6353 = vsel %vm784, %v6118, %v6352
          %6354 = vst [vmem:[%s5783 + $0x60] sm:$0xf] %v6353
          %6355 = vst [vmem:[%s5783 + $0x64] sm:$0xf] %v6127
          %v6356 = vld [vmem:[%s5783 + $0x68] sm:$0x1]
          %v6357 = vsel %vm362, %v6128, %v6356
          %6358 = vst [vmem:[%s5783 + $0x68] sm:$0x1] %v6357
          %v6359 = vld [vmem:[%s5783 + $0x6c] sm:$0xf]
          %v6360 = vsel %vm784, %v6135, %v6359
          %6361 = vst [vmem:[%s5783 + $0x6c] sm:$0xf] %v6360
          %6362 = vst [vmem:[%s5783 + $0x70] sm:$0xf] %v6144
          %v6363 = vld [vmem:[%s5783 + $0x74] sm:$0x1]
          %v6364 = vsel %vm362, %v6145, %v6363
          %6365 = vst [vmem:[%s5783 + $0x74] sm:$0x1] %v6364
          %v6366 = vld [vmem:[%s5783 + $0x78] sm:$0xf]
          %v6367 = vsel %vm784, %v6152, %v6366
          %6368 = vst [vmem:[%s5783 + $0x78] sm:$0xf] %v6367
          %6369 = vst [vmem:[%s5783 + $0x7c] sm:$0xf] %v6161
          %v6370 = vld [vmem:[%s5783 + $0x80] sm:$0x1]
          %v6371 = vsel %vm362, %v6162, %v6370
          %6372 = vst [vmem:[%s5783 + $0x80] sm:$0x1] %v6371
          %v6373 = vld [vmem:[%s5783 + $0x84] sm:$0xf]
          %v6374 = vsel %vm784, %v6169, %v6373
          %6375 = vst [vmem:[%s5783 + $0x84] sm:$0xf] %v6374
          %6376 = vst [vmem:[%s5783 + $0x88] sm:$0xf] %v6178
          %v6377 = vld [vmem:[%s5783 + $0x8c] sm:$0x1]
          %v6378 = vsel %vm362, %v6179, %v6377
          %6379 = vst [vmem:[%s5783 + $0x8c] sm:$0x1] %v6378
          %v6380 = vld [vmem:[%s5783 + $0x90] sm:$0xf]
          %v6381 = vsel %vm784, %v6186, %v6380
          %6382 = vst [vmem:[%s5783 + $0x90] sm:$0xf] %v6381
          %6383 = vst [vmem:[%s5783 + $0x94] sm:$0xf] %v6195
          %v6384 = vld [vmem:[%s5783 + $0x98] sm:$0x1]
          %v6385 = vsel %vm362, %v6196, %v6384
          %6386 = vst [vmem:[%s5783 + $0x98] sm:$0x1] %v6385
          %v6387 = vld [vmem:[%s5783 + $0x9c] sm:$0xf]
          %v6388 = vsel %vm784, %v6203, %v6387
          %6389 = vst [vmem:[%s5783 + $0x9c] sm:$0xf] %v6388
          %6390 = vst [vmem:[%s5783 + $0xa0] sm:$0xf] %v6212
          %v6391 = vld [vmem:[%s5783 + $0xa4] sm:$0x1]
          %v6392 = vsel %vm362, %v6213, %v6391
          %6393 = vst [vmem:[%s5783 + $0xa4] sm:$0x1] %v6392
          %v6394 = vld [vmem:[%s5783 + $0xa8] sm:$0xf]
          %v6395 = vsel %vm784, %v6220, %v6394
          %6396 = vst [vmem:[%s5783 + $0xa8] sm:$0xf] %v6395
          %6397 = vst [vmem:[%s5783 + $0xac] sm:$0xf] %v6229
          %v6398 = vld [vmem:[%s5783 + $0xb0] sm:$0x1]
          %v6399 = vsel %vm362, %v6230, %v6398
          %6400 = vst [vmem:[%s5783 + $0xb0] sm:$0x1] %v6399
          %v6401 = vld [vmem:[%s5783 + $0xb4] sm:$0xf]
          %v6402 = vsel %vm784, %v6237, %v6401
          %6403 = vst [vmem:[%s5783 + $0xb4] sm:$0xf] %v6402
          %6404 = vst [vmem:[%s5783 + $0xb8] sm:$0xf] %v6246
          %v6405 = vld [vmem:[%s5783 + $0xbc] sm:$0x1]
          %v6406 = vsel %vm362, %v6247, %v6405
          %6407 = vst [vmem:[%s5783 + $0xbc] sm:$0x1] %v6406
        $region56: #{tpu_custom_call.1} parent=39 // pred_fallthru
          _
        %v6408 = vld [vmem:[#allocation3] sm:$0xf]
        %v6409 = vld [vmem:[#allocation3 + $0x4] sm:$0xf]
        %v6410 = vld [vmem:[#allocation3 + $0xc] sm:$0xf]
        %v6411 = vld [vmem:[#allocation3 + $0x10] sm:$0xf]
        %v6412 = vld [vmem:[#allocation3 + $0x18] sm:$0xf]
        %v6413 = vld [vmem:[#allocation3 + $0x1c] sm:$0xf]
        %v6414 = vld [vmem:[#allocation3 + $0x24] sm:$0xf]
        %v6415 = vld [vmem:[#allocation3 + $0x28] sm:$0xf]
        %v6416 = vld [vmem:[#allocation3 + $0x30] sm:$0xf]
        %v6417 = vld [vmem:[#allocation3 + $0x34] sm:$0xf]
        %v6418 = vld [vmem:[#allocation3 + $0x3c] sm:$0xf]
        %v6419 = vld [vmem:[#allocation3 + $0x40] sm:$0xf]
        %v6420 = vld [vmem:[#allocation3 + $0x48] sm:$0xf]
        %v6421 = vld [vmem:[#allocation3 + $0x4c] sm:$0xf]
        %v6422 = vld [vmem:[#allocation3 + $0x54] sm:$0xf]
        %v6423 = vld [vmem:[#allocation3 + $0x58] sm:$0xf]
        %v6424 = vld [vmem:[#allocation3 + $0x60] sm:$0xf]
        %v6425 = vld [vmem:[#allocation3 + $0x64] sm:$0xf]
        %v6426 = vld [vmem:[#allocation3 + $0x6c] sm:$0xf]
        %v6427 = vld [vmem:[#allocation3 + $0x70] sm:$0xf]
        %v6428 = vld [vmem:[#allocation3 + $0x78] sm:$0xf]
        %v6429 = vld [vmem:[#allocation3 + $0x7c] sm:$0xf]
        %v6430 = vld [vmem:[#allocation3 + $0x84] sm:$0xf]
        %v6431 = vld [vmem:[#allocation3 + $0x88] sm:$0xf]
        %v6432 = vld [vmem:[#allocation3 + $0x90] sm:$0xf]
        %v6433 = vld [vmem:[#allocation3 + $0x94] sm:$0xf]
        %v6434 = vld [vmem:[#allocation3 + $0x9c] sm:$0xf]
        %v6435 = vld [vmem:[#allocation3 + $0xa0] sm:$0xf]
        %v6436 = vld [vmem:[#allocation3 + $0xa8] sm:$0xf]
        %v6437 = vld [vmem:[#allocation3 + $0xac] sm:$0xf]
        %v6438 = vld [vmem:[#allocation3 + $0xb4] sm:$0xf]
        %v6439 = vld [vmem:[#allocation3 + $0xb8] sm:$0xf]
        %v6440 = vld [vmem:[#allocation9] sm:$0xff]
        %v6441 = vld [vmem:[#allocation9 + $0x8] sm:$0xff]
        %v6442 = vld [vmem:[#allocation9 + $0x10] sm:$0xff]
        %v6443 = vld [vmem:[#allocation9 + $0x18] sm:$0xff]
        %v6444 = vld [vmem:[#allocation9 + $0x20] sm:$0xff]
        %v6445 = vld [vmem:[#allocation9 + $0x28] sm:$0xff]
        %v6446 = vld [vmem:[#allocation9 + $0x30] sm:$0xff]
        %v6447 = vld [vmem:[#allocation9 + $0x38] sm:$0xff]
        %v6448 = vld [vmem:[#allocation9 + $0x40] sm:$0xff]
        %v6449 = vld [vmem:[#allocation9 + $0x48] sm:$0xff]
        %v6450 = vld [vmem:[#allocation9 + $0x50] sm:$0xff]
        %v6451 = vld [vmem:[#allocation9 + $0x58] sm:$0xff]
        %v6452 = vld [vmem:[#allocation9 + $0x60] sm:$0xff]
        %v6453 = vld [vmem:[#allocation9 + $0x68] sm:$0xff]
        %v6454 = vld [vmem:[#allocation9 + $0x70] sm:$0xff]
        %v6455 = vld [vmem:[#allocation9 + $0x78] sm:$0xff]
        %v6456 = vld [vmem:[#allocation3 + $0x8] sm:$0x1]
        %v6457 = vld [vmem:[#allocation3 + $0x14] sm:$0x1]
        %v6458 = vld [vmem:[#allocation3 + $0x20] sm:$0x1]
        %v6459 = vld [vmem:[#allocation3 + $0x2c] sm:$0x1]
        %v6460 = vld [vmem:[#allocation3 + $0x38] sm:$0x1]
        %v6461 = vld [vmem:[#allocation3 + $0x44] sm:$0x1]
        %v6462 = vld [vmem:[#allocation3 + $0x50] sm:$0x1]
        %v6463 = vld [vmem:[#allocation3 + $0x5c] sm:$0x1]
        %v6464 = vld [vmem:[#allocation3 + $0x68] sm:$0x1]
        %v6465 = vld [vmem:[#allocation3 + $0x74] sm:$0x1]
        %v6466 = vld [vmem:[#allocation3 + $0x80] sm:$0x1]
        %v6467 = vld [vmem:[#allocation3 + $0x8c] sm:$0x1]
        %v6468 = vld [vmem:[#allocation3 + $0x98] sm:$0x1]
        %v6469 = vld [vmem:[#allocation3 + $0xa4] sm:$0x1]
        %v6470 = vld [vmem:[#allocation3 + $0xb0] sm:$0x1]
        %v6471 = vld [vmem:[#allocation3 + $0xbc] sm:$0x1]
        %vm6472 = vsmask.f32 3328
        %vm6473 = vsmask.f32 7440
        %vm6474 = vmor %vm6472, %vm6473
        %v6476 = vshrl.u32 %v6408, 16
        %v6478 = vrot.slane %v6476, 4
        %v6479 = vshll.u32 %v6408, 16
        %v6481 = vrot.slane %v6479, 5
        %v6482 = vor.u32 %v6478, %v6481
        %v6483 = vrot.slane %v6482, 4
        %v6485 = vshll.u32 %v6409, 16
        %v6487 = vrot.slane %v6485, 5
        %v6488 = vsel %vm6474, %v6483, %v6487
        %v6489 = vshrl.u32 %v6409, 16
        %v6491 = vrot.slane %v6489, 4
        %v6492 = vor.u32 %v6491, %v6487
        %v6493 = vrot.slane %v6492, 4
        %v6495 = vshll.u32 %v6456, 16
        %v6497 = vrot.slane %v6495, 5
        %v6498 = vsel %vm6474, %v6493, %v6497
        %v6500 = vshrl.u32 %v6410, 16
        %v6502 = vrot.slane %v6500, 4
        %v6503 = vshll.u32 %v6410, 16
        %v6505 = vrot.slane %v6503, 5
        %v6506 = vor.u32 %v6502, %v6505
        %v6507 = vrot.slane %v6506, 4
        %v6509 = vshll.u32 %v6411, 16
        %v6511 = vrot.slane %v6509, 5
        %v6512 = vsel %vm6474, %v6507, %v6511
        %v6513 = vshrl.u32 %v6411, 16
        %v6515 = vrot.slane %v6513, 4
        %v6516 = vor.u32 %v6515, %v6511
        %v6517 = vrot.slane %v6516, 4
        %v6519 = vshll.u32 %v6457, 16
        %v6521 = vrot.slane %v6519, 5
        %v6522 = vsel %vm6474, %v6517, %v6521
        %v6524 = vshrl.u32 %v6412, 16
        %v6526 = vrot.slane %v6524, 4
        %v6527 = vshll.u32 %v6412, 16
        %v6529 = vrot.slane %v6527, 5
        %v6530 = vor.u32 %v6526, %v6529
        %v6531 = vrot.slane %v6530, 4
        %v6533 = vshll.u32 %v6413, 16
        %v6535 = vrot.slane %v6533, 5
        %v6536 = vsel %vm6474, %v6531, %v6535
        %v6537 = vshrl.u32 %v6413, 16
        %v6539 = vrot.slane %v6537, 4
        %v6540 = vor.u32 %v6539, %v6535
        %v6541 = vrot.slane %v6540, 4
        %v6543 = vshll.u32 %v6458, 16
        %v6545 = vrot.slane %v6543, 5
        %v6546 = vsel %vm6474, %v6541, %v6545
        %v6548 = vshrl.u32 %v6414, 16
        %v6550 = vrot.slane %v6548, 4
        %v6551 = vshll.u32 %v6414, 16
        %v6553 = vrot.slane %v6551, 5
        %v6554 = vor.u32 %v6550, %v6553
        %v6555 = vrot.slane %v6554, 4
        %v6557 = vshll.u32 %v6415, 16
        %v6559 = vrot.slane %v6557, 5
        %v6560 = vsel %vm6474, %v6555, %v6559
        %v6561 = vshrl.u32 %v6415, 16
        %v6563 = vrot.slane %v6561, 4
        %v6564 = vor.u32 %v6563, %v6559
        %v6565 = vrot.slane %v6564, 4
        %v6567 = vshll.u32 %v6459, 16
        %v6569 = vrot.slane %v6567, 5
        %v6570 = vsel %vm6474, %v6565, %v6569
        %v6572 = vshrl.u32 %v6416, 16
        %v6574 = vrot.slane %v6572, 4
        %v6575 = vshll.u32 %v6416, 16
        %v6577 = vrot.slane %v6575, 5
        %v6578 = vor.u32 %v6574, %v6577
        %v6579 = vrot.slane %v6578, 4
        %v6581 = vshll.u32 %v6417, 16
        %v6583 = vrot.slane %v6581, 5
        %v6584 = vsel %vm6474, %v6579, %v6583
        %v6585 = vshrl.u32 %v6417, 16
        %v6587 = vrot.slane %v6585, 4
        %v6588 = vor.u32 %v6587, %v6583
        %v6589 = vrot.slane %v6588, 4
        %v6591 = vshll.u32 %v6460, 16
        %v6593 = vrot.slane %v6591, 5
        %v6594 = vsel %vm6474, %v6589, %v6593
        %v6596 = vshrl.u32 %v6418, 16
        %v6598 = vrot.slane %v6596, 4
        %v6599 = vshll.u32 %v6418, 16
        %v6601 = vrot.slane %v6599, 5
        %v6602 = vor.u32 %v6598, %v6601
        %v6603 = vrot.slane %v6602, 4
        %v6605 = vshll.u32 %v6419, 16
        %v6607 = vrot.slane %v6605, 5
        %v6608 = vsel %vm6474, %v6603, %v6607
        %v6609 = vshrl.u32 %v6419, 16
        %v6611 = vrot.slane %v6609, 4
        %v6612 = vor.u32 %v6611, %v6607
        %v6613 = vrot.slane %v6612, 4
        %v6615 = vshll.u32 %v6461, 16
        %v6617 = vrot.slane %v6615, 5
        %v6618 = vsel %vm6474, %v6613, %v6617
        %v6620 = vshrl.u32 %v6420, 16
        %v6622 = vrot.slane %v6620, 4
        %v6623 = vshll.u32 %v6420, 16
        %v6625 = vrot.slane %v6623, 5
        %v6626 = vor.u32 %v6622, %v6625
        %v6627 = vrot.slane %v6626, 4
        %v6629 = vshll.u32 %v6421, 16
        %v6631 = vrot.slane %v6629, 5
        %v6632 = vsel %vm6474, %v6627, %v6631
        %v6633 = vshrl.u32 %v6421, 16
        %v6635 = vrot.slane %v6633, 4
        %v6636 = vor.u32 %v6635, %v6631
        %v6637 = vrot.slane %v6636, 4
        %v6639 = vshll.u32 %v6462, 16
        %v6641 = vrot.slane %v6639, 5
        %v6642 = vsel %vm6474, %v6637, %v6641
        %v6644 = vshrl.u32 %v6422, 16
        %v6646 = vrot.slane %v6644, 4
        %v6647 = vshll.u32 %v6422, 16
        %v6649 = vrot.slane %v6647, 5
        %v6650 = vor.u32 %v6646, %v6649
        %v6651 = vrot.slane %v6650, 4
        %v6653 = vshll.u32 %v6423, 16
        %v6655 = vrot.slane %v6653, 5
        %v6656 = vsel %vm6474, %v6651, %v6655
        %v6657 = vshrl.u32 %v6423, 16
        %v6659 = vrot.slane %v6657, 4
        %v6660 = vor.u32 %v6659, %v6655
        %v6661 = vrot.slane %v6660, 4
        %v6663 = vshll.u32 %v6463, 16
        %v6665 = vrot.slane %v6663, 5
        %v6666 = vsel %vm6474, %v6661, %v6665
        %v6668 = vshrl.u32 %v6424, 16
        %v6670 = vrot.slane %v6668, 4
        %v6671 = vshll.u32 %v6424, 16
        %v6673 = vrot.slane %v6671, 5
        %v6674 = vor.u32 %v6670, %v6673
        %v6675 = vrot.slane %v6674, 4
        %v6677 = vshll.u32 %v6425, 16
        %v6679 = vrot.slane %v6677, 5
        %v6680 = vsel %vm6474, %v6675, %v6679
        %v6681 = vshrl.u32 %v6425, 16
        %v6683 = vrot.slane %v6681, 4
        %v6684 = vor.u32 %v6683, %v6679
        %v6685 = vrot.slane %v6684, 4
        %v6687 = vshll.u32 %v6464, 16
        %v6689 = vrot.slane %v6687, 5
        %v6690 = vsel %vm6474, %v6685, %v6689
        %v6692 = vshrl.u32 %v6426, 16
        %v6694 = vrot.slane %v6692, 4
        %v6695 = vshll.u32 %v6426, 16
        %v6697 = vrot.slane %v6695, 5
        %v6698 = vor.u32 %v6694, %v6697
        %v6699 = vrot.slane %v6698, 4
        %v6701 = vshll.u32 %v6427, 16
        %v6703 = vrot.slane %v6701, 5
        %v6704 = vsel %vm6474, %v6699, %v6703
        %v6705 = vshrl.u32 %v6427, 16
        %v6707 = vrot.slane %v6705, 4
        %v6708 = vor.u32 %v6707, %v6703
        %v6709 = vrot.slane %v6708, 4
        %v6711 = vshll.u32 %v6465, 16
        %v6713 = vrot.slane %v6711, 5
        %v6714 = vsel %vm6474, %v6709, %v6713
        %v6716 = vshrl.u32 %v6428, 16
        %v6718 = vrot.slane %v6716, 4
        %v6719 = vshll.u32 %v6428, 16
        %v6721 = vrot.slane %v6719, 5
        %v6722 = vor.u32 %v6718, %v6721
        %v6723 = vrot.slane %v6722, 4
        %v6725 = vshll.u32 %v6429, 16
        %v6727 = vrot.slane %v6725, 5
        %v6728 = vsel %vm6474, %v6723, %v6727
        %v6729 = vshrl.u32 %v6429, 16
        %v6731 = vrot.slane %v6729, 4
        %v6732 = vor.u32 %v6731, %v6727
        %v6733 = vrot.slane %v6732, 4
        %v6735 = vshll.u32 %v6466, 16
        %v6737 = vrot.slane %v6735, 5
        %v6738 = vsel %vm6474, %v6733, %v6737
        %v6740 = vshrl.u32 %v6430, 16
        %v6742 = vrot.slane %v6740, 4
        %v6743 = vshll.u32 %v6430, 16
        %v6745 = vrot.slane %v6743, 5
        %v6746 = vor.u32 %v6742, %v6745
        %v6747 = vrot.slane %v6746, 4
        %v6749 = vshll.u32 %v6431, 16
        %v6751 = vrot.slane %v6749, 5
        %v6752 = vsel %vm6474, %v6747, %v6751
        %v6753 = vshrl.u32 %v6431, 16
        %v6755 = vrot.slane %v6753, 4
        %v6756 = vor.u32 %v6755, %v6751
        %v6757 = vrot.slane %v6756, 4
        %v6759 = vshll.u32 %v6467, 16
        %v6761 = vrot.slane %v6759, 5
        %v6762 = vsel %vm6474, %v6757, %v6761
        %v6764 = vshrl.u32 %v6432, 16
        %v6766 = vrot.slane %v6764, 4
        %v6767 = vshll.u32 %v6432, 16
        %v6769 = vrot.slane %v6767, 5
        %v6770 = vor.u32 %v6766, %v6769
        %v6771 = vrot.slane %v6770, 4
        %v6773 = vshll.u32 %v6433, 16
        %v6775 = vrot.slane %v6773, 5
        %v6776 = vsel %vm6474, %v6771, %v6775
        %v6777 = vshrl.u32 %v6433, 16
        %v6779 = vrot.slane %v6777, 4
        %v6780 = vor.u32 %v6779, %v6775
        %v6781 = vrot.slane %v6780, 4
        %v6783 = vshll.u32 %v6468, 16
        %v6785 = vrot.slane %v6783, 5
        %v6786 = vsel %vm6474, %v6781, %v6785
        %v6788 = vshrl.u32 %v6434, 16
        %v6790 = vrot.slane %v6788, 4
        %v6791 = vshll.u32 %v6434, 16
        %v6793 = vrot.slane %v6791, 5
        %v6794 = vor.u32 %v6790, %v6793
        %v6795 = vrot.slane %v6794, 4
        %v6797 = vshll.u32 %v6435, 16
        %v6799 = vrot.slane %v6797, 5
        %v6800 = vsel %vm6474, %v6795, %v6799
        %v6801 = vshrl.u32 %v6435, 16
        %v6803 = vrot.slane %v6801, 4
        %v6804 = vor.u32 %v6803, %v6799
        %v6805 = vrot.slane %v6804, 4
        %v6807 = vshll.u32 %v6469, 16
        %v6809 = vrot.slane %v6807, 5
        %v6810 = vsel %vm6474, %v6805, %v6809
        %v6812 = vshrl.u32 %v6436, 16
        %v6814 = vrot.slane %v6812, 4
        %v6815 = vshll.u32 %v6436, 16
        %v6817 = vrot.slane %v6815, 5
        %v6818 = vor.u32 %v6814, %v6817
        %v6819 = vrot.slane %v6818, 4
        %v6821 = vshll.u32 %v6437, 16
        %v6823 = vrot.slane %v6821, 5
        %v6824 = vsel %vm6474, %v6819, %v6823
        %v6825 = vshrl.u32 %v6437, 16
        %v6827 = vrot.slane %v6825, 4
        %v6828 = vor.u32 %v6827, %v6823
        %v6829 = vrot.slane %v6828, 4
        %v6831 = vshll.u32 %v6470, 16
        %v6833 = vrot.slane %v6831, 5
        %v6834 = vsel %vm6474, %v6829, %v6833
        %v6836 = vshrl.u32 %v6438, 16
        %v6838 = vrot.slane %v6836, 4
        %v6839 = vshll.u32 %v6438, 16
        %v6841 = vrot.slane %v6839, 5
        %v6842 = vor.u32 %v6838, %v6841
        %v6843 = vrot.slane %v6842, 4
        %v6845 = vshll.u32 %v6439, 16
        %v6847 = vrot.slane %v6845, 5
        %v6848 = vsel %vm6474, %v6843, %v6847
        %v6849 = vshrl.u32 %v6439, 16
        %v6851 = vrot.slane %v6849, 4
        %v6852 = vor.u32 %v6851, %v6847
        %v6853 = vrot.slane %v6852, 4
        %v6855 = vshll.u32 %v6471, 16
        %v6857 = vrot.slane %v6855, 5
        %v6858 = vsel %vm6474, %v6853, %v6857
        %s6859 = scalar_lea.vmem [#allocation9], 128
        %v6860 = vld [vmem:[%s6859] sm:$0xff]
        %v6861 = vld [vmem:[%s6859 + $0x8] sm:$0xff]
        %v6862 = vld [vmem:[%s6859 + $0x10] sm:$0xff]
        %v6863 = vld [vmem:[%s6859 + $0x18] sm:$0xff]
        %v6864 = vld [vmem:[%s6859 + $0x20] sm:$0xff]
        %v6865 = vld [vmem:[%s6859 + $0x28] sm:$0xff]
        %v6866 = vld [vmem:[%s6859 + $0x30] sm:$0xff]
        %v6867 = vld [vmem:[%s6859 + $0x38] sm:$0xff]
        %v6868 = vld [vmem:[%s6859 + $0x40] sm:$0xff]
        %v6869 = vld [vmem:[%s6859 + $0x48] sm:$0xff]
        %v6870 = vld [vmem:[%s6859 + $0x50] sm:$0xff]
        %v6871 = vld [vmem:[%s6859 + $0x58] sm:$0xff]
        %v6872 = vld [vmem:[%s6859 + $0x60] sm:$0xff]
        %v6873 = vld [vmem:[%s6859 + $0x68] sm:$0xff]
        %v6874 = vld [vmem:[%s6859 + $0x70] sm:$0xff]
        %v6875 = vld [vmem:[%s6859 + $0x78] sm:$0xff]
        %v6876 = vunpack.c.l.b16 %v6488
        %v6877 = vunpack.c.l.b16 %v6498
        %v6878 = vunpack.c.l.b16 %v6512
        %v6879 = vunpack.c.l.b16 %v6522
        %v6880 = vunpack.c.l.b16 %v6536
        %v6881 = vunpack.c.l.b16 %v6546
        %v6882 = vunpack.c.l.b16 %v6560
        %v6883 = vunpack.c.l.b16 %v6570
        %v6884 = vunpack.c.l.b16 %v6584
        %v6885 = vunpack.c.l.b16 %v6594
        %v6886 = vunpack.c.l.b16 %v6608
        %v6887 = vunpack.c.l.b16 %v6618
        %v6888 = vunpack.c.l.b16 %v6632
        %v6889 = vunpack.c.l.b16 %v6642
        %v6890 = vunpack.c.l.b16 %v6656
        %v6891 = vunpack.c.l.b16 %v6666
        %v6892 = vunpack.c.l.b16 %v6680
        %v6893 = vunpack.c.l.b16 %v6690
        %v6894 = vunpack.c.l.b16 %v6704
        %v6895 = vunpack.c.l.b16 %v6714
        %v6896 = vunpack.c.l.b16 %v6728
        %v6897 = vunpack.c.l.b16 %v6738
        %v6898 = vunpack.c.l.b16 %v6752
        %v6899 = vunpack.c.l.b16 %v6762
        %v6900 = vunpack.c.l.b16 %v6776
        %v6901 = vunpack.c.l.b16 %v6786
        %v6902 = vunpack.c.l.b16 %v6800
        %v6903 = vunpack.c.l.b16 %v6810
        %v6904 = vunpack.c.l.b16 %v6824
        %v6905 = vunpack.c.l.b16 %v6834
        %v6906 = vunpack.c.l.b16 %v6848
        %v6907 = vunpack.c.l.b16 %v6858
        %v6908 = vpack.c.b16 %v6877, %v6876
        %v6909 = vpack.c.b16 %v6879, %v6878
        %v6910 = vpack.c.b16 %v6881, %v6880
        %v6911 = vpack.c.b16 %v6883, %v6882
        %v6912 = vpack.c.b16 %v6885, %v6884
        %v6913 = vpack.c.b16 %v6887, %v6886
        %v6914 = vpack.c.b16 %v6889, %v6888
        %v6915 = vpack.c.b16 %v6891, %v6890
        %v6916 = vpack.c.b16 %v6893, %v6892
        %v6917 = vpack.c.b16 %v6895, %v6894
        %v6918 = vpack.c.b16 %v6897, %v6896
        %v6919 = vpack.c.b16 %v6899, %v6898
        %v6920 = vpack.c.b16 %v6901, %v6900
        %v6921 = vpack.c.b16 %v6903, %v6902
        %v6922 = vpack.c.b16 %v6905, %v6904
        %v6923 = vpack.c.b16 %v6907, %v6906
        %v6956 = vunpack.c.l.b16 %v6860
        %v6957 = vunpack.c.h.b16 %v6860
        %v6958 = vunpack.c.l.b16 %v6861
        %v6959 = vunpack.c.h.b16 %v6861
        %v6960 = vunpack.c.l.b16 %v6862
        %v6961 = vunpack.c.h.b16 %v6862
        %v6962 = vunpack.c.l.b16 %v6863
        %v6963 = vunpack.c.h.b16 %v6863
        %v6964 = vunpack.c.l.b16 %v6864
        %v6965 = vunpack.c.h.b16 %v6864
        %v6966 = vunpack.c.l.b16 %v6865
        %v6967 = vunpack.c.h.b16 %v6865
        %v6968 = vunpack.c.l.b16 %v6866
        %v6969 = vunpack.c.h.b16 %v6866
        %v6970 = vunpack.c.l.b16 %v6867
        %v6971 = vunpack.c.h.b16 %v6867
        %v6972 = vunpack.c.l.b16 %v6868
        %v6973 = vunpack.c.h.b16 %v6868
        %v6974 = vunpack.c.l.b16 %v6869
        %v6975 = vunpack.c.h.b16 %v6869
        %v6976 = vunpack.c.l.b16 %v6870
        %v6977 = vunpack.c.h.b16 %v6870
        %v6978 = vunpack.c.l.b16 %v6871
        %v6979 = vunpack.c.h.b16 %v6871
        %v6980 = vunpack.c.l.b16 %v6872
        %v6981 = vunpack.c.h.b16 %v6872
        %v6982 = vunpack.c.l.b16 %v6873
        %v6983 = vunpack.c.h.b16 %v6873
        %v6984 = vunpack.c.l.b16 %v6874
        %v6985 = vunpack.c.h.b16 %v6874
        %v6986 = vunpack.c.l.b16 %v6875
        %v6987 = vunpack.c.h.b16 %v6875
        %v6988 = vpack.c.b16 %v6958, %v6956
        %v6989 = vpack.c.b16 %v6959, %v6957
        %v6990 = vpack.c.b16 %v6962, %v6960
        %v6991 = vpack.c.b16 %v6963, %v6961
        %v6992 = vpack.c.b16 %v6966, %v6964
        %v6993 = vpack.c.b16 %v6967, %v6965
        %v6994 = vpack.c.b16 %v6970, %v6968
        %v6995 = vpack.c.b16 %v6971, %v6969
        %v6996 = vpack.c.b16 %v6974, %v6972
        %v6997 = vpack.c.b16 %v6975, %v6973
        %v6998 = vpack.c.b16 %v6978, %v6976
        %v6999 = vpack.c.b16 %v6979, %v6977
        %v7000 = vpack.c.b16 %v6982, %v6980
        %v7001 = vpack.c.b16 %v6983, %v6981
        %v7002 = vpack.c.b16 %v6986, %v6984
        %v7003 = vpack.c.b16 %v6987, %v6985
        %7020 = vmatprep.subr.bf16.mxu0 %v6989
        %7021 = vmatpush1.bf16.msra.mxu0 %v6988
        %7022 = vmatprep.subr.bf16.mxu0 %v6991
        %7023 = vmatpush1.bf16.msra.mxu0 %v6990
        %7024 = vmatprep.subr.bf16.mxu0 %v6993
        %7025 = vmatpush1.bf16.msra.mxu0 %v6992
        %7026 = vmatprep.subr.bf16.mxu0 %v6995
        %7027 = vmatpush1.bf16.msra.mxu0 %v6994
        %7028 = vmatprep.subr.bf16.mxu0 %v6997
        %7029 = vmatpush1.bf16.msra.mxu0 %v6996
        %7030 = vmatprep.subr.bf16.mxu0 %v6999
        %7031 = vmatpush1.bf16.msra.mxu0 %v6998
        %7032 = vmatprep.subr.bf16.mxu0 %v7001
        %7033 = vmatpush1.bf16.msra.mxu0 %v7000
        %7034 = vmatprep.subr.bf16.mxu0 %v7003
        %7035 = vmatpush1.bf16.msra.mxu0 %v7002
        %7036 = vmatprep.subr.bf16.mxu0 0
        %7037 = vmatpush1.bf16.msra.mxu0 0
        %7038 = vmatprep.subr.bf16.mxu0 0
        %7039 = vmatpush1.bf16.msra.mxu0 0
        %7040 = vmatprep.subr.bf16.mxu0 0
        %7041 = vmatpush1.bf16.msra.mxu0 0
        %7042 = vmatprep.subr.bf16.mxu0 0
        %7043 = vmatpush1.bf16.msra.mxu0 0
        %7044 = vmatprep.subr.bf16.mxu0 0
        %7045 = vmatpush1.bf16.msra.mxu0 0
        %7046 = vmatprep.subr.bf16.mxu0 0
        %7047 = vmatpush1.bf16.msra.mxu0 0
        %7048 = vmatprep.subr.bf16.mxu0 0
        %7049 = vmatpush1.bf16.msra.mxu0 0
        %7050 = vmatprep.subr.bf16.mxu0 0
        %7051 = vmatpush1.bf16.msra.mxu0 0
        %7052 = vmatprep.mubr.bf16.mxu0 0
        %7053 = vmatmul.mubr.bf16.gmra.mrb[0].mxu0 %v6908
        %v7054 = vpop.f32.mrb[0].mxu0
        %v7055 = vadd.f32 0.0, %v7054
        %v7056 = vpop.f32.mrb[0].mxu0
        %v7057 = vadd.f32 0.0, %v7056
        %v7058 = vpop.f32.mrb[0].mxu0
        %v7059 = vadd.f32 0.0, %v7058
        %v7060 = vpop.f32.mrb[0].mxu0
        %v7061 = vadd.f32 0.0, %v7060
        %7062 = vmatprep.mubr.bf16.mxu0 0
        %7063 = vmatmul.mubr.bf16.gmra.mrb[0].mxu0 %v6909
        %v7064 = vpop.f32.mrb[0].mxu0
        %v7065 = vadd.f32 0.0, %v7064
        %v7066 = vpop.f32.mrb[0].mxu0
        %v7067 = vadd.f32 0.0, %v7066
        %v7068 = vpop.f32.mrb[0].mxu0
        %v7069 = vadd.f32 0.0, %v7068
        %v7070 = vpop.f32.mrb[0].mxu0
        %v7071 = vadd.f32 0.0, %v7070
        %7072 = vmatprep.mubr.bf16.mxu0 0
        %7073 = vmatmul.mubr.bf16.gmra.mrb[0].mxu0 %v6910
        %v7074 = vpop.f32.mrb[0].mxu0
        %v7075 = vadd.f32 0.0, %v7074
        %v7076 = vpop.f32.mrb[0].mxu0
        %v7077 = vadd.f32 0.0, %v7076
        %v7078 = vpop.f32.mrb[0].mxu0
        %v7079 = vadd.f32 0.0, %v7078
        %v7080 = vpop.f32.mrb[0].mxu0
        %v7081 = vadd.f32 0.0, %v7080
        %7082 = vmatprep.mubr.bf16.mxu0 0
        %7083 = vmatmul.mubr.bf16.gmra.mrb[0].mxu0 %v6911
        %v7084 = vpop.f32.mrb[0].mxu0
        %v7085 = vadd.f32 0.0, %v7084
        %v7086 = vpop.f32.mrb[0].mxu0
        %v7087 = vadd.f32 0.0, %v7086
        %v7088 = vpop.f32.mrb[0].mxu0
        %v7089 = vadd.f32 0.0, %v7088
        %v7090 = vpop.f32.mrb[0].mxu0
        %v7091 = vadd.f32 0.0, %v7090
        %7092 = vmatprep.mubr.bf16.mxu0 0
        %7093 = vmatmul.mubr.bf16.gmra.mrb[0].mxu0 %v6912
        %v7094 = vpop.f32.mrb[0].mxu0
        %v7095 = vadd.f32 0.0, %v7094
        %v7096 = vpop.f32.mrb[0].mxu0
        %v7097 = vadd.f32 0.0, %v7096
        %v7098 = vpop.f32.mrb[0].mxu0
        %v7099 = vadd.f32 0.0, %v7098
        %v7100 = vpop.f32.mrb[0].mxu0
        %v7101 = vadd.f32 0.0, %v7100
        %7102 = vmatprep.mubr.bf16.mxu0 0
        %7103 = vmatmul.mubr.bf16.gmra.mrb[0].mxu0 %v6913
        %v7104 = vpop.f32.mrb[0].mxu0
        %v7105 = vadd.f32 0.0, %v7104
        %v7106 = vpop.f32.mrb[0].mxu0
        %v7107 = vadd.f32 0.0, %v7106
        %v7108 = vpop.f32.mrb[0].mxu0
        %v7109 = vadd.f32 0.0, %v7108
        %v7110 = vpop.f32.mrb[0].mxu0
        %v7111 = vadd.f32 0.0, %v7110
        %7112 = vmatprep.mubr.bf16.mxu0 0
        %7113 = vmatmul.mubr.bf16.gmra.mrb[0].mxu0 %v6914
        %v7114 = vpop.f32.mrb[0].mxu0
        %v7115 = vadd.f32 0.0, %v7114
        %v7116 = vpop.f32.mrb[0].mxu0
        %v7117 = vadd.f32 0.0, %v7116
        %v7118 = vpop.f32.mrb[0].mxu0
        %v7119 = vadd.f32 0.0, %v7118
        %v7120 = vpop.f32.mrb[0].mxu0
        %v7121 = vadd.f32 0.0, %v7120
        %7122 = vmatprep.mubr.bf16.mxu0 0
        %7123 = vmatmul.mubr.bf16.gmra.mrb[0].mxu0 %v6915
        %v7124 = vpop.f32.mrb[0].mxu0
        %v7125 = vadd.f32 0.0, %v7124
        %v7126 = vpop.f32.mrb[0].mxu0
        %v7127 = vadd.f32 0.0, %v7126
        %v7128 = vpop.f32.mrb[0].mxu0
        %v7129 = vadd.f32 0.0, %v7128
        %v7130 = vpop.f32.mrb[0].mxu0
        %v7131 = vadd.f32 0.0, %v7130
        %7132 = vmatprep.mubr.bf16.mxu0 0
        %7133 = vmatmul.mubr.bf16.gmra.mrb[0].mxu0 %v6916
        %v7134 = vpop.f32.mrb[0].mxu0
        %v7135 = vadd.f32 0.0, %v7134
        %v7136 = vpop.f32.mrb[0].mxu0
        %v7137 = vadd.f32 0.0, %v7136
        %v7138 = vpop.f32.mrb[0].mxu0
        %v7139 = vadd.f32 0.0, %v7138
        %v7140 = vpop.f32.mrb[0].mxu0
        %v7141 = vadd.f32 0.0, %v7140
        %7142 = vmatprep.mubr.bf16.mxu0 0
        %7143 = vmatmul.mubr.bf16.gmra.mrb[0].mxu0 %v6917
        %v7144 = vpop.f32.mrb[0].mxu0
        %v7145 = vadd.f32 0.0, %v7144
        %v7146 = vpop.f32.mrb[0].mxu0
        %v7147 = vadd.f32 0.0, %v7146
        %v7148 = vpop.f32.mrb[0].mxu0
        %v7149 = vadd.f32 0.0, %v7148
        %v7150 = vpop.f32.mrb[0].mxu0
        %v7151 = vadd.f32 0.0, %v7150
        %7152 = vmatprep.mubr.bf16.mxu0 0
        %7153 = vmatmul.mubr.bf16.gmra.mrb[0].mxu0 %v6918
        %v7154 = vpop.f32.mrb[0].mxu0
        %v7155 = vadd.f32 0.0, %v7154
        %v7156 = vpop.f32.mrb[0].mxu0
        %v7157 = vadd.f32 0.0, %v7156
        %v7158 = vpop.f32.mrb[0].mxu0
        %v7159 = vadd.f32 0.0, %v7158
        %v7160 = vpop.f32.mrb[0].mxu0
        %v7161 = vadd.f32 0.0, %v7160
        %7162 = vmatprep.mubr.bf16.mxu0 0
        %7163 = vmatmul.mubr.bf16.gmra.mrb[0].mxu0 %v6919
        %v7164 = vpop.f32.mrb[0].mxu0
        %v7165 = vadd.f32 0.0, %v7164
        %v7166 = vpop.f32.mrb[0].mxu0
        %v7167 = vadd.f32 0.0, %v7166
        %v7168 = vpop.f32.mrb[0].mxu0
        %v7169 = vadd.f32 0.0, %v7168
        %v7170 = vpop.f32.mrb[0].mxu0
        %v7171 = vadd.f32 0.0, %v7170
        %7172 = vmatprep.mubr.bf16.mxu0 0
        %7173 = vmatmul.mubr.bf16.gmra.mrb[0].mxu0 %v6920
        %v7174 = vpop.f32.mrb[0].mxu0
        %v7175 = vadd.f32 0.0, %v7174
        %v7176 = vpop.f32.mrb[0].mxu0
        %v7177 = vadd.f32 0.0, %v7176
        %v7178 = vpop.f32.mrb[0].mxu0
        %v7179 = vadd.f32 0.0, %v7178
        %v7180 = vpop.f32.mrb[0].mxu0
        %v7181 = vadd.f32 0.0, %v7180
        %7182 = vmatprep.mubr.bf16.mxu0 0
        %7183 = vmatmul.mubr.bf16.gmra.mrb[0].mxu0 %v6921
        %v7184 = vpop.f32.mrb[0].mxu0
        %v7185 = vadd.f32 0.0, %v7184
        %v7186 = vpop.f32.mrb[0].mxu0
        %v7187 = vadd.f32 0.0, %v7186
        %v7188 = vpop.f32.mrb[0].mxu0
        %v7189 = vadd.f32 0.0, %v7188
        %v7190 = vpop.f32.mrb[0].mxu0
        %v7191 = vadd.f32 0.0, %v7190
        %7192 = vmatprep.mubr.bf16.mxu0 0
        %7193 = vmatmul.mubr.bf16.gmra.mrb[0].mxu0 %v6922
        %v7194 = vpop.f32.mrb[0].mxu0
        %v7195 = vadd.f32 0.0, %v7194
        %v7196 = vpop.f32.mrb[0].mxu0
        %v7197 = vadd.f32 0.0, %v7196
        %v7198 = vpop.f32.mrb[0].mxu0
        %v7199 = vadd.f32 0.0, %v7198
        %v7200 = vpop.f32.mrb[0].mxu0
        %v7201 = vadd.f32 0.0, %v7200
        %7202 = vmatprep.mubr.bf16.mxu0 0
        %7203 = vmatmul.mubr.bf16.gmra.mrb[0].mxu0 %v6923
        %v7204 = vpop.f32.mrb[0].mxu0
        %v7205 = vadd.f32 0.0, %v7204
        %v7206 = vpop.f32.mrb[0].mxu0
        %v7207 = vadd.f32 0.0, %v7206
        %v7208 = vpop.f32.mrb[0].mxu0
        %v7209 = vadd.f32 0.0, %v7208
        %v7210 = vpop.f32.mrb[0].mxu0
        %v7211 = vadd.f32 0.0, %v7210
        %7212 = vdwg.mxu0
        %v7245 = vunpack.c.l.b16 %v6408
        %v7246 = vunpack.c.l.b16 %v6409
        %v7247 = vunpack.c.l.b16 %v6410
        %v7248 = vunpack.c.l.b16 %v6411
        %v7249 = vunpack.c.l.b16 %v6412
        %v7250 = vunpack.c.l.b16 %v6413
        %v7251 = vunpack.c.l.b16 %v6414
        %v7252 = vunpack.c.l.b16 %v6415
        %v7253 = vunpack.c.l.b16 %v6416
        %v7254 = vunpack.c.l.b16 %v6417
        %v7255 = vunpack.c.l.b16 %v6418
        %v7256 = vunpack.c.l.b16 %v6419
        %v7257 = vunpack.c.l.b16 %v6420
        %v7258 = vunpack.c.l.b16 %v6421
        %v7259 = vunpack.c.l.b16 %v6422
        %v7260 = vunpack.c.l.b16 %v6423
        %v7261 = vunpack.c.l.b16 %v6424
        %v7262 = vunpack.c.l.b16 %v6425
        %v7263 = vunpack.c.l.b16 %v6426
        %v7264 = vunpack.c.l.b16 %v6427
        %v7265 = vunpack.c.l.b16 %v6428
        %v7266 = vunpack.c.l.b16 %v6429
        %v7267 = vunpack.c.l.b16 %v6430
        %v7268 = vunpack.c.l.b16 %v6431
        %v7269 = vunpack.c.l.b16 %v6432
        %v7270 = vunpack.c.l.b16 %v6433
        %v7271 = vunpack.c.l.b16 %v6434
        %v7272 = vunpack.c.l.b16 %v6435
        %v7273 = vunpack.c.l.b16 %v6436
        %v7274 = vunpack.c.l.b16 %v6437
        %v7275 = vunpack.c.l.b16 %v6438
        %v7276 = vunpack.c.l.b16 %v6439
        %v7277 = vpack.c.b16 %v7246, %v7245
        %v7278 = vpack.c.b16 %v7248, %v7247
        %v7279 = vpack.c.b16 %v7250, %v7249
        %v7280 = vpack.c.b16 %v7252, %v7251
        %v7281 = vpack.c.b16 %v7254, %v7253
        %v7282 = vpack.c.b16 %v7256, %v7255
        %v7283 = vpack.c.b16 %v7258, %v7257
        %v7284 = vpack.c.b16 %v7260, %v7259
        %v7285 = vpack.c.b16 %v7262, %v7261
        %v7286 = vpack.c.b16 %v7264, %v7263
        %v7287 = vpack.c.b16 %v7266, %v7265
        %v7288 = vpack.c.b16 %v7268, %v7267
        %v7289 = vpack.c.b16 %v7270, %v7269
        %v7290 = vpack.c.b16 %v7272, %v7271
        %v7291 = vpack.c.b16 %v7274, %v7273
        %v7292 = vpack.c.b16 %v7276, %v7275
        %v7325 = vunpack.c.l.b16 %v6440
        %v7326 = vunpack.c.h.b16 %v6440
        %v7327 = vunpack.c.l.b16 %v6441
        %v7328 = vunpack.c.h.b16 %v6441
        %v7329 = vunpack.c.l.b16 %v6442
        %v7330 = vunpack.c.h.b16 %v6442
        %v7331 = vunpack.c.l.b16 %v6443
        %v7332 = vunpack.c.h.b16 %v6443
        %v7333 = vunpack.c.l.b16 %v6444
        %v7334 = vunpack.c.h.b16 %v6444
        %v7335 = vunpack.c.l.b16 %v6445
        %v7336 = vunpack.c.h.b16 %v6445
        %v7337 = vunpack.c.l.b16 %v6446
        %v7338 = vunpack.c.h.b16 %v6446
        %v7339 = vunpack.c.l.b16 %v6447
        %v7340 = vunpack.c.h.b16 %v6447
        %v7341 = vunpack.c.l.b16 %v6448
        %v7342 = vunpack.c.h.b16 %v6448
        %v7343 = vunpack.c.l.b16 %v6449
        %v7344 = vunpack.c.h.b16 %v6449
        %v7345 = vunpack.c.l.b16 %v6450
        %v7346 = vunpack.c.h.b16 %v6450
        %v7347 = vunpack.c.l.b16 %v6451
        %v7348 = vunpack.c.h.b16 %v6451
        %v7349 = vunpack.c.l.b16 %v6452
        %v7350 = vunpack.c.h.b16 %v6452
        %v7351 = vunpack.c.l.b16 %v6453
        %v7352 = vunpack.c.h.b16 %v6453
        %v7353 = vunpack.c.l.b16 %v6454
        %v7354 = vunpack.c.h.b16 %v6454
        %v7355 = vunpack.c.l.b16 %v6455
        %v7356 = vunpack.c.h.b16 %v6455
        %v7357 = vpack.c.b16 %v7327, %v7325
        %v7358 = vpack.c.b16 %v7328, %v7326
        %v7359 = vpack.c.b16 %v7331, %v7329
        %v7360 = vpack.c.b16 %v7332, %v7330
        %v7361 = vpack.c.b16 %v7335, %v7333
        %v7362 = vpack.c.b16 %v7336, %v7334
        %v7363 = vpack.c.b16 %v7339, %v7337
        %v7364 = vpack.c.b16 %v7340, %v7338
        %v7365 = vpack.c.b16 %v7343, %v7341
        %v7366 = vpack.c.b16 %v7344, %v7342
        %v7367 = vpack.c.b16 %v7347, %v7345
        %v7368 = vpack.c.b16 %v7348, %v7346
        %v7369 = vpack.c.b16 %v7351, %v7349
        %v7370 = vpack.c.b16 %v7352, %v7350
        %v7371 = vpack.c.b16 %v7355, %v7353
        %v7372 = vpack.c.b16 %v7356, %v7354
        %7389 = vmatprep.subr.bf16.mxu0 %v7358
        %7390 = vmatpush1.bf16.msra.mxu0 %v7357
        %7391 = vmatprep.subr.bf16.mxu0 %v7360
        %7392 = vmatpush1.bf16.msra.mxu0 %v7359
        %7393 = vmatprep.subr.bf16.mxu0 %v7362
        %7394 = vmatpush1.bf16.msra.mxu0 %v7361
        %7395 = vmatprep.subr.bf16.mxu0 %v7364
        %7396 = vmatpush1.bf16.msra.mxu0 %v7363
        %7397 = vmatprep.subr.bf16.mxu0 %v7366
        %7398 = vmatpush1.bf16.msra.mxu0 %v7365
        %7399 = vmatprep.subr.bf16.mxu0 %v7368
        %7400 = vmatpush1.bf16.msra.mxu0 %v7367
        %7401 = vmatprep.subr.bf16.mxu0 %v7370
        %7402 = vmatpush1.bf16.msra.mxu0 %v7369
        %7403 = vmatprep.subr.bf16.mxu0 %v7372
        %7404 = vmatpush1.bf16.msra.mxu0 %v7371
        %7405 = vmatprep.subr.bf16.mxu0 0
        %7406 = vmatpush1.bf16.msra.mxu0 0
        %7407 = vmatprep.subr.bf16.mxu0 0
        %7408 = vmatpush1.bf16.msra.mxu0 0
        %7409 = vmatprep.subr.bf16.mxu0 0
        %7410 = vmatpush1.bf16.msra.mxu0 0
        %7411 = vmatprep.subr.bf16.mxu0 0
        %7412 = vmatpush1.bf16.msra.mxu0 0
        %7413 = vmatprep.subr.bf16.mxu0 0
        %7414 = vmatpush1.bf16.msra.mxu0 0
        %7415 = vmatprep.subr.bf16.mxu0 0
        %7416 = vmatpush1.bf16.msra.mxu0 0
        %7417 = vmatprep.subr.bf16.mxu0 0
        %7418 = vmatpush1.bf16.msra.mxu0 0
        %7419 = vmatprep.subr.bf16.mxu0 0
        %7420 = vmatpush1.bf16.msra.mxu0 0
        %7421 = vmatprep.mubr.bf16.mxu0 0
        %7422 = vmatmul.mubr.bf16.gmra.mrb[0].mxu0 %v7277
        %v7423 = vpop.f32.mrb[0].mxu0
        %v7424 = vadd.f32 %v7055, %v7423
        %v7425 = vpop.f32.mrb[0].mxu0
        %v7426 = vadd.f32 %v7057, %v7425
        %v7427 = vpop.f32.mrb[0].mxu0
        %v7428 = vadd.f32 %v7059, %v7427
        %v7429 = vpop.f32.mrb[0].mxu0
        %v7430 = vadd.f32 %v7061, %v7429
        %7431 = vmatprep.mubr.bf16.mxu0 0
        %7432 = vmatmul.mubr.bf16.gmra.mrb[0].mxu0 %v7278
        %v7433 = vpop.f32.mrb[0].mxu0
        %v7434 = vadd.f32 %v7065, %v7433
        %v7435 = vpop.f32.mrb[0].mxu0
        %v7436 = vadd.f32 %v7067, %v7435
        %v7437 = vpop.f32.mrb[0].mxu0
        %v7438 = vadd.f32 %v7069, %v7437
        %v7439 = vpop.f32.mrb[0].mxu0
        %v7440 = vadd.f32 %v7071, %v7439
        %7441 = vmatprep.mubr.bf16.mxu0 0
        %7442 = vmatmul.mubr.bf16.gmra.mrb[0].mxu0 %v7279
        %v7443 = vpop.f32.mrb[0].mxu0
        %v7444 = vadd.f32 %v7075, %v7443
        %v7445 = vpop.f32.mrb[0].mxu0
        %v7446 = vadd.f32 %v7077, %v7445
        %v7447 = vpop.f32.mrb[0].mxu0
        %v7448 = vadd.f32 %v7079, %v7447
        %v7449 = vpop.f32.mrb[0].mxu0
        %v7450 = vadd.f32 %v7081, %v7449
        %7451 = vmatprep.mubr.bf16.mxu0 0
        %7452 = vmatmul.mubr.bf16.gmra.mrb[0].mxu0 %v7280
        %v7453 = vpop.f32.mrb[0].mxu0
        %v7454 = vadd.f32 %v7085, %v7453
        %v7455 = vpop.f32.mrb[0].mxu0
        %v7456 = vadd.f32 %v7087, %v7455
        %v7457 = vpop.f32.mrb[0].mxu0
        %v7458 = vadd.f32 %v7089, %v7457
        %v7459 = vpop.f32.mrb[0].mxu0
        %v7460 = vadd.f32 %v7091, %v7459
        %7461 = vmatprep.mubr.bf16.mxu0 0
        %7462 = vmatmul.mubr.bf16.gmra.mrb[0].mxu0 %v7281
        %v7463 = vpop.f32.mrb[0].mxu0
        %v7464 = vadd.f32 %v7095, %v7463
        %v7465 = vpop.f32.mrb[0].mxu0
        %v7466 = vadd.f32 %v7097, %v7465
        %v7467 = vpop.f32.mrb[0].mxu0
        %v7468 = vadd.f32 %v7099, %v7467
        %v7469 = vpop.f32.mrb[0].mxu0
        %v7470 = vadd.f32 %v7101, %v7469
        %7471 = vmatprep.mubr.bf16.mxu0 0
        %7472 = vmatmul.mubr.bf16.gmra.mrb[0].mxu0 %v7282
        %v7473 = vpop.f32.mrb[0].mxu0
        %v7474 = vadd.f32 %v7105, %v7473
        %v7475 = vpop.f32.mrb[0].mxu0
        %v7476 = vadd.f32 %v7107, %v7475
        %v7477 = vpop.f32.mrb[0].mxu0
        %v7478 = vadd.f32 %v7109, %v7477
        %v7479 = vpop.f32.mrb[0].mxu0
        %v7480 = vadd.f32 %v7111, %v7479
        %7481 = vmatprep.mubr.bf16.mxu0 0
        %7482 = vmatmul.mubr.bf16.gmra.mrb[0].mxu0 %v7283
        %v7483 = vpop.f32.mrb[0].mxu0
        %v7484 = vadd.f32 %v7115, %v7483
        %v7485 = vpop.f32.mrb[0].mxu0
        %v7486 = vadd.f32 %v7117, %v7485
        %v7487 = vpop.f32.mrb[0].mxu0
        %v7488 = vadd.f32 %v7119, %v7487
        %v7489 = vpop.f32.mrb[0].mxu0
        %v7490 = vadd.f32 %v7121, %v7489
        %7491 = vmatprep.mubr.bf16.mxu0 0
        %7492 = vmatmul.mubr.bf16.gmra.mrb[0].mxu0 %v7284
        %v7493 = vpop.f32.mrb[0].mxu0
        %v7494 = vadd.f32 %v7125, %v7493
        %v7495 = vpop.f32.mrb[0].mxu0
        %v7496 = vadd.f32 %v7127, %v7495
        %v7497 = vpop.f32.mrb[0].mxu0
        %v7498 = vadd.f32 %v7129, %v7497
        %v7499 = vpop.f32.mrb[0].mxu0
        %v7500 = vadd.f32 %v7131, %v7499
        %7501 = vmatprep.mubr.bf16.mxu0 0
        %7502 = vmatmul.mubr.bf16.gmra.mrb[0].mxu0 %v7285
        %v7503 = vpop.f32.mrb[0].mxu0
        %v7504 = vadd.f32 %v7135, %v7503
        %v7505 = vpop.f32.mrb[0].mxu0
        %v7506 = vadd.f32 %v7137, %v7505
        %v7507 = vpop.f32.mrb[0].mxu0
        %v7508 = vadd.f32 %v7139, %v7507
        %v7509 = vpop.f32.mrb[0].mxu0
        %v7510 = vadd.f32 %v7141, %v7509
        %7511 = vmatprep.mubr.bf16.mxu0 0
        %7512 = vmatmul.mubr.bf16.gmra.mrb[0].mxu0 %v7286
        %v7513 = vpop.f32.mrb[0].mxu0
        %v7514 = vadd.f32 %v7145, %v7513
        %v7515 = vpop.f32.mrb[0].mxu0
        %v7516 = vadd.f32 %v7147, %v7515
        %v7517 = vpop.f32.mrb[0].mxu0
        %v7518 = vadd.f32 %v7149, %v7517
        %v7519 = vpop.f32.mrb[0].mxu0
        %v7520 = vadd.f32 %v7151, %v7519
        %7521 = vmatprep.mubr.bf16.mxu0 0
        %7522 = vmatmul.mubr.bf16.gmra.mrb[0].mxu0 %v7287
        %v7523 = vpop.f32.mrb[0].mxu0
        %v7524 = vadd.f32 %v7155, %v7523
        %v7525 = vpop.f32.mrb[0].mxu0
        %v7526 = vadd.f32 %v7157, %v7525
        %v7527 = vpop.f32.mrb[0].mxu0
        %v7528 = vadd.f32 %v7159, %v7527
        %v7529 = vpop.f32.mrb[0].mxu0
        %v7530 = vadd.f32 %v7161, %v7529
        %7531 = vmatprep.mubr.bf16.mxu0 0
        %7532 = vmatmul.mubr.bf16.gmra.mrb[0].mxu0 %v7288
        %v7533 = vpop.f32.mrb[0].mxu0
        %v7534 = vadd.f32 %v7165, %v7533
        %v7535 = vpop.f32.mrb[0].mxu0
        %v7536 = vadd.f32 %v7167, %v7535
        %v7537 = vpop.f32.mrb[0].mxu0
        %v7538 = vadd.f32 %v7169, %v7537
        %v7539 = vpop.f32.mrb[0].mxu0
        %v7540 = vadd.f32 %v7171, %v7539
        %7541 = vmatprep.mubr.bf16.mxu0 0
        %7542 = vmatmul.mubr.bf16.gmra.mrb[0].mxu0 %v7289
        %v7543 = vpop.f32.mrb[0].mxu0
        %v7544 = vadd.f32 %v7175, %v7543
        %v7545 = vpop.f32.mrb[0].mxu0
        %v7546 = vadd.f32 %v7177, %v7545
        %v7547 = vpop.f32.mrb[0].mxu0
        %v7548 = vadd.f32 %v7179, %v7547
        %v7549 = vpop.f32.mrb[0].mxu0
        %v7550 = vadd.f32 %v7181, %v7549
        %7551 = vmatprep.mubr.bf16.mxu0 0
        %7552 = vmatmul.mubr.bf16.gmra.mrb[0].mxu0 %v7290
        %v7553 = vpop.f32.mrb[0].mxu0
        %v7554 = vadd.f32 %v7185, %v7553
        %v7555 = vpop.f32.mrb[0].mxu0
        %v7556 = vadd.f32 %v7187, %v7555
        %v7557 = vpop.f32.mrb[0].mxu0
        %v7558 = vadd.f32 %v7189, %v7557
        %v7559 = vpop.f32.mrb[0].mxu0
        %v7560 = vadd.f32 %v7191, %v7559
        %7561 = vmatprep.mubr.bf16.mxu0 0
        %7562 = vmatmul.mubr.bf16.gmra.mrb[0].mxu0 %v7291
        %v7563 = vpop.f32.mrb[0].mxu0
        %v7564 = vadd.f32 %v7195, %v7563
        %v7565 = vpop.f32.mrb[0].mxu0
        %v7566 = vadd.f32 %v7197, %v7565
        %v7567 = vpop.f32.mrb[0].mxu0
        %v7568 = vadd.f32 %v7199, %v7567
        %v7569 = vpop.f32.mrb[0].mxu0
        %v7570 = vadd.f32 %v7201, %v7569
        %7571 = vmatprep.mubr.bf16.mxu0 0
        %7572 = vmatmul.mubr.bf16.gmra.mrb[0].mxu0 %v7292
        %v7573 = vpop.f32.mrb[0].mxu0
        %v7574 = vadd.f32 %v7205, %v7573
        %v7575 = vpop.f32.mrb[0].mxu0
        %v7576 = vadd.f32 %v7207, %v7575
        %v7577 = vpop.f32.mrb[0].mxu0
        %v7578 = vadd.f32 %v7209, %v7577
        %v7579 = vpop.f32.mrb[0].mxu0
        %v7580 = vadd.f32 %v7211, %v7579
        %7581 = vdwg.mxu0
        %v7582 = vld [vmem:[#allocation3] sm:$0xe]
        %v7583 = vld [vmem:[#allocation3 + $0xc] sm:$0xe]
        %v7584 = vld [vmem:[#allocation3 + $0x18] sm:$0xe]
        %v7585 = vld [vmem:[#allocation3 + $0x24] sm:$0xe]
        %v7586 = vld [vmem:[#allocation3 + $0x30] sm:$0xe]
        %v7587 = vld [vmem:[#allocation3 + $0x3c] sm:$0xe]
        %v7588 = vld [vmem:[#allocation3 + $0x48] sm:$0xe]
        %v7589 = vld [vmem:[#allocation3 + $0x54] sm:$0xe]
        %v7590 = vld [vmem:[#allocation3 + $0x60] sm:$0xe]
        %v7591 = vld [vmem:[#allocation3 + $0x6c] sm:$0xe]
        %v7592 = vld [vmem:[#allocation3 + $0x78] sm:$0xe]
        %v7593 = vld [vmem:[#allocation3 + $0x84] sm:$0xe]
        %v7594 = vld [vmem:[#allocation3 + $0x90] sm:$0xe]
        %v7595 = vld [vmem:[#allocation3 + $0x9c] sm:$0xe]
        %v7596 = vld [vmem:[#allocation3 + $0xa8] sm:$0xe]
        %v7597 = vld [vmem:[#allocation3 + $0xb4] sm:$0xe]
        %vm7630 = vcmask 1042432
        %vm7631 = vcmask 1046532
        %vm7632 = vmor %vm7630, %vm7631
        %v7633 = vrot.slane %v7582, 5
        %v7634 = vrot.slane %v7633, 4
        %v7635 = vrot.slane %v6409, 5
        %v7636 = vsel %vm7632, %v7634, %v7635
        %v7637 = vrot.slane %v7635, 4
        %v7638 = vrot.slane %v6456, 5
        %v7639 = vsel %vm7632, %v7637, %v7638
        %v7640 = vrot.slane %v7583, 5
        %v7641 = vrot.slane %v7640, 4
        %v7642 = vrot.slane %v6411, 5
        %v7643 = vsel %vm7632, %v7641, %v7642
        %v7644 = vrot.slane %v7642, 4
        %v7645 = vrot.slane %v6457, 5
        %v7646 = vsel %vm7632, %v7644, %v7645
        %v7647 = vrot.slane %v7584, 5
        %v7648 = vrot.slane %v7647, 4
        %v7649 = vrot.slane %v6413, 5
        %v7650 = vsel %vm7632, %v7648, %v7649
        %v7651 = vrot.slane %v7649, 4
        %v7652 = vrot.slane %v6458, 5
        %v7653 = vsel %vm7632, %v7651, %v7652
        %v7654 = vrot.slane %v7585, 5
        %v7655 = vrot.slane %v7654, 4
        %v7656 = vrot.slane %v6415, 5
        %v7657 = vsel %vm7632, %v7655, %v7656
        %v7658 = vrot.slane %v7656, 4
        %v7659 = vrot.slane %v6459, 5
        %v7660 = vsel %vm7632, %v7658, %v7659
        %v7661 = vrot.slane %v7586, 5
        %v7662 = vrot.slane %v7661, 4
        %v7663 = vrot.slane %v6417, 5
        %v7664 = vsel %vm7632, %v7662, %v7663
        %v7665 = vrot.slane %v7663, 4
        %v7666 = vrot.slane %v6460, 5
        %v7667 = vsel %vm7632, %v7665, %v7666
        %v7668 = vrot.slane %v7587, 5
        %v7669 = vrot.slane %v7668, 4
        %v7670 = vrot.slane %v6419, 5
        %v7671 = vsel %vm7632, %v7669, %v7670
        %v7672 = vrot.slane %v7670, 4
        %v7673 = vrot.slane %v6461, 5
        %v7674 = vsel %vm7632, %v7672, %v7673
        %v7675 = vrot.slane %v7588, 5
        %v7676 = vrot.slane %v7675, 4
        %v7677 = vrot.slane %v6421, 5
        %v7678 = vsel %vm7632, %v7676, %v7677
        %v7679 = vrot.slane %v7677, 4
        %v7680 = vrot.slane %v6462, 5
        %v7681 = vsel %vm7632, %v7679, %v7680
        %v7682 = vrot.slane %v7589, 5
        %v7683 = vrot.slane %v7682, 4
        %v7684 = vrot.slane %v6423, 5
        %v7685 = vsel %vm7632, %v7683, %v7684
        %v7686 = vrot.slane %v7684, 4
        %v7687 = vrot.slane %v6463, 5
        %v7688 = vsel %vm7632, %v7686, %v7687
        %v7689 = vrot.slane %v7590, 5
        %v7690 = vrot.slane %v7689, 4
        %v7691 = vrot.slane %v6425, 5
        %v7692 = vsel %vm7632, %v7690, %v7691
        %v7693 = vrot.slane %v7691, 4
        %v7694 = vrot.slane %v6464, 5
        %v7695 = vsel %vm7632, %v7693, %v7694
        %v7696 = vrot.slane %v7591, 5
        %v7697 = vrot.slane %v7696, 4
        %v7698 = vrot.slane %v6427, 5
        %v7699 = vsel %vm7632, %v7697, %v7698
        %v7700 = vrot.slane %v7698, 4
        %v7701 = vrot.slane %v6465, 5
        %v7702 = vsel %vm7632, %v7700, %v7701
        %v7703 = vrot.slane %v7592, 5
        %v7704 = vrot.slane %v7703, 4
        %v7705 = vrot.slane %v6429, 5
        %v7706 = vsel %vm7632, %v7704, %v7705
        %v7707 = vrot.slane %v7705, 4
        %v7708 = vrot.slane %v6466, 5
        %v7709 = vsel %vm7632, %v7707, %v7708
        %v7710 = vrot.slane %v7593, 5
        %v7711 = vrot.slane %v7710, 4
        %v7712 = vrot.slane %v6431, 5
        %v7713 = vsel %vm7632, %v7711, %v7712
        %v7714 = vrot.slane %v7712, 4
        %v7715 = vrot.slane %v6467, 5
        %v7716 = vsel %vm7632, %v7714, %v7715
        %v7717 = vrot.slane %v7594, 5
        %v7718 = vrot.slane %v7717, 4
        %v7719 = vrot.slane %v6433, 5
        %v7720 = vsel %vm7632, %v7718, %v7719
        %v7721 = vrot.slane %v7719, 4
        %v7722 = vrot.slane %v6468, 5
        %v7723 = vsel %vm7632, %v7721, %v7722
        %v7724 = vrot.slane %v7595, 5
        %v7725 = vrot.slane %v7724, 4
        %v7726 = vrot.slane %v6435, 5
        %v7727 = vsel %vm7632, %v7725, %v7726
        %v7728 = vrot.slane %v7726, 4
        %v7729 = vrot.slane %v6469, 5
        %v7730 = vsel %vm7632, %v7728, %v7729
        %v7731 = vrot.slane %v7596, 5
        %v7732 = vrot.slane %v7731, 4
        %v7733 = vrot.slane %v6437, 5
        %v7734 = vsel %vm7632, %v7732, %v7733
        %v7735 = vrot.slane %v7733, 4
        %v7736 = vrot.slane %v6470, 5
        %v7737 = vsel %vm7632, %v7735, %v7736
        %v7738 = vrot.slane %v7597, 5
        %v7739 = vrot.slane %v7738, 4
        %v7740 = vrot.slane %v6439, 5
        %v7741 = vsel %vm7632, %v7739, %v7740
        %v7742 = vrot.slane %v7740, 4
        %v7743 = vrot.slane %v6471, 5
        %v7744 = vsel %vm7632, %v7742, %v7743
        %s7745 = scalar_lea.vmem [#allocation9], 256
        %v7746 = vld [vmem:[%s7745] sm:$0xff]
        %v7747 = vld [vmem:[%s7745 + $0x8] sm:$0xff]
        %v7748 = vld [vmem:[%s7745 + $0x10] sm:$0xff]
        %v7749 = vld [vmem:[%s7745 + $0x18] sm:$0xff]
        %v7750 = vld [vmem:[%s7745 + $0x20] sm:$0xff]
        %v7751 = vld [vmem:[%s7745 + $0x28] sm:$0xff]
        %v7752 = vld [vmem:[%s7745 + $0x30] sm:$0xff]
        %v7753 = vld [vmem:[%s7745 + $0x38] sm:$0xff]
        %v7754 = vld [vmem:[%s7745 + $0x40] sm:$0xff]
        %v7755 = vld [vmem:[%s7745 + $0x48] sm:$0xff]
        %v7756 = vld [vmem:[%s7745 + $0x50] sm:$0xff]
        %v7757 = vld [vmem:[%s7745 + $0x58] sm:$0xff]
        %v7758 = vld [vmem:[%s7745 + $0x60] sm:$0xff]
        %v7759 = vld [vmem:[%s7745 + $0x68] sm:$0xff]
        %v7760 = vld [vmem:[%s7745 + $0x70] sm:$0xff]
        %v7761 = vld [vmem:[%s7745 + $0x78] sm:$0xff]
        %v7762 = vunpack.c.l.b16 %v7636
        %v7763 = vunpack.c.l.b16 %v7639
        %v7764 = vunpack.c.l.b16 %v7643
        %v7765 = vunpack.c.l.b16 %v7646
        %v7766 = vunpack.c.l.b16 %v7650
        %v7767 = vunpack.c.l.b16 %v7653
        %v7768 = vunpack.c.l.b16 %v7657
        %v7769 = vunpack.c.l.b16 %v7660
        %v7770 = vunpack.c.l.b16 %v7664
        %v7771 = vunpack.c.l.b16 %v7667
        %v7772 = vunpack.c.l.b16 %v7671
        %v7773 = vunpack.c.l.b16 %v7674
        %v7774 = vunpack.c.l.b16 %v7678
        %v7775 = vunpack.c.l.b16 %v7681
        %v7776 = vunpack.c.l.b16 %v7685
        %v7777 = vunpack.c.l.b16 %v7688
        %v7778 = vunpack.c.l.b16 %v7692
        %v7779 = vunpack.c.l.b16 %v7695
        %v7780 = vunpack.c.l.b16 %v7699
        %v7781 = vunpack.c.l.b16 %v7702
        %v7782 = vunpack.c.l.b16 %v7706
        %v7783 = vunpack.c.l.b16 %v7709
        %v7784 = vunpack.c.l.b16 %v7713
        %v7785 = vunpack.c.l.b16 %v7716
        %v7786 = vunpack.c.l.b16 %v7720
        %v7787 = vunpack.c.l.b16 %v7723
        %v7788 = vunpack.c.l.b16 %v7727
        %v7789 = vunpack.c.l.b16 %v7730
        %v7790 = vunpack.c.l.b16 %v7734
        %v7791 = vunpack.c.l.b16 %v7737
        %v7792 = vunpack.c.l.b16 %v7741
        %v7793 = vunpack.c.l.b16 %v7744
        %v7794 = vpack.c.b16 %v7763, %v7762
        %v7795 = vpack.c.b16 %v7765, %v7764
        %v7796 = vpack.c.b16 %v7767, %v7766
        %v7797 = vpack.c.b16 %v7769, %v7768
        %v7798 = vpack.c.b16 %v7771, %v7770
        %v7799 = vpack.c.b16 %v7773, %v7772
        %v7800 = vpack.c.b16 %v7775, %v7774
        %v7801 = vpack.c.b16 %v7777, %v7776
        %v7802 = vpack.c.b16 %v7779, %v7778
        %v7803 = vpack.c.b16 %v7781, %v7780
        %v7804 = vpack.c.b16 %v7783, %v7782
        %v7805 = vpack.c.b16 %v7785, %v7784
        %v7806 = vpack.c.b16 %v7787, %v7786
        %v7807 = vpack.c.b16 %v7789, %v7788
        %v7808 = vpack.c.b16 %v7791, %v7790
        %v7809 = vpack.c.b16 %v7793, %v7792
        %v7842 = vunpack.c.l.b16 %v7746
        %v7843 = vunpack.c.h.b16 %v7746
        %v7844 = vunpack.c.l.b16 %v7747
        %v7845 = vunpack.c.h.b16 %v7747
        %v7846 = vunpack.c.l.b16 %v7748
        %v7847 = vunpack.c.h.b16 %v7748
        %v7848 = vunpack.c.l.b16 %v7749
        %v7849 = vunpack.c.h.b16 %v7749
        %v7850 = vunpack.c.l.b16 %v7750
        %v7851 = vunpack.c.h.b16 %v7750
        %v7852 = vunpack.c.l.b16 %v7751
        %v7853 = vunpack.c.h.b16 %v7751
        %v7854 = vunpack.c.l.b16 %v7752
        %v7855 = vunpack.c.h.b16 %v7752
        %v7856 = vunpack.c.l.b16 %v7753
        %v7857 = vunpack.c.h.b16 %v7753
        %v7858 = vunpack.c.l.b16 %v7754
        %v7859 = vunpack.c.h.b16 %v7754
        %v7860 = vunpack.c.l.b16 %v7755
        %v7861 = vunpack.c.h.b16 %v7755
        %v7862 = vunpack.c.l.b16 %v7756
        %v7863 = vunpack.c.h.b16 %v7756
        %v7864 = vunpack.c.l.b16 %v7757
        %v7865 = vunpack.c.h.b16 %v7757
        %v7866 = vunpack.c.l.b16 %v7758
        %v7867 = vunpack.c.h.b16 %v7758
        %v7868 = vunpack.c.l.b16 %v7759
        %v7869 = vunpack.c.h.b16 %v7759
        %v7870 = vunpack.c.l.b16 %v7760
        %v7871 = vunpack.c.h.b16 %v7760
        %v7872 = vunpack.c.l.b16 %v7761
        %v7873 = vunpack.c.h.b16 %v7761
        %v7874 = vpack.c.b16 %v7844, %v7842
        %v7875 = vpack.c.b16 %v7845, %v7843
        %v7876 = vpack.c.b16 %v7848, %v7846
        %v7877 = vpack.c.b16 %v7849, %v7847
        %v7878 = vpack.c.b16 %v7852, %v7850
        %v7879 = vpack.c.b16 %v7853, %v7851
        %v7880 = vpack.c.b16 %v7856, %v7854
        %v7881 = vpack.c.b16 %v7857, %v7855
        %v7882 = vpack.c.b16 %v7860, %v7858
        %v7883 = vpack.c.b16 %v7861, %v7859
        %v7884 = vpack.c.b16 %v7864, %v7862
        %v7885 = vpack.c.b16 %v7865, %v7863
        %v7886 = vpack.c.b16 %v7868, %v7866
        %v7887 = vpack.c.b16 %v7869, %v7867
        %v7888 = vpack.c.b16 %v7872, %v7870
        %v7889 = vpack.c.b16 %v7873, %v7871
        %7906 = vmatprep.subr.bf16.mxu0 %v7875
        %7907 = vmatpush1.bf16.msra.mxu0 %v7874
        %7908 = vmatprep.subr.bf16.mxu0 %v7877
        %7909 = vmatpush1.bf16.msra.mxu0 %v7876
        %7910 = vmatprep.subr.bf16.mxu0 %v7879
        %7911 = vmatpush1.bf16.msra.mxu0 %v7878
        %7912 = vmatprep.subr.bf16.mxu0 %v7881
        %7913 = vmatpush1.bf16.msra.mxu0 %v7880
        %7914 = vmatprep.subr.bf16.mxu0 %v7883
        %7915 = vmatpush1.bf16.msra.mxu0 %v7882
        %7916 = vmatprep.subr.bf16.mxu0 %v7885
        %7917 = vmatpush1.bf16.msra.mxu0 %v7884
        %7918 = vmatprep.subr.bf16.mxu0 %v7887
        %7919 = vmatpush1.bf16.msra.mxu0 %v7886
        %7920 = vmatprep.subr.bf16.mxu0 %v7889
        %7921 = vmatpush1.bf16.msra.mxu0 %v7888
        %7922 = vmatprep.subr.bf16.mxu0 0
        %7923 = vmatpush1.bf16.msra.mxu0 0
        %7924 = vmatprep.subr.bf16.mxu0 0
        %7925 = vmatpush1.bf16.msra.mxu0 0
        %7926 = vmatprep.subr.bf16.mxu0 0
        %7927 = vmatpush1.bf16.msra.mxu0 0
        %7928 = vmatprep.subr.bf16.mxu0 0
        %7929 = vmatpush1.bf16.msra.mxu0 0
        %7930 = vmatprep.subr.bf16.mxu0 0
        %7931 = vmatpush1.bf16.msra.mxu0 0
        %7932 = vmatprep.subr.bf16.mxu0 0
        %7933 = vmatpush1.bf16.msra.mxu0 0
        %7934 = vmatprep.subr.bf16.mxu0 0
        %7935 = vmatpush1.bf16.msra.mxu0 0
        %7936 = vmatprep.subr.bf16.mxu0 0
        %7937 = vmatpush1.bf16.msra.mxu0 0
        %7938 = vmatprep.mubr.bf16.mxu0 0
        %7939 = vmatmul.mubr.bf16.gmra.mrb[0].mxu0 %v7794
        %v7940 = vpop.f32.mrb[0].mxu0
        %v7941 = vadd.f32 0.0, %v7940
        %v7942 = vpop.f32.mrb[0].mxu0
        %v7943 = vadd.f32 0.0, %v7942
        %v7944 = vpop.f32.mrb[0].mxu0
        %v7945 = vadd.f32 0.0, %v7944
        %v7946 = vpop.f32.mrb[0].mxu0
        %v7947 = vadd.f32 0.0, %v7946
        %7948 = vmatprep.mubr.bf16.mxu0 0
        %7949 = vmatmul.mubr.bf16.gmra.mrb[0].mxu0 %v7795
        %v7950 = vpop.f32.mrb[0].mxu0
        %v7951 = vadd.f32 0.0, %v7950
        %v7952 = vpop.f32.mrb[0].mxu0
        %v7953 = vadd.f32 0.0, %v7952
        %v7954 = vpop.f32.mrb[0].mxu0
        %v7955 = vadd.f32 0.0, %v7954
        %v7956 = vpop.f32.mrb[0].mxu0
        %v7957 = vadd.f32 0.0, %v7956
        %7958 = vmatprep.mubr.bf16.mxu0 0
        %7959 = vmatmul.mubr.bf16.gmra.mrb[0].mxu0 %v7796
        %v7960 = vpop.f32.mrb[0].mxu0
        %v7961 = vadd.f32 0.0, %v7960
        %v7962 = vpop.f32.mrb[0].mxu0
        %v7963 = vadd.f32 0.0, %v7962
        %v7964 = vpop.f32.mrb[0].mxu0
        %v7965 = vadd.f32 0.0, %v7964
        %v7966 = vpop.f32.mrb[0].mxu0
        %v7967 = vadd.f32 0.0, %v7966
        %7968 = vmatprep.mubr.bf16.mxu0 0
        %7969 = vmatmul.mubr.bf16.gmra.mrb[0].mxu0 %v7797
        %v7970 = vpop.f32.mrb[0].mxu0
        %v7971 = vadd.f32 0.0, %v7970
        %v7972 = vpop.f32.mrb[0].mxu0
        %v7973 = vadd.f32 0.0, %v7972
        %v7974 = vpop.f32.mrb[0].mxu0
        %v7975 = vadd.f32 0.0, %v7974
        %v7976 = vpop.f32.mrb[0].mxu0
        %v7977 = vadd.f32 0.0, %v7976
        %7978 = vmatprep.mubr.bf16.mxu0 0
        %7979 = vmatmul.mubr.bf16.gmra.mrb[0].mxu0 %v7798
        %v7980 = vpop.f32.mrb[0].mxu0
        %v7981 = vadd.f32 0.0, %v7980
        %v7982 = vpop.f32.mrb[0].mxu0
        %v7983 = vadd.f32 0.0, %v7982
        %v7984 = vpop.f32.mrb[0].mxu0
        %v7985 = vadd.f32 0.0, %v7984
        %v7986 = vpop.f32.mrb[0].mxu0
        %v7987 = vadd.f32 0.0, %v7986
        %7988 = vmatprep.mubr.bf16.mxu0 0
        %7989 = vmatmul.mubr.bf16.gmra.mrb[0].mxu0 %v7799
        %v7990 = vpop.f32.mrb[0].mxu0
        %v7991 = vadd.f32 0.0, %v7990
        %v7992 = vpop.f32.mrb[0].mxu0
        %v7993 = vadd.f32 0.0, %v7992
        %v7994 = vpop.f32.mrb[0].mxu0
        %v7995 = vadd.f32 0.0, %v7994
        %v7996 = vpop.f32.mrb[0].mxu0
        %v7997 = vadd.f32 0.0, %v7996
        %7998 = vmatprep.mubr.bf16.mxu0 0
        %7999 = vmatmul.mubr.bf16.gmra.mrb[0].mxu0 %v7800
        %v8000 = vpop.f32.mrb[0].mxu0
        %v8001 = vadd.f32 0.0, %v8000
        %v8002 = vpop.f32.mrb[0].mxu0
        %v8003 = vadd.f32 0.0, %v8002
        %v8004 = vpop.f32.mrb[0].mxu0
        %v8005 = vadd.f32 0.0, %v8004
        %v8006 = vpop.f32.mrb[0].mxu0
        %v8007 = vadd.f32 0.0, %v8006
        %8008 = vmatprep.mubr.bf16.mxu0 0
        %8009 = vmatmul.mubr.bf16.gmra.mrb[0].mxu0 %v7801
        %v8010 = vpop.f32.mrb[0].mxu0
        %v8011 = vadd.f32 0.0, %v8010
        %v8012 = vpop.f32.mrb[0].mxu0
        %v8013 = vadd.f32 0.0, %v8012
        %v8014 = vpop.f32.mrb[0].mxu0
        %v8015 = vadd.f32 0.0, %v8014
        %v8016 = vpop.f32.mrb[0].mxu0
        %v8017 = vadd.f32 0.0, %v8016
        %8018 = vmatprep.mubr.bf16.mxu0 0
        %8019 = vmatmul.mubr.bf16.gmra.mrb[0].mxu0 %v7802
        %v8020 = vpop.f32.mrb[0].mxu0
        %v8021 = vadd.f32 0.0, %v8020
        %v8022 = vpop.f32.mrb[0].mxu0
        %v8023 = vadd.f32 0.0, %v8022
        %v8024 = vpop.f32.mrb[0].mxu0
        %v8025 = vadd.f32 0.0, %v8024
        %v8026 = vpop.f32.mrb[0].mxu0
        %v8027 = vadd.f32 0.0, %v8026
        %8028 = vmatprep.mubr.bf16.mxu0 0
        %8029 = vmatmul.mubr.bf16.gmra.mrb[0].mxu0 %v7803
        %v8030 = vpop.f32.mrb[0].mxu0
        %v8031 = vadd.f32 0.0, %v8030
        %v8032 = vpop.f32.mrb[0].mxu0
        %v8033 = vadd.f32 0.0, %v8032
        %v8034 = vpop.f32.mrb[0].mxu0
        %v8035 = vadd.f32 0.0, %v8034
        %v8036 = vpop.f32.mrb[0].mxu0
        %v8037 = vadd.f32 0.0, %v8036
        %8038 = vmatprep.mubr.bf16.mxu0 0
        %8039 = vmatmul.mubr.bf16.gmra.mrb[0].mxu0 %v7804
        %v8040 = vpop.f32.mrb[0].mxu0
        %v8041 = vadd.f32 0.0, %v8040
        %v8042 = vpop.f32.mrb[0].mxu0
        %v8043 = vadd.f32 0.0, %v8042
        %v8044 = vpop.f32.mrb[0].mxu0
        %v8045 = vadd.f32 0.0, %v8044
        %v8046 = vpop.f32.mrb[0].mxu0
        %v8047 = vadd.f32 0.0, %v8046
        %8048 = vmatprep.mubr.bf16.mxu0 0
        %8049 = vmatmul.mubr.bf16.gmra.mrb[0].mxu0 %v7805
        %v8050 = vpop.f32.mrb[0].mxu0
        %v8051 = vadd.f32 0.0, %v8050
        %v8052 = vpop.f32.mrb[0].mxu0
        %v8053 = vadd.f32 0.0, %v8052
        %v8054 = vpop.f32.mrb[0].mxu0
        %v8055 = vadd.f32 0.0, %v8054
        %v8056 = vpop.f32.mrb[0].mxu0
        %v8057 = vadd.f32 0.0, %v8056
        %8058 = vmatprep.mubr.bf16.mxu0 0
        %8059 = vmatmul.mubr.bf16.gmra.mrb[0].mxu0 %v7806
        %v8060 = vpop.f32.mrb[0].mxu0
        %v8061 = vadd.f32 0.0, %v8060
        %v8062 = vpop.f32.mrb[0].mxu0
        %v8063 = vadd.f32 0.0, %v8062
        %v8064 = vpop.f32.mrb[0].mxu0
        %v8065 = vadd.f32 0.0, %v8064
        %v8066 = vpop.f32.mrb[0].mxu0
        %v8067 = vadd.f32 0.0, %v8066
        %8068 = vmatprep.mubr.bf16.mxu0 0
        %8069 = vmatmul.mubr.bf16.gmra.mrb[0].mxu0 %v7807
        %v8070 = vpop.f32.mrb[0].mxu0
        %v8071 = vadd.f32 0.0, %v8070
        %v8072 = vpop.f32.mrb[0].mxu0
        %v8073 = vadd.f32 0.0, %v8072
        %v8074 = vpop.f32.mrb[0].mxu0
        %v8075 = vadd.f32 0.0, %v8074
        %v8076 = vpop.f32.mrb[0].mxu0
        %v8077 = vadd.f32 0.0, %v8076
        %8078 = vmatprep.mubr.bf16.mxu0 0
        %8079 = vmatmul.mubr.bf16.gmra.mrb[0].mxu0 %v7808
        %v8080 = vpop.f32.mrb[0].mxu0
        %v8081 = vadd.f32 0.0, %v8080
        %v8082 = vpop.f32.mrb[0].mxu0
        %v8083 = vadd.f32 0.0, %v8082
        %v8084 = vpop.f32.mrb[0].mxu0
        %v8085 = vadd.f32 0.0, %v8084
        %v8086 = vpop.f32.mrb[0].mxu0
        %v8087 = vadd.f32 0.0, %v8086
        %8088 = vmatprep.mubr.bf16.mxu0 0
        %8089 = vmatmul.mubr.bf16.gmra.mrb[0].mxu0 %v7809
        %v8090 = vpop.f32.mrb[0].mxu0
        %v8091 = vadd.f32 0.0, %v8090
        %v8092 = vpop.f32.mrb[0].mxu0
        %v8093 = vadd.f32 0.0, %v8092
        %v8094 = vpop.f32.mrb[0].mxu0
        %v8095 = vadd.f32 0.0, %v8094
        %v8096 = vpop.f32.mrb[0].mxu0
        %v8097 = vadd.f32 0.0, %v8096
        %8098 = vdwg.mxu0
        %v8099 = vadd.f32 %v7424, %v7941
        %v8100 = vadd.f32 %v7426, %v7943
        %v8101 = vadd.f32 %v7428, %v7945
        %v8102 = vadd.f32 %v7430, %v7947
        %v8103 = vadd.f32 %v7434, %v7951
        %v8104 = vadd.f32 %v7436, %v7953
        %v8105 = vadd.f32 %v7438, %v7955
        %v8106 = vadd.f32 %v7440, %v7957
        %v8107 = vadd.f32 %v7444, %v7961
        %v8108 = vadd.f32 %v7446, %v7963
        %v8109 = vadd.f32 %v7448, %v7965
        %v8110 = vadd.f32 %v7450, %v7967
        %v8111 = vadd.f32 %v7454, %v7971
        %v8112 = vadd.f32 %v7456, %v7973
        %v8113 = vadd.f32 %v7458, %v7975
        %v8114 = vadd.f32 %v7460, %v7977
        %v8115 = vadd.f32 %v7464, %v7981
        %v8116 = vadd.f32 %v7466, %v7983
        %v8117 = vadd.f32 %v7468, %v7985
        %v8118 = vadd.f32 %v7470, %v7987
        %v8119 = vadd.f32 %v7474, %v7991
        %v8120 = vadd.f32 %v7476, %v7993
        %v8121 = vadd.f32 %v7478, %v7995
        %v8122 = vadd.f32 %v7480, %v7997
        %v8123 = vadd.f32 %v7484, %v8001
        %v8124 = vadd.f32 %v7486, %v8003
        %v8125 = vadd.f32 %v7488, %v8005
        %v8126 = vadd.f32 %v7490, %v8007
        %v8127 = vadd.f32 %v7494, %v8011
        %v8128 = vadd.f32 %v7496, %v8013
        %v8129 = vadd.f32 %v7498, %v8015
        %v8130 = vadd.f32 %v7500, %v8017
        %v8131 = vadd.f32 %v7504, %v8021
        %v8132 = vadd.f32 %v7506, %v8023
        %v8133 = vadd.f32 %v7508, %v8025
        %v8134 = vadd.f32 %v7510, %v8027
        %v8135 = vadd.f32 %v7514, %v8031
        %v8136 = vadd.f32 %v7516, %v8033
        %v8137 = vadd.f32 %v7518, %v8035
        %v8138 = vadd.f32 %v7520, %v8037
        %v8139 = vadd.f32 %v7524, %v8041
        %v8140 = vadd.f32 %v7526, %v8043
        %v8141 = vadd.f32 %v7528, %v8045
        %v8142 = vadd.f32 %v7530, %v8047
        %v8143 = vadd.f32 %v7534, %v8051
        %v8144 = vadd.f32 %v7536, %v8053
        %v8145 = vadd.f32 %v7538, %v8055
        %v8146 = vadd.f32 %v7540, %v8057
        %v8147 = vadd.f32 %v7544, %v8061
        %v8148 = vadd.f32 %v7546, %v8063
        %v8149 = vadd.f32 %v7548, %v8065
        %v8150 = vadd.f32 %v7550, %v8067
        %v8151 = vadd.f32 %v7554, %v8071
        %v8152 = vadd.f32 %v7556, %v8073
        %v8153 = vadd.f32 %v7558, %v8075
        %v8154 = vadd.f32 %v7560, %v8077
        %v8155 = vadd.f32 %v7564, %v8081
        %v8156 = vadd.f32 %v7566, %v8083
        %v8157 = vadd.f32 %v7568, %v8085
        %v8158 = vadd.f32 %v7570, %v8087
        %v8159 = vadd.f32 %v7574, %v8091
        %v8160 = vadd.f32 %v7576, %v8093
        %v8161 = vadd.f32 %v7578, %v8095
        %v8162 = vadd.f32 %v7580, %v8097
        %s8163 = scalar_lea.vmem [#allocation3], 12
        %v8164 = vld [vmem:[%s8163] sm:$0xf]
        %v8165 = vld [vmem:[%s8163 + $0x4] sm:$0xf]
        %v8166 = vld [vmem:[%s8163 + $0xc] sm:$0xf]
        %v8167 = vld [vmem:[%s8163 + $0x10] sm:$0xf]
        %v8168 = vld [vmem:[%s8163 + $0x18] sm:$0xf]
        %v8169 = vld [vmem:[%s8163 + $0x1c] sm:$0xf]
        %v8170 = vld [vmem:[%s8163 + $0x24] sm:$0xf]
        %v8171 = vld [vmem:[%s8163 + $0x28] sm:$0xf]
        %v8172 = vld [vmem:[%s8163 + $0x30] sm:$0xf]
        %v8173 = vld [vmem:[%s8163 + $0x34] sm:$0xf]
        %v8174 = vld [vmem:[%s8163 + $0x3c] sm:$0xf]
        %v8175 = vld [vmem:[%s8163 + $0x40] sm:$0xf]
        %v8176 = vld [vmem:[%s8163 + $0x48] sm:$0xf]
        %v8177 = vld [vmem:[%s8163 + $0x4c] sm:$0xf]
        %v8178 = vld [vmem:[%s8163 + $0x54] sm:$0xf]
        %v8179 = vld [vmem:[%s8163 + $0x58] sm:$0xf]
        %v8180 = vld [vmem:[%s8163 + $0x60] sm:$0xf]
        %v8181 = vld [vmem:[%s8163 + $0x64] sm:$0xf]
        %v8182 = vld [vmem:[%s8163 + $0x6c] sm:$0xf]
        %v8183 = vld [vmem:[%s8163 + $0x70] sm:$0xf]
        %v8184 = vld [vmem:[%s8163 + $0x78] sm:$0xf]
        %v8185 = vld [vmem:[%s8163 + $0x7c] sm:$0xf]
        %v8186 = vld [vmem:[%s8163 + $0x84] sm:$0xf]
        %v8187 = vld [vmem:[%s8163 + $0x88] sm:$0xf]
        %v8188 = vld [vmem:[%s8163 + $0x90] sm:$0xf]
        %v8189 = vld [vmem:[%s8163 + $0x94] sm:$0xf]
        %v8190 = vld [vmem:[%s8163 + $0x9c] sm:$0xf]
        %v8191 = vld [vmem:[%s8163 + $0xa0] sm:$0xf]
        %v8192 = vld [vmem:[%s8163 + $0xa8] sm:$0xf]
        %v8193 = vld [vmem:[%s8163 + $0xac] sm:$0xf]
        %v8194 = vld [vmem:[%s8163 + $0xb4] sm:$0xf]
        %v8195 = vld [vmem:[%s8163 + $0xb8] sm:$0xf]
        %s8196 = scalar_lea.vmem [#allocation9], 384
        %v8197 = vld [vmem:[%s8196] sm:$0xff]
        %v8198 = vld [vmem:[%s8196 + $0x8] sm:$0xff]
        %v8199 = vld [vmem:[%s8196 + $0x10] sm:$0xff]
        %v8200 = vld [vmem:[%s8196 + $0x18] sm:$0xff]
        %v8201 = vld [vmem:[%s8196 + $0x20] sm:$0xff]
        %v8202 = vld [vmem:[%s8196 + $0x28] sm:$0xff]
        %v8203 = vld [vmem:[%s8196 + $0x30] sm:$0xff]
        %v8204 = vld [vmem:[%s8196 + $0x38] sm:$0xff]
        %v8205 = vld [vmem:[%s8196 + $0x40] sm:$0xff]
        %v8206 = vld [vmem:[%s8196 + $0x48] sm:$0xff]
        %v8207 = vld [vmem:[%s8196 + $0x50] sm:$0xff]
        %v8208 = vld [vmem:[%s8196 + $0x58] sm:$0xff]
        %v8209 = vld [vmem:[%s8196 + $0x60] sm:$0xff]
        %v8210 = vld [vmem:[%s8196 + $0x68] sm:$0xff]
        %v8211 = vld [vmem:[%s8196 + $0x70] sm:$0xff]
        %v8212 = vld [vmem:[%s8196 + $0x78] sm:$0xff]
        %v8245 = vunpack.c.l.b16 %v8164
        %v8246 = vunpack.c.l.b16 %v8165
        %v8247 = vunpack.c.l.b16 %v8166
        %v8248 = vunpack.c.l.b16 %v8167
        %v8249 = vunpack.c.l.b16 %v8168
        %v8250 = vunpack.c.l.b16 %v8169
        %v8251 = vunpack.c.l.b16 %v8170
        %v8252 = vunpack.c.l.b16 %v8171
        %v8253 = vunpack.c.l.b16 %v8172
        %v8254 = vunpack.c.l.b16 %v8173
        %v8255 = vunpack.c.l.b16 %v8174
        %v8256 = vunpack.c.l.b16 %v8175
        %v8257 = vunpack.c.l.b16 %v8176
        %v8258 = vunpack.c.l.b16 %v8177
        %v8259 = vunpack.c.l.b16 %v8178
        %v8260 = vunpack.c.l.b16 %v8179
        %v8261 = vunpack.c.l.b16 %v8180
        %v8262 = vunpack.c.l.b16 %v8181
        %v8263 = vunpack.c.l.b16 %v8182
        %v8264 = vunpack.c.l.b16 %v8183
        %v8265 = vunpack.c.l.b16 %v8184
        %v8266 = vunpack.c.l.b16 %v8185
        %v8267 = vunpack.c.l.b16 %v8186
        %v8268 = vunpack.c.l.b16 %v8187
        %v8269 = vunpack.c.l.b16 %v8188
        %v8270 = vunpack.c.l.b16 %v8189
        %v8271 = vunpack.c.l.b16 %v8190
        %v8272 = vunpack.c.l.b16 %v8191
        %v8273 = vunpack.c.l.b16 %v8192
        %v8274 = vunpack.c.l.b16 %v8193
        %v8275 = vunpack.c.l.b16 %v8194
        %v8276 = vunpack.c.l.b16 %v8195
        %v8277 = vpack.c.b16 %v8246, %v8245
        %v8278 = vpack.c.b16 %v8248, %v8247
        %v8279 = vpack.c.b16 %v8250, %v8249
        %v8280 = vpack.c.b16 %v8252, %v8251
        %v8281 = vpack.c.b16 %v8254, %v8253
        %v8282 = vpack.c.b16 %v8256, %v8255
        %v8283 = vpack.c.b16 %v8258, %v8257
        %v8284 = vpack.c.b16 %v8260, %v8259
        %v8285 = vpack.c.b16 %v8262, %v8261
        %v8286 = vpack.c.b16 %v8264, %v8263
        %v8287 = vpack.c.b16 %v8266, %v8265
        %v8288 = vpack.c.b16 %v8268, %v8267
        %v8289 = vpack.c.b16 %v8270, %v8269
        %v8290 = vpack.c.b16 %v8272, %v8271
        %v8291 = vpack.c.b16 %v8274, %v8273
        %v8292 = vpack.c.b16 %v8276, %v8275
        %v8325 = vunpack.c.l.b16 %v8197
        %v8326 = vunpack.c.h.b16 %v8197
        %v8327 = vunpack.c.l.b16 %v8198
        %v8328 = vunpack.c.h.b16 %v8198
        %v8329 = vunpack.c.l.b16 %v8199
        %v8330 = vunpack.c.h.b16 %v8199
        %v8331 = vunpack.c.l.b16 %v8200
        %v8332 = vunpack.c.h.b16 %v8200
        %v8333 = vunpack.c.l.b16 %v8201
        %v8334 = vunpack.c.h.b16 %v8201
        %v8335 = vunpack.c.l.b16 %v8202
        %v8336 = vunpack.c.h.b16 %v8202
        %v8337 = vunpack.c.l.b16 %v8203
        %v8338 = vunpack.c.h.b16 %v8203
        %v8339 = vunpack.c.l.b16 %v8204
        %v8340 = vunpack.c.h.b16 %v8204
        %v8341 = vunpack.c.l.b16 %v8205
        %v8342 = vunpack.c.h.b16 %v8205
        %v8343 = vunpack.c.l.b16 %v8206
        %v8344 = vunpack.c.h.b16 %v8206
        %v8345 = vunpack.c.l.b16 %v8207
        %v8346 = vunpack.c.h.b16 %v8207
        %v8347 = vunpack.c.l.b16 %v8208
        %v8348 = vunpack.c.h.b16 %v8208
        %v8349 = vunpack.c.l.b16 %v8209
        %v8350 = vunpack.c.h.b16 %v8209
        %v8351 = vunpack.c.l.b16 %v8210
        %v8352 = vunpack.c.h.b16 %v8210
        %v8353 = vunpack.c.l.b16 %v8211
        %v8354 = vunpack.c.h.b16 %v8211
        %v8355 = vunpack.c.l.b16 %v8212
        %v8356 = vunpack.c.h.b16 %v8212
        %v8357 = vpack.c.b16 %v8327, %v8325
        %v8358 = vpack.c.b16 %v8328, %v8326
        %v8359 = vpack.c.b16 %v8331, %v8329
        %v8360 = vpack.c.b16 %v8332, %v8330
        %v8361 = vpack.c.b16 %v8335, %v8333
        %v8362 = vpack.c.b16 %v8336, %v8334
        %v8363 = vpack.c.b16 %v8339, %v8337
        %v8364 = vpack.c.b16 %v8340, %v8338
        %v8365 = vpack.c.b16 %v8343, %v8341
        %v8366 = vpack.c.b16 %v8344, %v8342
        %v8367 = vpack.c.b16 %v8347, %v8345
        %v8368 = vpack.c.b16 %v8348, %v8346
        %v8369 = vpack.c.b16 %v8351, %v8349
        %v8370 = vpack.c.b16 %v8352, %v8350
        %v8371 = vpack.c.b16 %v8355, %v8353
        %v8372 = vpack.c.b16 %v8356, %v8354
        %8389 = vmatprep.subr.bf16.mxu0 %v8358
        %8390 = vmatpush1.bf16.msra.mxu0 %v8357
        %8391 = vmatprep.subr.bf16.mxu0 %v8360
        %8392 = vmatpush1.bf16.msra.mxu0 %v8359
        %8393 = vmatprep.subr.bf16.mxu0 %v8362
        %8394 = vmatpush1.bf16.msra.mxu0 %v8361
        %8395 = vmatprep.subr.bf16.mxu0 %v8364
        %8396 = vmatpush1.bf16.msra.mxu0 %v8363
        %8397 = vmatprep.subr.bf16.mxu0 %v8366
        %8398 = vmatpush1.bf16.msra.mxu0 %v8365
        %8399 = vmatprep.subr.bf16.mxu0 %v8368
        %8400 = vmatpush1.bf16.msra.mxu0 %v8367
        %8401 = vmatprep.subr.bf16.mxu0 %v8370
        %8402 = vmatpush1.bf16.msra.mxu0 %v8369
        %8403 = vmatprep.subr.bf16.mxu0 %v8372
        %8404 = vmatpush1.bf16.msra.mxu0 %v8371
        %8405 = vmatprep.subr.bf16.mxu0 0
        %8406 = vmatpush1.bf16.msra.mxu0 0
        %8407 = vmatprep.subr.bf16.mxu0 0
        %8408 = vmatpush1.bf16.msra.mxu0 0
        %8409 = vmatprep.subr.bf16.mxu0 0
        %8410 = vmatpush1.bf16.msra.mxu0 0
        %8411 = vmatprep.subr.bf16.mxu0 0
        %8412 = vmatpush1.bf16.msra.mxu0 0
        %8413 = vmatprep.subr.bf16.mxu0 0
        %8414 = vmatpush1.bf16.msra.mxu0 0
        %8415 = vmatprep.subr.bf16.mxu0 0
        %8416 = vmatpush1.bf16.msra.mxu0 0
        %8417 = vmatprep.subr.bf16.mxu0 0
        %8418 = vmatpush1.bf16.msra.mxu0 0
        %8419 = vmatprep.subr.bf16.mxu0 0
        %8420 = vmatpush1.bf16.msra.mxu0 0
        %8421 = vmatprep.mubr.bf16.mxu0 0
        %8422 = vmatmul.mubr.bf16.gmra.mrb[0].mxu0 %v8277
        %v8423 = vpop.f32.mrb[0].mxu0
        %v8424 = vadd.f32 0.0, %v8423
        %v8425 = vpop.f32.mrb[0].mxu0
        %v8426 = vadd.f32 0.0, %v8425
        %v8427 = vpop.f32.mrb[0].mxu0
        %v8428 = vadd.f32 0.0, %v8427
        %v8429 = vpop.f32.mrb[0].mxu0
        %v8430 = vadd.f32 0.0, %v8429
        %8431 = vmatprep.mubr.bf16.mxu0 0
        %8432 = vmatmul.mubr.bf16.gmra.mrb[0].mxu0 %v8278
        %v8433 = vpop.f32.mrb[0].mxu0
        %v8434 = vadd.f32 0.0, %v8433
        %v8435 = vpop.f32.mrb[0].mxu0
        %v8436 = vadd.f32 0.0, %v8435
        %v8437 = vpop.f32.mrb[0].mxu0
        %v8438 = vadd.f32 0.0, %v8437
        %v8439 = vpop.f32.mrb[0].mxu0
        %v8440 = vadd.f32 0.0, %v8439
        %8441 = vmatprep.mubr.bf16.mxu0 0
        %8442 = vmatmul.mubr.bf16.gmra.mrb[0].mxu0 %v8279
        %v8443 = vpop.f32.mrb[0].mxu0
        %v8444 = vadd.f32 0.0, %v8443
        %v8445 = vpop.f32.mrb[0].mxu0
        %v8446 = vadd.f32 0.0, %v8445
        %v8447 = vpop.f32.mrb[0].mxu0
        %v8448 = vadd.f32 0.0, %v8447
        %v8449 = vpop.f32.mrb[0].mxu0
        %v8450 = vadd.f32 0.0, %v8449
        %8451 = vmatprep.mubr.bf16.mxu0 0
        %8452 = vmatmul.mubr.bf16.gmra.mrb[0].mxu0 %v8280
        %v8453 = vpop.f32.mrb[0].mxu0
        %v8454 = vadd.f32 0.0, %v8453
        %v8455 = vpop.f32.mrb[0].mxu0
        %v8456 = vadd.f32 0.0, %v8455
        %v8457 = vpop.f32.mrb[0].mxu0
        %v8458 = vadd.f32 0.0, %v8457
        %v8459 = vpop.f32.mrb[0].mxu0
        %v8460 = vadd.f32 0.0, %v8459
        %8461 = vmatprep.mubr.bf16.mxu0 0
        %8462 = vmatmul.mubr.bf16.gmra.mrb[0].mxu0 %v8281
        %v8463 = vpop.f32.mrb[0].mxu0
        %v8464 = vadd.f32 0.0, %v8463
        %v8465 = vpop.f32.mrb[0].mxu0
        %v8466 = vadd.f32 0.0, %v8465
        %v8467 = vpop.f32.mrb[0].mxu0
        %v8468 = vadd.f32 0.0, %v8467
        %v8469 = vpop.f32.mrb[0].mxu0
        %v8470 = vadd.f32 0.0, %v8469
        %8471 = vmatprep.mubr.bf16.mxu0 0
        %8472 = vmatmul.mubr.bf16.gmra.mrb[0].mxu0 %v8282
        %v8473 = vpop.f32.mrb[0].mxu0
        %v8474 = vadd.f32 0.0, %v8473
        %v8475 = vpop.f32.mrb[0].mxu0
        %v8476 = vadd.f32 0.0, %v8475
        %v8477 = vpop.f32.mrb[0].mxu0
        %v8478 = vadd.f32 0.0, %v8477
        %v8479 = vpop.f32.mrb[0].mxu0
        %v8480 = vadd.f32 0.0, %v8479
        %8481 = vmatprep.mubr.bf16.mxu0 0
        %8482 = vmatmul.mubr.bf16.gmra.mrb[0].mxu0 %v8283
        %v8483 = vpop.f32.mrb[0].mxu0
        %v8484 = vadd.f32 0.0, %v8483
        %v8485 = vpop.f32.mrb[0].mxu0
        %v8486 = vadd.f32 0.0, %v8485
        %v8487 = vpop.f32.mrb[0].mxu0
        %v8488 = vadd.f32 0.0, %v8487
        %v8489 = vpop.f32.mrb[0].mxu0
        %v8490 = vadd.f32 0.0, %v8489
        %8491 = vmatprep.mubr.bf16.mxu0 0
        %8492 = vmatmul.mubr.bf16.gmra.mrb[0].mxu0 %v8284
        %v8493 = vpop.f32.mrb[0].mxu0
        %v8494 = vadd.f32 0.0, %v8493
        %v8495 = vpop.f32.mrb[0].mxu0
        %v8496 = vadd.f32 0.0, %v8495
        %v8497 = vpop.f32.mrb[0].mxu0
        %v8498 = vadd.f32 0.0, %v8497
        %v8499 = vpop.f32.mrb[0].mxu0
        %v8500 = vadd.f32 0.0, %v8499
        %8501 = vmatprep.mubr.bf16.mxu0 0
        %8502 = vmatmul.mubr.bf16.gmra.mrb[0].mxu0 %v8285
        %v8503 = vpop.f32.mrb[0].mxu0
        %v8504 = vadd.f32 0.0, %v8503
        %v8505 = vpop.f32.mrb[0].mxu0
        %v8506 = vadd.f32 0.0, %v8505
        %v8507 = vpop.f32.mrb[0].mxu0
        %v8508 = vadd.f32 0.0, %v8507
        %v8509 = vpop.f32.mrb[0].mxu0
        %v8510 = vadd.f32 0.0, %v8509
        %8511 = vmatprep.mubr.bf16.mxu0 0
        %8512 = vmatmul.mubr.bf16.gmra.mrb[0].mxu0 %v8286
        %v8513 = vpop.f32.mrb[0].mxu0
        %v8514 = vadd.f32 0.0, %v8513
        %v8515 = vpop.f32.mrb[0].mxu0
        %v8516 = vadd.f32 0.0, %v8515
        %v8517 = vpop.f32.mrb[0].mxu0
        %v8518 = vadd.f32 0.0, %v8517
        %v8519 = vpop.f32.mrb[0].mxu0
        %v8520 = vadd.f32 0.0, %v8519
        %8521 = vmatprep.mubr.bf16.mxu0 0
        %8522 = vmatmul.mubr.bf16.gmra.mrb[0].mxu0 %v8287
        %v8523 = vpop.f32.mrb[0].mxu0
        %v8524 = vadd.f32 0.0, %v8523
        %v8525 = vpop.f32.mrb[0].mxu0
        %v8526 = vadd.f32 0.0, %v8525
        %v8527 = vpop.f32.mrb[0].mxu0
        %v8528 = vadd.f32 0.0, %v8527
        %v8529 = vpop.f32.mrb[0].mxu0
        %v8530 = vadd.f32 0.0, %v8529
        %8531 = vmatprep.mubr.bf16.mxu0 0
        %8532 = vmatmul.mubr.bf16.gmra.mrb[0].mxu0 %v8288
        %v8533 = vpop.f32.mrb[0].mxu0
        %v8534 = vadd.f32 0.0, %v8533
        %v8535 = vpop.f32.mrb[0].mxu0
        %v8536 = vadd.f32 0.0, %v8535
        %v8537 = vpop.f32.mrb[0].mxu0
        %v8538 = vadd.f32 0.0, %v8537
        %v8539 = vpop.f32.mrb[0].mxu0
        %v8540 = vadd.f32 0.0, %v8539
        %8541 = vmatprep.mubr.bf16.mxu0 0
        %8542 = vmatmul.mubr.bf16.gmra.mrb[0].mxu0 %v8289
        %v8543 = vpop.f32.mrb[0].mxu0
        %v8544 = vadd.f32 0.0, %v8543
        %v8545 = vpop.f32.mrb[0].mxu0
        %v8546 = vadd.f32 0.0, %v8545
        %v8547 = vpop.f32.mrb[0].mxu0
        %v8548 = vadd.f32 0.0, %v8547
        %v8549 = vpop.f32.mrb[0].mxu0
        %v8550 = vadd.f32 0.0, %v8549
        %8551 = vmatprep.mubr.bf16.mxu0 0
        %8552 = vmatmul.mubr.bf16.gmra.mrb[0].mxu0 %v8290
        %v8553 = vpop.f32.mrb[0].mxu0
        %v8554 = vadd.f32 0.0, %v8553
        %v8555 = vpop.f32.mrb[0].mxu0
        %v8556 = vadd.f32 0.0, %v8555
        %v8557 = vpop.f32.mrb[0].mxu0
        %v8558 = vadd.f32 0.0, %v8557
        %v8559 = vpop.f32.mrb[0].mxu0
        %v8560 = vadd.f32 0.0, %v8559
        %8561 = vmatprep.mubr.bf16.mxu0 0
        %8562 = vmatmul.mubr.bf16.gmra.mrb[0].mxu0 %v8291
        %v8563 = vpop.f32.mrb[0].mxu0
        %v8564 = vadd.f32 0.0, %v8563
        %v8565 = vpop.f32.mrb[0].mxu0
        %v8566 = vadd.f32 0.0, %v8565
        %v8567 = vpop.f32.mrb[0].mxu0
        %v8568 = vadd.f32 0.0, %v8567
        %v8569 = vpop.f32.mrb[0].mxu0
        %v8570 = vadd.f32 0.0, %v8569
        %8571 = vmatprep.mubr.bf16.mxu0 0
        %8572 = vmatmul.mubr.bf16.gmra.mrb[0].mxu0 %v8292
        %v8573 = vpop.f32.mrb[0].mxu0
        %v8574 = vadd.f32 0.0, %v8573
        %v8575 = vpop.f32.mrb[0].mxu0
        %v8576 = vadd.f32 0.0, %v8575
        %v8577 = vpop.f32.mrb[0].mxu0
        %v8578 = vadd.f32 0.0, %v8577
        %v8579 = vpop.f32.mrb[0].mxu0
        %v8580 = vadd.f32 0.0, %v8579
        %8581 = vdwg.mxu0
        %v8582 = vadd.f32 %v8099, %v8424
        %v8583 = vadd.f32 %v8100, %v8426
        %v8584 = vadd.f32 %v8101, %v8428
        %v8585 = vadd.f32 %v8102, %v8430
        %v8586 = vadd.f32 %v8103, %v8434
        %v8587 = vadd.f32 %v8104, %v8436
        %v8588 = vadd.f32 %v8105, %v8438
        %v8589 = vadd.f32 %v8106, %v8440
        %v8590 = vadd.f32 %v8107, %v8444
        %v8591 = vadd.f32 %v8108, %v8446
        %v8592 = vadd.f32 %v8109, %v8448
        %v8593 = vadd.f32 %v8110, %v8450
        %v8594 = vadd.f32 %v8111, %v8454
        %v8595 = vadd.f32 %v8112, %v8456
        %v8596 = vadd.f32 %v8113, %v8458
        %v8597 = vadd.f32 %v8114, %v8460
        %v8598 = vadd.f32 %v8115, %v8464
        %v8599 = vadd.f32 %v8116, %v8466
        %v8600 = vadd.f32 %v8117, %v8468
        %v8601 = vadd.f32 %v8118, %v8470
        %v8602 = vadd.f32 %v8119, %v8474
        %v8603 = vadd.f32 %v8120, %v8476
        %v8604 = vadd.f32 %v8121, %v8478
        %v8605 = vadd.f32 %v8122, %v8480
        %v8606 = vadd.f32 %v8123, %v8484
        %v8607 = vadd.f32 %v8124, %v8486
        %v8608 = vadd.f32 %v8125, %v8488
        %v8609 = vadd.f32 %v8126, %v8490
        %v8610 = vadd.f32 %v8127, %v8494
        %v8611 = vadd.f32 %v8128, %v8496
        %v8612 = vadd.f32 %v8129, %v8498
        %v8613 = vadd.f32 %v8130, %v8500
        %v8614 = vadd.f32 %v8131, %v8504
        %v8615 = vadd.f32 %v8132, %v8506
        %v8616 = vadd.f32 %v8133, %v8508
        %v8617 = vadd.f32 %v8134, %v8510
        %v8618 = vadd.f32 %v8135, %v8514
        %v8619 = vadd.f32 %v8136, %v8516
        %v8620 = vadd.f32 %v8137, %v8518
        %v8621 = vadd.f32 %v8138, %v8520
        %v8622 = vadd.f32 %v8139, %v8524
        %v8623 = vadd.f32 %v8140, %v8526
        %v8624 = vadd.f32 %v8141, %v8528
        %v8625 = vadd.f32 %v8142, %v8530
        %v8626 = vadd.f32 %v8143, %v8534
        %v8627 = vadd.f32 %v8144, %v8536
        %v8628 = vadd.f32 %v8145, %v8538
        %v8629 = vadd.f32 %v8146, %v8540
        %v8630 = vadd.f32 %v8147, %v8544
        %v8631 = vadd.f32 %v8148, %v8546
        %v8632 = vadd.f32 %v8149, %v8548
        %v8633 = vadd.f32 %v8150, %v8550
        %v8634 = vadd.f32 %v8151, %v8554
        %v8635 = vadd.f32 %v8152, %v8556
        %v8636 = vadd.f32 %v8153, %v8558
        %v8637 = vadd.f32 %v8154, %v8560
        %v8638 = vadd.f32 %v8155, %v8564
        %v8639 = vadd.f32 %v8156, %v8566
        %v8640 = vadd.f32 %v8157, %v8568
        %v8641 = vadd.f32 %v8158, %v8570
        %v8642 = vadd.f32 %v8159, %v8574
        %v8643 = vadd.f32 %v8160, %v8576
        %v8644 = vadd.f32 %v8161, %v8578
        %v8645 = vadd.f32 %v8162, %v8580
        %v8646 = vld [vmem:[%s8163] sm:$0xf]
        %v8647 = vld [vmem:[%s8163 + $0x4] sm:$0xf]
        %v8648 = vld [vmem:[%s8163 + $0x8] sm:$0x1]
        %v8649 = vld [vmem:[%s8163 + $0xc] sm:$0xf]
        %v8650 = vld [vmem:[%s8163 + $0x10] sm:$0xf]
        %v8651 = vld [vmem:[%s8163 + $0x14] sm:$0x1]
        %v8652 = vld [vmem:[%s8163 + $0x18] sm:$0xf]
        %v8653 = vld [vmem:[%s8163 + $0x1c] sm:$0xf]
        %v8654 = vld [vmem:[%s8163 + $0x20] sm:$0x1]
        %v8655 = vld [vmem:[%s8163 + $0x24] sm:$0xf]
        %v8656 = vld [vmem:[%s8163 + $0x28] sm:$0xf]
        %v8657 = vld [vmem:[%s8163 + $0x2c] sm:$0x1]
        %v8658 = vld [vmem:[%s8163 + $0x30] sm:$0xf]
        %v8659 = vld [vmem:[%s8163 + $0x34] sm:$0xf]
        %v8660 = vld [vmem:[%s8163 + $0x38] sm:$0x1]
        %v8661 = vld [vmem:[%s8163 + $0x3c] sm:$0xf]
        %v8662 = vld [vmem:[%s8163 + $0x40] sm:$0xf]
        %v8663 = vld [vmem:[%s8163 + $0x44] sm:$0x1]
        %v8664 = vld [vmem:[%s8163 + $0x48] sm:$0xf]
        %v8665 = vld [vmem:[%s8163 + $0x4c] sm:$0xf]
        %v8666 = vld [vmem:[%s8163 + $0x50] sm:$0x1]
        %v8667 = vld [vmem:[%s8163 + $0x54] sm:$0xf]
        %v8668 = vld [vmem:[%s8163 + $0x58] sm:$0xf]
        %v8669 = vld [vmem:[%s8163 + $0x5c] sm:$0x1]
        %v8670 = vld [vmem:[%s8163 + $0x60] sm:$0xf]
        %v8671 = vld [vmem:[%s8163 + $0x64] sm:$0xf]
        %v8672 = vld [vmem:[%s8163 + $0x68] sm:$0x1]
        %v8673 = vld [vmem:[%s8163 + $0x6c] sm:$0xf]
        %v8674 = vld [vmem:[%s8163 + $0x70] sm:$0xf]
        %v8675 = vld [vmem:[%s8163 + $0x74] sm:$0x1]
        %v8676 = vld [vmem:[%s8163 + $0x78] sm:$0xf]
        %v8677 = vld [vmem:[%s8163 + $0x7c] sm:$0xf]
        %v8678 = vld [vmem:[%s8163 + $0x80] sm:$0x1]
        %v8679 = vld [vmem:[%s8163 + $0x84] sm:$0xf]
        %v8680 = vld [vmem:[%s8163 + $0x88] sm:$0xf]
        %v8681 = vld [vmem:[%s8163 + $0x8c] sm:$0x1]
        %v8682 = vld [vmem:[%s8163 + $0x90] sm:$0xf]
        %v8683 = vld [vmem:[%s8163 + $0x94] sm:$0xf]
        %v8684 = vld [vmem:[%s8163 + $0x98] sm:$0x1]
        %v8685 = vld [vmem:[%s8163 + $0x9c] sm:$0xf]
        %v8686 = vld [vmem:[%s8163 + $0xa0] sm:$0xf]
        %v8687 = vld [vmem:[%s8163 + $0xa4] sm:$0x1]
        %v8688 = vld [vmem:[%s8163 + $0xa8] sm:$0xf]
        %v8689 = vld [vmem:[%s8163 + $0xac] sm:$0xf]
        %v8690 = vld [vmem:[%s8163 + $0xb0] sm:$0x1]
        %v8691 = vld [vmem:[%s8163 + $0xb4] sm:$0xf]
        %v8692 = vld [vmem:[%s8163 + $0xb8] sm:$0xf]
        %v8693 = vld [vmem:[%s8163 + $0xbc] sm:$0x1]
        %v8695 = vshrl.u32 %v8646, 16
        %v8697 = vrot.slane %v8695, 4
        %v8698 = vshll.u32 %v8646, 16
        %v8700 = vrot.slane %v8698, 5
        %v8701 = vor.u32 %v8697, %v8700
        %v8702 = vrot.slane %v8701, 4
        %v8704 = vshll.u32 %v8647, 16
        %v8706 = vrot.slane %v8704, 5
        %v8707 = vsel %vm6474, %v8702, %v8706
        %v8708 = vshrl.u32 %v8647, 16
        %v8710 = vrot.slane %v8708, 4
        %v8711 = vor.u32 %v8710, %v8706
        %v8712 = vrot.slane %v8711, 4
        %v8714 = vshll.u32 %v8648, 16
        %v8716 = vrot.slane %v8714, 5
        %v8717 = vsel %vm6474, %v8712, %v8716
        %v8719 = vshrl.u32 %v8649, 16
        %v8721 = vrot.slane %v8719, 4
        %v8722 = vshll.u32 %v8649, 16
        %v8724 = vrot.slane %v8722, 5
        %v8725 = vor.u32 %v8721, %v8724
        %v8726 = vrot.slane %v8725, 4
        %v8728 = vshll.u32 %v8650, 16
        %v8730 = vrot.slane %v8728, 5
        %v8731 = vsel %vm6474, %v8726, %v8730
        %v8732 = vshrl.u32 %v8650, 16
        %v8734 = vrot.slane %v8732, 4
        %v8735 = vor.u32 %v8734, %v8730
        %v8736 = vrot.slane %v8735, 4
        %v8738 = vshll.u32 %v8651, 16
        %v8740 = vrot.slane %v8738, 5
        %v8741 = vsel %vm6474, %v8736, %v8740
        %v8743 = vshrl.u32 %v8652, 16
        %v8745 = vrot.slane %v8743, 4
        %v8746 = vshll.u32 %v8652, 16
        %v8748 = vrot.slane %v8746, 5
        %v8749 = vor.u32 %v8745, %v8748
        %v8750 = vrot.slane %v8749, 4
        %v8752 = vshll.u32 %v8653, 16
        %v8754 = vrot.slane %v8752, 5
        %v8755 = vsel %vm6474, %v8750, %v8754
        %v8756 = vshrl.u32 %v8653, 16
        %v8758 = vrot.slane %v8756, 4
        %v8759 = vor.u32 %v8758, %v8754
        %v8760 = vrot.slane %v8759, 4
        %v8762 = vshll.u32 %v8654, 16
        %v8764 = vrot.slane %v8762, 5
        %v8765 = vsel %vm6474, %v8760, %v8764
        %v8767 = vshrl.u32 %v8655, 16
        %v8769 = vrot.slane %v8767, 4
        %v8770 = vshll.u32 %v8655, 16
        %v8772 = vrot.slane %v8770, 5
        %v8773 = vor.u32 %v8769, %v8772
        %v8774 = vrot.slane %v8773, 4
        %v8776 = vshll.u32 %v8656, 16
        %v8778 = vrot.slane %v8776, 5
        %v8779 = vsel %vm6474, %v8774, %v8778
        %v8780 = vshrl.u32 %v8656, 16
        %v8782 = vrot.slane %v8780, 4
        %v8783 = vor.u32 %v8782, %v8778
        %v8784 = vrot.slane %v8783, 4
        %v8786 = vshll.u32 %v8657, 16
        %v8788 = vrot.slane %v8786, 5
        %v8789 = vsel %vm6474, %v8784, %v8788
        %v8791 = vshrl.u32 %v8658, 16
        %v8793 = vrot.slane %v8791, 4
        %v8794 = vshll.u32 %v8658, 16
        %v8796 = vrot.slane %v8794, 5
        %v8797 = vor.u32 %v8793, %v8796
        %v8798 = vrot.slane %v8797, 4
        %v8800 = vshll.u32 %v8659, 16
        %v8802 = vrot.slane %v8800, 5
        %v8803 = vsel %vm6474, %v8798, %v8802
        %v8804 = vshrl.u32 %v8659, 16
        %v8806 = vrot.slane %v8804, 4
        %v8807 = vor.u32 %v8806, %v8802
        %v8808 = vrot.slane %v8807, 4
        %v8810 = vshll.u32 %v8660, 16
        %v8812 = vrot.slane %v8810, 5
        %v8813 = vsel %vm6474, %v8808, %v8812
        %v8815 = vshrl.u32 %v8661, 16
        %v8817 = vrot.slane %v8815, 4
        %v8818 = vshll.u32 %v8661, 16
        %v8820 = vrot.slane %v8818, 5
        %v8821 = vor.u32 %v8817, %v8820
        %v8822 = vrot.slane %v8821, 4
        %v8824 = vshll.u32 %v8662, 16
        %v8826 = vrot.slane %v8824, 5
        %v8827 = vsel %vm6474, %v8822, %v8826
        %v8828 = vshrl.u32 %v8662, 16
        %v8830 = vrot.slane %v8828, 4
        %v8831 = vor.u32 %v8830, %v8826
        %v8832 = vrot.slane %v8831, 4
        %v8834 = vshll.u32 %v8663, 16
        %v8836 = vrot.slane %v8834, 5
        %v8837 = vsel %vm6474, %v8832, %v8836
        %v8839 = vshrl.u32 %v8664, 16
        %v8841 = vrot.slane %v8839, 4
        %v8842 = vshll.u32 %v8664, 16
        %v8844 = vrot.slane %v8842, 5
        %v8845 = vor.u32 %v8841, %v8844
        %v8846 = vrot.slane %v8845, 4
        %v8848 = vshll.u32 %v8665, 16
        %v8850 = vrot.slane %v8848, 5
        %v8851 = vsel %vm6474, %v8846, %v8850
        %v8852 = vshrl.u32 %v8665, 16
        %v8854 = vrot.slane %v8852, 4
        %v8855 = vor.u32 %v8854, %v8850
        %v8856 = vrot.slane %v8855, 4
        %v8858 = vshll.u32 %v8666, 16
        %v8860 = vrot.slane %v8858, 5
        %v8861 = vsel %vm6474, %v8856, %v8860
        %v8863 = vshrl.u32 %v8667, 16
        %v8865 = vrot.slane %v8863, 4
        %v8866 = vshll.u32 %v8667, 16
        %v8868 = vrot.slane %v8866, 5
        %v8869 = vor.u32 %v8865, %v8868
        %v8870 = vrot.slane %v8869, 4
        %v8872 = vshll.u32 %v8668, 16
        %v8874 = vrot.slane %v8872, 5
        %v8875 = vsel %vm6474, %v8870, %v8874
        %v8876 = vshrl.u32 %v8668, 16
        %v8878 = vrot.slane %v8876, 4
        %v8879 = vor.u32 %v8878, %v8874
        %v8880 = vrot.slane %v8879, 4
        %v8882 = vshll.u32 %v8669, 16
        %v8884 = vrot.slane %v8882, 5
        %v8885 = vsel %vm6474, %v8880, %v8884
        %v8887 = vshrl.u32 %v8670, 16
        %v8889 = vrot.slane %v8887, 4
        %v8890 = vshll.u32 %v8670, 16
        %v8892 = vrot.slane %v8890, 5
        %v8893 = vor.u32 %v8889, %v8892
        %v8894 = vrot.slane %v8893, 4
        %v8896 = vshll.u32 %v8671, 16
        %v8898 = vrot.slane %v8896, 5
        %v8899 = vsel %vm6474, %v8894, %v8898
        %v8900 = vshrl.u32 %v8671, 16
        %v8902 = vrot.slane %v8900, 4
        %v8903 = vor.u32 %v8902, %v8898
        %v8904 = vrot.slane %v8903, 4
        %v8906 = vshll.u32 %v8672, 16
        %v8908 = vrot.slane %v8906, 5
        %v8909 = vsel %vm6474, %v8904, %v8908
        %v8911 = vshrl.u32 %v8673, 16
        %v8913 = vrot.slane %v8911, 4
        %v8914 = vshll.u32 %v8673, 16
        %v8916 = vrot.slane %v8914, 5
        %v8917 = vor.u32 %v8913, %v8916
        %v8918 = vrot.slane %v8917, 4
        %v8920 = vshll.u32 %v8674, 16
        %v8922 = vrot.slane %v8920, 5
        %v8923 = vsel %vm6474, %v8918, %v8922
        %v8924 = vshrl.u32 %v8674, 16
        %v8926 = vrot.slane %v8924, 4
        %v8927 = vor.u32 %v8926, %v8922
        %v8928 = vrot.slane %v8927, 4
        %v8930 = vshll.u32 %v8675, 16
        %v8932 = vrot.slane %v8930, 5
        %v8933 = vsel %vm6474, %v8928, %v8932
        %v8935 = vshrl.u32 %v8676, 16
        %v8937 = vrot.slane %v8935, 4
        %v8938 = vshll.u32 %v8676, 16
        %v8940 = vrot.slane %v8938, 5
        %v8941 = vor.u32 %v8937, %v8940
        %v8942 = vrot.slane %v8941, 4
        %v8944 = vshll.u32 %v8677, 16
        %v8946 = vrot.slane %v8944, 5
        %v8947 = vsel %vm6474, %v8942, %v8946
        %v8948 = vshrl.u32 %v8677, 16
        %v8950 = vrot.slane %v8948, 4
        %v8951 = vor.u32 %v8950, %v8946
        %v8952 = vrot.slane %v8951, 4
        %v8954 = vshll.u32 %v8678, 16
        %v8956 = vrot.slane %v8954, 5
        %v8957 = vsel %vm6474, %v8952, %v8956
        %v8959 = vshrl.u32 %v8679, 16
        %v8961 = vrot.slane %v8959, 4
        %v8962 = vshll.u32 %v8679, 16
        %v8964 = vrot.slane %v8962, 5
        %v8965 = vor.u32 %v8961, %v8964
        %v8966 = vrot.slane %v8965, 4
        %v8968 = vshll.u32 %v8680, 16
        %v8970 = vrot.slane %v8968, 5
        %v8971 = vsel %vm6474, %v8966, %v8970
        %v8972 = vshrl.u32 %v8680, 16
        %v8974 = vrot.slane %v8972, 4
        %v8975 = vor.u32 %v8974, %v8970
        %v8976 = vrot.slane %v8975, 4
        %v8978 = vshll.u32 %v8681, 16
        %v8980 = vrot.slane %v8978, 5
        %v8981 = vsel %vm6474, %v8976, %v8980
        %v8983 = vshrl.u32 %v8682, 16
        %v8985 = vrot.slane %v8983, 4
        %v8986 = vshll.u32 %v8682, 16
        %v8988 = vrot.slane %v8986, 5
        %v8989 = vor.u32 %v8985, %v8988
        %v8990 = vrot.slane %v8989, 4
        %v8992 = vshll.u32 %v8683, 16
        %v8994 = vrot.slane %v8992, 5
        %v8995 = vsel %vm6474, %v8990, %v8994
        %v8996 = vshrl.u32 %v8683, 16
        %v8998 = vrot.slane %v8996, 4
        %v8999 = vor.u32 %v8998, %v8994
        %v9000 = vrot.slane %v8999, 4
        %v9002 = vshll.u32 %v8684, 16
        %v9004 = vrot.slane %v9002, 5
        %v9005 = vsel %vm6474, %v9000, %v9004
        %v9007 = vshrl.u32 %v8685, 16
        %v9009 = vrot.slane %v9007, 4
        %v9010 = vshll.u32 %v8685, 16
        %v9012 = vrot.slane %v9010, 5
        %v9013 = vor.u32 %v9009, %v9012
        %v9014 = vrot.slane %v9013, 4
        %v9016 = vshll.u32 %v8686, 16
        %v9018 = vrot.slane %v9016, 5
        %v9019 = vsel %vm6474, %v9014, %v9018
        %v9020 = vshrl.u32 %v8686, 16
        %v9022 = vrot.slane %v9020, 4
        %v9023 = vor.u32 %v9022, %v9018
        %v9024 = vrot.slane %v9023, 4
        %v9026 = vshll.u32 %v8687, 16
        %v9028 = vrot.slane %v9026, 5
        %v9029 = vsel %vm6474, %v9024, %v9028
        %v9031 = vshrl.u32 %v8688, 16
        %v9033 = vrot.slane %v9031, 4
        %v9034 = vshll.u32 %v8688, 16
        %v9036 = vrot.slane %v9034, 5
        %v9037 = vor.u32 %v9033, %v9036
        %v9038 = vrot.slane %v9037, 4
        %v9040 = vshll.u32 %v8689, 16
        %v9042 = vrot.slane %v9040, 5
        %v9043 = vsel %vm6474, %v9038, %v9042
        %v9044 = vshrl.u32 %v8689, 16
        %v9046 = vrot.slane %v9044, 4
        %v9047 = vor.u32 %v9046, %v9042
        %v9048 = vrot.slane %v9047, 4
        %v9050 = vshll.u32 %v8690, 16
        %v9052 = vrot.slane %v9050, 5
        %v9053 = vsel %vm6474, %v9048, %v9052
        %v9055 = vshrl.u32 %v8691, 16
        %v9057 = vrot.slane %v9055, 4
        %v9058 = vshll.u32 %v8691, 16
        %v9060 = vrot.slane %v9058, 5
        %v9061 = vor.u32 %v9057, %v9060
        %v9062 = vrot.slane %v9061, 4
        %v9064 = vshll.u32 %v8692, 16
        %v9066 = vrot.slane %v9064, 5
        %v9067 = vsel %vm6474, %v9062, %v9066
        %v9068 = vshrl.u32 %v8692, 16
        %v9070 = vrot.slane %v9068, 4
        %v9071 = vor.u32 %v9070, %v9066
        %v9072 = vrot.slane %v9071, 4
        %v9074 = vshll.u32 %v8693, 16
        %v9076 = vrot.slane %v9074, 5
        %v9077 = vsel %vm6474, %v9072, %v9076
        %s9078 = scalar_lea.vmem [#allocation9], 512
        %v9079 = vld [vmem:[%s9078] sm:$0xff]
        %v9080 = vld [vmem:[%s9078 + $0x8] sm:$0xff]
        %v9081 = vld [vmem:[%s9078 + $0x10] sm:$0xff]
        %v9082 = vld [vmem:[%s9078 + $0x18] sm:$0xff]
        %v9083 = vld [vmem:[%s9078 + $0x20] sm:$0xff]
        %v9084 = vld [vmem:[%s9078 + $0x28] sm:$0xff]
        %v9085 = vld [vmem:[%s9078 + $0x30] sm:$0xff]
        %v9086 = vld [vmem:[%s9078 + $0x38] sm:$0xff]
        %v9087 = vld [vmem:[%s9078 + $0x40] sm:$0xff]
        %v9088 = vld [vmem:[%s9078 + $0x48] sm:$0xff]
        %v9089 = vld [vmem:[%s9078 + $0x50] sm:$0xff]
        %v9090 = vld [vmem:[%s9078 + $0x58] sm:$0xff]
        %v9091 = vld [vmem:[%s9078 + $0x60] sm:$0xff]
        %v9092 = vld [vmem:[%s9078 + $0x68] sm:$0xff]
        %v9093 = vld [vmem:[%s9078 + $0x70] sm:$0xff]
        %v9094 = vld [vmem:[%s9078 + $0x78] sm:$0xff]
        %v9095 = vunpack.c.l.b16 %v8707
        %v9096 = vunpack.c.l.b16 %v8717
        %v9097 = vunpack.c.l.b16 %v8731
        %v9098 = vunpack.c.l.b16 %v8741
        %v9099 = vunpack.c.l.b16 %v8755
        %v9100 = vunpack.c.l.b16 %v8765
        %v9101 = vunpack.c.l.b16 %v8779
        %v9102 = vunpack.c.l.b16 %v8789
        %v9103 = vunpack.c.l.b16 %v8803
        %v9104 = vunpack.c.l.b16 %v8813
        %v9105 = vunpack.c.l.b16 %v8827
        %v9106 = vunpack.c.l.b16 %v8837
        %v9107 = vunpack.c.l.b16 %v8851
        %v9108 = vunpack.c.l.b16 %v8861
        %v9109 = vunpack.c.l.b16 %v8875
        %v9110 = vunpack.c.l.b16 %v8885
        %v9111 = vunpack.c.l.b16 %v8899
        %v9112 = vunpack.c.l.b16 %v8909
        %v9113 = vunpack.c.l.b16 %v8923
        %v9114 = vunpack.c.l.b16 %v8933
        %v9115 = vunpack.c.l.b16 %v8947
        %v9116 = vunpack.c.l.b16 %v8957
        %v9117 = vunpack.c.l.b16 %v8971
        %v9118 = vunpack.c.l.b16 %v8981
        %v9119 = vunpack.c.l.b16 %v8995
        %v9120 = vunpack.c.l.b16 %v9005
        %v9121 = vunpack.c.l.b16 %v9019
        %v9122 = vunpack.c.l.b16 %v9029
        %v9123 = vunpack.c.l.b16 %v9043
        %v9124 = vunpack.c.l.b16 %v9053
        %v9125 = vunpack.c.l.b16 %v9067
        %v9126 = vunpack.c.l.b16 %v9077
        %v9127 = vpack.c.b16 %v9096, %v9095
        %v9128 = vpack.c.b16 %v9098, %v9097
        %v9129 = vpack.c.b16 %v9100, %v9099
        %v9130 = vpack.c.b16 %v9102, %v9101
        %v9131 = vpack.c.b16 %v9104, %v9103
        %v9132 = vpack.c.b16 %v9106, %v9105
        %v9133 = vpack.c.b16 %v9108, %v9107
        %v9134 = vpack.c.b16 %v9110, %v9109
        %v9135 = vpack.c.b16 %v9112, %v9111
        %v9136 = vpack.c.b16 %v9114, %v9113
        %v9137 = vpack.c.b16 %v9116, %v9115
        %v9138 = vpack.c.b16 %v9118, %v9117
        %v9139 = vpack.c.b16 %v9120, %v9119
        %v9140 = vpack.c.b16 %v9122, %v9121
        %v9141 = vpack.c.b16 %v9124, %v9123
        %v9142 = vpack.c.b16 %v9126, %v9125
        %v9175 = vunpack.c.l.b16 %v9079
        %v9176 = vunpack.c.h.b16 %v9079
        %v9177 = vunpack.c.l.b16 %v9080
        %v9178 = vunpack.c.h.b16 %v9080
        %v9179 = vunpack.c.l.b16 %v9081
        %v9180 = vunpack.c.h.b16 %v9081
        %v9181 = vunpack.c.l.b16 %v9082
        %v9182 = vunpack.c.h.b16 %v9082
        %v9183 = vunpack.c.l.b16 %v9083
        %v9184 = vunpack.c.h.b16 %v9083
        %v9185 = vunpack.c.l.b16 %v9084
        %v9186 = vunpack.c.h.b16 %v9084
        %v9187 = vunpack.c.l.b16 %v9085
        %v9188 = vunpack.c.h.b16 %v9085
        %v9189 = vunpack.c.l.b16 %v9086
        %v9190 = vunpack.c.h.b16 %v9086
        %v9191 = vunpack.c.l.b16 %v9087
        %v9192 = vunpack.c.h.b16 %v9087
        %v9193 = vunpack.c.l.b16 %v9088
        %v9194 = vunpack.c.h.b16 %v9088
        %v9195 = vunpack.c.l.b16 %v9089
        %v9196 = vunpack.c.h.b16 %v9089
        %v9197 = vunpack.c.l.b16 %v9090
        %v9198 = vunpack.c.h.b16 %v9090
        %v9199 = vunpack.c.l.b16 %v9091
        %v9200 = vunpack.c.h.b16 %v9091
        %v9201 = vunpack.c.l.b16 %v9092
        %v9202 = vunpack.c.h.b16 %v9092
        %v9203 = vunpack.c.l.b16 %v9093
        %v9204 = vunpack.c.h.b16 %v9093
        %v9205 = vunpack.c.l.b16 %v9094
        %v9206 = vunpack.c.h.b16 %v9094
        %v9207 = vpack.c.b16 %v9177, %v9175
        %v9208 = vpack.c.b16 %v9178, %v9176
        %v9209 = vpack.c.b16 %v9181, %v9179
        %v9210 = vpack.c.b16 %v9182, %v9180
        %v9211 = vpack.c.b16 %v9185, %v9183
        %v9212 = vpack.c.b16 %v9186, %v9184
        %v9213 = vpack.c.b16 %v9189, %v9187
        %v9214 = vpack.c.b16 %v9190, %v9188
        %v9215 = vpack.c.b16 %v9193, %v9191
        %v9216 = vpack.c.b16 %v9194, %v9192
        %v9217 = vpack.c.b16 %v9197, %v9195
        %v9218 = vpack.c.b16 %v9198, %v9196
        %v9219 = vpack.c.b16 %v9201, %v9199
        %v9220 = vpack.c.b16 %v9202, %v9200
        %v9221 = vpack.c.b16 %v9205, %v9203
        %v9222 = vpack.c.b16 %v9206, %v9204
        %9239 = vmatprep.subr.bf16.mxu0 %v9208
        %9240 = vmatpush1.bf16.msra.mxu0 %v9207
        %9241 = vmatprep.subr.bf16.mxu0 %v9210
        %9242 = vmatpush1.bf16.msra.mxu0 %v9209
        %9243 = vmatprep.subr.bf16.mxu0 %v9212
        %9244 = vmatpush1.bf16.msra.mxu0 %v9211
        %9245 = vmatprep.subr.bf16.mxu0 %v9214
        %9246 = vmatpush1.bf16.msra.mxu0 %v9213
        %9247 = vmatprep.subr.bf16.mxu0 %v9216
        %9248 = vmatpush1.bf16.msra.mxu0 %v9215
        %9249 = vmatprep.subr.bf16.mxu0 %v9218
        %9250 = vmatpush1.bf16.msra.mxu0 %v9217
        %9251 = vmatprep.subr.bf16.mxu0 %v9220
        %9252 = vmatpush1.bf16.msra.mxu0 %v9219
        %9253 = vmatprep.subr.bf16.mxu0 %v9222
        %9254 = vmatpush1.bf16.msra.mxu0 %v9221
        %9255 = vmatprep.subr.bf16.mxu0 0
        %9256 = vmatpush1.bf16.msra.mxu0 0
        %9257 = vmatprep.subr.bf16.mxu0 0
        %9258 = vmatpush1.bf16.msra.mxu0 0
        %9259 = vmatprep.subr.bf16.mxu0 0
        %9260 = vmatpush1.bf16.msra.mxu0 0
        %9261 = vmatprep.subr.bf16.mxu0 0
        %9262 = vmatpush1.bf16.msra.mxu0 0
        %9263 = vmatprep.subr.bf16.mxu0 0
        %9264 = vmatpush1.bf16.msra.mxu0 0
        %9265 = vmatprep.subr.bf16.mxu0 0
        %9266 = vmatpush1.bf16.msra.mxu0 0
        %9267 = vmatprep.subr.bf16.mxu0 0
        %9268 = vmatpush1.bf16.msra.mxu0 0
        %9269 = vmatprep.subr.bf16.mxu0 0
        %9270 = vmatpush1.bf16.msra.mxu0 0
        %9271 = vmatprep.mubr.bf16.mxu0 0
        %9272 = vmatmul.mubr.bf16.gmra.mrb[0].mxu0 %v9127
        %v9273 = vpop.f32.mrb[0].mxu0
        %v9274 = vadd.f32 0.0, %v9273
        %v9275 = vpop.f32.mrb[0].mxu0
        %v9276 = vadd.f32 0.0, %v9275
        %v9277 = vpop.f32.mrb[0].mxu0
        %v9278 = vadd.f32 0.0, %v9277
        %v9279 = vpop.f32.mrb[0].mxu0
        %v9280 = vadd.f32 0.0, %v9279
        %9281 = vmatprep.mubr.bf16.mxu0 0
        %9282 = vmatmul.mubr.bf16.gmra.mrb[0].mxu0 %v9128
        %v9283 = vpop.f32.mrb[0].mxu0
        %v9284 = vadd.f32 0.0, %v9283
        %v9285 = vpop.f32.mrb[0].mxu0
        %v9286 = vadd.f32 0.0, %v9285
        %v9287 = vpop.f32.mrb[0].mxu0
        %v9288 = vadd.f32 0.0, %v9287
        %v9289 = vpop.f32.mrb[0].mxu0
        %v9290 = vadd.f32 0.0, %v9289
        %9291 = vmatprep.mubr.bf16.mxu0 0
        %9292 = vmatmul.mubr.bf16.gmra.mrb[0].mxu0 %v9129
        %v9293 = vpop.f32.mrb[0].mxu0
        %v9294 = vadd.f32 0.0, %v9293
        %v9295 = vpop.f32.mrb[0].mxu0
        %v9296 = vadd.f32 0.0, %v9295
        %v9297 = vpop.f32.mrb[0].mxu0
        %v9298 = vadd.f32 0.0, %v9297
        %v9299 = vpop.f32.mrb[0].mxu0
        %v9300 = vadd.f32 0.0, %v9299
        %9301 = vmatprep.mubr.bf16.mxu0 0
        %9302 = vmatmul.mubr.bf16.gmra.mrb[0].mxu0 %v9130
        %v9303 = vpop.f32.mrb[0].mxu0
        %v9304 = vadd.f32 0.0, %v9303
        %v9305 = vpop.f32.mrb[0].mxu0
        %v9306 = vadd.f32 0.0, %v9305
        %v9307 = vpop.f32.mrb[0].mxu0
        %v9308 = vadd.f32 0.0, %v9307
        %v9309 = vpop.f32.mrb[0].mxu0
        %v9310 = vadd.f32 0.0, %v9309
        %9311 = vmatprep.mubr.bf16.mxu0 0
        %9312 = vmatmul.mubr.bf16.gmra.mrb[0].mxu0 %v9131
        %v9313 = vpop.f32.mrb[0].mxu0
        %v9314 = vadd.f32 0.0, %v9313
        %v9315 = vpop.f32.mrb[0].mxu0
        %v9316 = vadd.f32 0.0, %v9315
        %v9317 = vpop.f32.mrb[0].mxu0
        %v9318 = vadd.f32 0.0, %v9317
        %v9319 = vpop.f32.mrb[0].mxu0
        %v9320 = vadd.f32 0.0, %v9319
        %9321 = vmatprep.mubr.bf16.mxu0 0
        %9322 = vmatmul.mubr.bf16.gmra.mrb[0].mxu0 %v9132
        %v9323 = vpop.f32.mrb[0].mxu0
        %v9324 = vadd.f32 0.0, %v9323
        %v9325 = vpop.f32.mrb[0].mxu0
        %v9326 = vadd.f32 0.0, %v9325
        %v9327 = vpop.f32.mrb[0].mxu0
        %v9328 = vadd.f32 0.0, %v9327
        %v9329 = vpop.f32.mrb[0].mxu0
        %v9330 = vadd.f32 0.0, %v9329
        %9331 = vmatprep.mubr.bf16.mxu0 0
        %9332 = vmatmul.mubr.bf16.gmra.mrb[0].mxu0 %v9133
        %v9333 = vpop.f32.mrb[0].mxu0
        %v9334 = vadd.f32 0.0, %v9333
        %v9335 = vpop.f32.mrb[0].mxu0
        %v9336 = vadd.f32 0.0, %v9335
        %v9337 = vpop.f32.mrb[0].mxu0
        %v9338 = vadd.f32 0.0, %v9337
        %v9339 = vpop.f32.mrb[0].mxu0
        %v9340 = vadd.f32 0.0, %v9339
        %9341 = vmatprep.mubr.bf16.mxu0 0
        %9342 = vmatmul.mubr.bf16.gmra.mrb[0].mxu0 %v9134
        %v9343 = vpop.f32.mrb[0].mxu0
        %v9344 = vadd.f32 0.0, %v9343
        %v9345 = vpop.f32.mrb[0].mxu0
        %v9346 = vadd.f32 0.0, %v9345
        %v9347 = vpop.f32.mrb[0].mxu0
        %v9348 = vadd.f32 0.0, %v9347
        %v9349 = vpop.f32.mrb[0].mxu0
        %v9350 = vadd.f32 0.0, %v9349
        %9351 = vmatprep.mubr.bf16.mxu0 0
        %9352 = vmatmul.mubr.bf16.gmra.mrb[0].mxu0 %v9135
        %v9353 = vpop.f32.mrb[0].mxu0
        %v9354 = vadd.f32 0.0, %v9353
        %v9355 = vpop.f32.mrb[0].mxu0
        %v9356 = vadd.f32 0.0, %v9355
        %v9357 = vpop.f32.mrb[0].mxu0
        %v9358 = vadd.f32 0.0, %v9357
        %v9359 = vpop.f32.mrb[0].mxu0
        %v9360 = vadd.f32 0.0, %v9359
        %9361 = vmatprep.mubr.bf16.mxu0 0
        %9362 = vmatmul.mubr.bf16.gmra.mrb[0].mxu0 %v9136
        %v9363 = vpop.f32.mrb[0].mxu0
        %v9364 = vadd.f32 0.0, %v9363
        %v9365 = vpop.f32.mrb[0].mxu0
        %v9366 = vadd.f32 0.0, %v9365
        %v9367 = vpop.f32.mrb[0].mxu0
        %v9368 = vadd.f32 0.0, %v9367
        %v9369 = vpop.f32.mrb[0].mxu0
        %v9370 = vadd.f32 0.0, %v9369
        %9371 = vmatprep.mubr.bf16.mxu0 0
        %9372 = vmatmul.mubr.bf16.gmra.mrb[0].mxu0 %v9137
        %v9373 = vpop.f32.mrb[0].mxu0
        %v9374 = vadd.f32 0.0, %v9373
        %v9375 = vpop.f32.mrb[0].mxu0
        %v9376 = vadd.f32 0.0, %v9375
        %v9377 = vpop.f32.mrb[0].mxu0
        %v9378 = vadd.f32 0.0, %v9377
        %v9379 = vpop.f32.mrb[0].mxu0
        %v9380 = vadd.f32 0.0, %v9379
        %9381 = vmatprep.mubr.bf16.mxu0 0
        %9382 = vmatmul.mubr.bf16.gmra.mrb[0].mxu0 %v9138
        %v9383 = vpop.f32.mrb[0].mxu0
        %v9384 = vadd.f32 0.0, %v9383
        %v9385 = vpop.f32.mrb[0].mxu0
        %v9386 = vadd.f32 0.0, %v9385
        %v9387 = vpop.f32.mrb[0].mxu0
        %v9388 = vadd.f32 0.0, %v9387
        %v9389 = vpop.f32.mrb[0].mxu0
        %v9390 = vadd.f32 0.0, %v9389
        %9391 = vmatprep.mubr.bf16.mxu0 0
        %9392 = vmatmul.mubr.bf16.gmra.mrb[0].mxu0 %v9139
        %v9393 = vpop.f32.mrb[0].mxu0
        %v9394 = vadd.f32 0.0, %v9393
        %v9395 = vpop.f32.mrb[0].mxu0
        %v9396 = vadd.f32 0.0, %v9395
        %v9397 = vpop.f32.mrb[0].mxu0
        %v9398 = vadd.f32 0.0, %v9397
        %v9399 = vpop.f32.mrb[0].mxu0
        %v9400 = vadd.f32 0.0, %v9399
        %9401 = vmatprep.mubr.bf16.mxu0 0
        %9402 = vmatmul.mubr.bf16.gmra.mrb[0].mxu0 %v9140
        %v9403 = vpop.f32.mrb[0].mxu0
        %v9404 = vadd.f32 0.0, %v9403
        %v9405 = vpop.f32.mrb[0].mxu0
        %v9406 = vadd.f32 0.0, %v9405
        %v9407 = vpop.f32.mrb[0].mxu0
        %v9408 = vadd.f32 0.0, %v9407
        %v9409 = vpop.f32.mrb[0].mxu0
        %v9410 = vadd.f32 0.0, %v9409
        %9411 = vmatprep.mubr.bf16.mxu0 0
        %9412 = vmatmul.mubr.bf16.gmra.mrb[0].mxu0 %v9141
        %v9413 = vpop.f32.mrb[0].mxu0
        %v9414 = vadd.f32 0.0, %v9413
        %v9415 = vpop.f32.mrb[0].mxu0
        %v9416 = vadd.f32 0.0, %v9415
        %v9417 = vpop.f32.mrb[0].mxu0
        %v9418 = vadd.f32 0.0, %v9417
        %v9419 = vpop.f32.mrb[0].mxu0
        %v9420 = vadd.f32 0.0, %v9419
        %9421 = vmatprep.mubr.bf16.mxu0 0
        %9422 = vmatmul.mubr.bf16.gmra.mrb[0].mxu0 %v9142
        %v9423 = vpop.f32.mrb[0].mxu0
        %v9424 = vadd.f32 0.0, %v9423
        %v9425 = vpop.f32.mrb[0].mxu0
        %v9426 = vadd.f32 0.0, %v9425
        %v9427 = vpop.f32.mrb[0].mxu0
        %v9428 = vadd.f32 0.0, %v9427
        %v9429 = vpop.f32.mrb[0].mxu0
        %v9430 = vadd.f32 0.0, %v9429
        %9431 = vdwg.mxu0
        %v9432 = vadd.f32 %v8582, %v9274
        %v9433 = vadd.f32 %v8583, %v9276
        %v9434 = vadd.f32 %v8584, %v9278
        %v9435 = vadd.f32 %v8585, %v9280
        %v9436 = vadd.f32 %v8586, %v9284
        %v9437 = vadd.f32 %v8587, %v9286
        %v9438 = vadd.f32 %v8588, %v9288
        %v9439 = vadd.f32 %v8589, %v9290
        %v9440 = vadd.f32 %v8590, %v9294
        %v9441 = vadd.f32 %v8591, %v9296
        %v9442 = vadd.f32 %v8592, %v9298
        %v9443 = vadd.f32 %v8593, %v9300
        %v9444 = vadd.f32 %v8594, %v9304
        %v9445 = vadd.f32 %v8595, %v9306
        %v9446 = vadd.f32 %v8596, %v9308
        %v9447 = vadd.f32 %v8597, %v9310
        %v9448 = vadd.f32 %v8598, %v9314
        %v9449 = vadd.f32 %v8599, %v9316
        %v9450 = vadd.f32 %v8600, %v9318
        %v9451 = vadd.f32 %v8601, %v9320
        %v9452 = vadd.f32 %v8602, %v9324
        %v9453 = vadd.f32 %v8603, %v9326
        %v9454 = vadd.f32 %v8604, %v9328
        %v9455 = vadd.f32 %v8605, %v9330
        %v9456 = vadd.f32 %v8606, %v9334
        %v9457 = vadd.f32 %v8607, %v9336
        %v9458 = vadd.f32 %v8608, %v9338
        %v9459 = vadd.f32 %v8609, %v9340
        %v9460 = vadd.f32 %v8610, %v9344
        %v9461 = vadd.f32 %v8611, %v9346
        %v9462 = vadd.f32 %v8612, %v9348
        %v9463 = vadd.f32 %v8613, %v9350
        %v9464 = vadd.f32 %v8614, %v9354
        %v9465 = vadd.f32 %v8615, %v9356
        %v9466 = vadd.f32 %v8616, %v9358
        %v9467 = vadd.f32 %v8617, %v9360
        %v9468 = vadd.f32 %v8618, %v9364
        %v9469 = vadd.f32 %v8619, %v9366
        %v9470 = vadd.f32 %v8620, %v9368
        %v9471 = vadd.f32 %v8621, %v9370
        %v9472 = vadd.f32 %v8622, %v9374
        %v9473 = vadd.f32 %v8623, %v9376
        %v9474 = vadd.f32 %v8624, %v9378
        %v9475 = vadd.f32 %v8625, %v9380
        %v9476 = vadd.f32 %v8626, %v9384
        %v9477 = vadd.f32 %v8627, %v9386
        %v9478 = vadd.f32 %v8628, %v9388
        %v9479 = vadd.f32 %v8629, %v9390
        %v9480 = vadd.f32 %v8630, %v9394
        %v9481 = vadd.f32 %v8631, %v9396
        %v9482 = vadd.f32 %v8632, %v9398
        %v9483 = vadd.f32 %v8633, %v9400
        %v9484 = vadd.f32 %v8634, %v9404
        %v9485 = vadd.f32 %v8635, %v9406
        %v9486 = vadd.f32 %v8636, %v9408
        %v9487 = vadd.f32 %v8637, %v9410
        %v9488 = vadd.f32 %v8638, %v9414
        %v9489 = vadd.f32 %v8639, %v9416
        %v9490 = vadd.f32 %v8640, %v9418
        %v9491 = vadd.f32 %v8641, %v9420
        %v9492 = vadd.f32 %v8642, %v9424
        %v9493 = vadd.f32 %v8643, %v9426
        %v9494 = vadd.f32 %v8644, %v9428
        %v9495 = vadd.f32 %v8645, %v9430
        %v9496 = vld [vmem:[%s8163] sm:$0xe]
        %v9497 = vld [vmem:[%s8163 + $0xc] sm:$0xe]
        %v9498 = vld [vmem:[%s8163 + $0x18] sm:$0xe]
        %v9499 = vld [vmem:[%s8163 + $0x24] sm:$0xe]
        %v9500 = vld [vmem:[%s8163 + $0x30] sm:$0xe]
        %v9501 = vld [vmem:[%s8163 + $0x3c] sm:$0xe]
        %v9502 = vld [vmem:[%s8163 + $0x48] sm:$0xe]
        %v9503 = vld [vmem:[%s8163 + $0x54] sm:$0xe]
        %v9504 = vld [vmem:[%s8163 + $0x60] sm:$0xe]
        %v9505 = vld [vmem:[%s8163 + $0x6c] sm:$0xe]
        %v9506 = vld [vmem:[%s8163 + $0x78] sm:$0xe]
        %v9507 = vld [vmem:[%s8163 + $0x84] sm:$0xe]
        %v9508 = vld [vmem:[%s8163 + $0x90] sm:$0xe]
        %v9509 = vld [vmem:[%s8163 + $0x9c] sm:$0xe]
        %v9510 = vld [vmem:[%s8163 + $0xa8] sm:$0xe]
        %v9511 = vld [vmem:[%s8163 + $0xb4] sm:$0xe]
        %v9560 = vrot.slane %v9496, 5
        %v9561 = vrot.slane %v9560, 4
        %v9562 = vrot.slane %v8647, 5
        %v9563 = vsel %vm7632, %v9561, %v9562
        %v9564 = vrot.slane %v9562, 4
        %v9565 = vrot.slane %v8648, 5
        %v9566 = vsel %vm7632, %v9564, %v9565
        %v9567 = vrot.slane %v9497, 5
        %v9568 = vrot.slane %v9567, 4
        %v9569 = vrot.slane %v8650, 5
        %v9570 = vsel %vm7632, %v9568, %v9569
        %v9571 = vrot.slane %v9569, 4
        %v9572 = vrot.slane %v8651, 5
        %v9573 = vsel %vm7632, %v9571, %v9572
        %v9574 = vrot.slane %v9498, 5
        %v9575 = vrot.slane %v9574, 4
        %v9576 = vrot.slane %v8653, 5
        %v9577 = vsel %vm7632, %v9575, %v9576
        %v9578 = vrot.slane %v9576, 4
        %v9579 = vrot.slane %v8654, 5
        %v9580 = vsel %vm7632, %v9578, %v9579
        %v9581 = vrot.slane %v9499, 5
        %v9582 = vrot.slane %v9581, 4
        %v9583 = vrot.slane %v8656, 5
        %v9584 = vsel %vm7632, %v9582, %v9583
        %v9585 = vrot.slane %v9583, 4
        %v9586 = vrot.slane %v8657, 5
        %v9587 = vsel %vm7632, %v9585, %v9586
        %v9588 = vrot.slane %v9500, 5
        %v9589 = vrot.slane %v9588, 4
        %v9590 = vrot.slane %v8659, 5
        %v9591 = vsel %vm7632, %v9589, %v9590
        %v9592 = vrot.slane %v9590, 4
        %v9593 = vrot.slane %v8660, 5
        %v9594 = vsel %vm7632, %v9592, %v9593
        %v9595 = vrot.slane %v9501, 5
        %v9596 = vrot.slane %v9595, 4
        %v9597 = vrot.slane %v8662, 5
        %v9598 = vsel %vm7632, %v9596, %v9597
        %v9599 = vrot.slane %v9597, 4
        %v9600 = vrot.slane %v8663, 5
        %v9601 = vsel %vm7632, %v9599, %v9600
        %v9602 = vrot.slane %v9502, 5
        %v9603 = vrot.slane %v9602, 4
        %v9604 = vrot.slane %v8665, 5
        %v9605 = vsel %vm7632, %v9603, %v9604
        %v9606 = vrot.slane %v9604, 4
        %v9607 = vrot.slane %v8666, 5
        %v9608 = vsel %vm7632, %v9606, %v9607
        %v9609 = vrot.slane %v9503, 5
        %v9610 = vrot.slane %v9609, 4
        %v9611 = vrot.slane %v8668, 5
        %v9612 = vsel %vm7632, %v9610, %v9611
        %v9613 = vrot.slane %v9611, 4
        %v9614 = vrot.slane %v8669, 5
        %v9615 = vsel %vm7632, %v9613, %v9614
        %v9616 = vrot.slane %v9504, 5
        %v9617 = vrot.slane %v9616, 4
        %v9618 = vrot.slane %v8671, 5
        %v9619 = vsel %vm7632, %v9617, %v9618
        %v9620 = vrot.slane %v9618, 4
        %v9621 = vrot.slane %v8672, 5
        %v9622 = vsel %vm7632, %v9620, %v9621
        %v9623 = vrot.slane %v9505, 5
        %v9624 = vrot.slane %v9623, 4
        %v9625 = vrot.slane %v8674, 5
        %v9626 = vsel %vm7632, %v9624, %v9625
        %v9627 = vrot.slane %v9625, 4
        %v9628 = vrot.slane %v8675, 5
        %v9629 = vsel %vm7632, %v9627, %v9628
        %v9630 = vrot.slane %v9506, 5
        %v9631 = vrot.slane %v9630, 4
        %v9632 = vrot.slane %v8677, 5
        %v9633 = vsel %vm7632, %v9631, %v9632
        %v9634 = vrot.slane %v9632, 4
        %v9635 = vrot.slane %v8678, 5
        %v9636 = vsel %vm7632, %v9634, %v9635
        %v9637 = vrot.slane %v9507, 5
        %v9638 = vrot.slane %v9637, 4
        %v9639 = vrot.slane %v8680, 5
        %v9640 = vsel %vm7632, %v9638, %v9639
        %v9641 = vrot.slane %v9639, 4
        %v9642 = vrot.slane %v8681, 5
        %v9643 = vsel %vm7632, %v9641, %v9642
        %v9644 = vrot.slane %v9508, 5
        %v9645 = vrot.slane %v9644, 4
        %v9646 = vrot.slane %v8683, 5
        %v9647 = vsel %vm7632, %v9645, %v9646
        %v9648 = vrot.slane %v9646, 4
        %v9649 = vrot.slane %v8684, 5
        %v9650 = vsel %vm7632, %v9648, %v9649
        %v9651 = vrot.slane %v9509, 5
        %v9652 = vrot.slane %v9651, 4
        %v9653 = vrot.slane %v8686, 5
        %v9654 = vsel %vm7632, %v9652, %v9653
        %v9655 = vrot.slane %v9653, 4
        %v9656 = vrot.slane %v8687, 5
        %v9657 = vsel %vm7632, %v9655, %v9656
        %v9658 = vrot.slane %v9510, 5
        %v9659 = vrot.slane %v9658, 4
        %v9660 = vrot.slane %v8689, 5
        %v9661 = vsel %vm7632, %v9659, %v9660
        %v9662 = vrot.slane %v9660, 4
        %v9663 = vrot.slane %v8690, 5
        %v9664 = vsel %vm7632, %v9662, %v9663
        %v9665 = vrot.slane %v9511, 5
        %v9666 = vrot.slane %v9665, 4
        %v9667 = vrot.slane %v8692, 5
        %v9668 = vsel %vm7632, %v9666, %v9667
        %v9669 = vrot.slane %v9667, 4
        %v9670 = vrot.slane %v8693, 5
        %v9671 = vsel %vm7632, %v9669, %v9670
        %s9672 = scalar_lea.vmem [#allocation9], 640
        %v9673 = vld [vmem:[%s9672] sm:$0xff]
        %v9674 = vld [vmem:[%s9672 + $0x8] sm:$0xff]
        %v9675 = vld [vmem:[%s9672 + $0x10] sm:$0xff]
        %v9676 = vld [vmem:[%s9672 + $0x18] sm:$0xff]
        %v9677 = vld [vmem:[%s9672 + $0x20] sm:$0xff]
        %v9678 = vld [vmem:[%s9672 + $0x28] sm:$0xff]
        %v9679 = vld [vmem:[%s9672 + $0x30] sm:$0xff]
        %v9680 = vld [vmem:[%s9672 + $0x38] sm:$0xff]
        %v9681 = vld [vmem:[%s9672 + $0x40] sm:$0xff]
        %v9682 = vld [vmem:[%s9672 + $0x48] sm:$0xff]
        %v9683 = vld [vmem:[%s9672 + $0x50] sm:$0xff]
        %v9684 = vld [vmem:[%s9672 + $0x58] sm:$0xff]
        %v9685 = vld [vmem:[%s9672 + $0x60] sm:$0xff]
        %v9686 = vld [vmem:[%s9672 + $0x68] sm:$0xff]
        %v9687 = vld [vmem:[%s9672 + $0x70] sm:$0xff]
        %v9688 = vld [vmem:[%s9672 + $0x78] sm:$0xff]
        %v9689 = vunpack.c.l.b16 %v9563
        %v9690 = vunpack.c.l.b16 %v9566
        %v9691 = vunpack.c.l.b16 %v9570
        %v9692 = vunpack.c.l.b16 %v9573
        %v9693 = vunpack.c.l.b16 %v9577
        %v9694 = vunpack.c.l.b16 %v9580
        %v9695 = vunpack.c.l.b16 %v9584
        %v9696 = vunpack.c.l.b16 %v9587
        %v9697 = vunpack.c.l.b16 %v9591
        %v9698 = vunpack.c.l.b16 %v9594
        %v9699 = vunpack.c.l.b16 %v9598
        %v9700 = vunpack.c.l.b16 %v9601
        %v9701 = vunpack.c.l.b16 %v9605
        %v9702 = vunpack.c.l.b16 %v9608
        %v9703 = vunpack.c.l.b16 %v9612
        %v9704 = vunpack.c.l.b16 %v9615
        %v9705 = vunpack.c.l.b16 %v9619
        %v9706 = vunpack.c.l.b16 %v9622
        %v9707 = vunpack.c.l.b16 %v9626
        %v9708 = vunpack.c.l.b16 %v9629
        %v9709 = vunpack.c.l.b16 %v9633
        %v9710 = vunpack.c.l.b16 %v9636
        %v9711 = vunpack.c.l.b16 %v9640
        %v9712 = vunpack.c.l.b16 %v9643
        %v9713 = vunpack.c.l.b16 %v9647
        %v9714 = vunpack.c.l.b16 %v9650
        %v9715 = vunpack.c.l.b16 %v9654
        %v9716 = vunpack.c.l.b16 %v9657
        %v9717 = vunpack.c.l.b16 %v9661
        %v9718 = vunpack.c.l.b16 %v9664
        %v9719 = vunpack.c.l.b16 %v9668
        %v9720 = vunpack.c.l.b16 %v9671
        %v9721 = vpack.c.b16 %v9690, %v9689
        %v9722 = vpack.c.b16 %v9692, %v9691
        %v9723 = vpack.c.b16 %v9694, %v9693
        %v9724 = vpack.c.b16 %v9696, %v9695
        %v9725 = vpack.c.b16 %v9698, %v9697
        %v9726 = vpack.c.b16 %v9700, %v9699
        %v9727 = vpack.c.b16 %v9702, %v9701
        %v9728 = vpack.c.b16 %v9704, %v9703
        %v9729 = vpack.c.b16 %v9706, %v9705
        %v9730 = vpack.c.b16 %v9708, %v9707
        %v9731 = vpack.c.b16 %v9710, %v9709
        %v9732 = vpack.c.b16 %v9712, %v9711
        %v9733 = vpack.c.b16 %v9714, %v9713
        %v9734 = vpack.c.b16 %v9716, %v9715
        %v9735 = vpack.c.b16 %v9718, %v9717
        %v9736 = vpack.c.b16 %v9720, %v9719
        %v9769 = vunpack.c.l.b16 %v9673
        %v9770 = vunpack.c.h.b16 %v9673
        %v9771 = vunpack.c.l.b16 %v9674
        %v9772 = vunpack.c.h.b16 %v9674
        %v9773 = vunpack.c.l.b16 %v9675
        %v9774 = vunpack.c.h.b16 %v9675
        %v9775 = vunpack.c.l.b16 %v9676
        %v9776 = vunpack.c.h.b16 %v9676
        %v9777 = vunpack.c.l.b16 %v9677
        %v9778 = vunpack.c.h.b16 %v9677
        %v9779 = vunpack.c.l.b16 %v9678
        %v9780 = vunpack.c.h.b16 %v9678
        %v9781 = vunpack.c.l.b16 %v9679
        %v9782 = vunpack.c.h.b16 %v9679
        %v9783 = vunpack.c.l.b16 %v9680
        %v9784 = vunpack.c.h.b16 %v9680
        %v9785 = vunpack.c.l.b16 %v9681
        %v9786 = vunpack.c.h.b16 %v9681
        %v9787 = vunpack.c.l.b16 %v9682
        %v9788 = vunpack.c.h.b16 %v9682
        %v9789 = vunpack.c.l.b16 %v9683
        %v9790 = vunpack.c.h.b16 %v9683
        %v9791 = vunpack.c.l.b16 %v9684
        %v9792 = vunpack.c.h.b16 %v9684
        %v9793 = vunpack.c.l.b16 %v9685
        %v9794 = vunpack.c.h.b16 %v9685
        %v9795 = vunpack.c.l.b16 %v9686
        %v9796 = vunpack.c.h.b16 %v9686
        %v9797 = vunpack.c.l.b16 %v9687
        %v9798 = vunpack.c.h.b16 %v9687
        %v9799 = vunpack.c.l.b16 %v9688
        %v9800 = vunpack.c.h.b16 %v9688
        %v9801 = vpack.c.b16 %v9771, %v9769
        %v9802 = vpack.c.b16 %v9772, %v9770
        %v9803 = vpack.c.b16 %v9775, %v9773
        %v9804 = vpack.c.b16 %v9776, %v9774
        %v9805 = vpack.c.b16 %v9779, %v9777
        %v9806 = vpack.c.b16 %v9780, %v9778
        %v9807 = vpack.c.b16 %v9783, %v9781
        %v9808 = vpack.c.b16 %v9784, %v9782
        %v9809 = vpack.c.b16 %v9787, %v9785
        %v9810 = vpack.c.b16 %v9788, %v9786
        %v9811 = vpack.c.b16 %v9791, %v9789
        %v9812 = vpack.c.b16 %v9792, %v9790
        %v9813 = vpack.c.b16 %v9795, %v9793
        %v9814 = vpack.c.b16 %v9796, %v9794
        %v9815 = vpack.c.b16 %v9799, %v9797
        %v9816 = vpack.c.b16 %v9800, %v9798
        %9833 = vmatprep.subr.bf16.mxu0 %v9802
        %9834 = vmatpush1.bf16.msra.mxu0 %v9801
        %9835 = vmatprep.subr.bf16.mxu0 %v9804
        %9836 = vmatpush1.bf16.msra.mxu0 %v9803
        %9837 = vmatprep.subr.bf16.mxu0 %v9806
        %9838 = vmatpush1.bf16.msra.mxu0 %v9805
        %9839 = vmatprep.subr.bf16.mxu0 %v9808
        %9840 = vmatpush1.bf16.msra.mxu0 %v9807
        %9841 = vmatprep.subr.bf16.mxu0 %v9810
        %9842 = vmatpush1.bf16.msra.mxu0 %v9809
        %9843 = vmatprep.subr.bf16.mxu0 %v9812
        %9844 = vmatpush1.bf16.msra.mxu0 %v9811
        %9845 = vmatprep.subr.bf16.mxu0 %v9814
        %9846 = vmatpush1.bf16.msra.mxu0 %v9813
        %9847 = vmatprep.subr.bf16.mxu0 %v9816
        %9848 = vmatpush1.bf16.msra.mxu0 %v9815
        %9849 = vmatprep.subr.bf16.mxu0 0
        %9850 = vmatpush1.bf16.msra.mxu0 0
        %9851 = vmatprep.subr.bf16.mxu0 0
        %9852 = vmatpush1.bf16.msra.mxu0 0
        %9853 = vmatprep.subr.bf16.mxu0 0
        %9854 = vmatpush1.bf16.msra.mxu0 0
        %9855 = vmatprep.subr.bf16.mxu0 0
        %9856 = vmatpush1.bf16.msra.mxu0 0
        %9857 = vmatprep.subr.bf16.mxu0 0
        %9858 = vmatpush1.bf16.msra.mxu0 0
        %9859 = vmatprep.subr.bf16.mxu0 0
        %9860 = vmatpush1.bf16.msra.mxu0 0
        %9861 = vmatprep.subr.bf16.mxu0 0
        %9862 = vmatpush1.bf16.msra.mxu0 0
        %9863 = vmatprep.subr.bf16.mxu0 0
        %9864 = vmatpush1.bf16.msra.mxu0 0
        %9865 = vmatprep.mubr.bf16.mxu0 0
        %9866 = vmatmul.mubr.bf16.gmra.mrb[0].mxu0 %v9721
        %v9867 = vpop.f32.mrb[0].mxu0
        %v9868 = vadd.f32 0.0, %v9867
        %v9869 = vpop.f32.mrb[0].mxu0
        %v9870 = vadd.f32 0.0, %v9869
        %v9871 = vpop.f32.mrb[0].mxu0
        %v9872 = vadd.f32 0.0, %v9871
        %v9873 = vpop.f32.mrb[0].mxu0
        %v9874 = vadd.f32 0.0, %v9873
        %9875 = vmatprep.mubr.bf16.mxu0 0
        %9876 = vmatmul.mubr.bf16.gmra.mrb[0].mxu0 %v9722
        %v9877 = vpop.f32.mrb[0].mxu0
        %v9878 = vadd.f32 0.0, %v9877
        %v9879 = vpop.f32.mrb[0].mxu0
        %v9880 = vadd.f32 0.0, %v9879
        %v9881 = vpop.f32.mrb[0].mxu0
        %v9882 = vadd.f32 0.0, %v9881
        %v9883 = vpop.f32.mrb[0].mxu0
        %v9884 = vadd.f32 0.0, %v9883
        %9885 = vmatprep.mubr.bf16.mxu0 0
        %9886 = vmatmul.mubr.bf16.gmra.mrb[0].mxu0 %v9723
        %v9887 = vpop.f32.mrb[0].mxu0
        %v9888 = vadd.f32 0.0, %v9887
        %v9889 = vpop.f32.mrb[0].mxu0
        %v9890 = vadd.f32 0.0, %v9889
        %v9891 = vpop.f32.mrb[0].mxu0
        %v9892 = vadd.f32 0.0, %v9891
        %v9893 = vpop.f32.mrb[0].mxu0
        %v9894 = vadd.f32 0.0, %v9893
        %9895 = vmatprep.mubr.bf16.mxu0 0
        %9896 = vmatmul.mubr.bf16.gmra.mrb[0].mxu0 %v9724
        %v9897 = vpop.f32.mrb[0].mxu0
        %v9898 = vadd.f32 0.0, %v9897
        %v9899 = vpop.f32.mrb[0].mxu0
        %v9900 = vadd.f32 0.0, %v9899
        %v9901 = vpop.f32.mrb[0].mxu0
        %v9902 = vadd.f32 0.0, %v9901
        %v9903 = vpop.f32.mrb[0].mxu0
        %v9904 = vadd.f32 0.0, %v9903
        %9905 = vmatprep.mubr.bf16.mxu0 0
        %9906 = vmatmul.mubr.bf16.gmra.mrb[0].mxu0 %v9725
        %v9907 = vpop.f32.mrb[0].mxu0
        %v9908 = vadd.f32 0.0, %v9907
        %v9909 = vpop.f32.mrb[0].mxu0
        %v9910 = vadd.f32 0.0, %v9909
        %v9911 = vpop.f32.mrb[0].mxu0
        %v9912 = vadd.f32 0.0, %v9911
        %v9913 = vpop.f32.mrb[0].mxu0
        %v9914 = vadd.f32 0.0, %v9913
        %9915 = vmatprep.mubr.bf16.mxu0 0
        %9916 = vmatmul.mubr.bf16.gmra.mrb[0].mxu0 %v9726
        %v9917 = vpop.f32.mrb[0].mxu0
        %v9918 = vadd.f32 0.0, %v9917
        %v9919 = vpop.f32.mrb[0].mxu0
        %v9920 = vadd.f32 0.0, %v9919
        %v9921 = vpop.f32.mrb[0].mxu0
        %v9922 = vadd.f32 0.0, %v9921
        %v9923 = vpop.f32.mrb[0].mxu0
        %v9924 = vadd.f32 0.0, %v9923
        %9925 = vmatprep.mubr.bf16.mxu0 0
        %9926 = vmatmul.mubr.bf16.gmra.mrb[0].mxu0 %v9727
        %v9927 = vpop.f32.mrb[0].mxu0
        %v9928 = vadd.f32 0.0, %v9927
        %v9929 = vpop.f32.mrb[0].mxu0
        %v9930 = vadd.f32 0.0, %v9929
        %v9931 = vpop.f32.mrb[0].mxu0
        %v9932 = vadd.f32 0.0, %v9931
        %v9933 = vpop.f32.mrb[0].mxu0
        %v9934 = vadd.f32 0.0, %v9933
        %9935 = vmatprep.mubr.bf16.mxu0 0
        %9936 = vmatmul.mubr.bf16.gmra.mrb[0].mxu0 %v9728
        %v9937 = vpop.f32.mrb[0].mxu0
        %v9938 = vadd.f32 0.0, %v9937
        %v9939 = vpop.f32.mrb[0].mxu0
        %v9940 = vadd.f32 0.0, %v9939
        %v9941 = vpop.f32.mrb[0].mxu0
        %v9942 = vadd.f32 0.0, %v9941
        %v9943 = vpop.f32.mrb[0].mxu0
        %v9944 = vadd.f32 0.0, %v9943
        %9945 = vmatprep.mubr.bf16.mxu0 0
        %9946 = vmatmul.mubr.bf16.gmra.mrb[0].mxu0 %v9729
        %v9947 = vpop.f32.mrb[0].mxu0
        %v9948 = vadd.f32 0.0, %v9947
        %v9949 = vpop.f32.mrb[0].mxu0
        %v9950 = vadd.f32 0.0, %v9949
        %v9951 = vpop.f32.mrb[0].mxu0
        %v9952 = vadd.f32 0.0, %v9951
        %v9953 = vpop.f32.mrb[0].mxu0
        %v9954 = vadd.f32 0.0, %v9953
        %9955 = vmatprep.mubr.bf16.mxu0 0
        %9956 = vmatmul.mubr.bf16.gmra.mrb[0].mxu0 %v9730
        %v9957 = vpop.f32.mrb[0].mxu0
        %v9958 = vadd.f32 0.0, %v9957
        %v9959 = vpop.f32.mrb[0].mxu0
        %v9960 = vadd.f32 0.0, %v9959
        %v9961 = vpop.f32.mrb[0].mxu0
        %v9962 = vadd.f32 0.0, %v9961
        %v9963 = vpop.f32.mrb[0].mxu0
        %v9964 = vadd.f32 0.0, %v9963
        %9965 = vmatprep.mubr.bf16.mxu0 0
        %9966 = vmatmul.mubr.bf16.gmra.mrb[0].mxu0 %v9731
        %v9967 = vpop.f32.mrb[0].mxu0
        %v9968 = vadd.f32 0.0, %v9967
        %v9969 = vpop.f32.mrb[0].mxu0
        %v9970 = vadd.f32 0.0, %v9969
        %v9971 = vpop.f32.mrb[0].mxu0
        %v9972 = vadd.f32 0.0, %v9971
        %v9973 = vpop.f32.mrb[0].mxu0
        %v9974 = vadd.f32 0.0, %v9973
        %9975 = vmatprep.mubr.bf16.mxu0 0
        %9976 = vmatmul.mubr.bf16.gmra.mrb[0].mxu0 %v9732
        %v9977 = vpop.f32.mrb[0].mxu0
        %v9978 = vadd.f32 0.0, %v9977
        %v9979 = vpop.f32.mrb[0].mxu0
        %v9980 = vadd.f32 0.0, %v9979
        %v9981 = vpop.f32.mrb[0].mxu0
        %v9982 = vadd.f32 0.0, %v9981
        %v9983 = vpop.f32.mrb[0].mxu0
        %v9984 = vadd.f32 0.0, %v9983
        %9985 = vmatprep.mubr.bf16.mxu0 0
        %9986 = vmatmul.mubr.bf16.gmra.mrb[0].mxu0 %v9733
        %v9987 = vpop.f32.mrb[0].mxu0
        %v9988 = vadd.f32 0.0, %v9987
        %v9989 = vpop.f32.mrb[0].mxu0
        %v9990 = vadd.f32 0.0, %v9989
        %v9991 = vpop.f32.mrb[0].mxu0
        %v9992 = vadd.f32 0.0, %v9991
        %v9993 = vpop.f32.mrb[0].mxu0
        %v9994 = vadd.f32 0.0, %v9993
        %9995 = vmatprep.mubr.bf16.mxu0 0
        %9996 = vmatmul.mubr.bf16.gmra.mrb[0].mxu0 %v9734
        %v9997 = vpop.f32.mrb[0].mxu0
        %v9998 = vadd.f32 0.0, %v9997
        %v9999 = vpop.f32.mrb[0].mxu0
        %v10000 = vadd.f32 0.0, %v9999
        %v10001 = vpop.f32.mrb[0].mxu0
        %v10002 = vadd.f32 0.0, %v10001
        %v10003 = vpop.f32.mrb[0].mxu0
        %v10004 = vadd.f32 0.0, %v10003
        %10005 = vmatprep.mubr.bf16.mxu0 0
        %10006 = vmatmul.mubr.bf16.gmra.mrb[0].mxu0 %v9735
        %v10007 = vpop.f32.mrb[0].mxu0
        %v10008 = vadd.f32 0.0, %v10007
        %v10009 = vpop.f32.mrb[0].mxu0
        %v10010 = vadd.f32 0.0, %v10009
        %v10011 = vpop.f32.mrb[0].mxu0
        %v10012 = vadd.f32 0.0, %v10011
        %v10013 = vpop.f32.mrb[0].mxu0
        %v10014 = vadd.f32 0.0, %v10013
        %10015 = vmatprep.mubr.bf16.mxu0 0
        %10016 = vmatmul.mubr.bf16.gmra.mrb[0].mxu0 %v9736
        %v10017 = vpop.f32.mrb[0].mxu0
        %v10018 = vadd.f32 0.0, %v10017
        %v10019 = vpop.f32.mrb[0].mxu0
        %v10020 = vadd.f32 0.0, %v10019
        %v10021 = vpop.f32.mrb[0].mxu0
        %v10022 = vadd.f32 0.0, %v10021
        %v10023 = vpop.f32.mrb[0].mxu0
        %v10024 = vadd.f32 0.0, %v10023
        %10025 = vdwg.mxu0
        %v10026 = vadd.f32 %v9432, %v9868
        %v10027 = vadd.f32 %v9433, %v9870
        %v10028 = vadd.f32 %v9434, %v9872
        %v10029 = vadd.f32 %v9435, %v9874
        %v10030 = vadd.f32 %v9436, %v9878
        %v10031 = vadd.f32 %v9437, %v9880
        %v10032 = vadd.f32 %v9438, %v9882
        %v10033 = vadd.f32 %v9439, %v9884
        %v10034 = vadd.f32 %v9440, %v9888
        %v10035 = vadd.f32 %v9441, %v9890
        %v10036 = vadd.f32 %v9442, %v9892
        %v10037 = vadd.f32 %v9443, %v9894
        %v10038 = vadd.f32 %v9444, %v9898
        %v10039 = vadd.f32 %v9445, %v9900
        %v10040 = vadd.f32 %v9446, %v9902
        %v10041 = vadd.f32 %v9447, %v9904
        %v10042 = vadd.f32 %v9448, %v9908
        %v10043 = vadd.f32 %v9449, %v9910
        %v10044 = vadd.f32 %v9450, %v9912
        %v10045 = vadd.f32 %v9451, %v9914
        %v10046 = vadd.f32 %v9452, %v9918
        %v10047 = vadd.f32 %v9453, %v9920
        %v10048 = vadd.f32 %v9454, %v9922
        %v10049 = vadd.f32 %v9455, %v9924
        %v10050 = vadd.f32 %v9456, %v9928
        %v10051 = vadd.f32 %v9457, %v9930
        %v10052 = vadd.f32 %v9458, %v9932
        %v10053 = vadd.f32 %v9459, %v9934
        %v10054 = vadd.f32 %v9460, %v9938
        %v10055 = vadd.f32 %v9461, %v9940
        %v10056 = vadd.f32 %v9462, %v9942
        %v10057 = vadd.f32 %v9463, %v9944
        %v10058 = vadd.f32 %v9464, %v9948
        %v10059 = vadd.f32 %v9465, %v9950
        %v10060 = vadd.f32 %v9466, %v9952
        %v10061 = vadd.f32 %v9467, %v9954
        %v10062 = vadd.f32 %v9468, %v9958
        %v10063 = vadd.f32 %v9469, %v9960
        %v10064 = vadd.f32 %v9470, %v9962
        %v10065 = vadd.f32 %v9471, %v9964
        %v10066 = vadd.f32 %v9472, %v9968
        %v10067 = vadd.f32 %v9473, %v9970
        %v10068 = vadd.f32 %v9474, %v9972
        %v10069 = vadd.f32 %v9475, %v9974
        %v10070 = vadd.f32 %v9476, %v9978
        %v10071 = vadd.f32 %v9477, %v9980
        %v10072 = vadd.f32 %v9478, %v9982
        %v10073 = vadd.f32 %v9479, %v9984
        %v10074 = vadd.f32 %v9480, %v9988
        %v10075 = vadd.f32 %v9481, %v9990
        %v10076 = vadd.f32 %v9482, %v9992
        %v10077 = vadd.f32 %v9483, %v9994
        %v10078 = vadd.f32 %v9484, %v9998
        %v10079 = vadd.f32 %v9485, %v10000
        %v10080 = vadd.f32 %v9486, %v10002
        %v10081 = vadd.f32 %v9487, %v10004
        %v10082 = vadd.f32 %v9488, %v10008
        %v10083 = vadd.f32 %v9489, %v10010
        %v10084 = vadd.f32 %v9490, %v10012
        %v10085 = vadd.f32 %v9491, %v10014
        %v10086 = vadd.f32 %v9492, %v10018
        %v10087 = vadd.f32 %v9493, %v10020
        %v10088 = vadd.f32 %v9494, %v10022
        %v10089 = vadd.f32 %v9495, %v10024
        %s10090 = scalar_lea.vmem [#allocation3], 24
        %v10091 = vld [vmem:[%s10090] sm:$0xf]
        %v10092 = vld [vmem:[%s10090 + $0x4] sm:$0xf]
        %v10093 = vld [vmem:[%s10090 + $0xc] sm:$0xf]
        %v10094 = vld [vmem:[%s10090 + $0x10] sm:$0xf]
        %v10095 = vld [vmem:[%s10090 + $0x18] sm:$0xf]
        %v10096 = vld [vmem:[%s10090 + $0x1c] sm:$0xf]
        %v10097 = vld [vmem:[%s10090 + $0x24] sm:$0xf]
        %v10098 = vld [vmem:[%s10090 + $0x28] sm:$0xf]
        %v10099 = vld [vmem:[%s10090 + $0x30] sm:$0xf]
        %v10100 = vld [vmem:[%s10090 + $0x34] sm:$0xf]
        %v10101 = vld [vmem:[%s10090 + $0x3c] sm:$0xf]
        %v10102 = vld [vmem:[%s10090 + $0x40] sm:$0xf]
        %v10103 = vld [vmem:[%s10090 + $0x48] sm:$0xf]
        %v10104 = vld [vmem:[%s10090 + $0x4c] sm:$0xf]
        %v10105 = vld [vmem:[%s10090 + $0x54] sm:$0xf]
        %v10106 = vld [vmem:[%s10090 + $0x58] sm:$0xf]
        %v10107 = vld [vmem:[%s10090 + $0x60] sm:$0xf]
        %v10108 = vld [vmem:[%s10090 + $0x64] sm:$0xf]
        %v10109 = vld [vmem:[%s10090 + $0x6c] sm:$0xf]
        %v10110 = vld [vmem:[%s10090 + $0x70] sm:$0xf]
        %v10111 = vld [vmem:[%s10090 + $0x78] sm:$0xf]
        %v10112 = vld [vmem:[%s10090 + $0x7c] sm:$0xf]
        %v10113 = vld [vmem:[%s10090 + $0x84] sm:$0xf]
        %v10114 = vld [vmem:[%s10090 + $0x88] sm:$0xf]
        %v10115 = vld [vmem:[%s10090 + $0x90] sm:$0xf]
        %v10116 = vld [vmem:[%s10090 + $0x94] sm:$0xf]
        %v10117 = vld [vmem:[%s10090 + $0x9c] sm:$0xf]
        %v10118 = vld [vmem:[%s10090 + $0xa0] sm:$0xf]
        %v10119 = vld [vmem:[%s10090 + $0xa8] sm:$0xf]
        %v10120 = vld [vmem:[%s10090 + $0xac] sm:$0xf]
        %v10121 = vld [vmem:[%s10090 + $0xb4] sm:$0xf]
        %v10122 = vld [vmem:[%s10090 + $0xb8] sm:$0xf]
        %s10123 = scalar_lea.vmem [#allocation9], 768
        %v10124 = vld [vmem:[%s10123] sm:$0xff]
        %v10125 = vld [vmem:[%s10123 + $0x8] sm:$0xff]
        %v10126 = vld [vmem:[%s10123 + $0x10] sm:$0xff]
        %v10127 = vld [vmem:[%s10123 + $0x18] sm:$0xff]
        %v10128 = vld [vmem:[%s10123 + $0x20] sm:$0xff]
        %v10129 = vld [vmem:[%s10123 + $0x28] sm:$0xff]
        %v10130 = vld [vmem:[%s10123 + $0x30] sm:$0xff]
        %v10131 = vld [vmem:[%s10123 + $0x38] sm:$0xff]
        %v10132 = vld [vmem:[%s10123 + $0x40] sm:$0xff]
        %v10133 = vld [vmem:[%s10123 + $0x48] sm:$0xff]
        %v10134 = vld [vmem:[%s10123 + $0x50] sm:$0xff]
        %v10135 = vld [vmem:[%s10123 + $0x58] sm:$0xff]
        %v10136 = vld [vmem:[%s10123 + $0x60] sm:$0xff]
        %v10137 = vld [vmem:[%s10123 + $0x68] sm:$0xff]
        %v10138 = vld [vmem:[%s10123 + $0x70] sm:$0xff]
        %v10139 = vld [vmem:[%s10123 + $0x78] sm:$0xff]
        %v10172 = vunpack.c.l.b16 %v10091
        %v10173 = vunpack.c.l.b16 %v10092
        %v10174 = vunpack.c.l.b16 %v10093
        %v10175 = vunpack.c.l.b16 %v10094
        %v10176 = vunpack.c.l.b16 %v10095
        %v10177 = vunpack.c.l.b16 %v10096
        %v10178 = vunpack.c.l.b16 %v10097
        %v10179 = vunpack.c.l.b16 %v10098
        %v10180 = vunpack.c.l.b16 %v10099
        %v10181 = vunpack.c.l.b16 %v10100
        %v10182 = vunpack.c.l.b16 %v10101
        %v10183 = vunpack.c.l.b16 %v10102
        %v10184 = vunpack.c.l.b16 %v10103
        %v10185 = vunpack.c.l.b16 %v10104
        %v10186 = vunpack.c.l.b16 %v10105
        %v10187 = vunpack.c.l.b16 %v10106
        %v10188 = vunpack.c.l.b16 %v10107
        %v10189 = vunpack.c.l.b16 %v10108
        %v10190 = vunpack.c.l.b16 %v10109
        %v10191 = vunpack.c.l.b16 %v10110
        %v10192 = vunpack.c.l.b16 %v10111
        %v10193 = vunpack.c.l.b16 %v10112
        %v10194 = vunpack.c.l.b16 %v10113
        %v10195 = vunpack.c.l.b16 %v10114
        %v10196 = vunpack.c.l.b16 %v10115
        %v10197 = vunpack.c.l.b16 %v10116
        %v10198 = vunpack.c.l.b16 %v10117
        %v10199 = vunpack.c.l.b16 %v10118
        %v10200 = vunpack.c.l.b16 %v10119
        %v10201 = vunpack.c.l.b16 %v10120
        %v10202 = vunpack.c.l.b16 %v10121
        %v10203 = vunpack.c.l.b16 %v10122
        %v10204 = vpack.c.b16 %v10173, %v10172
        %v10205 = vpack.c.b16 %v10175, %v10174
        %v10206 = vpack.c.b16 %v10177, %v10176
        %v10207 = vpack.c.b16 %v10179, %v10178
        %v10208 = vpack.c.b16 %v10181, %v10180
        %v10209 = vpack.c.b16 %v10183, %v10182
        %v10210 = vpack.c.b16 %v10185, %v10184
        %v10211 = vpack.c.b16 %v10187, %v10186
        %v10212 = vpack.c.b16 %v10189, %v10188
        %v10213 = vpack.c.b16 %v10191, %v10190
        %v10214 = vpack.c.b16 %v10193, %v10192
        %v10215 = vpack.c.b16 %v10195, %v10194
        %v10216 = vpack.c.b16 %v10197, %v10196
        %v10217 = vpack.c.b16 %v10199, %v10198
        %v10218 = vpack.c.b16 %v10201, %v10200
        %v10219 = vpack.c.b16 %v10203, %v10202
        %v10252 = vunpack.c.l.b16 %v10124
        %v10253 = vunpack.c.h.b16 %v10124
        %v10254 = vunpack.c.l.b16 %v10125
        %v10255 = vunpack.c.h.b16 %v10125
        %v10256 = vunpack.c.l.b16 %v10126
        %v10257 = vunpack.c.h.b16 %v10126
        %v10258 = vunpack.c.l.b16 %v10127
        %v10259 = vunpack.c.h.b16 %v10127
        %v10260 = vunpack.c.l.b16 %v10128
        %v10261 = vunpack.c.h.b16 %v10128
        %v10262 = vunpack.c.l.b16 %v10129
        %v10263 = vunpack.c.h.b16 %v10129
        %v10264 = vunpack.c.l.b16 %v10130
        %v10265 = vunpack.c.h.b16 %v10130
        %v10266 = vunpack.c.l.b16 %v10131
        %v10267 = vunpack.c.h.b16 %v10131
        %v10268 = vunpack.c.l.b16 %v10132
        %v10269 = vunpack.c.h.b16 %v10132
        %v10270 = vunpack.c.l.b16 %v10133
        %v10271 = vunpack.c.h.b16 %v10133
        %v10272 = vunpack.c.l.b16 %v10134
        %v10273 = vunpack.c.h.b16 %v10134
        %v10274 = vunpack.c.l.b16 %v10135
        %v10275 = vunpack.c.h.b16 %v10135
        %v10276 = vunpack.c.l.b16 %v10136
        %v10277 = vunpack.c.h.b16 %v10136
        %v10278 = vunpack.c.l.b16 %v10137
        %v10279 = vunpack.c.h.b16 %v10137
        %v10280 = vunpack.c.l.b16 %v10138
        %v10281 = vunpack.c.h.b16 %v10138
        %v10282 = vunpack.c.l.b16 %v10139
        %v10283 = vunpack.c.h.b16 %v10139
        %v10284 = vpack.c.b16 %v10254, %v10252
        %v10285 = vpack.c.b16 %v10255, %v10253
        %v10286 = vpack.c.b16 %v10258, %v10256
        %v10287 = vpack.c.b16 %v10259, %v10257
        %v10288 = vpack.c.b16 %v10262, %v10260
        %v10289 = vpack.c.b16 %v10263, %v10261
        %v10290 = vpack.c.b16 %v10266, %v10264
        %v10291 = vpack.c.b16 %v10267, %v10265
        %v10292 = vpack.c.b16 %v10270, %v10268
        %v10293 = vpack.c.b16 %v10271, %v10269
        %v10294 = vpack.c.b16 %v10274, %v10272
        %v10295 = vpack.c.b16 %v10275, %v10273
        %v10296 = vpack.c.b16 %v10278, %v10276
        %v10297 = vpack.c.b16 %v10279, %v10277
        %v10298 = vpack.c.b16 %v10282, %v10280
        %v10299 = vpack.c.b16 %v10283, %v10281
        %10316 = vmatprep.subr.bf16.mxu0 %v10285
        %10317 = vmatpush1.bf16.msra.mxu0 %v10284
        %10318 = vmatprep.subr.bf16.mxu0 %v10287
        %10319 = vmatpush1.bf16.msra.mxu0 %v10286
        %10320 = vmatprep.subr.bf16.mxu0 %v10289
        %10321 = vmatpush1.bf16.msra.mxu0 %v10288
        %10322 = vmatprep.subr.bf16.mxu0 %v10291
        %10323 = vmatpush1.bf16.msra.mxu0 %v10290
        %10324 = vmatprep.subr.bf16.mxu0 %v10293
        %10325 = vmatpush1.bf16.msra.mxu0 %v10292
        %10326 = vmatprep.subr.bf16.mxu0 %v10295
        %10327 = vmatpush1.bf16.msra.mxu0 %v10294
        %10328 = vmatprep.subr.bf16.mxu0 %v10297
        %10329 = vmatpush1.bf16.msra.mxu0 %v10296
        %10330 = vmatprep.subr.bf16.mxu0 %v10299
        %10331 = vmatpush1.bf16.msra.mxu0 %v10298
        %10332 = vmatprep.subr.bf16.mxu0 0
        %10333 = vmatpush1.bf16.msra.mxu0 0
        %10334 = vmatprep.subr.bf16.mxu0 0
        %10335 = vmatpush1.bf16.msra.mxu0 0
        %10336 = vmatprep.subr.bf16.mxu0 0
        %10337 = vmatpush1.bf16.msra.mxu0 0
        %10338 = vmatprep.subr.bf16.mxu0 0
        %10339 = vmatpush1.bf16.msra.mxu0 0
        %10340 = vmatprep.subr.bf16.mxu0 0
        %10341 = vmatpush1.bf16.msra.mxu0 0
        %10342 = vmatprep.subr.bf16.mxu0 0
        %10343 = vmatpush1.bf16.msra.mxu0 0
        %10344 = vmatprep.subr.bf16.mxu0 0
        %10345 = vmatpush1.bf16.msra.mxu0 0
        %10346 = vmatprep.subr.bf16.mxu0 0
        %10347 = vmatpush1.bf16.msra.mxu0 0
        %10348 = vmatprep.mubr.bf16.mxu0 0
        %10349 = vmatmul.mubr.bf16.gmra.mrb[0].mxu0 %v10204
        %v10350 = vpop.f32.mrb[0].mxu0
        %v10351 = vadd.f32 0.0, %v10350
        %v10352 = vpop.f32.mrb[0].mxu0
        %v10353 = vadd.f32 0.0, %v10352
        %v10354 = vpop.f32.mrb[0].mxu0
        %v10355 = vadd.f32 0.0, %v10354
        %v10356 = vpop.f32.mrb[0].mxu0
        %v10357 = vadd.f32 0.0, %v10356
        %10358 = vmatprep.mubr.bf16.mxu0 0
        %10359 = vmatmul.mubr.bf16.gmra.mrb[0].mxu0 %v10205
        %v10360 = vpop.f32.mrb[0].mxu0
        %v10361 = vadd.f32 0.0, %v10360
        %v10362 = vpop.f32.mrb[0].mxu0
        %v10363 = vadd.f32 0.0, %v10362
        %v10364 = vpop.f32.mrb[0].mxu0
        %v10365 = vadd.f32 0.0, %v10364
        %v10366 = vpop.f32.mrb[0].mxu0
        %v10367 = vadd.f32 0.0, %v10366
        %10368 = vmatprep.mubr.bf16.mxu0 0
        %10369 = vmatmul.mubr.bf16.gmra.mrb[0].mxu0 %v10206
        %v10370 = vpop.f32.mrb[0].mxu0
        %v10371 = vadd.f32 0.0, %v10370
        %v10372 = vpop.f32.mrb[0].mxu0
        %v10373 = vadd.f32 0.0, %v10372
        %v10374 = vpop.f32.mrb[0].mxu0
        %v10375 = vadd.f32 0.0, %v10374
        %v10376 = vpop.f32.mrb[0].mxu0
        %v10377 = vadd.f32 0.0, %v10376
        %10378 = vmatprep.mubr.bf16.mxu0 0
        %10379 = vmatmul.mubr.bf16.gmra.mrb[0].mxu0 %v10207
        %v10380 = vpop.f32.mrb[0].mxu0
        %v10381 = vadd.f32 0.0, %v10380
        %v10382 = vpop.f32.mrb[0].mxu0
        %v10383 = vadd.f32 0.0, %v10382
        %v10384 = vpop.f32.mrb[0].mxu0
        %v10385 = vadd.f32 0.0, %v10384
        %v10386 = vpop.f32.mrb[0].mxu0
        %v10387 = vadd.f32 0.0, %v10386
        %10388 = vmatprep.mubr.bf16.mxu0 0
        %10389 = vmatmul.mubr.bf16.gmra.mrb[0].mxu0 %v10208
        %v10390 = vpop.f32.mrb[0].mxu0
        %v10391 = vadd.f32 0.0, %v10390
        %v10392 = vpop.f32.mrb[0].mxu0
        %v10393 = vadd.f32 0.0, %v10392
        %v10394 = vpop.f32.mrb[0].mxu0
        %v10395 = vadd.f32 0.0, %v10394
        %v10396 = vpop.f32.mrb[0].mxu0
        %v10397 = vadd.f32 0.0, %v10396
        %10398 = vmatprep.mubr.bf16.mxu0 0
        %10399 = vmatmul.mubr.bf16.gmra.mrb[0].mxu0 %v10209
        %v10400 = vpop.f32.mrb[0].mxu0
        %v10401 = vadd.f32 0.0, %v10400
        %v10402 = vpop.f32.mrb[0].mxu0
        %v10403 = vadd.f32 0.0, %v10402
        %v10404 = vpop.f32.mrb[0].mxu0
        %v10405 = vadd.f32 0.0, %v10404
        %v10406 = vpop.f32.mrb[0].mxu0
        %v10407 = vadd.f32 0.0, %v10406
        %10408 = vmatprep.mubr.bf16.mxu0 0
        %10409 = vmatmul.mubr.bf16.gmra.mrb[0].mxu0 %v10210
        %v10410 = vpop.f32.mrb[0].mxu0
        %v10411 = vadd.f32 0.0, %v10410
        %v10412 = vpop.f32.mrb[0].mxu0
        %v10413 = vadd.f32 0.0, %v10412
        %v10414 = vpop.f32.mrb[0].mxu0
        %v10415 = vadd.f32 0.0, %v10414
        %v10416 = vpop.f32.mrb[0].mxu0
        %v10417 = vadd.f32 0.0, %v10416
        %10418 = vmatprep.mubr.bf16.mxu0 0
        %10419 = vmatmul.mubr.bf16.gmra.mrb[0].mxu0 %v10211
        %v10420 = vpop.f32.mrb[0].mxu0
        %v10421 = vadd.f32 0.0, %v10420
        %v10422 = vpop.f32.mrb[0].mxu0
        %v10423 = vadd.f32 0.0, %v10422
        %v10424 = vpop.f32.mrb[0].mxu0
        %v10425 = vadd.f32 0.0, %v10424
        %v10426 = vpop.f32.mrb[0].mxu0
        %v10427 = vadd.f32 0.0, %v10426
        %10428 = vmatprep.mubr.bf16.mxu0 0
        %10429 = vmatmul.mubr.bf16.gmra.mrb[0].mxu0 %v10212
        %v10430 = vpop.f32.mrb[0].mxu0
        %v10431 = vadd.f32 0.0, %v10430
        %v10432 = vpop.f32.mrb[0].mxu0
        %v10433 = vadd.f32 0.0, %v10432
        %v10434 = vpop.f32.mrb[0].mxu0
        %v10435 = vadd.f32 0.0, %v10434
        %v10436 = vpop.f32.mrb[0].mxu0
        %v10437 = vadd.f32 0.0, %v10436
        %10438 = vmatprep.mubr.bf16.mxu0 0
        %10439 = vmatmul.mubr.bf16.gmra.mrb[0].mxu0 %v10213
        %v10440 = vpop.f32.mrb[0].mxu0
        %v10441 = vadd.f32 0.0, %v10440
        %v10442 = vpop.f32.mrb[0].mxu0
        %v10443 = vadd.f32 0.0, %v10442
        %v10444 = vpop.f32.mrb[0].mxu0
        %v10445 = vadd.f32 0.0, %v10444
        %v10446 = vpop.f32.mrb[0].mxu0
        %v10447 = vadd.f32 0.0, %v10446
        %10448 = vmatprep.mubr.bf16.mxu0 0
        %10449 = vmatmul.mubr.bf16.gmra.mrb[0].mxu0 %v10214
        %v10450 = vpop.f32.mrb[0].mxu0
        %v10451 = vadd.f32 0.0, %v10450
        %v10452 = vpop.f32.mrb[0].mxu0
        %v10453 = vadd.f32 0.0, %v10452
        %v10454 = vpop.f32.mrb[0].mxu0
        %v10455 = vadd.f32 0.0, %v10454
        %v10456 = vpop.f32.mrb[0].mxu0
        %v10457 = vadd.f32 0.0, %v10456
        %10458 = vmatprep.mubr.bf16.mxu0 0
        %10459 = vmatmul.mubr.bf16.gmra.mrb[0].mxu0 %v10215
        %v10460 = vpop.f32.mrb[0].mxu0
        %v10461 = vadd.f32 0.0, %v10460
        %v10462 = vpop.f32.mrb[0].mxu0
        %v10463 = vadd.f32 0.0, %v10462
        %v10464 = vpop.f32.mrb[0].mxu0
        %v10465 = vadd.f32 0.0, %v10464
        %v10466 = vpop.f32.mrb[0].mxu0
        %v10467 = vadd.f32 0.0, %v10466
        %10468 = vmatprep.mubr.bf16.mxu0 0
        %10469 = vmatmul.mubr.bf16.gmra.mrb[0].mxu0 %v10216
        %v10470 = vpop.f32.mrb[0].mxu0
        %v10471 = vadd.f32 0.0, %v10470
        %v10472 = vpop.f32.mrb[0].mxu0
        %v10473 = vadd.f32 0.0, %v10472
        %v10474 = vpop.f32.mrb[0].mxu0
        %v10475 = vadd.f32 0.0, %v10474
        %v10476 = vpop.f32.mrb[0].mxu0
        %v10477 = vadd.f32 0.0, %v10476
        %10478 = vmatprep.mubr.bf16.mxu0 0
        %10479 = vmatmul.mubr.bf16.gmra.mrb[0].mxu0 %v10217
        %v10480 = vpop.f32.mrb[0].mxu0
        %v10481 = vadd.f32 0.0, %v10480
        %v10482 = vpop.f32.mrb[0].mxu0
        %v10483 = vadd.f32 0.0, %v10482
        %v10484 = vpop.f32.mrb[0].mxu0
        %v10485 = vadd.f32 0.0, %v10484
        %v10486 = vpop.f32.mrb[0].mxu0
        %v10487 = vadd.f32 0.0, %v10486
        %10488 = vmatprep.mubr.bf16.mxu0 0
        %10489 = vmatmul.mubr.bf16.gmra.mrb[0].mxu0 %v10218
        %v10490 = vpop.f32.mrb[0].mxu0
        %v10491 = vadd.f32 0.0, %v10490
        %v10492 = vpop.f32.mrb[0].mxu0
        %v10493 = vadd.f32 0.0, %v10492
        %v10494 = vpop.f32.mrb[0].mxu0
        %v10495 = vadd.f32 0.0, %v10494
        %v10496 = vpop.f32.mrb[0].mxu0
        %v10497 = vadd.f32 0.0, %v10496
        %10498 = vmatprep.mubr.bf16.mxu0 0
        %10499 = vmatmul.mubr.bf16.gmra.mrb[0].mxu0 %v10219
        %v10500 = vpop.f32.mrb[0].mxu0
        %v10501 = vadd.f32 0.0, %v10500
        %v10502 = vpop.f32.mrb[0].mxu0
        %v10503 = vadd.f32 0.0, %v10502
        %v10504 = vpop.f32.mrb[0].mxu0
        %v10505 = vadd.f32 0.0, %v10504
        %v10506 = vpop.f32.mrb[0].mxu0
        %v10507 = vadd.f32 0.0, %v10506
        %10508 = vdwg.mxu0
        %v10509 = vadd.f32 %v10026, %v10351
        %v10510 = vadd.f32 %v10027, %v10353
        %v10511 = vadd.f32 %v10028, %v10355
        %v10512 = vadd.f32 %v10029, %v10357
        %v10513 = vadd.f32 %v10030, %v10361
        %v10514 = vadd.f32 %v10031, %v10363
        %v10515 = vadd.f32 %v10032, %v10365
        %v10516 = vadd.f32 %v10033, %v10367
        %v10517 = vadd.f32 %v10034, %v10371
        %v10518 = vadd.f32 %v10035, %v10373
        %v10519 = vadd.f32 %v10036, %v10375
        %v10520 = vadd.f32 %v10037, %v10377
        %v10521 = vadd.f32 %v10038, %v10381
        %v10522 = vadd.f32 %v10039, %v10383
        %v10523 = vadd.f32 %v10040, %v10385
        %v10524 = vadd.f32 %v10041, %v10387
        %v10525 = vadd.f32 %v10042, %v10391
        %v10526 = vadd.f32 %v10043, %v10393
        %v10527 = vadd.f32 %v10044, %v10395
        %v10528 = vadd.f32 %v10045, %v10397
        %v10529 = vadd.f32 %v10046, %v10401
        %v10530 = vadd.f32 %v10047, %v10403
        %v10531 = vadd.f32 %v10048, %v10405
        %v10532 = vadd.f32 %v10049, %v10407
        %v10533 = vadd.f32 %v10050, %v10411
        %v10534 = vadd.f32 %v10051, %v10413
        %v10535 = vadd.f32 %v10052, %v10415
        %v10536 = vadd.f32 %v10053, %v10417
        %v10537 = vadd.f32 %v10054, %v10421
        %v10538 = vadd.f32 %v10055, %v10423
        %v10539 = vadd.f32 %v10056, %v10425
        %v10540 = vadd.f32 %v10057, %v10427
        %v10541 = vadd.f32 %v10058, %v10431
        %v10542 = vadd.f32 %v10059, %v10433
        %v10543 = vadd.f32 %v10060, %v10435
        %v10544 = vadd.f32 %v10061, %v10437
        %v10545 = vadd.f32 %v10062, %v10441
        %v10546 = vadd.f32 %v10063, %v10443
        %v10547 = vadd.f32 %v10064, %v10445
        %v10548 = vadd.f32 %v10065, %v10447
        %v10549 = vadd.f32 %v10066, %v10451
        %v10550 = vadd.f32 %v10067, %v10453
        %v10551 = vadd.f32 %v10068, %v10455
        %v10552 = vadd.f32 %v10069, %v10457
        %v10553 = vadd.f32 %v10070, %v10461
        %v10554 = vadd.f32 %v10071, %v10463
        %v10555 = vadd.f32 %v10072, %v10465
        %v10556 = vadd.f32 %v10073, %v10467
        %v10557 = vadd.f32 %v10074, %v10471
        %v10558 = vadd.f32 %v10075, %v10473
        %v10559 = vadd.f32 %v10076, %v10475
        %v10560 = vadd.f32 %v10077, %v10477
        %v10561 = vadd.f32 %v10078, %v10481
        %v10562 = vadd.f32 %v10079, %v10483
        %v10563 = vadd.f32 %v10080, %v10485
        %v10564 = vadd.f32 %v10081, %v10487
        %v10565 = vadd.f32 %v10082, %v10491
        %v10566 = vadd.f32 %v10083, %v10493
        %v10567 = vadd.f32 %v10084, %v10495
        %v10568 = vadd.f32 %v10085, %v10497
        %v10569 = vadd.f32 %v10086, %v10501
        %v10570 = vadd.f32 %v10087, %v10503
        %v10571 = vadd.f32 %v10088, %v10505
        %v10572 = vadd.f32 %v10089, %v10507
        %v10573 = vld [vmem:[%s10090] sm:$0xf]
        %v10574 = vld [vmem:[%s10090 + $0x4] sm:$0xf]
        %v10575 = vld [vmem:[%s10090 + $0x8] sm:$0x1]
        %v10576 = vld [vmem:[%s10090 + $0xc] sm:$0xf]
        %v10577 = vld [vmem:[%s10090 + $0x10] sm:$0xf]
        %v10578 = vld [vmem:[%s10090 + $0x14] sm:$0x1]
        %v10579 = vld [vmem:[%s10090 + $0x18] sm:$0xf]
        %v10580 = vld [vmem:[%s10090 + $0x1c] sm:$0xf]
        %v10581 = vld [vmem:[%s10090 + $0x20] sm:$0x1]
        %v10582 = vld [vmem:[%s10090 + $0x24] sm:$0xf]
        %v10583 = vld [vmem:[%s10090 + $0x28] sm:$0xf]
        %v10584 = vld [vmem:[%s10090 + $0x2c] sm:$0x1]
        %v10585 = vld [vmem:[%s10090 + $0x30] sm:$0xf]
        %v10586 = vld [vmem:[%s10090 + $0x34] sm:$0xf]
        %v10587 = vld [vmem:[%s10090 + $0x38] sm:$0x1]
        %v10588 = vld [vmem:[%s10090 + $0x3c] sm:$0xf]
        %v10589 = vld [vmem:[%s10090 + $0x40] sm:$0xf]
        %v10590 = vld [vmem:[%s10090 + $0x44] sm:$0x1]
        %v10591 = vld [vmem:[%s10090 + $0x48] sm:$0xf]
        %v10592 = vld [vmem:[%s10090 + $0x4c] sm:$0xf]
        %v10593 = vld [vmem:[%s10090 + $0x50] sm:$0x1]
        %v10594 = vld [vmem:[%s10090 + $0x54] sm:$0xf]
        %v10595 = vld [vmem:[%s10090 + $0x58] sm:$0xf]
        %v10596 = vld [vmem:[%s10090 + $0x5c] sm:$0x1]
        %v10597 = vld [vmem:[%s10090 + $0x60] sm:$0xf]
        %v10598 = vld [vmem:[%s10090 + $0x64] sm:$0xf]
        %v10599 = vld [vmem:[%s10090 + $0x68] sm:$0x1]
        %v10600 = vld [vmem:[%s10090 + $0x6c] sm:$0xf]
        %v10601 = vld [vmem:[%s10090 + $0x70] sm:$0xf]
        %v10602 = vld [vmem:[%s10090 + $0x74] sm:$0x1]
        %v10603 = vld [vmem:[%s10090 + $0x78] sm:$0xf]
        %v10604 = vld [vmem:[%s10090 + $0x7c] sm:$0xf]
        %v10605 = vld [vmem:[%s10090 + $0x80] sm:$0x1]
        %v10606 = vld [vmem:[%s10090 + $0x84] sm:$0xf]
        %v10607 = vld [vmem:[%s10090 + $0x88] sm:$0xf]
        %v10608 = vld [vmem:[%s10090 + $0x8c] sm:$0x1]
        %v10609 = vld [vmem:[%s10090 + $0x90] sm:$0xf]
        %v10610 = vld [vmem:[%s10090 + $0x94] sm:$0xf]
        %v10611 = vld [vmem:[%s10090 + $0x98] sm:$0x1]
        %v10612 = vld [vmem:[%s10090 + $0x9c] sm:$0xf]
        %v10613 = vld [vmem:[%s10090 + $0xa0] sm:$0xf]
        %v10614 = vld [vmem:[%s10090 + $0xa4] sm:$0x1]
        %v10615 = vld [vmem:[%s10090 + $0xa8] sm:$0xf]
        %v10616 = vld [vmem:[%s10090 + $0xac] sm:$0xf]
        %v10617 = vld [vmem:[%s10090 + $0xb0] sm:$0x1]
        %v10618 = vld [vmem:[%s10090 + $0xb4] sm:$0xf]
        %v10619 = vld [vmem:[%s10090 + $0xb8] sm:$0xf]
        %v10620 = vld [vmem:[%s10090 + $0xbc] sm:$0x1]
        %v10622 = vshrl.u32 %v10573, 16
        %v10624 = vrot.slane %v10622, 4
        %v10625 = vshll.u32 %v10573, 16
        %v10627 = vrot.slane %v10625, 5
        %v10628 = vor.u32 %v10624, %v10627
        %v10629 = vrot.slane %v10628, 4
        %v10631 = vshll.u32 %v10574, 16
        %v10633 = vrot.slane %v10631, 5
        %v10634 = vsel %vm6474, %v10629, %v10633
        %v10635 = vshrl.u32 %v10574, 16
        %v10637 = vrot.slane %v10635, 4
        %v10638 = vor.u32 %v10637, %v10633
        %v10639 = vrot.slane %v10638, 4
        %v10641 = vshll.u32 %v10575, 16
        %v10643 = vrot.slane %v10641, 5
        %v10644 = vsel %vm6474, %v10639, %v10643
        %v10646 = vshrl.u32 %v10576, 16
        %v10648 = vrot.slane %v10646, 4
        %v10649 = vshll.u32 %v10576, 16
        %v10651 = vrot.slane %v10649, 5
        %v10652 = vor.u32 %v10648, %v10651
        %v10653 = vrot.slane %v10652, 4
        %v10655 = vshll.u32 %v10577, 16
        %v10657 = vrot.slane %v10655, 5
        %v10658 = vsel %vm6474, %v10653, %v10657
        %v10659 = vshrl.u32 %v10577, 16
        %v10661 = vrot.slane %v10659, 4
        %v10662 = vor.u32 %v10661, %v10657
        %v10663 = vrot.slane %v10662, 4
        %v10665 = vshll.u32 %v10578, 16
        %v10667 = vrot.slane %v10665, 5
        %v10668 = vsel %vm6474, %v10663, %v10667
        %v10670 = vshrl.u32 %v10579, 16
        %v10672 = vrot.slane %v10670, 4
        %v10673 = vshll.u32 %v10579, 16
        %v10675 = vrot.slane %v10673, 5
        %v10676 = vor.u32 %v10672, %v10675
        %v10677 = vrot.slane %v10676, 4
        %v10679 = vshll.u32 %v10580, 16
        %v10681 = vrot.slane %v10679, 5
        %v10682 = vsel %vm6474, %v10677, %v10681
        %v10683 = vshrl.u32 %v10580, 16
        %v10685 = vrot.slane %v10683, 4
        %v10686 = vor.u32 %v10685, %v10681
        %v10687 = vrot.slane %v10686, 4
        %v10689 = vshll.u32 %v10581, 16
        %v10691 = vrot.slane %v10689, 5
        %v10692 = vsel %vm6474, %v10687, %v10691
        %v10694 = vshrl.u32 %v10582, 16
        %v10696 = vrot.slane %v10694, 4
        %v10697 = vshll.u32 %v10582, 16
        %v10699 = vrot.slane %v10697, 5
        %v10700 = vor.u32 %v10696, %v10699
        %v10701 = vrot.slane %v10700, 4
        %v10703 = vshll.u32 %v10583, 16
        %v10705 = vrot.slane %v10703, 5
        %v10706 = vsel %vm6474, %v10701, %v10705
        %v10707 = vshrl.u32 %v10583, 16
        %v10709 = vrot.slane %v10707, 4
        %v10710 = vor.u32 %v10709, %v10705
        %v10711 = vrot.slane %v10710, 4
        %v10713 = vshll.u32 %v10584, 16
        %v10715 = vrot.slane %v10713, 5
        %v10716 = vsel %vm6474, %v10711, %v10715
        %v10718 = vshrl.u32 %v10585, 16
        %v10720 = vrot.slane %v10718, 4
        %v10721 = vshll.u32 %v10585, 16
        %v10723 = vrot.slane %v10721, 5
        %v10724 = vor.u32 %v10720, %v10723
        %v10725 = vrot.slane %v10724, 4
        %v10727 = vshll.u32 %v10586, 16
        %v10729 = vrot.slane %v10727, 5
        %v10730 = vsel %vm6474, %v10725, %v10729
        %v10731 = vshrl.u32 %v10586, 16
        %v10733 = vrot.slane %v10731, 4
        %v10734 = vor.u32 %v10733, %v10729
        %v10735 = vrot.slane %v10734, 4
        %v10737 = vshll.u32 %v10587, 16
        %v10739 = vrot.slane %v10737, 5
        %v10740 = vsel %vm6474, %v10735, %v10739
        %v10742 = vshrl.u32 %v10588, 16
        %v10744 = vrot.slane %v10742, 4
        %v10745 = vshll.u32 %v10588, 16
        %v10747 = vrot.slane %v10745, 5
        %v10748 = vor.u32 %v10744, %v10747
        %v10749 = vrot.slane %v10748, 4
        %v10751 = vshll.u32 %v10589, 16
        %v10753 = vrot.slane %v10751, 5
        %v10754 = vsel %vm6474, %v10749, %v10753
        %v10755 = vshrl.u32 %v10589, 16
        %v10757 = vrot.slane %v10755, 4
        %v10758 = vor.u32 %v10757, %v10753
        %v10759 = vrot.slane %v10758, 4
        %v10761 = vshll.u32 %v10590, 16
        %v10763 = vrot.slane %v10761, 5
        %v10764 = vsel %vm6474, %v10759, %v10763
        %v10766 = vshrl.u32 %v10591, 16
        %v10768 = vrot.slane %v10766, 4
        %v10769 = vshll.u32 %v10591, 16
        %v10771 = vrot.slane %v10769, 5
        %v10772 = vor.u32 %v10768, %v10771
        %v10773 = vrot.slane %v10772, 4
        %v10775 = vshll.u32 %v10592, 16
        %v10777 = vrot.slane %v10775, 5
        %v10778 = vsel %vm6474, %v10773, %v10777
        %v10779 = vshrl.u32 %v10592, 16
        %v10781 = vrot.slane %v10779, 4
        %v10782 = vor.u32 %v10781, %v10777
        %v10783 = vrot.slane %v10782, 4
        %v10785 = vshll.u32 %v10593, 16
        %v10787 = vrot.slane %v10785, 5
        %v10788 = vsel %vm6474, %v10783, %v10787
        %v10790 = vshrl.u32 %v10594, 16
        %v10792 = vrot.slane %v10790, 4
        %v10793 = vshll.u32 %v10594, 16
        %v10795 = vrot.slane %v10793, 5
        %v10796 = vor.u32 %v10792, %v10795
        %v10797 = vrot.slane %v10796, 4
        %v10799 = vshll.u32 %v10595, 16
        %v10801 = vrot.slane %v10799, 5
        %v10802 = vsel %vm6474, %v10797, %v10801
        %v10803 = vshrl.u32 %v10595, 16
        %v10805 = vrot.slane %v10803, 4
        %v10806 = vor.u32 %v10805, %v10801
        %v10807 = vrot.slane %v10806, 4
        %v10809 = vshll.u32 %v10596, 16
        %v10811 = vrot.slane %v10809, 5
        %v10812 = vsel %vm6474, %v10807, %v10811
        %v10814 = vshrl.u32 %v10597, 16
        %v10816 = vrot.slane %v10814, 4
        %v10817 = vshll.u32 %v10597, 16
        %v10819 = vrot.slane %v10817, 5
        %v10820 = vor.u32 %v10816, %v10819
        %v10821 = vrot.slane %v10820, 4
        %v10823 = vshll.u32 %v10598, 16
        %v10825 = vrot.slane %v10823, 5
        %v10826 = vsel %vm6474, %v10821, %v10825
        %v10827 = vshrl.u32 %v10598, 16
        %v10829 = vrot.slane %v10827, 4
        %v10830 = vor.u32 %v10829, %v10825
        %v10831 = vrot.slane %v10830, 4
        %v10833 = vshll.u32 %v10599, 16
        %v10835 = vrot.slane %v10833, 5
        %v10836 = vsel %vm6474, %v10831, %v10835
        %v10838 = vshrl.u32 %v10600, 16
        %v10840 = vrot.slane %v10838, 4
        %v10841 = vshll.u32 %v10600, 16
        %v10843 = vrot.slane %v10841, 5
        %v10844 = vor.u32 %v10840, %v10843
        %v10845 = vrot.slane %v10844, 4
        %v10847 = vshll.u32 %v10601, 16
        %v10849 = vrot.slane %v10847, 5
        %v10850 = vsel %vm6474, %v10845, %v10849
        %v10851 = vshrl.u32 %v10601, 16
        %v10853 = vrot.slane %v10851, 4
        %v10854 = vor.u32 %v10853, %v10849
        %v10855 = vrot.slane %v10854, 4
        %v10857 = vshll.u32 %v10602, 16
        %v10859 = vrot.slane %v10857, 5
        %v10860 = vsel %vm6474, %v10855, %v10859
        %v10862 = vshrl.u32 %v10603, 16
        %v10864 = vrot.slane %v10862, 4
        %v10865 = vshll.u32 %v10603, 16
        %v10867 = vrot.slane %v10865, 5
        %v10868 = vor.u32 %v10864, %v10867
        %v10869 = vrot.slane %v10868, 4
        %v10871 = vshll.u32 %v10604, 16
        %v10873 = vrot.slane %v10871, 5
        %v10874 = vsel %vm6474, %v10869, %v10873
        %v10875 = vshrl.u32 %v10604, 16
        %v10877 = vrot.slane %v10875, 4
        %v10878 = vor.u32 %v10877, %v10873
        %v10879 = vrot.slane %v10878, 4
        %v10881 = vshll.u32 %v10605, 16
        %v10883 = vrot.slane %v10881, 5
        %v10884 = vsel %vm6474, %v10879, %v10883
        %v10886 = vshrl.u32 %v10606, 16
        %v10888 = vrot.slane %v10886, 4
        %v10889 = vshll.u32 %v10606, 16
        %v10891 = vrot.slane %v10889, 5
        %v10892 = vor.u32 %v10888, %v10891
        %v10893 = vrot.slane %v10892, 4
        %v10895 = vshll.u32 %v10607, 16
        %v10897 = vrot.slane %v10895, 5
        %v10898 = vsel %vm6474, %v10893, %v10897
        %v10899 = vshrl.u32 %v10607, 16
        %v10901 = vrot.slane %v10899, 4
        %v10902 = vor.u32 %v10901, %v10897
        %v10903 = vrot.slane %v10902, 4
        %v10905 = vshll.u32 %v10608, 16
        %v10907 = vrot.slane %v10905, 5
        %v10908 = vsel %vm6474, %v10903, %v10907
        %v10910 = vshrl.u32 %v10609, 16
        %v10912 = vrot.slane %v10910, 4
        %v10913 = vshll.u32 %v10609, 16
        %v10915 = vrot.slane %v10913, 5
        %v10916 = vor.u32 %v10912, %v10915
        %v10917 = vrot.slane %v10916, 4
        %v10919 = vshll.u32 %v10610, 16
        %v10921 = vrot.slane %v10919, 5
        %v10922 = vsel %vm6474, %v10917, %v10921
        %v10923 = vshrl.u32 %v10610, 16
        %v10925 = vrot.slane %v10923, 4
        %v10926 = vor.u32 %v10925, %v10921
        %v10927 = vrot.slane %v10926, 4
        %v10929 = vshll.u32 %v10611, 16
        %v10931 = vrot.slane %v10929, 5
        %v10932 = vsel %vm6474, %v10927, %v10931
        %v10934 = vshrl.u32 %v10612, 16
        %v10936 = vrot.slane %v10934, 4
        %v10937 = vshll.u32 %v10612, 16
        %v10939 = vrot.slane %v10937, 5
        %v10940 = vor.u32 %v10936, %v10939
        %v10941 = vrot.slane %v10940, 4
        %v10943 = vshll.u32 %v10613, 16
        %v10945 = vrot.slane %v10943, 5
        %v10946 = vsel %vm6474, %v10941, %v10945
        %v10947 = vshrl.u32 %v10613, 16
        %v10949 = vrot.slane %v10947, 4
        %v10950 = vor.u32 %v10949, %v10945
        %v10951 = vrot.slane %v10950, 4
        %v10953 = vshll.u32 %v10614, 16
        %v10955 = vrot.slane %v10953, 5
        %v10956 = vsel %vm6474, %v10951, %v10955
        %v10958 = vshrl.u32 %v10615, 16
        %v10960 = vrot.slane %v10958, 4
        %v10961 = vshll.u32 %v10615, 16
        %v10963 = vrot.slane %v10961, 5
        %v10964 = vor.u32 %v10960, %v10963
        %v10965 = vrot.slane %v10964, 4
        %v10967 = vshll.u32 %v10616, 16
        %v10969 = vrot.slane %v10967, 5
        %v10970 = vsel %vm6474, %v10965, %v10969
        %v10971 = vshrl.u32 %v10616, 16
        %v10973 = vrot.slane %v10971, 4
        %v10974 = vor.u32 %v10973, %v10969
        %v10975 = vrot.slane %v10974, 4
        %v10977 = vshll.u32 %v10617, 16
        %v10979 = vrot.slane %v10977, 5
        %v10980 = vsel %vm6474, %v10975, %v10979
        %v10982 = vshrl.u32 %v10618, 16
        %v10984 = vrot.slane %v10982, 4
        %v10985 = vshll.u32 %v10618, 16
        %v10987 = vrot.slane %v10985, 5
        %v10988 = vor.u32 %v10984, %v10987
        %v10989 = vrot.slane %v10988, 4
        %v10991 = vshll.u32 %v10619, 16
        %v10993 = vrot.slane %v10991, 5
        %v10994 = vsel %vm6474, %v10989, %v10993
        %v10995 = vshrl.u32 %v10619, 16
        %v10997 = vrot.slane %v10995, 4
        %v10998 = vor.u32 %v10997, %v10993
        %v10999 = vrot.slane %v10998, 4
        %v11001 = vshll.u32 %v10620, 16
        %v11003 = vrot.slane %v11001, 5
        %v11004 = vsel %vm6474, %v10999, %v11003
        %s11005 = scalar_lea.vmem [#allocation9], 896
        %v11006 = vld [vmem:[%s11005] sm:$0xff]
        %v11007 = vld [vmem:[%s11005 + $0x8] sm:$0xff]
        %v11008 = vld [vmem:[%s11005 + $0x10] sm:$0xff]
        %v11009 = vld [vmem:[%s11005 + $0x18] sm:$0xff]
        %v11010 = vld [vmem:[%s11005 + $0x20] sm:$0xff]
        %v11011 = vld [vmem:[%s11005 + $0x28] sm:$0xff]
        %v11012 = vld [vmem:[%s11005 + $0x30] sm:$0xff]
        %v11013 = vld [vmem:[%s11005 + $0x38] sm:$0xff]
        %v11014 = vld [vmem:[%s11005 + $0x40] sm:$0xff]
        %v11015 = vld [vmem:[%s11005 + $0x48] sm:$0xff]
        %v11016 = vld [vmem:[%s11005 + $0x50] sm:$0xff]
        %v11017 = vld [vmem:[%s11005 + $0x58] sm:$0xff]
        %v11018 = vld [vmem:[%s11005 + $0x60] sm:$0xff]
        %v11019 = vld [vmem:[%s11005 + $0x68] sm:$0xff]
        %v11020 = vld [vmem:[%s11005 + $0x70] sm:$0xff]
        %v11021 = vld [vmem:[%s11005 + $0x78] sm:$0xff]
        %v11022 = vunpack.c.l.b16 %v10634
        %v11023 = vunpack.c.l.b16 %v10644
        %v11024 = vunpack.c.l.b16 %v10658
        %v11025 = vunpack.c.l.b16 %v10668
        %v11026 = vunpack.c.l.b16 %v10682
        %v11027 = vunpack.c.l.b16 %v10692
        %v11028 = vunpack.c.l.b16 %v10706
        %v11029 = vunpack.c.l.b16 %v10716
        %v11030 = vunpack.c.l.b16 %v10730
        %v11031 = vunpack.c.l.b16 %v10740
        %v11032 = vunpack.c.l.b16 %v10754
        %v11033 = vunpack.c.l.b16 %v10764
        %v11034 = vunpack.c.l.b16 %v10778
        %v11035 = vunpack.c.l.b16 %v10788
        %v11036 = vunpack.c.l.b16 %v10802
        %v11037 = vunpack.c.l.b16 %v10812
        %v11038 = vunpack.c.l.b16 %v10826
        %v11039 = vunpack.c.l.b16 %v10836
        %v11040 = vunpack.c.l.b16 %v10850
        %v11041 = vunpack.c.l.b16 %v10860
        %v11042 = vunpack.c.l.b16 %v10874
        %v11043 = vunpack.c.l.b16 %v10884
        %v11044 = vunpack.c.l.b16 %v10898
        %v11045 = vunpack.c.l.b16 %v10908
        %v11046 = vunpack.c.l.b16 %v10922
        %v11047 = vunpack.c.l.b16 %v10932
        %v11048 = vunpack.c.l.b16 %v10946
        %v11049 = vunpack.c.l.b16 %v10956
        %v11050 = vunpack.c.l.b16 %v10970
        %v11051 = vunpack.c.l.b16 %v10980
        %v11052 = vunpack.c.l.b16 %v10994
        %v11053 = vunpack.c.l.b16 %v11004
        %v11054 = vpack.c.b16 %v11023, %v11022
        %v11055 = vpack.c.b16 %v11025, %v11024
        %v11056 = vpack.c.b16 %v11027, %v11026
        %v11057 = vpack.c.b16 %v11029, %v11028
        %v11058 = vpack.c.b16 %v11031, %v11030
        %v11059 = vpack.c.b16 %v11033, %v11032
        %v11060 = vpack.c.b16 %v11035, %v11034
        %v11061 = vpack.c.b16 %v11037, %v11036
        %v11062 = vpack.c.b16 %v11039, %v11038
        %v11063 = vpack.c.b16 %v11041, %v11040
        %v11064 = vpack.c.b16 %v11043, %v11042
        %v11065 = vpack.c.b16 %v11045, %v11044
        %v11066 = vpack.c.b16 %v11047, %v11046
        %v11067 = vpack.c.b16 %v11049, %v11048
        %v11068 = vpack.c.b16 %v11051, %v11050
        %v11069 = vpack.c.b16 %v11053, %v11052
        %v11102 = vunpack.c.l.b16 %v11006
        %v11103 = vunpack.c.h.b16 %v11006
        %v11104 = vunpack.c.l.b16 %v11007
        %v11105 = vunpack.c.h.b16 %v11007
        %v11106 = vunpack.c.l.b16 %v11008
        %v11107 = vunpack.c.h.b16 %v11008
        %v11108 = vunpack.c.l.b16 %v11009
        %v11109 = vunpack.c.h.b16 %v11009
        %v11110 = vunpack.c.l.b16 %v11010
        %v11111 = vunpack.c.h.b16 %v11010
        %v11112 = vunpack.c.l.b16 %v11011
        %v11113 = vunpack.c.h.b16 %v11011
        %v11114 = vunpack.c.l.b16 %v11012
        %v11115 = vunpack.c.h.b16 %v11012
        %v11116 = vunpack.c.l.b16 %v11013
        %v11117 = vunpack.c.h.b16 %v11013
        %v11118 = vunpack.c.l.b16 %v11014
        %v11119 = vunpack.c.h.b16 %v11014
        %v11120 = vunpack.c.l.b16 %v11015
        %v11121 = vunpack.c.h.b16 %v11015
        %v11122 = vunpack.c.l.b16 %v11016
        %v11123 = vunpack.c.h.b16 %v11016
        %v11124 = vunpack.c.l.b16 %v11017
        %v11125 = vunpack.c.h.b16 %v11017
        %v11126 = vunpack.c.l.b16 %v11018
        %v11127 = vunpack.c.h.b16 %v11018
        %v11128 = vunpack.c.l.b16 %v11019
        %v11129 = vunpack.c.h.b16 %v11019
        %v11130 = vunpack.c.l.b16 %v11020
        %v11131 = vunpack.c.h.b16 %v11020
        %v11132 = vunpack.c.l.b16 %v11021
        %v11133 = vunpack.c.h.b16 %v11021
        %v11134 = vpack.c.b16 %v11104, %v11102
        %v11135 = vpack.c.b16 %v11105, %v11103
        %v11136 = vpack.c.b16 %v11108, %v11106
        %v11137 = vpack.c.b16 %v11109, %v11107
        %v11138 = vpack.c.b16 %v11112, %v11110
        %v11139 = vpack.c.b16 %v11113, %v11111
        %v11140 = vpack.c.b16 %v11116, %v11114
        %v11141 = vpack.c.b16 %v11117, %v11115
        %v11142 = vpack.c.b16 %v11120, %v11118
        %v11143 = vpack.c.b16 %v11121, %v11119
        %v11144 = vpack.c.b16 %v11124, %v11122
        %v11145 = vpack.c.b16 %v11125, %v11123
        %v11146 = vpack.c.b16 %v11128, %v11126
        %v11147 = vpack.c.b16 %v11129, %v11127
        %v11148 = vpack.c.b16 %v11132, %v11130
        %v11149 = vpack.c.b16 %v11133, %v11131
        %11166 = vmatprep.subr.bf16.mxu0 %v11135
        %11167 = vmatpush1.bf16.msra.mxu0 %v11134
        %11168 = vmatprep.subr.bf16.mxu0 %v11137
        %11169 = vmatpush1.bf16.msra.mxu0 %v11136
        %11170 = vmatprep.subr.bf16.mxu0 %v11139
        %11171 = vmatpush1.bf16.msra.mxu0 %v11138
        %11172 = vmatprep.subr.bf16.mxu0 %v11141
        %11173 = vmatpush1.bf16.msra.mxu0 %v11140
        %11174 = vmatprep.subr.bf16.mxu0 %v11143
        %11175 = vmatpush1.bf16.msra.mxu0 %v11142
        %11176 = vmatprep.subr.bf16.mxu0 %v11145
        %11177 = vmatpush1.bf16.msra.mxu0 %v11144
        %11178 = vmatprep.subr.bf16.mxu0 %v11147
        %11179 = vmatpush1.bf16.msra.mxu0 %v11146
        %11180 = vmatprep.subr.bf16.mxu0 %v11149
        %11181 = vmatpush1.bf16.msra.mxu0 %v11148
        %11182 = vmatprep.subr.bf16.mxu0 0
        %11183 = vmatpush1.bf16.msra.mxu0 0
        %11184 = vmatprep.subr.bf16.mxu0 0
        %11185 = vmatpush1.bf16.msra.mxu0 0
        %11186 = vmatprep.subr.bf16.mxu0 0
        %11187 = vmatpush1.bf16.msra.mxu0 0
        %11188 = vmatprep.subr.bf16.mxu0 0
        %11189 = vmatpush1.bf16.msra.mxu0 0
        %11190 = vmatprep.subr.bf16.mxu0 0
        %11191 = vmatpush1.bf16.msra.mxu0 0
        %11192 = vmatprep.subr.bf16.mxu0 0
        %11193 = vmatpush1.bf16.msra.mxu0 0
        %11194 = vmatprep.subr.bf16.mxu0 0
        %11195 = vmatpush1.bf16.msra.mxu0 0
        %11196 = vmatprep.subr.bf16.mxu0 0
        %11197 = vmatpush1.bf16.msra.mxu0 0
        %11198 = vmatprep.mubr.bf16.mxu0 0
        %11199 = vmatmul.mubr.bf16.gmra.mrb[0].mxu0 %v11054
        %v11200 = vpop.f32.mrb[0].mxu0
        %v11201 = vadd.f32 0.0, %v11200
        %v11202 = vpop.f32.mrb[0].mxu0
        %v11203 = vadd.f32 0.0, %v11202
        %v11204 = vpop.f32.mrb[0].mxu0
        %v11205 = vadd.f32 0.0, %v11204
        %v11206 = vpop.f32.mrb[0].mxu0
        %v11207 = vadd.f32 0.0, %v11206
        %11208 = vmatprep.mubr.bf16.mxu0 0
        %11209 = vmatmul.mubr.bf16.gmra.mrb[0].mxu0 %v11055
        %v11210 = vpop.f32.mrb[0].mxu0
        %v11211 = vadd.f32 0.0, %v11210
        %v11212 = vpop.f32.mrb[0].mxu0
        %v11213 = vadd.f32 0.0, %v11212
        %v11214 = vpop.f32.mrb[0].mxu0
        %v11215 = vadd.f32 0.0, %v11214
        %v11216 = vpop.f32.mrb[0].mxu0
        %v11217 = vadd.f32 0.0, %v11216
        %11218 = vmatprep.mubr.bf16.mxu0 0
        %11219 = vmatmul.mubr.bf16.gmra.mrb[0].mxu0 %v11056
        %v11220 = vpop.f32.mrb[0].mxu0
        %v11221 = vadd.f32 0.0, %v11220
        %v11222 = vpop.f32.mrb[0].mxu0
        %v11223 = vadd.f32 0.0, %v11222
        %v11224 = vpop.f32.mrb[0].mxu0
        %v11225 = vadd.f32 0.0, %v11224
        %v11226 = vpop.f32.mrb[0].mxu0
        %v11227 = vadd.f32 0.0, %v11226
        %11228 = vmatprep.mubr.bf16.mxu0 0
        %11229 = vmatmul.mubr.bf16.gmra.mrb[0].mxu0 %v11057
        %v11230 = vpop.f32.mrb[0].mxu0
        %v11231 = vadd.f32 0.0, %v11230
        %v11232 = vpop.f32.mrb[0].mxu0
        %v11233 = vadd.f32 0.0, %v11232
        %v11234 = vpop.f32.mrb[0].mxu0
        %v11235 = vadd.f32 0.0, %v11234
        %v11236 = vpop.f32.mrb[0].mxu0
        %v11237 = vadd.f32 0.0, %v11236
        %11238 = vmatprep.mubr.bf16.mxu0 0
        %11239 = vmatmul.mubr.bf16.gmra.mrb[0].mxu0 %v11058
        %v11240 = vpop.f32.mrb[0].mxu0
        %v11241 = vadd.f32 0.0, %v11240
        %v11242 = vpop.f32.mrb[0].mxu0
        %v11243 = vadd.f32 0.0, %v11242
        %v11244 = vpop.f32.mrb[0].mxu0
        %v11245 = vadd.f32 0.0, %v11244
        %v11246 = vpop.f32.mrb[0].mxu0
        %v11247 = vadd.f32 0.0, %v11246
        %11248 = vmatprep.mubr.bf16.mxu0 0
        %11249 = vmatmul.mubr.bf16.gmra.mrb[0].mxu0 %v11059
        %v11250 = vpop.f32.mrb[0].mxu0
        %v11251 = vadd.f32 0.0, %v11250
        %v11252 = vpop.f32.mrb[0].mxu0
        %v11253 = vadd.f32 0.0, %v11252
        %v11254 = vpop.f32.mrb[0].mxu0
        %v11255 = vadd.f32 0.0, %v11254
        %v11256 = vpop.f32.mrb[0].mxu0
        %v11257 = vadd.f32 0.0, %v11256
        %11258 = vmatprep.mubr.bf16.mxu0 0
        %11259 = vmatmul.mubr.bf16.gmra.mrb[0].mxu0 %v11060
        %v11260 = vpop.f32.mrb[0].mxu0
        %v11261 = vadd.f32 0.0, %v11260
        %v11262 = vpop.f32.mrb[0].mxu0
        %v11263 = vadd.f32 0.0, %v11262
        %v11264 = vpop.f32.mrb[0].mxu0
        %v11265 = vadd.f32 0.0, %v11264
        %v11266 = vpop.f32.mrb[0].mxu0
        %v11267 = vadd.f32 0.0, %v11266
        %11268 = vmatprep.mubr.bf16.mxu0 0
        %11269 = vmatmul.mubr.bf16.gmra.mrb[0].mxu0 %v11061
        %v11270 = vpop.f32.mrb[0].mxu0
        %v11271 = vadd.f32 0.0, %v11270
        %v11272 = vpop.f32.mrb[0].mxu0
        %v11273 = vadd.f32 0.0, %v11272
        %v11274 = vpop.f32.mrb[0].mxu0
        %v11275 = vadd.f32 0.0, %v11274
        %v11276 = vpop.f32.mrb[0].mxu0
        %v11277 = vadd.f32 0.0, %v11276
        %11278 = vmatprep.mubr.bf16.mxu0 0
        %11279 = vmatmul.mubr.bf16.gmra.mrb[0].mxu0 %v11062
        %v11280 = vpop.f32.mrb[0].mxu0
        %v11281 = vadd.f32 0.0, %v11280
        %v11282 = vpop.f32.mrb[0].mxu0
        %v11283 = vadd.f32 0.0, %v11282
        %v11284 = vpop.f32.mrb[0].mxu0
        %v11285 = vadd.f32 0.0, %v11284
        %v11286 = vpop.f32.mrb[0].mxu0
        %v11287 = vadd.f32 0.0, %v11286
        %11288 = vmatprep.mubr.bf16.mxu0 0
        %11289 = vmatmul.mubr.bf16.gmra.mrb[0].mxu0 %v11063
        %v11290 = vpop.f32.mrb[0].mxu0
        %v11291 = vadd.f32 0.0, %v11290
        %v11292 = vpop.f32.mrb[0].mxu0
        %v11293 = vadd.f32 0.0, %v11292
        %v11294 = vpop.f32.mrb[0].mxu0
        %v11295 = vadd.f32 0.0, %v11294
        %v11296 = vpop.f32.mrb[0].mxu0
        %v11297 = vadd.f32 0.0, %v11296
        %11298 = vmatprep.mubr.bf16.mxu0 0
        %11299 = vmatmul.mubr.bf16.gmra.mrb[0].mxu0 %v11064
        %v11300 = vpop.f32.mrb[0].mxu0
        %v11301 = vadd.f32 0.0, %v11300
        %v11302 = vpop.f32.mrb[0].mxu0
        %v11303 = vadd.f32 0.0, %v11302
        %v11304 = vpop.f32.mrb[0].mxu0
        %v11305 = vadd.f32 0.0, %v11304
        %v11306 = vpop.f32.mrb[0].mxu0
        %v11307 = vadd.f32 0.0, %v11306
        %11308 = vmatprep.mubr.bf16.mxu0 0
        %11309 = vmatmul.mubr.bf16.gmra.mrb[0].mxu0 %v11065
        %v11310 = vpop.f32.mrb[0].mxu0
        %v11311 = vadd.f32 0.0, %v11310
        %v11312 = vpop.f32.mrb[0].mxu0
        %v11313 = vadd.f32 0.0, %v11312
        %v11314 = vpop.f32.mrb[0].mxu0
        %v11315 = vadd.f32 0.0, %v11314
        %v11316 = vpop.f32.mrb[0].mxu0
        %v11317 = vadd.f32 0.0, %v11316
        %11318 = vmatprep.mubr.bf16.mxu0 0
        %11319 = vmatmul.mubr.bf16.gmra.mrb[0].mxu0 %v11066
        %v11320 = vpop.f32.mrb[0].mxu0
        %v11321 = vadd.f32 0.0, %v11320
        %v11322 = vpop.f32.mrb[0].mxu0
        %v11323 = vadd.f32 0.0, %v11322
        %v11324 = vpop.f32.mrb[0].mxu0
        %v11325 = vadd.f32 0.0, %v11324
        %v11326 = vpop.f32.mrb[0].mxu0
        %v11327 = vadd.f32 0.0, %v11326
        %11328 = vmatprep.mubr.bf16.mxu0 0
        %11329 = vmatmul.mubr.bf16.gmra.mrb[0].mxu0 %v11067
        %v11330 = vpop.f32.mrb[0].mxu0
        %v11331 = vadd.f32 0.0, %v11330
        %v11332 = vpop.f32.mrb[0].mxu0
        %v11333 = vadd.f32 0.0, %v11332
        %v11334 = vpop.f32.mrb[0].mxu0
        %v11335 = vadd.f32 0.0, %v11334
        %v11336 = vpop.f32.mrb[0].mxu0
        %v11337 = vadd.f32 0.0, %v11336
        %11338 = vmatprep.mubr.bf16.mxu0 0
        %11339 = vmatmul.mubr.bf16.gmra.mrb[0].mxu0 %v11068
        %v11340 = vpop.f32.mrb[0].mxu0
        %v11341 = vadd.f32 0.0, %v11340
        %v11342 = vpop.f32.mrb[0].mxu0
        %v11343 = vadd.f32 0.0, %v11342
        %v11344 = vpop.f32.mrb[0].mxu0
        %v11345 = vadd.f32 0.0, %v11344
        %v11346 = vpop.f32.mrb[0].mxu0
        %v11347 = vadd.f32 0.0, %v11346
        %11348 = vmatprep.mubr.bf16.mxu0 0
        %11349 = vmatmul.mubr.bf16.gmra.mrb[0].mxu0 %v11069
        %v11350 = vpop.f32.mrb[0].mxu0
        %v11351 = vadd.f32 0.0, %v11350
        %v11352 = vpop.f32.mrb[0].mxu0
        %v11353 = vadd.f32 0.0, %v11352
        %v11354 = vpop.f32.mrb[0].mxu0
        %v11355 = vadd.f32 0.0, %v11354
        %v11356 = vpop.f32.mrb[0].mxu0
        %v11357 = vadd.f32 0.0, %v11356
        %11358 = vdwg.mxu0
        %v11359 = vadd.f32 %v10509, %v11201
        %v11360 = vadd.f32 %v10510, %v11203
        %v11361 = vadd.f32 %v10511, %v11205
        %v11362 = vadd.f32 %v10512, %v11207
        %v11363 = vadd.f32 %v10513, %v11211
        %v11364 = vadd.f32 %v10514, %v11213
        %v11365 = vadd.f32 %v10515, %v11215
        %v11366 = vadd.f32 %v10516, %v11217
        %v11367 = vadd.f32 %v10517, %v11221
        %v11368 = vadd.f32 %v10518, %v11223
        %v11369 = vadd.f32 %v10519, %v11225
        %v11370 = vadd.f32 %v10520, %v11227
        %v11371 = vadd.f32 %v10521, %v11231
        %v11372 = vadd.f32 %v10522, %v11233
        %v11373 = vadd.f32 %v10523, %v11235
        %v11374 = vadd.f32 %v10524, %v11237
        %v11375 = vadd.f32 %v10525, %v11241
        %v11376 = vadd.f32 %v10526, %v11243
        %v11377 = vadd.f32 %v10527, %v11245
        %v11378 = vadd.f32 %v10528, %v11247
        %v11379 = vadd.f32 %v10529, %v11251
        %v11380 = vadd.f32 %v10530, %v11253
        %v11381 = vadd.f32 %v10531, %v11255
        %v11382 = vadd.f32 %v10532, %v11257
        %v11383 = vadd.f32 %v10533, %v11261
        %v11384 = vadd.f32 %v10534, %v11263
        %v11385 = vadd.f32 %v10535, %v11265
        %v11386 = vadd.f32 %v10536, %v11267
        %v11387 = vadd.f32 %v10537, %v11271
        %v11388 = vadd.f32 %v10538, %v11273
        %v11389 = vadd.f32 %v10539, %v11275
        %v11390 = vadd.f32 %v10540, %v11277
        %v11391 = vadd.f32 %v10541, %v11281
        %v11392 = vadd.f32 %v10542, %v11283
        %v11393 = vadd.f32 %v10543, %v11285
        %v11394 = vadd.f32 %v10544, %v11287
        %v11395 = vadd.f32 %v10545, %v11291
        %v11396 = vadd.f32 %v10546, %v11293
        %v11397 = vadd.f32 %v10547, %v11295
        %v11398 = vadd.f32 %v10548, %v11297
        %v11399 = vadd.f32 %v10549, %v11301
        %v11400 = vadd.f32 %v10550, %v11303
        %v11401 = vadd.f32 %v10551, %v11305
        %v11402 = vadd.f32 %v10552, %v11307
        %v11403 = vadd.f32 %v10553, %v11311
        %v11404 = vadd.f32 %v10554, %v11313
        %v11405 = vadd.f32 %v10555, %v11315
        %v11406 = vadd.f32 %v10556, %v11317
        %v11407 = vadd.f32 %v10557, %v11321
        %v11408 = vadd.f32 %v10558, %v11323
        %v11409 = vadd.f32 %v10559, %v11325
        %v11410 = vadd.f32 %v10560, %v11327
        %v11411 = vadd.f32 %v10561, %v11331
        %v11412 = vadd.f32 %v10562, %v11333
        %v11413 = vadd.f32 %v10563, %v11335
        %v11414 = vadd.f32 %v10564, %v11337
        %v11415 = vadd.f32 %v10565, %v11341
        %v11416 = vadd.f32 %v10566, %v11343
        %v11417 = vadd.f32 %v10567, %v11345
        %v11418 = vadd.f32 %v10568, %v11347
        %v11419 = vadd.f32 %v10569, %v11351
        %v11420 = vadd.f32 %v10570, %v11353
        %v11421 = vadd.f32 %v10571, %v11355
        %v11422 = vadd.f32 %v10572, %v11357
        %v11423 = vld [vmem:[%s10090] sm:$0xe]
        %v11424 = vld [vmem:[%s10090 + $0xc] sm:$0xe]
        %v11425 = vld [vmem:[%s10090 + $0x18] sm:$0xe]
        %v11426 = vld [vmem:[%s10090 + $0x24] sm:$0xe]
        %v11427 = vld [vmem:[%s10090 + $0x30] sm:$0xe]
        %v11428 = vld [vmem:[%s10090 + $0x3c] sm:$0xe]
        %v11429 = vld [vmem:[%s10090 + $0x48] sm:$0xe]
        %v11430 = vld [vmem:[%s10090 + $0x54] sm:$0xe]
        %v11431 = vld [vmem:[%s10090 + $0x60] sm:$0xe]
        %v11432 = vld [vmem:[%s10090 + $0x6c] sm:$0xe]
        %v11433 = vld [vmem:[%s10090 + $0x78] sm:$0xe]
        %v11434 = vld [vmem:[%s10090 + $0x84] sm:$0xe]
        %v11435 = vld [vmem:[%s10090 + $0x90] sm:$0xe]
        %v11436 = vld [vmem:[%s10090 + $0x9c] sm:$0xe]
        %v11437 = vld [vmem:[%s10090 + $0xa8] sm:$0xe]
        %v11438 = vld [vmem:[%s10090 + $0xb4] sm:$0xe]
        %v11487 = vrot.slane %v11423, 5
        %v11488 = vrot.slane %v11487, 4
        %v11489 = vrot.slane %v10574, 5
        %v11490 = vsel %vm7632, %v11488, %v11489
        %v11491 = vrot.slane %v11489, 4
        %v11492 = vrot.slane %v10575, 5
        %v11493 = vsel %vm7632, %v11491, %v11492
        %v11494 = vrot.slane %v11424, 5
        %v11495 = vrot.slane %v11494, 4
        %v11496 = vrot.slane %v10577, 5
        %v11497 = vsel %vm7632, %v11495, %v11496
        %v11498 = vrot.slane %v11496, 4
        %v11499 = vrot.slane %v10578, 5
        %v11500 = vsel %vm7632, %v11498, %v11499
        %v11501 = vrot.slane %v11425, 5
        %v11502 = vrot.slane %v11501, 4
        %v11503 = vrot.slane %v10580, 5
        %v11504 = vsel %vm7632, %v11502, %v11503
        %v11505 = vrot.slane %v11503, 4
        %v11506 = vrot.slane %v10581, 5
        %v11507 = vsel %vm7632, %v11505, %v11506
        %v11508 = vrot.slane %v11426, 5
        %v11509 = vrot.slane %v11508, 4
        %v11510 = vrot.slane %v10583, 5
        %v11511 = vsel %vm7632, %v11509, %v11510
        %v11512 = vrot.slane %v11510, 4
        %v11513 = vrot.slane %v10584, 5
        %v11514 = vsel %vm7632, %v11512, %v11513
        %v11515 = vrot.slane %v11427, 5
        %v11516 = vrot.slane %v11515, 4
        %v11517 = vrot.slane %v10586, 5
        %v11518 = vsel %vm7632, %v11516, %v11517
        %v11519 = vrot.slane %v11517, 4
        %v11520 = vrot.slane %v10587, 5
        %v11521 = vsel %vm7632, %v11519, %v11520
        %v11522 = vrot.slane %v11428, 5
        %v11523 = vrot.slane %v11522, 4
        %v11524 = vrot.slane %v10589, 5
        %v11525 = vsel %vm7632, %v11523, %v11524
        %v11526 = vrot.slane %v11524, 4
        %v11527 = vrot.slane %v10590, 5
        %v11528 = vsel %vm7632, %v11526, %v11527
        %v11529 = vrot.slane %v11429, 5
        %v11530 = vrot.slane %v11529, 4
        %v11531 = vrot.slane %v10592, 5
        %v11532 = vsel %vm7632, %v11530, %v11531
        %v11533 = vrot.slane %v11531, 4
        %v11534 = vrot.slane %v10593, 5
        %v11535 = vsel %vm7632, %v11533, %v11534
        %v11536 = vrot.slane %v11430, 5
        %v11537 = vrot.slane %v11536, 4
        %v11538 = vrot.slane %v10595, 5
        %v11539 = vsel %vm7632, %v11537, %v11538
        %v11540 = vrot.slane %v11538, 4
        %v11541 = vrot.slane %v10596, 5
        %v11542 = vsel %vm7632, %v11540, %v11541
        %v11543 = vrot.slane %v11431, 5
        %v11544 = vrot.slane %v11543, 4
        %v11545 = vrot.slane %v10598, 5
        %v11546 = vsel %vm7632, %v11544, %v11545
        %v11547 = vrot.slane %v11545, 4
        %v11548 = vrot.slane %v10599, 5
        %v11549 = vsel %vm7632, %v11547, %v11548
        %v11550 = vrot.slane %v11432, 5
        %v11551 = vrot.slane %v11550, 4
        %v11552 = vrot.slane %v10601, 5
        %v11553 = vsel %vm7632, %v11551, %v11552
        %v11554 = vrot.slane %v11552, 4
        %v11555 = vrot.slane %v10602, 5
        %v11556 = vsel %vm7632, %v11554, %v11555
        %v11557 = vrot.slane %v11433, 5
        %v11558 = vrot.slane %v11557, 4
        %v11559 = vrot.slane %v10604, 5
        %v11560 = vsel %vm7632, %v11558, %v11559
        %v11561 = vrot.slane %v11559, 4
        %v11562 = vrot.slane %v10605, 5
        %v11563 = vsel %vm7632, %v11561, %v11562
        %v11564 = vrot.slane %v11434, 5
        %v11565 = vrot.slane %v11564, 4
        %v11566 = vrot.slane %v10607, 5
        %v11567 = vsel %vm7632, %v11565, %v11566
        %v11568 = vrot.slane %v11566, 4
        %v11569 = vrot.slane %v10608, 5
        %v11570 = vsel %vm7632, %v11568, %v11569
        %v11571 = vrot.slane %v11435, 5
        %v11572 = vrot.slane %v11571, 4
        %v11573 = vrot.slane %v10610, 5
        %v11574 = vsel %vm7632, %v11572, %v11573
        %v11575 = vrot.slane %v11573, 4
        %v11576 = vrot.slane %v10611, 5
        %v11577 = vsel %vm7632, %v11575, %v11576
        %v11578 = vrot.slane %v11436, 5
        %v11579 = vrot.slane %v11578, 4
        %v11580 = vrot.slane %v10613, 5
        %v11581 = vsel %vm7632, %v11579, %v11580
        %v11582 = vrot.slane %v11580, 4
        %v11583 = vrot.slane %v10614, 5
        %v11584 = vsel %vm7632, %v11582, %v11583
        %v11585 = vrot.slane %v11437, 5
        %v11586 = vrot.slane %v11585, 4
        %v11587 = vrot.slane %v10616, 5
        %v11588 = vsel %vm7632, %v11586, %v11587
        %v11589 = vrot.slane %v11587, 4
        %v11590 = vrot.slane %v10617, 5
        %v11591 = vsel %vm7632, %v11589, %v11590
        %v11592 = vrot.slane %v11438, 5
        %v11593 = vrot.slane %v11592, 4
        %v11594 = vrot.slane %v10619, 5
        %v11595 = vsel %vm7632, %v11593, %v11594
        %v11596 = vrot.slane %v11594, 4
        %v11597 = vrot.slane %v10620, 5
        %v11598 = vsel %vm7632, %v11596, %v11597
        %s11599 = scalar_lea.vmem [#allocation9], 1024
        %v11600 = vld [vmem:[%s11599] sm:$0xff]
        %v11601 = vld [vmem:[%s11599 + $0x8] sm:$0xff]
        %v11602 = vld [vmem:[%s11599 + $0x10] sm:$0xff]
        %v11603 = vld [vmem:[%s11599 + $0x18] sm:$0xff]
        %v11604 = vld [vmem:[%s11599 + $0x20] sm:$0xff]
        %v11605 = vld [vmem:[%s11599 + $0x28] sm:$0xff]
        %v11606 = vld [vmem:[%s11599 + $0x30] sm:$0xff]
        %v11607 = vld [vmem:[%s11599 + $0x38] sm:$0xff]
        %v11608 = vld [vmem:[%s11599 + $0x40] sm:$0xff]
        %v11609 = vld [vmem:[%s11599 + $0x48] sm:$0xff]
        %v11610 = vld [vmem:[%s11599 + $0x50] sm:$0xff]
        %v11611 = vld [vmem:[%s11599 + $0x58] sm:$0xff]
        %v11612 = vld [vmem:[%s11599 + $0x60] sm:$0xff]
        %v11613 = vld [vmem:[%s11599 + $0x68] sm:$0xff]
        %v11614 = vld [vmem:[%s11599 + $0x70] sm:$0xff]
        %v11615 = vld [vmem:[%s11599 + $0x78] sm:$0xff]
        %v11616 = vunpack.c.l.b16 %v11490
        %v11617 = vunpack.c.l.b16 %v11493
        %v11618 = vunpack.c.l.b16 %v11497
        %v11619 = vunpack.c.l.b16 %v11500
        %v11620 = vunpack.c.l.b16 %v11504
        %v11621 = vunpack.c.l.b16 %v11507
        %v11622 = vunpack.c.l.b16 %v11511
        %v11623 = vunpack.c.l.b16 %v11514
        %v11624 = vunpack.c.l.b16 %v11518
        %v11625 = vunpack.c.l.b16 %v11521
        %v11626 = vunpack.c.l.b16 %v11525
        %v11627 = vunpack.c.l.b16 %v11528
        %v11628 = vunpack.c.l.b16 %v11532
        %v11629 = vunpack.c.l.b16 %v11535
        %v11630 = vunpack.c.l.b16 %v11539
        %v11631 = vunpack.c.l.b16 %v11542
        %v11632 = vunpack.c.l.b16 %v11546
        %v11633 = vunpack.c.l.b16 %v11549
        %v11634 = vunpack.c.l.b16 %v11553
        %v11635 = vunpack.c.l.b16 %v11556
        %v11636 = vunpack.c.l.b16 %v11560
        %v11637 = vunpack.c.l.b16 %v11563
        %v11638 = vunpack.c.l.b16 %v11567
        %v11639 = vunpack.c.l.b16 %v11570
        %v11640 = vunpack.c.l.b16 %v11574
        %v11641 = vunpack.c.l.b16 %v11577
        %v11642 = vunpack.c.l.b16 %v11581
        %v11643 = vunpack.c.l.b16 %v11584
        %v11644 = vunpack.c.l.b16 %v11588
        %v11645 = vunpack.c.l.b16 %v11591
        %v11646 = vunpack.c.l.b16 %v11595
        %v11647 = vunpack.c.l.b16 %v11598
        %v11648 = vpack.c.b16 %v11617, %v11616
        %v11649 = vpack.c.b16 %v11619, %v11618
        %v11650 = vpack.c.b16 %v11621, %v11620
        %v11651 = vpack.c.b16 %v11623, %v11622
        %v11652 = vpack.c.b16 %v11625, %v11624
        %v11653 = vpack.c.b16 %v11627, %v11626
        %v11654 = vpack.c.b16 %v11629, %v11628
        %v11655 = vpack.c.b16 %v11631, %v11630
        %v11656 = vpack.c.b16 %v11633, %v11632
        %v11657 = vpack.c.b16 %v11635, %v11634
        %v11658 = vpack.c.b16 %v11637, %v11636
        %v11659 = vpack.c.b16 %v11639, %v11638
        %v11660 = vpack.c.b16 %v11641, %v11640
        %v11661 = vpack.c.b16 %v11643, %v11642
        %v11662 = vpack.c.b16 %v11645, %v11644
        %v11663 = vpack.c.b16 %v11647, %v11646
        %v11696 = vunpack.c.l.b16 %v11600
        %v11697 = vunpack.c.h.b16 %v11600
        %v11698 = vunpack.c.l.b16 %v11601
        %v11699 = vunpack.c.h.b16 %v11601
        %v11700 = vunpack.c.l.b16 %v11602
        %v11701 = vunpack.c.h.b16 %v11602
        %v11702 = vunpack.c.l.b16 %v11603
        %v11703 = vunpack.c.h.b16 %v11603
        %v11704 = vunpack.c.l.b16 %v11604
        %v11705 = vunpack.c.h.b16 %v11604
        %v11706 = vunpack.c.l.b16 %v11605
        %v11707 = vunpack.c.h.b16 %v11605
        %v11708 = vunpack.c.l.b16 %v11606
        %v11709 = vunpack.c.h.b16 %v11606
        %v11710 = vunpack.c.l.b16 %v11607
        %v11711 = vunpack.c.h.b16 %v11607
        %v11712 = vunpack.c.l.b16 %v11608
        %v11713 = vunpack.c.h.b16 %v11608
        %v11714 = vunpack.c.l.b16 %v11609
        %v11715 = vunpack.c.h.b16 %v11609
        %v11716 = vunpack.c.l.b16 %v11610
        %v11717 = vunpack.c.h.b16 %v11610
        %v11718 = vunpack.c.l.b16 %v11611
        %v11719 = vunpack.c.h.b16 %v11611
        %v11720 = vunpack.c.l.b16 %v11612
        %v11721 = vunpack.c.h.b16 %v11612
        %v11722 = vunpack.c.l.b16 %v11613
        %v11723 = vunpack.c.h.b16 %v11613
        %v11724 = vunpack.c.l.b16 %v11614
        %v11725 = vunpack.c.h.b16 %v11614
        %v11726 = vunpack.c.l.b16 %v11615
        %v11727 = vunpack.c.h.b16 %v11615
        %v11728 = vpack.c.b16 %v11698, %v11696
        %v11729 = vpack.c.b16 %v11699, %v11697
        %v11730 = vpack.c.b16 %v11702, %v11700
        %v11731 = vpack.c.b16 %v11703, %v11701
        %v11732 = vpack.c.b16 %v11706, %v11704
        %v11733 = vpack.c.b16 %v11707, %v11705
        %v11734 = vpack.c.b16 %v11710, %v11708
        %v11735 = vpack.c.b16 %v11711, %v11709
        %v11736 = vpack.c.b16 %v11714, %v11712
        %v11737 = vpack.c.b16 %v11715, %v11713
        %v11738 = vpack.c.b16 %v11718, %v11716
        %v11739 = vpack.c.b16 %v11719, %v11717
        %v11740 = vpack.c.b16 %v11722, %v11720
        %v11741 = vpack.c.b16 %v11723, %v11721
        %v11742 = vpack.c.b16 %v11726, %v11724
        %v11743 = vpack.c.b16 %v11727, %v11725
        %11760 = vmatprep.subr.bf16.mxu0 %v11729
        %11761 = vmatpush1.bf16.msra.mxu0 %v11728
        %11762 = vmatprep.subr.bf16.mxu0 %v11731
        %11763 = vmatpush1.bf16.msra.mxu0 %v11730
        %11764 = vmatprep.subr.bf16.mxu0 %v11733
        %11765 = vmatpush1.bf16.msra.mxu0 %v11732
        %11766 = vmatprep.subr.bf16.mxu0 %v11735
        %11767 = vmatpush1.bf16.msra.mxu0 %v11734
        %11768 = vmatprep.subr.bf16.mxu0 %v11737
        %11769 = vmatpush1.bf16.msra.mxu0 %v11736
        %11770 = vmatprep.subr.bf16.mxu0 %v11739
        %11771 = vmatpush1.bf16.msra.mxu0 %v11738
        %11772 = vmatprep.subr.bf16.mxu0 %v11741
        %11773 = vmatpush1.bf16.msra.mxu0 %v11740
        %11774 = vmatprep.subr.bf16.mxu0 %v11743
        %11775 = vmatpush1.bf16.msra.mxu0 %v11742
        %11776 = vmatprep.subr.bf16.mxu0 0
        %11777 = vmatpush1.bf16.msra.mxu0 0
        %11778 = vmatprep.subr.bf16.mxu0 0
        %11779 = vmatpush1.bf16.msra.mxu0 0
        %11780 = vmatprep.subr.bf16.mxu0 0
        %11781 = vmatpush1.bf16.msra.mxu0 0
        %11782 = vmatprep.subr.bf16.mxu0 0
        %11783 = vmatpush1.bf16.msra.mxu0 0
        %11784 = vmatprep.subr.bf16.mxu0 0
        %11785 = vmatpush1.bf16.msra.mxu0 0
        %11786 = vmatprep.subr.bf16.mxu0 0
        %11787 = vmatpush1.bf16.msra.mxu0 0
        %11788 = vmatprep.subr.bf16.mxu0 0
        %11789 = vmatpush1.bf16.msra.mxu0 0
        %11790 = vmatprep.subr.bf16.mxu0 0
        %11791 = vmatpush1.bf16.msra.mxu0 0
        %11792 = vmatprep.mubr.bf16.mxu0 0
        %11793 = vmatmul.mubr.bf16.gmra.mrb[0].mxu0 %v11648
        %v11794 = vpop.f32.mrb[0].mxu0
        %v11795 = vadd.f32 0.0, %v11794
        %v11796 = vpop.f32.mrb[0].mxu0
        %v11797 = vadd.f32 0.0, %v11796
        %v11798 = vpop.f32.mrb[0].mxu0
        %v11799 = vadd.f32 0.0, %v11798
        %v11800 = vpop.f32.mrb[0].mxu0
        %v11801 = vadd.f32 0.0, %v11800
        %11802 = vmatprep.mubr.bf16.mxu0 0
        %11803 = vmatmul.mubr.bf16.gmra.mrb[0].mxu0 %v11649
        %v11804 = vpop.f32.mrb[0].mxu0
        %v11805 = vadd.f32 0.0, %v11804
        %v11806 = vpop.f32.mrb[0].mxu0
        %v11807 = vadd.f32 0.0, %v11806
        %v11808 = vpop.f32.mrb[0].mxu0
        %v11809 = vadd.f32 0.0, %v11808
        %v11810 = vpop.f32.mrb[0].mxu0
        %v11811 = vadd.f32 0.0, %v11810
        %11812 = vmatprep.mubr.bf16.mxu0 0
        %11813 = vmatmul.mubr.bf16.gmra.mrb[0].mxu0 %v11650
        %v11814 = vpop.f32.mrb[0].mxu0
        %v11815 = vadd.f32 0.0, %v11814
        %v11816 = vpop.f32.mrb[0].mxu0
        %v11817 = vadd.f32 0.0, %v11816
        %v11818 = vpop.f32.mrb[0].mxu0
        %v11819 = vadd.f32 0.0, %v11818
        %v11820 = vpop.f32.mrb[0].mxu0
        %v11821 = vadd.f32 0.0, %v11820
        %11822 = vmatprep.mubr.bf16.mxu0 0
        %11823 = vmatmul.mubr.bf16.gmra.mrb[0].mxu0 %v11651
        %v11824 = vpop.f32.mrb[0].mxu0
        %v11825 = vadd.f32 0.0, %v11824
        %v11826 = vpop.f32.mrb[0].mxu0
        %v11827 = vadd.f32 0.0, %v11826
        %v11828 = vpop.f32.mrb[0].mxu0
        %v11829 = vadd.f32 0.0, %v11828
        %v11830 = vpop.f32.mrb[0].mxu0
        %v11831 = vadd.f32 0.0, %v11830
        %11832 = vmatprep.mubr.bf16.mxu0 0
        %11833 = vmatmul.mubr.bf16.gmra.mrb[0].mxu0 %v11652
        %v11834 = vpop.f32.mrb[0].mxu0
        %v11835 = vadd.f32 0.0, %v11834
        %v11836 = vpop.f32.mrb[0].mxu0
        %v11837 = vadd.f32 0.0, %v11836
        %v11838 = vpop.f32.mrb[0].mxu0
        %v11839 = vadd.f32 0.0, %v11838
        %v11840 = vpop.f32.mrb[0].mxu0
        %v11841 = vadd.f32 0.0, %v11840
        %11842 = vmatprep.mubr.bf16.mxu0 0
        %11843 = vmatmul.mubr.bf16.gmra.mrb[0].mxu0 %v11653
        %v11844 = vpop.f32.mrb[0].mxu0
        %v11845 = vadd.f32 0.0, %v11844
        %v11846 = vpop.f32.mrb[0].mxu0
        %v11847 = vadd.f32 0.0, %v11846
        %v11848 = vpop.f32.mrb[0].mxu0
        %v11849 = vadd.f32 0.0, %v11848
        %v11850 = vpop.f32.mrb[0].mxu0
        %v11851 = vadd.f32 0.0, %v11850
        %11852 = vmatprep.mubr.bf16.mxu0 0
        %11853 = vmatmul.mubr.bf16.gmra.mrb[0].mxu0 %v11654
        %v11854 = vpop.f32.mrb[0].mxu0
        %v11855 = vadd.f32 0.0, %v11854
        %v11856 = vpop.f32.mrb[0].mxu0
        %v11857 = vadd.f32 0.0, %v11856
        %v11858 = vpop.f32.mrb[0].mxu0
        %v11859 = vadd.f32 0.0, %v11858
        %v11860 = vpop.f32.mrb[0].mxu0
        %v11861 = vadd.f32 0.0, %v11860
        %11862 = vmatprep.mubr.bf16.mxu0 0
        %11863 = vmatmul.mubr.bf16.gmra.mrb[0].mxu0 %v11655
        %v11864 = vpop.f32.mrb[0].mxu0
        %v11865 = vadd.f32 0.0, %v11864
        %v11866 = vpop.f32.mrb[0].mxu0
        %v11867 = vadd.f32 0.0, %v11866
        %v11868 = vpop.f32.mrb[0].mxu0
        %v11869 = vadd.f32 0.0, %v11868
        %v11870 = vpop.f32.mrb[0].mxu0
        %v11871 = vadd.f32 0.0, %v11870
        %11872 = vmatprep.mubr.bf16.mxu0 0
        %11873 = vmatmul.mubr.bf16.gmra.mrb[0].mxu0 %v11656
        %v11874 = vpop.f32.mrb[0].mxu0
        %v11875 = vadd.f32 0.0, %v11874
        %v11876 = vpop.f32.mrb[0].mxu0
        %v11877 = vadd.f32 0.0, %v11876
        %v11878 = vpop.f32.mrb[0].mxu0
        %v11879 = vadd.f32 0.0, %v11878
        %v11880 = vpop.f32.mrb[0].mxu0
        %v11881 = vadd.f32 0.0, %v11880
        %11882 = vmatprep.mubr.bf16.mxu0 0
        %11883 = vmatmul.mubr.bf16.gmra.mrb[0].mxu0 %v11657
        %v11884 = vpop.f32.mrb[0].mxu0
        %v11885 = vadd.f32 0.0, %v11884
        %v11886 = vpop.f32.mrb[0].mxu0
        %v11887 = vadd.f32 0.0, %v11886
        %v11888 = vpop.f32.mrb[0].mxu0
        %v11889 = vadd.f32 0.0, %v11888
        %v11890 = vpop.f32.mrb[0].mxu0
        %v11891 = vadd.f32 0.0, %v11890
        %11892 = vmatprep.mubr.bf16.mxu0 0
        %11893 = vmatmul.mubr.bf16.gmra.mrb[0].mxu0 %v11658
        %v11894 = vpop.f32.mrb[0].mxu0
        %v11895 = vadd.f32 0.0, %v11894
        %v11896 = vpop.f32.mrb[0].mxu0
        %v11897 = vadd.f32 0.0, %v11896
        %v11898 = vpop.f32.mrb[0].mxu0
        %v11899 = vadd.f32 0.0, %v11898
        %v11900 = vpop.f32.mrb[0].mxu0
        %v11901 = vadd.f32 0.0, %v11900
        %11902 = vmatprep.mubr.bf16.mxu0 0
        %11903 = vmatmul.mubr.bf16.gmra.mrb[0].mxu0 %v11659
        %v11904 = vpop.f32.mrb[0].mxu0
        %v11905 = vadd.f32 0.0, %v11904
        %v11906 = vpop.f32.mrb[0].mxu0
        %v11907 = vadd.f32 0.0, %v11906
        %v11908 = vpop.f32.mrb[0].mxu0
        %v11909 = vadd.f32 0.0, %v11908
        %v11910 = vpop.f32.mrb[0].mxu0
        %v11911 = vadd.f32 0.0, %v11910
        %11912 = vmatprep.mubr.bf16.mxu0 0
        %11913 = vmatmul.mubr.bf16.gmra.mrb[0].mxu0 %v11660
        %v11914 = vpop.f32.mrb[0].mxu0
        %v11915 = vadd.f32 0.0, %v11914
        %v11916 = vpop.f32.mrb[0].mxu0
        %v11917 = vadd.f32 0.0, %v11916
        %v11918 = vpop.f32.mrb[0].mxu0
        %v11919 = vadd.f32 0.0, %v11918
        %v11920 = vpop.f32.mrb[0].mxu0
        %v11921 = vadd.f32 0.0, %v11920
        %11922 = vmatprep.mubr.bf16.mxu0 0
        %11923 = vmatmul.mubr.bf16.gmra.mrb[0].mxu0 %v11661
        %v11924 = vpop.f32.mrb[0].mxu0
        %v11925 = vadd.f32 0.0, %v11924
        %v11926 = vpop.f32.mrb[0].mxu0
        %v11927 = vadd.f32 0.0, %v11926
        %v11928 = vpop.f32.mrb[0].mxu0
        %v11929 = vadd.f32 0.0, %v11928
        %v11930 = vpop.f32.mrb[0].mxu0
        %v11931 = vadd.f32 0.0, %v11930
        %11932 = vmatprep.mubr.bf16.mxu0 0
        %11933 = vmatmul.mubr.bf16.gmra.mrb[0].mxu0 %v11662
        %v11934 = vpop.f32.mrb[0].mxu0
        %v11935 = vadd.f32 0.0, %v11934
        %v11936 = vpop.f32.mrb[0].mxu0
        %v11937 = vadd.f32 0.0, %v11936
        %v11938 = vpop.f32.mrb[0].mxu0
        %v11939 = vadd.f32 0.0, %v11938
        %v11940 = vpop.f32.mrb[0].mxu0
        %v11941 = vadd.f32 0.0, %v11940
        %11942 = vmatprep.mubr.bf16.mxu0 0
        %11943 = vmatmul.mubr.bf16.gmra.mrb[0].mxu0 %v11663
        %v11944 = vpop.f32.mrb[0].mxu0
        %v11945 = vadd.f32 0.0, %v11944
        %v11946 = vpop.f32.mrb[0].mxu0
        %v11947 = vadd.f32 0.0, %v11946
        %v11948 = vpop.f32.mrb[0].mxu0
        %v11949 = vadd.f32 0.0, %v11948
        %v11950 = vpop.f32.mrb[0].mxu0
        %v11951 = vadd.f32 0.0, %v11950
        %11952 = vdwg.mxu0
        %v11953 = vadd.f32 %v11359, %v11795
        %v11954 = vadd.f32 %v11360, %v11797
        %v11955 = vadd.f32 %v11361, %v11799
        %v11956 = vadd.f32 %v11362, %v11801
        %v11957 = vadd.f32 %v11363, %v11805
        %v11958 = vadd.f32 %v11364, %v11807
        %v11959 = vadd.f32 %v11365, %v11809
        %v11960 = vadd.f32 %v11366, %v11811
        %v11961 = vadd.f32 %v11367, %v11815
        %v11962 = vadd.f32 %v11368, %v11817
        %v11963 = vadd.f32 %v11369, %v11819
        %v11964 = vadd.f32 %v11370, %v11821
        %v11965 = vadd.f32 %v11371, %v11825
        %v11966 = vadd.f32 %v11372, %v11827
        %v11967 = vadd.f32 %v11373, %v11829
        %v11968 = vadd.f32 %v11374, %v11831
        %v11969 = vadd.f32 %v11375, %v11835
        %v11970 = vadd.f32 %v11376, %v11837
        %v11971 = vadd.f32 %v11377, %v11839
        %v11972 = vadd.f32 %v11378, %v11841
        %v11973 = vadd.f32 %v11379, %v11845
        %v11974 = vadd.f32 %v11380, %v11847
        %v11975 = vadd.f32 %v11381, %v11849
        %v11976 = vadd.f32 %v11382, %v11851
        %v11977 = vadd.f32 %v11383, %v11855
        %v11978 = vadd.f32 %v11384, %v11857
        %v11979 = vadd.f32 %v11385, %v11859
        %v11980 = vadd.f32 %v11386, %v11861
        %v11981 = vadd.f32 %v11387, %v11865
        %v11982 = vadd.f32 %v11388, %v11867
        %v11983 = vadd.f32 %v11389, %v11869
        %v11984 = vadd.f32 %v11390, %v11871
        %v11985 = vadd.f32 %v11391, %v11875
        %v11986 = vadd.f32 %v11392, %v11877
        %v11987 = vadd.f32 %v11393, %v11879
        %v11988 = vadd.f32 %v11394, %v11881
        %v11989 = vadd.f32 %v11395, %v11885
        %v11990 = vadd.f32 %v11396, %v11887
        %v11991 = vadd.f32 %v11397, %v11889
        %v11992 = vadd.f32 %v11398, %v11891
        %v11993 = vadd.f32 %v11399, %v11895
        %v11994 = vadd.f32 %v11400, %v11897
        %v11995 = vadd.f32 %v11401, %v11899
        %v11996 = vadd.f32 %v11402, %v11901
        %v11997 = vadd.f32 %v11403, %v11905
        %v11998 = vadd.f32 %v11404, %v11907
        %v11999 = vadd.f32 %v11405, %v11909
        %v12000 = vadd.f32 %v11406, %v11911
        %v12001 = vadd.f32 %v11407, %v11915
        %v12002 = vadd.f32 %v11408, %v11917
        %v12003 = vadd.f32 %v11409, %v11919
        %v12004 = vadd.f32 %v11410, %v11921
        %v12005 = vadd.f32 %v11411, %v11925
        %v12006 = vadd.f32 %v11412, %v11927
        %v12007 = vadd.f32 %v11413, %v11929
        %v12008 = vadd.f32 %v11414, %v11931
        %v12009 = vadd.f32 %v11415, %v11935
        %v12010 = vadd.f32 %v11416, %v11937
        %v12011 = vadd.f32 %v11417, %v11939
        %v12012 = vadd.f32 %v11418, %v11941
        %v12013 = vadd.f32 %v11419, %v11945
        %v12014 = vadd.f32 %v11420, %v11947
        %v12015 = vadd.f32 %v11421, %v11949
        %v12016 = vadd.f32 %v11422, %v11951
        %v12017 = vld [vmem:[%s312] sm:$0x3]
        %v12019 = vlaneseq
        %v12020 = vshrl.u32 %v12019, 7
        %v12021 = vsub.s32 0, %v12020
        %v12022 = vrot.slane %v12017, %v12021
        %v12023 = vlaneseq
        %v12024 = vshrl.u32 %v12023, 7
        %v12025 = vsub.s32 1, %v12024
        %v12026 = vrot.slane %v12017, %v12025
        %v12029 = vadd.f32 %v11953, %v12022
        %v12030 = vadd.f32 %v11954, %v12026
        %v12031 = vadd.f32 %v11955, %v12022
        %v12032 = vadd.f32 %v11956, %v12026
        %v12033 = vadd.f32 %v11957, %v12022
        %v12034 = vadd.f32 %v11958, %v12026
        %v12035 = vadd.f32 %v11959, %v12022
        %v12036 = vadd.f32 %v11960, %v12026
        %v12037 = vadd.f32 %v11961, %v12022
        %v12038 = vadd.f32 %v11962, %v12026
        %v12039 = vadd.f32 %v11963, %v12022
        %v12040 = vadd.f32 %v11964, %v12026
        %v12041 = vadd.f32 %v11965, %v12022
        %v12042 = vadd.f32 %v11966, %v12026
        %v12043 = vadd.f32 %v11967, %v12022
        %v12044 = vadd.f32 %v11968, %v12026
        %v12045 = vadd.f32 %v11969, %v12022
        %v12046 = vadd.f32 %v11970, %v12026
        %v12047 = vadd.f32 %v11971, %v12022
        %v12048 = vadd.f32 %v11972, %v12026
        %v12049 = vadd.f32 %v11973, %v12022
        %v12050 = vadd.f32 %v11974, %v12026
        %v12051 = vadd.f32 %v11975, %v12022
        %v12052 = vadd.f32 %v11976, %v12026
        %v12053 = vadd.f32 %v11977, %v12022
        %v12054 = vadd.f32 %v11978, %v12026
        %v12055 = vadd.f32 %v11979, %v12022
        %v12056 = vadd.f32 %v11980, %v12026
        %v12057 = vadd.f32 %v11981, %v12022
        %v12058 = vadd.f32 %v11982, %v12026
        %v12059 = vadd.f32 %v11983, %v12022
        %v12060 = vadd.f32 %v11984, %v12026
        %v12061 = vadd.f32 %v11985, %v12022
        %v12062 = vadd.f32 %v11986, %v12026
        %v12063 = vadd.f32 %v11987, %v12022
        %v12064 = vadd.f32 %v11988, %v12026
        %v12065 = vadd.f32 %v11989, %v12022
        %v12066 = vadd.f32 %v11990, %v12026
        %v12067 = vadd.f32 %v11991, %v12022
        %v12068 = vadd.f32 %v11992, %v12026
        %v12069 = vadd.f32 %v11993, %v12022
        %v12070 = vadd.f32 %v11994, %v12026
        %v12071 = vadd.f32 %v11995, %v12022
        %v12072 = vadd.f32 %v11996, %v12026
        %v12073 = vadd.f32 %v11997, %v12022
        %v12074 = vadd.f32 %v11998, %v12026
        %v12075 = vadd.f32 %v11999, %v12022
        %v12076 = vadd.f32 %v12000, %v12026
        %v12077 = vadd.f32 %v12001, %v12022
        %v12078 = vadd.f32 %v12002, %v12026
        %v12079 = vadd.f32 %v12003, %v12022
        %v12080 = vadd.f32 %v12004, %v12026
        %v12081 = vadd.f32 %v12005, %v12022
        %v12082 = vadd.f32 %v12006, %v12026
        %v12083 = vadd.f32 %v12007, %v12022
        %v12084 = vadd.f32 %v12008, %v12026
        %v12085 = vadd.f32 %v12009, %v12022
        %v12086 = vadd.f32 %v12010, %v12026
        %v12087 = vadd.f32 %v12011, %v12022
        %v12088 = vadd.f32 %v12012, %v12026
        %v12089 = vadd.f32 %v12013, %v12022
        %v12090 = vadd.f32 %v12014, %v12026
        %v12091 = vadd.f32 %v12015, %v12022
        %v12092 = vadd.f32 %v12016, %v12026
        %v12093 = vpack.c.bf16 %v12031, %v12029
        %v12094 = vpack.c.bf16 %v12032, %v12030
        %v12095 = vpack.c.bf16 %v12035, %v12033
        %v12096 = vpack.c.bf16 %v12036, %v12034
        %v12097 = vpack.c.bf16 %v12039, %v12037
        %v12098 = vpack.c.bf16 %v12040, %v12038
        %v12099 = vpack.c.bf16 %v12043, %v12041
        %v12100 = vpack.c.bf16 %v12044, %v12042
        %v12101 = vpack.c.bf16 %v12047, %v12045
        %v12102 = vpack.c.bf16 %v12048, %v12046
        %v12103 = vpack.c.bf16 %v12051, %v12049
        %v12104 = vpack.c.bf16 %v12052, %v12050
        %v12105 = vpack.c.bf16 %v12055, %v12053
        %v12106 = vpack.c.bf16 %v12056, %v12054
        %v12107 = vpack.c.bf16 %v12059, %v12057
        %v12108 = vpack.c.bf16 %v12060, %v12058
        %v12109 = vpack.c.bf16 %v12063, %v12061
        %v12110 = vpack.c.bf16 %v12064, %v12062
        %v12111 = vpack.c.bf16 %v12067, %v12065
        %v12112 = vpack.c.bf16 %v12068, %v12066
        %v12113 = vpack.c.bf16 %v12071, %v12069
        %v12114 = vpack.c.bf16 %v12072, %v12070
        %v12115 = vpack.c.bf16 %v12075, %v12073
        %v12116 = vpack.c.bf16 %v12076, %v12074
        %v12117 = vpack.c.bf16 %v12079, %v12077
        %v12118 = vpack.c.bf16 %v12080, %v12078
        %v12119 = vpack.c.bf16 %v12083, %v12081
        %v12120 = vpack.c.bf16 %v12084, %v12082
        %v12121 = vpack.c.bf16 %v12087, %v12085
        %v12122 = vpack.c.bf16 %v12088, %v12086
        %v12123 = vpack.c.bf16 %v12091, %v12089
        %v12124 = vpack.c.bf16 %v12092, %v12090
        %v12157 = vunpack.c.l.b16 %v12093
        %v12158 = vunpack.c.l.b16 %v12094
        %v12159 = vunpack.c.h.b16 %v12093
        %v12160 = vunpack.c.h.b16 %v12094
        %v12161 = vunpack.c.l.b16 %v12095
        %v12162 = vunpack.c.l.b16 %v12096
        %v12163 = vunpack.c.h.b16 %v12095
        %v12164 = vunpack.c.h.b16 %v12096
        %v12165 = vunpack.c.l.b16 %v12097
        %v12166 = vunpack.c.l.b16 %v12098
        %v12167 = vunpack.c.h.b16 %v12097
        %v12168 = vunpack.c.h.b16 %v12098
        %v12169 = vunpack.c.l.b16 %v12099
        %v12170 = vunpack.c.l.b16 %v12100
        %v12171 = vunpack.c.h.b16 %v12099
        %v12172 = vunpack.c.h.b16 %v12100
        %v12173 = vunpack.c.l.b16 %v12101
        %v12174 = vunpack.c.l.b16 %v12102
        %v12175 = vunpack.c.h.b16 %v12101
        %v12176 = vunpack.c.h.b16 %v12102
        %v12177 = vunpack.c.l.b16 %v12103
        %v12178 = vunpack.c.l.b16 %v12104
        %v12179 = vunpack.c.h.b16 %v12103
        %v12180 = vunpack.c.h.b16 %v12104
        %v12181 = vunpack.c.l.b16 %v12105
        %v12182 = vunpack.c.l.b16 %v12106
        %v12183 = vunpack.c.h.b16 %v12105
        %v12184 = vunpack.c.h.b16 %v12106
        %v12185 = vunpack.c.l.b16 %v12107
        %v12186 = vunpack.c.l.b16 %v12108
        %v12187 = vunpack.c.h.b16 %v12107
        %v12188 = vunpack.c.h.b16 %v12108
        %v12189 = vunpack.c.l.b16 %v12109
        %v12190 = vunpack.c.l.b16 %v12110
        %v12191 = vunpack.c.h.b16 %v12109
        %v12192 = vunpack.c.h.b16 %v12110
        %v12193 = vunpack.c.l.b16 %v12111
        %v12194 = vunpack.c.l.b16 %v12112
        %v12195 = vunpack.c.h.b16 %v12111
        %v12196 = vunpack.c.h.b16 %v12112
        %v12197 = vunpack.c.l.b16 %v12113
        %v12198 = vunpack.c.l.b16 %v12114
        %v12199 = vunpack.c.h.b16 %v12113
        %v12200 = vunpack.c.h.b16 %v12114
        %v12201 = vunpack.c.l.b16 %v12115
        %v12202 = vunpack.c.l.b16 %v12116
        %v12203 = vunpack.c.h.b16 %v12115
        %v12204 = vunpack.c.h.b16 %v12116
        %v12205 = vunpack.c.l.b16 %v12117
        %v12206 = vunpack.c.l.b16 %v12118
        %v12207 = vunpack.c.h.b16 %v12117
        %v12208 = vunpack.c.h.b16 %v12118
        %v12209 = vunpack.c.l.b16 %v12119
        %v12210 = vunpack.c.l.b16 %v12120
        %v12211 = vunpack.c.h.b16 %v12119
        %v12212 = vunpack.c.h.b16 %v12120
        %v12213 = vunpack.c.l.b16 %v12121
        %v12214 = vunpack.c.l.b16 %v12122
        %v12215 = vunpack.c.h.b16 %v12121
        %v12216 = vunpack.c.h.b16 %v12122
        %v12217 = vunpack.c.l.b16 %v12123
        %v12218 = vunpack.c.l.b16 %v12124
        %v12219 = vunpack.c.h.b16 %v12123
        %v12220 = vunpack.c.h.b16 %v12124
        %v12221 = vpack.c.b16 %v12158, %v12157
        %v12222 = vpack.c.b16 %v12160, %v12159
        %v12223 = vpack.c.b16 %v12162, %v12161
        %v12224 = vpack.c.b16 %v12164, %v12163
        %v12225 = vpack.c.b16 %v12166, %v12165
        %v12226 = vpack.c.b16 %v12168, %v12167
        %v12227 = vpack.c.b16 %v12170, %v12169
        %v12228 = vpack.c.b16 %v12172, %v12171
        %v12229 = vpack.c.b16 %v12174, %v12173
        %v12230 = vpack.c.b16 %v12176, %v12175
        %v12231 = vpack.c.b16 %v12178, %v12177
        %v12232 = vpack.c.b16 %v12180, %v12179
        %v12233 = vpack.c.b16 %v12182, %v12181
        %v12234 = vpack.c.b16 %v12184, %v12183
        %v12235 = vpack.c.b16 %v12186, %v12185
        %v12236 = vpack.c.b16 %v12188, %v12187
        %v12237 = vpack.c.b16 %v12190, %v12189
        %v12238 = vpack.c.b16 %v12192, %v12191
        %v12239 = vpack.c.b16 %v12194, %v12193
        %v12240 = vpack.c.b16 %v12196, %v12195
        %v12241 = vpack.c.b16 %v12198, %v12197
        %v12242 = vpack.c.b16 %v12200, %v12199
        %v12243 = vpack.c.b16 %v12202, %v12201
        %v12244 = vpack.c.b16 %v12204, %v12203
        %v12245 = vpack.c.b16 %v12206, %v12205
        %v12246 = vpack.c.b16 %v12208, %v12207
        %v12247 = vpack.c.b16 %v12210, %v12209
        %v12248 = vpack.c.b16 %v12212, %v12211
        %v12249 = vpack.c.b16 %v12214, %v12213
        %v12250 = vpack.c.b16 %v12216, %v12215
        %v12251 = vpack.c.b16 %v12218, %v12217
        %v12252 = vpack.c.b16 %v12220, %v12219
        %12285 = vst [vmem:[%s307] sm:$0xff] %v12221
        %12286 = vst [vmem:[%s307 + $0x8] sm:$0xff] %v12222
        %12287 = vst [vmem:[%s307 + $0x10] sm:$0xff] %v12223
        %12288 = vst [vmem:[%s307 + $0x18] sm:$0xff] %v12224
        %12289 = vst [vmem:[%s307 + $0x20] sm:$0xff] %v12225
        %12290 = vst [vmem:[%s307 + $0x28] sm:$0xff] %v12226
        %12291 = vst [vmem:[%s307 + $0x30] sm:$0xff] %v12227
        %12292 = vst [vmem:[%s307 + $0x38] sm:$0xff] %v12228
        %12293 = vst [vmem:[%s307 + $0x40] sm:$0xff] %v12229
        %12294 = vst [vmem:[%s307 + $0x48] sm:$0xff] %v12230
        %12295 = vst [vmem:[%s307 + $0x50] sm:$0xff] %v12231
        %12296 = vst [vmem:[%s307 + $0x58] sm:$0xff] %v12232
        %12297 = vst [vmem:[%s307 + $0x60] sm:$0xff] %v12233
        %12298 = vst [vmem:[%s307 + $0x68] sm:$0xff] %v12234
        %12299 = vst [vmem:[%s307 + $0x70] sm:$0xff] %v12235
        %12300 = vst [vmem:[%s307 + $0x78] sm:$0xff] %v12236
        %12301 = vst [vmem:[%s307 + $0x80] sm:$0xff] %v12237
        %12302 = vst [vmem:[%s307 + $0x88] sm:$0xff] %v12238
        %12303 = vst [vmem:[%s307 + $0x90] sm:$0xff] %v12239
        %12304 = vst [vmem:[%s307 + $0x98] sm:$0xff] %v12240
        %12305 = vst [vmem:[%s307 + $0xa0] sm:$0xff] %v12241
        %12306 = vst [vmem:[%s307 + $0xa8] sm:$0xff] %v12242
        %12307 = vst [vmem:[%s307 + $0xb0] sm:$0xff] %v12243
        %12308 = vst [vmem:[%s307 + $0xb8] sm:$0xff] %v12244
        %12309 = vst [vmem:[%s307 + $0xc0] sm:$0xff] %v12245
        %12310 = vst [vmem:[%s307 + $0xc8] sm:$0xff] %v12246
        %12311 = vst [vmem:[%s307 + $0xd0] sm:$0xff] %v12247
        %12312 = vst [vmem:[%s307 + $0xd8] sm:$0xff] %v12248
        %12313 = vst [vmem:[%s307 + $0xe0] sm:$0xff] %v12249
        %12314 = vst [vmem:[%s307 + $0xe8] sm:$0xff] %v12250
        %12315 = vst [vmem:[%s307 + $0xf0] sm:$0xff] %v12251
        %12316 = vst [vmem:[%s307 + $0xf8] sm:$0xff] %v12252
        %s12317 = sand.u32 %s165, 1
        %s12318 = scalar_lea.sflag [#allocation6], %s12317
        %s12319 = sand.u32 %s165, 1
        %s12320 = smul.addr %s12319, 256
        %s12321 = scalar_lea.vmem [#allocation10], %s12320
        // Predicated region
        $region57: #{tpu_custom_call.1} parent=39 // pred_check
          %p12322 = pneg %p175
        $region58: #{tpu_custom_call.1} parent=39 // pred_check_branch
          %12324 = sbr.rel (%p12322) target = $region60
        $region59: #{tpu_custom_call.1} parent=39 // pred_region
          %s12325 = smul.u32 2, %s28
          %s12327 = ssub.s32 4096, 4096
          %12328 = vsyncadd %s12318, %s12327
          %s12329 = smul.addr %s27, 64
          %s12330 = sadd.s32 %s12325, %s12329
          %s12331 = smul.addr %s12330, 64
          %s12332 = scalar_lea.hbm %s5, %s12331
          %s12333 = sshll.u32 %s12321, 4
          %s12334 = int_to_ptr.vmem [resolvable:$true] %s12333
          %12339 = dma.vmem_to_hbm [thread:$0]  %s12334, 4096, %s12332, %s12318, 128, 128, 8
        $region60: #{tpu_custom_call.1} parent=39 // pred_fallthru
          _
      $region40: #{tpu_custom_call.1} parent=5 // pred_fallthru
        _
      %p12340 = scmp.le.s32.totalorder 2, %s18
      // Predicated region
      $region61: #{tpu_custom_call.1} parent=5 // pred_check
        %p12341 = pneg %p12340
      $region62: #{tpu_custom_call.1} parent=5 // pred_check_branch
        %12343 = sbr.rel (%p12341) target = $region64
      $region63: #{tpu_custom_call.1} parent=5 // pred_region
        %s12344 = ssub.s32 %s18, 2
        // Predicated region
        $region65: #{tpu_custom_call.1} parent=63 // pred_check
          %p12345 = pneg %p181
        $region66: #{tpu_custom_call.1} parent=63 // pred_check_branch
          %12347 = sbr.rel (%p12345) target = $region68
        $region67: #{tpu_custom_call.1} parent=63 // pred_region
          %s12348 = sand.u32 %s166, 1
          %s12349 = scalar_lea.sflag [#allocation6], %s12348
          %s12350 = sand.u32 %s166, 1
          %s12351 = smul.addr %s12350, 256
          %s12352 = scalar_lea.vmem [#allocation10], %s12351
          %12353 = dma.done %s12349, 4096
        $region68: #{tpu_custom_call.1} parent=63 // pred_fallthru
          _
      $region64: #{tpu_custom_call.1} parent=5 // pred_fallthru
        _
    $region6: #{tpu_custom_call.1} parent=1 // loop_footer
      %s22 = sadd.s32 1, %s18
    $region7: #{tpu_custom_call.1} parent=1 // loop_footer_branch
      %17 = sbr.rel target = $region3
    $region8: #{tpu_custom_call.1} parent=1 // loop_exit
      _
    %12354 = vsyncpa [#allocation5], 1
    %s12355 = scalar_lea.sflag [#allocation5], 1
    %12356 = vsyncpa %s12355, 1
    %12357 = vsyncpa [#allocation8], 1
    %12358 = vsyncpa [#allocation6], 1
    %s12359 = scalar_lea.sflag [#allocation6], 1
    %12360 = vsyncpa %s12359, 1

</llo_original>
